<compile_context>
chip_gen: v7x
topology: tpu7x:2x2x1
jax: 0.10.0
libtpu: 0.0.40
codegen_flags: <defaults>
</compile_context>

<pallas_src>
import numpy as np

import jax
import jax.numpy as jnp
from jax.experimental import pallas as pl
from jax.experimental.pallas import tpu as pltpu

_EPS = 1e-5


# ----------------------------- static geometry helpers -----------------------------

def _round_up(x, m):
    return (x + m - 1) // m * m


def _geo(n, h, w):
    hp, wp = h + 2, w + 2
    l = n * hp * wp
    # +2*Wp+2 slack so every 3x3 tap offset (<= 2*Wp+2) can be taken as a static
    # lane slice; round lane count up to a multiple of 128 for clean vregs.
    return dict(N=n, H=h, W=w, Hp=hp, Wp=wp, L=l,
                Ptot=_round_up(l + 2 * wp + 2, 128))


def _valid_mask(geo, stride):
    # (1, L) f32 mask of output base positions used by a stride-`stride` conv.
    hh = np.arange(geo["Hp"])[:, None]
    ww = np.arange(geo["Wp"])[None, :]
    m = (hh < geo["H"]) & (ww < geo["W"]) & (hh % stride == 0) & (ww % stride == 0)
    return np.tile(m[None], (geo["N"], 1, 1)).astype(np.float32).reshape(1, -1)


def _repack_matrix(gs, gd, stride):
    # (L_src, Ptot_dst) 0/1 matrix: selected valid source base positions -> padded
    # interior positions of the destination grid.  All other columns stay zero,
    # so the matmul also (re)creates the zero padding border.
    S = np.zeros((gs["L"], gd["Ptot"]), np.float32)
    for p in range(gs["L"]):
        n, rem = divmod(p, gs["Hp"] * gs["Wp"])
        h, w = divmod(rem, gs["Wp"])
        if h < gs["H"] and w < gs["W"] and h % stride == 0 and w % stride == 0:
            q = n * gd["Hp"] * gd["Wp"] + (h // stride + 1) * gd["Wp"] + (w // stride + 1)
            S[p, q] = 1.0
    return S


def _pool_matrix(geo):
    # (L, N) matrix performing the global average pool per image.
    P = np.zeros((geo["L"], geo["N"]), np.float32)
    inv = 1.0 / (geo["H"] * geo["W"])
    for p in range(geo["L"]):
        n, rem = divmod(p, geo["Hp"] * geo["Wp"])
        h, w = divmod(rem, geo["Wp"])
        if h < geo["H"] and w < geo["W"]:
            P[p, n] = inv
    return P


def _flatten_conv_w(w, pad_cin_to=None):
    # (kh, kw, cin, cout) -> (cout, kh*kw*cin) in (dy, dx, ci) patch order, bf16
    # (MXU-native inputs; accumulation stays f32 inside the kernel).
    kh, kw, cin, cout = w.shape
    if pad_cin_to is not None and pad_cin_to > cin:
        w = jnp.pad(w, ((0, 0), (0, 0), (0, pad_cin_to - cin), (0, 0)))
        cin = pad_cin_to
    return jnp.transpose(w, (3, 0, 1, 2)).reshape(cout, kh * kw * cin).astype(jnp.bfloat16)


# ----------------------------- the fused Pallas kernel -----------------------------

def _make_kernel(plan):
    def kernel(*refs):
        out_ref = refs[-1]
        r = refs[:-1]

        def shift(val, k, length):
            # lanes [k, k+length) of a (C, Ptot) value (k, length are static).
            return val[:, k:k + length]

        def conv_bn(a, geo, wi, gi, bi, mi, stride, ksize):
            # in-VMEM im2col: 9 shifted lane views -> one bf16 MXU matmul.
            wp, l = geo["Wp"], geo["L"]
            if ksize == 1:
                patches = shift(a, wp + 1, l)                     # center taps
            else:
                patches = jnp.concatenate(
                    [shift(a, dy * wp + dx, l) for dy in range(3) for dx in range(3)],
                    axis=0)                                       # (9*Cin, L)
            acc = jnp.dot(r[wi][...], patches.astype(jnp.bfloat16),
                          preferred_element_type=jnp.float32)     # (Cout, L) f32
            # one-pass masked batch statistics (f32): var = E[x^2] - mean^2
            m = r[mi][...]                                        # (1, L)
            inv_n = 1.0 / (geo["N"] * (geo["H"] // stride) * (geo["W"] // stride))
            mean = jnp.sum(acc * m, axis=1, keepdims=True) * inv_n
            ex2 = jnp.sum(acc * acc * m, axis=1, keepdims=True) * inv_n
            var = ex2 - mean * mean
            scale = r[gi][...] * jax.lax.rsqrt(var + _EPS)
            return acc * scale + (r[bi][...] - mean * scale)

        def repack_s1(vals, geo, mi):
            # stride-1: zero out pad-position junk, then shift valid outputs into
            # the interior of the (same-size) padded grid via lane concatenation.
            wp, l, ptot = geo["Wp"], geo["L"], geo["Ptot"]
            c = vals.shape[0]
            z = vals * r[mi][...]
            lead = jnp.zeros((c, wp + 1), jnp.float32)
            tail = jnp.zeros((c, ptot - l - wp - 1), jnp.float32)
            return jnp.concatenate([lead, z, tail], axis=1)       # (C, Ptot)

        def repack_s2(vals, si):
            # stride-2: select every other row/col and re-pad via a 0/1 matmul.
            return jnp.dot(vals, r[si][...], preferred_element_type=jnp.float32)

        # ---- stem: conv -> BN -> ReLU ----
        st = plan["stem"]
        geo_a = st["geo"]
        buf = repack_s1(
            jnp.maximum(conv_bn(r[plan["x0"]][...], geo_a,
                                st["w"], st["g"], st["b"], st["m1"], 1, 3), 0.0),
            geo_a, st["m1"])

        # ---- BasicBlocks ----
        out = None
        for bp in plan["blocks"]:
            gs, gd, s = bp["src_geo"], bp["dst_geo"], bp["stride"]
            out1 = jnp.maximum(
                conv_bn(buf, gs, bp["w1"], bp["g1"], bp["b1"], bp["m_src"], s, 3), 0.0)
            if bp["sc"] is None:                        # identity shortcut
                buf1 = repack_s1(out1, gd, bp["m_dst"])
                sc_buf = buf
            else:                                       # 1x1 conv + BN projection
                buf1 = repack_s2(out1, bp["S"])
                wsc, gsc, bsc = bp["sc"]
                sc_buf = repack_s2(
                    conv_bn(buf, gs, wsc, gsc, bsc, bp["m_src"], s, 1), bp["S"])
            out2 = conv_bn(buf1, gd, bp["w2"], bp["g2"], bp["b2"], bp["m_dst"], 1, 3)
            out = jnp.maximum(out2 + shift(sc_buf, gd["Wp"] + 1, gd["L"]), 0.0)
            if not bp["last"]:
                buf = repack_s1(out, gd, bp["m_dst"])

        # ---- global average pool + Linear (still inside the same kernel) ----
        pooled = jnp.dot(out, r[plan["pool"]][...],
                         preferred_element_type=jnp.float32)       # (C, N)
        logits = jnp.dot(r[plan["fcw"]][...], pooled,
                         preferred_element_type=jnp.float32) + r[plan["fcb"]][...]
        out_ref[...] = logits                                      # (num_classes, N)

    return kernel


# ----------------------------- wrapper (jit-friendly) -----------------------------

def resnet_forward(params, x_nchw):
    n, c_in, h, w = x_nchw.shape
    assert h % 4 == 0 and w % 4 == 0, "two stride-2 stages require spatial % 4 == 0"
    geo_a = _geo(n, h, w)
    cin_pad = _round_up(c_in, 8)

    inputs = []

    def add(arr):
        inputs.append(arr)
        return len(inputs) - 1

    # packed, zero-padded input stage buffer: (C_pad, Ptot_A)
    xt = jnp.transpose(x_nchw, (1, 0, 2, 3)).astype(jnp.float32)        # (C, N, H, W)
    xt = jnp.pad(xt, ((0, cin_pad - c_in), (0, 0), (1, 1), (1, 1)))
    x0 = xt.reshape(cin_pad, n * geo_a["Hp"] * geo_a["Wp"])
    x0 = jnp.pad(x0, ((0, 0), (0, geo_a["Ptot"] - x0.shape[1])))
    x0_i = add(x0)

    mask_cache, s_cache = {}, {}

    def mask_i(geo, stride):
        key = (geo["Hp"], geo["Wp"], stride)
        if key not in mask_cache:
            mask_cache[key] = add(jnp.asarray(_valid_mask(geo, stride)))
        return mask_cache[key]

    def s_i(gs, gd, stride):
        key = (gs["Hp"], gd["Hp"])
        if key not in s_cache:
            s_cache[key] = add(jnp.asarray(_repack_matrix(gs, gd, stride)))
        return s_cache[key]

    def add_bn(g, b):
        return (add(g.reshape(-1, 1).astype(jnp.float32)),
                add(b.reshape(-1, 1).astype(jnp.float32)))

    g1_i, b1_i = add_bn(params["bn1_g"], params["bn1_b"])
    plan = {
        "x0": x0_i,
        "stem": {"geo": geo_a,
                 "w": add(_flatten_conv_w(params["conv1_w"], cin_pad)),
                 "g": g1_i, "b": b1_i, "m1": mask_i(geo_a, 1)},
        "blocks": [],
    }

    blocks_flat = [bp for name in ("layer1", "layer2", "layer3") for bp in params[name]]
    cur = geo_a
    for i, bp in enumerate(blocks_flat):
        # In this CIFAR ResNet a projection shortcut appears exactly when stride == 2.
        stride = 2 if "sc_w" in bp else 1
        gs = cur
        gd = gs if stride == 1 else _geo(n, gs["H"] // stride, gs["W"] // stride)
        g1i, b1i = add_bn(bp["bn1_g"], bp["bn1_b"])
        w1i = add(_flatten_conv_w(bp["conv1_w"]))
        g2i, b2i = add_bn(bp["bn2_g"], bp["bn2_b"])
        w2i = add(_flatten_conv_w(bp["conv2_w"]))
        bplan = {"src_geo": gs, "dst_geo": gd, "stride": stride,
                 "w1": w1i, "g1": g1i, "b1": b1i,
                 "w2": w2i, "g2": g2i, "b2": b2i,
                 "m_src": mask_i(gs, stride), "m_dst": mask_i(gd, 1),
                 "last": i == len(blocks_flat) - 1,
                 "sc": None, "S": None}
        if "sc_w" in bp:
            gsci, bsci = add_bn(bp["sc_g"], bp["sc_b"])
            bplan["sc"] = (add(_flatten_conv_w(bp["sc_w"])), gsci, bsci)
            bplan["S"] = s_i(gs, gd, stride)
        plan["blocks"].append(bplan)
        cur = gd

    plan["pool"] = add(jnp.asarray(_pool_matrix(cur)))
    num_classes = params["fc_w"].shape[1]
    plan["fcw"] = add(jnp.transpose(params["fc_w"]).astype(jnp.float32))
    plan["fcb"] = add(params["fc_b"].reshape(-1, 1).astype(jnp.float32))

    out = pl.pallas_call(
        _make_kernel(plan),
        out_shape=jax.ShapeDtypeStruct((num_classes, n), jnp.float32),
        in_specs=[pl.BlockSpec(memory_space=pltpu.MemorySpace.VMEM)] * len(inputs),
        out_specs=pl.BlockSpec(memory_space=pltpu.MemorySpace.VMEM),
    )(*inputs)
    return jnp.transpose(out)                                       # (N, num_classes)


# ----------------------------- deterministic parameter init -----------------------------

def init_params(key, num_blocks=(1, 1, 1), num_classes=10, k=3):
    keys = iter(jax.random.split(key, 128))

    def kaiming(shape, fan_in):
        return jax.random.normal(next(keys), shape, jnp.float32) * jnp.sqrt(2.0 / fan_in)

    params = {
        "conv1_w": kaiming((k, k, 3, 16), 3 * k * k),
        "bn1_g": jnp.ones((16,), jnp.float32),
        "bn1_b": jnp.zeros((16,), jnp.float32),
    }
    in_planes = 16
    for li, (planes, stride0, nb) in enumerate(zip((16, 32, 64), (1, 2, 2), num_blocks), 1):
        blocks = []
        for s in [stride0] + [1] * (nb - 1):
            bp = {
                "conv1_w": kaiming((k, k, in_planes, planes), in_planes * k * k),
                "bn1_g": jnp.ones((planes,), jnp.float32),
                "bn1_b": jnp.zeros((planes,), jnp.float32),
                "conv2_w": kaiming((k, k, planes, planes), planes * k * k),
                "bn2_g": jnp.ones((planes,), jnp.float32),
                "bn2_b": jnp.zeros((planes,), jnp.float32),
            }
            if s != 1 or in_planes != planes:
                bp["sc_w"] = kaiming((1, 1, in_planes, planes), in_planes)
                bp["sc_g"] = jnp.ones((planes,), jnp.float32)
                bp["sc_b"] = jnp.zeros((planes,), jnp.float32)
            blocks.append(bp)
            in_planes = planes
        params[f"layer{li}"] = blocks
    params["fc_w"] = kaiming((64, num_classes), 64)      # stored transposed (in, out)
    bound = 1.0 / jnp.sqrt(64.0)
    params["fc_b"] = jax.random.uniform(next(keys), (num_classes,), jnp.float32, -bound, bound)
    return params


if __name__ == "__main__":
    key = jax.random.PRNGKey(0)
    pkey, xkey = jax.random.split(key)
    params = init_params(pkey, num_blocks=(1, 1, 1), num_classes=10, k=3)
    # PyTorch-style NCHW input: batch=2, channels=3 (RGB), spatial=16x16
    x = jax.random.normal(xkey, (2, 3, 16, 16), jnp.float32)
    fwd = jax.jit(resnet_forward)
    out = fwd(params, x)
    jax.block_until_ready(out)
    assert out.shape == (2, 10) and out.dtype == jnp.float32
    assert bool(jnp.all(jnp.isfinite(out)))
    print("KERNEL_OK")
</pallas_src>

<mosaic_0001>
module attributes {stable_mosaic.version = 11 : i64} {
  func.func @kernel(%arg0: memref<8x768xf32, #tpu.memory_space<vmem>>, %arg1: memref<16x1xf32, #tpu.memory_space<vmem>>, %arg2: memref<16x1xf32, #tpu.memory_space<vmem>>, %arg3: memref<16x72xbf16, #tpu.memory_space<vmem>>, %arg4: memref<1x648xf32, #tpu.memory_space<vmem>>, %arg5: memref<16x1xf32, #tpu.memory_space<vmem>>, %arg6: memref<16x1xf32, #tpu.memory_space<vmem>>, %arg7: memref<16x144xbf16, #tpu.memory_space<vmem>>, %arg8: memref<16x1xf32, #tpu.memory_space<vmem>>, %arg9: memref<16x1xf32, #tpu.memory_space<vmem>>, %arg10: memref<16x144xbf16, #tpu.memory_space<vmem>>, %arg11: memref<32x1xf32, #tpu.memory_space<vmem>>, %arg12: memref<32x1xf32, #tpu.memory_space<vmem>>, %arg13: memref<32x144xbf16, #tpu.memory_space<vmem>>, %arg14: memref<32x1xf32, #tpu.memory_space<vmem>>, %arg15: memref<32x1xf32, #tpu.memory_space<vmem>>, %arg16: memref<32x288xbf16, #tpu.memory_space<vmem>>, %arg17: memref<1x648xf32, #tpu.memory_space<vmem>>, %arg18: memref<1x200xf32, #tpu.memory_space<vmem>>, %arg19: memref<32x1xf32, #tpu.memory_space<vmem>>, %arg20: memref<32x1xf32, #tpu.memory_space<vmem>>, %arg21: memref<32x16xbf16, #tpu.memory_space<vmem>>, %arg22: memref<648x256xf32, #tpu.memory_space<vmem>>, %arg23: memref<64x1xf32, #tpu.memory_space<vmem>>, %arg24: memref<64x1xf32, #tpu.memory_space<vmem>>, %arg25: memref<64x288xbf16, #tpu.memory_space<vmem>>, %arg26: memref<64x1xf32, #tpu.memory_space<vmem>>, %arg27: memref<64x1xf32, #tpu.memory_space<vmem>>, %arg28: memref<64x576xbf16, #tpu.memory_space<vmem>>, %arg29: memref<1x200xf32, #tpu.memory_space<vmem>>, %arg30: memref<1x72xf32, #tpu.memory_space<vmem>>, %arg31: memref<64x1xf32, #tpu.memory_space<vmem>>, %arg32: memref<64x1xf32, #tpu.memory_space<vmem>>, %arg33: memref<64x32xbf16, #tpu.memory_space<vmem>>, %arg34: memref<200x128xf32, #tpu.memory_space<vmem>>, %arg35: memref<72x2xf32, #tpu.memory_space<vmem>>, %arg36: memref<10x64xf32, #tpu.memory_space<vmem>>, %arg37: memref<10x1xf32, #tpu.memory_space<vmem>>, %arg38: memref<10x2xf32, #tpu.memory_space<vmem>>) attributes {dimension_semantics = [], scalar_prefetch = 0 : i64, scratch_operands = 0 : i64, tpu.core_type = #tpu.core_type<tc>} {
    %c0 = arith.constant 0 : index
    %c0_0 = arith.constant 0 : index
    %0 = vector.load %arg0[%c0, %c0_0] : memref<8x768xf32, #tpu.memory_space<vmem>>, vector<8x768xf32>
    %1 = vector.extract_strided_slice %0 {offsets = [0, 0], sizes = [8, 648], strides = [1, 1]} : vector<8x768xf32> to vector<8x648xf32>
    %2 = vector.extract_strided_slice %0 {offsets = [0, 1], sizes = [8, 648], strides = [1, 1]} : vector<8x768xf32> to vector<8x648xf32>
    %3 = vector.extract_strided_slice %0 {offsets = [0, 2], sizes = [8, 648], strides = [1, 1]} : vector<8x768xf32> to vector<8x648xf32>
    %4 = vector.extract_strided_slice %0 {offsets = [0, 18], sizes = [8, 648], strides = [1, 1]} : vector<8x768xf32> to vector<8x648xf32>
    %5 = vector.extract_strided_slice %0 {offsets = [0, 19], sizes = [8, 648], strides = [1, 1]} : vector<8x768xf32> to vector<8x648xf32>
    %6 = vector.extract_strided_slice %0 {offsets = [0, 20], sizes = [8, 648], strides = [1, 1]} : vector<8x768xf32> to vector<8x648xf32>
    %7 = vector.extract_strided_slice %0 {offsets = [0, 36], sizes = [8, 648], strides = [1, 1]} : vector<8x768xf32> to vector<8x648xf32>
    %8 = vector.extract_strided_slice %0 {offsets = [0, 37], sizes = [8, 648], strides = [1, 1]} : vector<8x768xf32> to vector<8x648xf32>
    %9 = vector.extract_strided_slice %0 {offsets = [0, 38], sizes = [8, 648], strides = [1, 1]} : vector<8x768xf32> to vector<8x648xf32>
    %10 = tpu.concatenate %1, %2, %3, %4, %5, %6, %7, %8, %9 in 0 : vector<8x648xf32>, vector<8x648xf32>, vector<8x648xf32>, vector<8x648xf32>, vector<8x648xf32>, vector<8x648xf32>, vector<8x648xf32>, vector<8x648xf32>, vector<8x648xf32> -> vector<72x648xf32>
    %c0_1 = arith.constant 0 : index
    %c0_2 = arith.constant 0 : index
    %11 = vector.load %arg3[%c0_1, %c0_2] : memref<16x72xbf16, #tpu.memory_space<vmem>>, vector<16x72xbf16>
    %12 = arith.truncf %10 : vector<72x648xf32> to vector<72x648xbf16>
    %cst = arith.constant dense<0.000000e+00> : vector<16x648xf32>
    %13 = tpu.matmul %11, %12, %cst {dimension_numbers = #tpu.dot_dimension_numbers<[1], [0], [0], [1], [0, 0, 1, 1], [], []>} : vector<16x72xbf16>, vector<72x648xbf16>, vector<16x648xf32> -> vector<16x648xf32>
    %c0_3 = arith.constant 0 : index
    %c0_4 = arith.constant 0 : index
    %14 = vector.load %arg4[%c0_3, %c0_4] : memref<1x648xf32, #tpu.memory_space<vmem>>, vector<1x648xf32>
    %15 = vector.broadcast %14 : vector<1x648xf32> to vector<16x648xf32>
    %16 = arith.mulf %13, %15 : vector<16x648xf32>
    %cst_5 = arith.constant dense<0.000000e+00> : vector<16xf32>
    %17 = vector.multi_reduction <add>, %16, %cst_5 [1] : vector<16x648xf32> to vector<16xf32>
    %18 = vector.shape_cast %17 : vector<16xf32> to vector<16x1xf32>
    %cst_6 = arith.constant 0.001953125 : f32
    %19 = vector.broadcast %cst_6 : f32 to vector<16x1xf32>
    %20 = arith.mulf %18, %19 : vector<16x1xf32>
    %21 = arith.mulf %13, %13 : vector<16x648xf32>
    %22 = vector.broadcast %14 : vector<1x648xf32> to vector<16x648xf32>
    %23 = arith.mulf %21, %22 : vector<16x648xf32>
    %cst_7 = arith.constant dense<0.000000e+00> : vector<16xf32>
    %24 = vector.multi_reduction <add>, %23, %cst_7 [1] : vector<16x648xf32> to vector<16xf32>
    %25 = vector.shape_cast %24 : vector<16xf32> to vector<16x1xf32>
    %cst_8 = arith.constant 0.001953125 : f32
    %26 = vector.broadcast %cst_8 : f32 to vector<16x1xf32>
    %27 = arith.mulf %25, %26 : vector<16x1xf32>
    %28 = arith.mulf %20, %20 : vector<16x1xf32>
    %29 = arith.subf %27, %28 : vector<16x1xf32>
    %c0_9 = arith.constant 0 : index
    %c0_10 = arith.constant 0 : index
    %30 = vector.load %arg1[%c0_9, %c0_10] : memref<16x1xf32, #tpu.memory_space<vmem>>, vector<16x1xf32>
    %cst_11 = arith.constant 9.99999974E-6 : f32
    %31 = vector.broadcast %cst_11 : f32 to vector<16x1xf32>
    %32 = arith.addf %29, %31 : vector<16x1xf32>
    %33 = math.rsqrt %32 : vector<16x1xf32>
    %34 = arith.mulf %30, %33 : vector<16x1xf32>
    %35 = vector.broadcast %34 : vector<16x1xf32> to vector<16x648xf32>
    %36 = arith.mulf %13, %35 : vector<16x648xf32>
    %c0_12 = arith.constant 0 : index
    %c0_13 = arith.constant 0 : index
    %37 = vector.load %arg2[%c0_12, %c0_13] : memref<16x1xf32, #tpu.memory_space<vmem>>, vector<16x1xf32>
    %38 = arith.mulf %20, %34 : vector<16x1xf32>
    %39 = arith.subf %37, %38 : vector<16x1xf32>
    %40 = vector.broadcast %39 : vector<16x1xf32> to vector<16x648xf32>
    %41 = arith.addf %36, %40 : vector<16x648xf32>
    %cst_14 = arith.constant 0.000000e+00 : f32
    %42 = vector.broadcast %cst_14 : f32 to vector<16x648xf32>
    %43 = arith.maximumf %41, %42 : vector<16x648xf32>
    %c0_15 = arith.constant 0 : index
    %c0_16 = arith.constant 0 : index
    %44 = vector.load %arg4[%c0_15, %c0_16] : memref<1x648xf32, #tpu.memory_space<vmem>>, vector<1x648xf32>
    %45 = vector.broadcast %44 : vector<1x648xf32> to vector<16x648xf32>
    %46 = arith.mulf %43, %45 : vector<16x648xf32>
    %cst_17 = arith.constant 0.000000e+00 : f32
    %47 = vector.broadcast %cst_17 : f32 to vector<16x19xf32>
    %cst_18 = arith.constant 0.000000e+00 : f32
    %48 = vector.broadcast %cst_18 : f32 to vector<16x101xf32>
    %49 = tpu.concatenate %47, %46, %48 in 1 : vector<16x19xf32>, vector<16x648xf32>, vector<16x101xf32> -> vector<16x768xf32>
    %50 = vector.extract_strided_slice %49 {offsets = [0, 0], sizes = [16, 648], strides = [1, 1]} : vector<16x768xf32> to vector<16x648xf32>
    %51 = vector.extract_strided_slice %49 {offsets = [0, 1], sizes = [16, 648], strides = [1, 1]} : vector<16x768xf32> to vector<16x648xf32>
    %52 = vector.extract_strided_slice %49 {offsets = [0, 2], sizes = [16, 648], strides = [1, 1]} : vector<16x768xf32> to vector<16x648xf32>
    %53 = vector.extract_strided_slice %49 {offsets = [0, 18], sizes = [16, 648], strides = [1, 1]} : vector<16x768xf32> to vector<16x648xf32>
    %54 = vector.extract_strided_slice %49 {offsets = [0, 19], sizes = [16, 648], strides = [1, 1]} : vector<16x768xf32> to vector<16x648xf32>
    %55 = vector.extract_strided_slice %49 {offsets = [0, 20], sizes = [16, 648], strides = [1, 1]} : vector<16x768xf32> to vector<16x648xf32>
    %56 = vector.extract_strided_slice %49 {offsets = [0, 36], sizes = [16, 648], strides = [1, 1]} : vector<16x768xf32> to vector<16x648xf32>
    %57 = vector.extract_strided_slice %49 {offsets = [0, 37], sizes = [16, 648], strides = [1, 1]} : vector<16x768xf32> to vector<16x648xf32>
    %58 = vector.extract_strided_slice %49 {offsets = [0, 38], sizes = [16, 648], strides = [1, 1]} : vector<16x768xf32> to vector<16x648xf32>
    %59 = tpu.concatenate %50, %51, %52, %53, %54, %55, %56, %57, %58 in 0 : vector<16x648xf32>, vector<16x648xf32>, vector<16x648xf32>, vector<16x648xf32>, vector<16x648xf32>, vector<16x648xf32>, vector<16x648xf32>, vector<16x648xf32>, vector<16x648xf32> -> vector<144x648xf32>
    %c0_19 = arith.constant 0 : index
    %c0_20 = arith.constant 0 : index
    %60 = vector.load %arg7[%c0_19, %c0_20] : memref<16x144xbf16, #tpu.memory_space<vmem>>, vector<16x144xbf16>
    %61 = arith.truncf %59 : vector<144x648xf32> to vector<144x648xbf16>
    %cst_21 = arith.constant dense<0.000000e+00> : vector<16x648xf32>
    %62 = tpu.matmul %60, %61, %cst_21 {dimension_numbers = #tpu.dot_dimension_numbers<[1], [0], [0], [1], [0, 0, 1, 1], [], []>} : vector<16x144xbf16>, vector<144x648xbf16>, vector<16x648xf32> -> vector<16x648xf32>
    %c0_22 = arith.constant 0 : index
    %c0_23 = arith.constant 0 : index
    %63 = vector.load %arg4[%c0_22, %c0_23] : memref<1x648xf32, #tpu.memory_space<vmem>>, vector<1x648xf32>
    %64 = vector.broadcast %63 : vector<1x648xf32> to vector<16x648xf32>
    %65 = arith.mulf %62, %64 : vector<16x648xf32>
    %cst_24 = arith.constant dense<0.000000e+00> : vector<16xf32>
    %66 = vector.multi_reduction <add>, %65, %cst_24 [1] : vector<16x648xf32> to vector<16xf32>
    %67 = vector.shape_cast %66 : vector<16xf32> to vector<16x1xf32>
    %cst_25 = arith.constant 0.001953125 : f32
    %68 = vector.broadcast %cst_25 : f32 to vector<16x1xf32>
    %69 = arith.mulf %67, %68 : vector<16x1xf32>
    %70 = arith.mulf %62, %62 : vector<16x648xf32>
    %71 = vector.broadcast %63 : vector<1x648xf32> to vector<16x648xf32>
    %72 = arith.mulf %70, %71 : vector<16x648xf32>
    %cst_26 = arith.constant dense<0.000000e+00> : vector<16xf32>
    %73 = vector.multi_reduction <add>, %72, %cst_26 [1] : vector<16x648xf32> to vector<16xf32>
    %74 = vector.shape_cast %73 : vector<16xf32> to vector<16x1xf32>
    %cst_27 = arith.constant 0.001953125 : f32
    %75 = vector.broadcast %cst_27 : f32 to vector<16x1xf32>
    %76 = arith.mulf %74, %75 : vector<16x1xf32>
    %77 = arith.mulf %69, %69 : vector<16x1xf32>
    %78 = arith.subf %76, %77 : vector<16x1xf32>
    %c0_28 = arith.constant 0 : index
    %c0_29 = arith.constant 0 : index
    %79 = vector.load %arg5[%c0_28, %c0_29] : memref<16x1xf32, #tpu.memory_space<vmem>>, vector<16x1xf32>
    %cst_30 = arith.constant 9.99999974E-6 : f32
    %80 = vector.broadcast %cst_30 : f32 to vector<16x1xf32>
    %81 = arith.addf %78, %80 : vector<16x1xf32>
    %82 = math.rsqrt %81 : vector<16x1xf32>
    %83 = arith.mulf %79, %82 : vector<16x1xf32>
    %84 = vector.broadcast %83 : vector<16x1xf32> to vector<16x648xf32>
    %85 = arith.mulf %62, %84 : vector<16x648xf32>
    %c0_31 = arith.constant 0 : index
    %c0_32 = arith.constant 0 : index
    %86 = vector.load %arg6[%c0_31, %c0_32] : memref<16x1xf32, #tpu.memory_space<vmem>>, vector<16x1xf32>
    %87 = arith.mulf %69, %83 : vector<16x1xf32>
    %88 = arith.subf %86, %87 : vector<16x1xf32>
    %89 = vector.broadcast %88 : vector<16x1xf32> to vector<16x648xf32>
    %90 = arith.addf %85, %89 : vector<16x648xf32>
    %cst_33 = arith.constant 0.000000e+00 : f32
    %91 = vector.broadcast %cst_33 : f32 to vector<16x648xf32>
    %92 = arith.maximumf %90, %91 : vector<16x648xf32>
    %c0_34 = arith.constant 0 : index
    %c0_35 = arith.constant 0 : index
    %93 = vector.load %arg4[%c0_34, %c0_35] : memref<1x648xf32, #tpu.memory_space<vmem>>, vector<1x648xf32>
    %94 = vector.broadcast %93 : vector<1x648xf32> to vector<16x648xf32>
    %95 = arith.mulf %92, %94 : vector<16x648xf32>
    %cst_36 = arith.constant 0.000000e+00 : f32
    %96 = vector.broadcast %cst_36 : f32 to vector<16x19xf32>
    %cst_37 = arith.constant 0.000000e+00 : f32
    %97 = vector.broadcast %cst_37 : f32 to vector<16x101xf32>
    %98 = tpu.concatenate %96, %95, %97 in 1 : vector<16x19xf32>, vector<16x648xf32>, vector<16x101xf32> -> vector<16x768xf32>
    %99 = vector.extract_strided_slice %98 {offsets = [0, 0], sizes = [16, 648], strides = [1, 1]} : vector<16x768xf32> to vector<16x648xf32>
    %100 = vector.extract_strided_slice %98 {offsets = [0, 1], sizes = [16, 648], strides = [1, 1]} : vector<16x768xf32> to vector<16x648xf32>
    %101 = vector.extract_strided_slice %98 {offsets = [0, 2], sizes = [16, 648], strides = [1, 1]} : vector<16x768xf32> to vector<16x648xf32>
    %102 = vector.extract_strided_slice %98 {offsets = [0, 18], sizes = [16, 648], strides = [1, 1]} : vector<16x768xf32> to vector<16x648xf32>
    %103 = vector.extract_strided_slice %98 {offsets = [0, 19], sizes = [16, 648], strides = [1, 1]} : vector<16x768xf32> to vector<16x648xf32>
    %104 = vector.extract_strided_slice %98 {offsets = [0, 20], sizes = [16, 648], strides = [1, 1]} : vector<16x768xf32> to vector<16x648xf32>
    %105 = vector.extract_strided_slice %98 {offsets = [0, 36], sizes = [16, 648], strides = [1, 1]} : vector<16x768xf32> to vector<16x648xf32>
    %106 = vector.extract_strided_slice %98 {offsets = [0, 37], sizes = [16, 648], strides = [1, 1]} : vector<16x768xf32> to vector<16x648xf32>
    %107 = vector.extract_strided_slice %98 {offsets = [0, 38], sizes = [16, 648], strides = [1, 1]} : vector<16x768xf32> to vector<16x648xf32>
    %108 = tpu.concatenate %99, %100, %101, %102, %103, %104, %105, %106, %107 in 0 : vector<16x648xf32>, vector<16x648xf32>, vector<16x648xf32>, vector<16x648xf32>, vector<16x648xf32>, vector<16x648xf32>, vector<16x648xf32>, vector<16x648xf32>, vector<16x648xf32> -> vector<144x648xf32>
    %c0_38 = arith.constant 0 : index
    %c0_39 = arith.constant 0 : index
    %109 = vector.load %arg10[%c0_38, %c0_39] : memref<16x144xbf16, #tpu.memory_space<vmem>>, vector<16x144xbf16>
    %110 = arith.truncf %108 : vector<144x648xf32> to vector<144x648xbf16>
    %cst_40 = arith.constant dense<0.000000e+00> : vector<16x648xf32>
    %111 = tpu.matmul %109, %110, %cst_40 {dimension_numbers = #tpu.dot_dimension_numbers<[1], [0], [0], [1], [0, 0, 1, 1], [], []>} : vector<16x144xbf16>, vector<144x648xbf16>, vector<16x648xf32> -> vector<16x648xf32>
    %c0_41 = arith.constant 0 : index
    %c0_42 = arith.constant 0 : index
    %112 = vector.load %arg4[%c0_41, %c0_42] : memref<1x648xf32, #tpu.memory_space<vmem>>, vector<1x648xf32>
    %113 = vector.broadcast %112 : vector<1x648xf32> to vector<16x648xf32>
    %114 = arith.mulf %111, %113 : vector<16x648xf32>
    %cst_43 = arith.constant dense<0.000000e+00> : vector<16xf32>
    %115 = vector.multi_reduction <add>, %114, %cst_43 [1] : vector<16x648xf32> to vector<16xf32>
    %116 = vector.shape_cast %115 : vector<16xf32> to vector<16x1xf32>
    %cst_44 = arith.constant 0.001953125 : f32
    %117 = vector.broadcast %cst_44 : f32 to vector<16x1xf32>
    %118 = arith.mulf %116, %117 : vector<16x1xf32>
    %119 = arith.mulf %111, %111 : vector<16x648xf32>
    %120 = vector.broadcast %112 : vector<1x648xf32> to vector<16x648xf32>
    %121 = arith.mulf %119, %120 : vector<16x648xf32>
    %cst_45 = arith.constant dense<0.000000e+00> : vector<16xf32>
    %122 = vector.multi_reduction <add>, %121, %cst_45 [1] : vector<16x648xf32> to vector<16xf32>
    %123 = vector.shape_cast %122 : vector<16xf32> to vector<16x1xf32>
    %cst_46 = arith.constant 0.001953125 : f32
    %124 = vector.broadcast %cst_46 : f32 to vector<16x1xf32>
    %125 = arith.mulf %123, %124 : vector<16x1xf32>
    %126 = arith.mulf %118, %118 : vector<16x1xf32>
    %127 = arith.subf %125, %126 : vector<16x1xf32>
    %c0_47 = arith.constant 0 : index
    %c0_48 = arith.constant 0 : index
    %128 = vector.load %arg8[%c0_47, %c0_48] : memref<16x1xf32, #tpu.memory_space<vmem>>, vector<16x1xf32>
    %cst_49 = arith.constant 9.99999974E-6 : f32
    %129 = vector.broadcast %cst_49 : f32 to vector<16x1xf32>
    %130 = arith.addf %127, %129 : vector<16x1xf32>
    %131 = math.rsqrt %130 : vector<16x1xf32>
    %132 = arith.mulf %128, %131 : vector<16x1xf32>
    %133 = vector.broadcast %132 : vector<16x1xf32> to vector<16x648xf32>
    %134 = arith.mulf %111, %133 : vector<16x648xf32>
    %c0_50 = arith.constant 0 : index
    %c0_51 = arith.constant 0 : index
    %135 = vector.load %arg9[%c0_50, %c0_51] : memref<16x1xf32, #tpu.memory_space<vmem>>, vector<16x1xf32>
    %136 = arith.mulf %118, %132 : vector<16x1xf32>
    %137 = arith.subf %135, %136 : vector<16x1xf32>
    %138 = vector.broadcast %137 : vector<16x1xf32> to vector<16x648xf32>
    %139 = arith.addf %134, %138 : vector<16x648xf32>
    %140 = vector.extract_strided_slice %49 {offsets = [0, 19], sizes = [16, 648], strides = [1, 1]} : vector<16x768xf32> to vector<16x648xf32>
    %141 = arith.addf %139, %140 : vector<16x648xf32>
    %cst_52 = arith.constant 0.000000e+00 : f32
    %142 = vector.broadcast %cst_52 : f32 to vector<16x648xf32>
    %143 = arith.maximumf %141, %142 : vector<16x648xf32>
    %c0_53 = arith.constant 0 : index
    %c0_54 = arith.constant 0 : index
    %144 = vector.load %arg4[%c0_53, %c0_54] : memref<1x648xf32, #tpu.memory_space<vmem>>, vector<1x648xf32>
    %145 = vector.broadcast %144 : vector<1x648xf32> to vector<16x648xf32>
    %146 = arith.mulf %143, %145 : vector<16x648xf32>
    %cst_55 = arith.constant 0.000000e+00 : f32
    %147 = vector.broadcast %cst_55 : f32 to vector<16x19xf32>
    %cst_56 = arith.constant 0.000000e+00 : f32
    %148 = vector.broadcast %cst_56 : f32 to vector<16x101xf32>
    %149 = tpu.concatenate %147, %146, %148 in 1 : vector<16x19xf32>, vector<16x648xf32>, vector<16x101xf32> -> vector<16x768xf32>
    %150 = vector.extract_strided_slice %149 {offsets = [0, 0], sizes = [16, 648], strides = [1, 1]} : vector<16x768xf32> to vector<16x648xf32>
    %151 = vector.extract_strided_slice %149 {offsets = [0, 1], sizes = [16, 648], strides = [1, 1]} : vector<16x768xf32> to vector<16x648xf32>
    %152 = vector.extract_strided_slice %149 {offsets = [0, 2], sizes = [16, 648], strides = [1, 1]} : vector<16x768xf32> to vector<16x648xf32>
    %153 = vector.extract_strided_slice %149 {offsets = [0, 18], sizes = [16, 648], strides = [1, 1]} : vector<16x768xf32> to vector<16x648xf32>
    %154 = vector.extract_strided_slice %149 {offsets = [0, 19], sizes = [16, 648], strides = [1, 1]} : vector<16x768xf32> to vector<16x648xf32>
    %155 = vector.extract_strided_slice %149 {offsets = [0, 20], sizes = [16, 648], strides = [1, 1]} : vector<16x768xf32> to vector<16x648xf32>
    %156 = vector.extract_strided_slice %149 {offsets = [0, 36], sizes = [16, 648], strides = [1, 1]} : vector<16x768xf32> to vector<16x648xf32>
    %157 = vector.extract_strided_slice %149 {offsets = [0, 37], sizes = [16, 648], strides = [1, 1]} : vector<16x768xf32> to vector<16x648xf32>
    %158 = vector.extract_strided_slice %149 {offsets = [0, 38], sizes = [16, 648], strides = [1, 1]} : vector<16x768xf32> to vector<16x648xf32>
    %159 = tpu.concatenate %150, %151, %152, %153, %154, %155, %156, %157, %158 in 0 : vector<16x648xf32>, vector<16x648xf32>, vector<16x648xf32>, vector<16x648xf32>, vector<16x648xf32>, vector<16x648xf32>, vector<16x648xf32>, vector<16x648xf32>, vector<16x648xf32> -> vector<144x648xf32>
    %c0_57 = arith.constant 0 : index
    %c0_58 = arith.constant 0 : index
    %160 = vector.load %arg13[%c0_57, %c0_58] : memref<32x144xbf16, #tpu.memory_space<vmem>>, vector<32x144xbf16>
    %161 = arith.truncf %159 : vector<144x648xf32> to vector<144x648xbf16>
    %cst_59 = arith.constant dense<0.000000e+00> : vector<32x648xf32>
    %162 = tpu.matmul %160, %161, %cst_59 {dimension_numbers = #tpu.dot_dimension_numbers<[1], [0], [0], [1], [0, 0, 1, 1], [], []>} : vector<32x144xbf16>, vector<144x648xbf16>, vector<32x648xf32> -> vector<32x648xf32>
    %c0_60 = arith.constant 0 : index
    %c0_61 = arith.constant 0 : index
    %163 = vector.load %arg17[%c0_60, %c0_61] : memref<1x648xf32, #tpu.memory_space<vmem>>, vector<1x648xf32>
    %164 = vector.broadcast %163 : vector<1x648xf32> to vector<32x648xf32>
    %165 = arith.mulf %162, %164 : vector<32x648xf32>
    %cst_62 = arith.constant dense<0.000000e+00> : vector<32xf32>
    %166 = vector.multi_reduction <add>, %165, %cst_62 [1] : vector<32x648xf32> to vector<32xf32>
    %167 = vector.shape_cast %166 : vector<32xf32> to vector<32x1xf32>
    %cst_63 = arith.constant 7.812500e-03 : f32
    %168 = vector.broadcast %cst_63 : f32 to vector<32x1xf32>
    %169 = arith.mulf %167, %168 : vector<32x1xf32>
    %170 = arith.mulf %162, %162 : vector<32x648xf32>
    %171 = vector.broadcast %163 : vector<1x648xf32> to vector<32x648xf32>
    %172 = arith.mulf %170, %171 : vector<32x648xf32>
    %cst_64 = arith.constant dense<0.000000e+00> : vector<32xf32>
    %173 = vector.multi_reduction <add>, %172, %cst_64 [1] : vector<32x648xf32> to vector<32xf32>
    %174 = vector.shape_cast %173 : vector<32xf32> to vector<32x1xf32>
    %cst_65 = arith.constant 7.812500e-03 : f32
    %175 = vector.broadcast %cst_65 : f32 to vector<32x1xf32>
    %176 = arith.mulf %174, %175 : vector<32x1xf32>
    %177 = arith.mulf %169, %169 : vector<32x1xf32>
    %178 = arith.subf %176, %177 : vector<32x1xf32>
    %c0_66 = arith.constant 0 : index
    %c0_67 = arith.constant 0 : index
    %179 = vector.load %arg11[%c0_66, %c0_67] : memref<32x1xf32, #tpu.memory_space<vmem>>, vector<32x1xf32>
    %cst_68 = arith.constant 9.99999974E-6 : f32
    %180 = vector.broadcast %cst_68 : f32 to vector<32x1xf32>
    %181 = arith.addf %178, %180 : vector<32x1xf32>
    %182 = math.rsqrt %181 : vector<32x1xf32>
    %183 = arith.mulf %179, %182 : vector<32x1xf32>
    %184 = vector.broadcast %183 : vector<32x1xf32> to vector<32x648xf32>
    %185 = arith.mulf %162, %184 : vector<32x648xf32>
    %c0_69 = arith.constant 0 : index
    %c0_70 = arith.constant 0 : index
    %186 = vector.load %arg12[%c0_69, %c0_70] : memref<32x1xf32, #tpu.memory_space<vmem>>, vector<32x1xf32>
    %187 = arith.mulf %169, %183 : vector<32x1xf32>
    %188 = arith.subf %186, %187 : vector<32x1xf32>
    %189 = vector.broadcast %188 : vector<32x1xf32> to vector<32x648xf32>
    %190 = arith.addf %185, %189 : vector<32x648xf32>
    %cst_71 = arith.constant 0.000000e+00 : f32
    %191 = vector.broadcast %cst_71 : f32 to vector<32x648xf32>
    %192 = arith.maximumf %190, %191 : vector<32x648xf32>
    %c0_72 = arith.constant 0 : index
    %c0_73 = arith.constant 0 : index
    %193 = vector.load %arg22[%c0_72, %c0_73] : memref<648x256xf32, #tpu.memory_space<vmem>>, vector<648x256xf32>
    %cst_74 = arith.constant dense<0.000000e+00> : vector<32x256xf32>
    %194 = tpu.matmul %192, %193, %cst_74 {dimension_numbers = #tpu.dot_dimension_numbers<[1], [0], [0], [1], [0, 0, 1, 1], [], []>} : vector<32x648xf32>, vector<648x256xf32>, vector<32x256xf32> -> vector<32x256xf32>
    %195 = vector.extract_strided_slice %149 {offsets = [0, 19], sizes = [16, 648], strides = [1, 1]} : vector<16x768xf32> to vector<16x648xf32>
    %c0_75 = arith.constant 0 : index
    %c0_76 = arith.constant 0 : index
    %196 = vector.load %arg21[%c0_75, %c0_76] : memref<32x16xbf16, #tpu.memory_space<vmem>>, vector<32x16xbf16>
    %197 = arith.truncf %195 : vector<16x648xf32> to vector<16x648xbf16>
    %cst_77 = arith.constant dense<0.000000e+00> : vector<32x648xf32>
    %198 = tpu.matmul %196, %197, %cst_77 {dimension_numbers = #tpu.dot_dimension_numbers<[1], [0], [0], [1], [0, 0, 1, 1], [], []>} : vector<32x16xbf16>, vector<16x648xbf16>, vector<32x648xf32> -> vector<32x648xf32>
    %c0_78 = arith.constant 0 : index
    %c0_79 = arith.constant 0 : index
    %199 = vector.load %arg17[%c0_78, %c0_79] : memref<1x648xf32, #tpu.memory_space<vmem>>, vector<1x648xf32>
    %200 = vector.broadcast %199 : vector<1x648xf32> to vector<32x648xf32>
    %201 = arith.mulf %198, %200 : vector<32x648xf32>
    %cst_80 = arith.constant dense<0.000000e+00> : vector<32xf32>
    %202 = vector.multi_reduction <add>, %201, %cst_80 [1] : vector<32x648xf32> to vector<32xf32>
    %203 = vector.shape_cast %202 : vector<32xf32> to vector<32x1xf32>
    %cst_81 = arith.constant 7.812500e-03 : f32
    %204 = vector.broadcast %cst_81 : f32 to vector<32x1xf32>
    %205 = arith.mulf %203, %204 : vector<32x1xf32>
    %206 = arith.mulf %198, %198 : vector<32x648xf32>
    %207 = vector.broadcast %199 : vector<1x648xf32> to vector<32x648xf32>
    %208 = arith.mulf %206, %207 : vector<32x648xf32>
    %cst_82 = arith.constant dense<0.000000e+00> : vector<32xf32>
    %209 = vector.multi_reduction <add>, %208, %cst_82 [1] : vector<32x648xf32> to vector<32xf32>
    %210 = vector.shape_cast %209 : vector<32xf32> to vector<32x1xf32>
    %cst_83 = arith.constant 7.812500e-03 : f32
    %211 = vector.broadcast %cst_83 : f32 to vector<32x1xf32>
    %212 = arith.mulf %210, %211 : vector<32x1xf32>
    %213 = arith.mulf %205, %205 : vector<32x1xf32>
    %214 = arith.subf %212, %213 : vector<32x1xf32>
    %c0_84 = arith.constant 0 : index
    %c0_85 = arith.constant 0 : index
    %215 = vector.load %arg19[%c0_84, %c0_85] : memref<32x1xf32, #tpu.memory_space<vmem>>, vector<32x1xf32>
    %cst_86 = arith.constant 9.99999974E-6 : f32
    %216 = vector.broadcast %cst_86 : f32 to vector<32x1xf32>
    %217 = arith.addf %214, %216 : vector<32x1xf32>
    %218 = math.rsqrt %217 : vector<32x1xf32>
    %219 = arith.mulf %215, %218 : vector<32x1xf32>
    %220 = vector.broadcast %219 : vector<32x1xf32> to vector<32x648xf32>
    %221 = arith.mulf %198, %220 : vector<32x648xf32>
    %c0_87 = arith.constant 0 : index
    %c0_88 = arith.constant 0 : index
    %222 = vector.load %arg20[%c0_87, %c0_88] : memref<32x1xf32, #tpu.memory_space<vmem>>, vector<32x1xf32>
    %223 = arith.mulf %205, %219 : vector<32x1xf32>
    %224 = arith.subf %222, %223 : vector<32x1xf32>
    %225 = vector.broadcast %224 : vector<32x1xf32> to vector<32x648xf32>
    %226 = arith.addf %221, %225 : vector<32x648xf32>
    %c0_89 = arith.constant 0 : index
    %c0_90 = arith.constant 0 : index
    %227 = vector.load %arg22[%c0_89, %c0_90] : memref<648x256xf32, #tpu.memory_space<vmem>>, vector<648x256xf32>
    %cst_91 = arith.constant dense<0.000000e+00> : vector<32x256xf32>
    %228 = tpu.matmul %226, %227, %cst_91 {dimension_numbers = #tpu.dot_dimension_numbers<[1], [0], [0], [1], [0, 0, 1, 1], [], []>} : vector<32x648xf32>, vector<648x256xf32>, vector<32x256xf32> -> vector<32x256xf32>
    %229 = vector.extract_strided_slice %194 {offsets = [0, 0], sizes = [32, 200], strides = [1, 1]} : vector<32x256xf32> to vector<32x200xf32>
    %230 = vector.extract_strided_slice %194 {offsets = [0, 1], sizes = [32, 200], strides = [1, 1]} : vector<32x256xf32> to vector<32x200xf32>
    %231 = vector.extract_strided_slice %194 {offsets = [0, 2], sizes = [32, 200], strides = [1, 1]} : vector<32x256xf32> to vector<32x200xf32>
    %232 = vector.extract_strided_slice %194 {offsets = [0, 10], sizes = [32, 200], strides = [1, 1]} : vector<32x256xf32> to vector<32x200xf32>
    %233 = vector.extract_strided_slice %194 {offsets = [0, 11], sizes = [32, 200], strides = [1, 1]} : vector<32x256xf32> to vector<32x200xf32>
    %234 = vector.extract_strided_slice %194 {offsets = [0, 12], sizes = [32, 200], strides = [1, 1]} : vector<32x256xf32> to vector<32x200xf32>
    %235 = vector.extract_strided_slice %194 {offsets = [0, 20], sizes = [32, 200], strides = [1, 1]} : vector<32x256xf32> to vector<32x200xf32>
    %236 = vector.extract_strided_slice %194 {offsets = [0, 21], sizes = [32, 200], strides = [1, 1]} : vector<32x256xf32> to vector<32x200xf32>
    %237 = vector.extract_strided_slice %194 {offsets = [0, 22], sizes = [32, 200], strides = [1, 1]} : vector<32x256xf32> to vector<32x200xf32>
    %238 = tpu.concatenate %229, %230, %231, %232, %233, %234, %235, %236, %237 in 0 : vector<32x200xf32>, vector<32x200xf32>, vector<32x200xf32>, vector<32x200xf32>, vector<32x200xf32>, vector<32x200xf32>, vector<32x200xf32>, vector<32x200xf32>, vector<32x200xf32> -> vector<288x200xf32>
    %c0_92 = arith.constant 0 : index
    %c0_93 = arith.constant 0 : index
    %239 = vector.load %arg16[%c0_92, %c0_93] : memref<32x288xbf16, #tpu.memory_space<vmem>>, vector<32x288xbf16>
    %240 = arith.truncf %238 : vector<288x200xf32> to vector<288x200xbf16>
    %cst_94 = arith.constant dense<0.000000e+00> : vector<32x200xf32>
    %241 = tpu.matmul %239, %240, %cst_94 {dimension_numbers = #tpu.dot_dimension_numbers<[1], [0], [0], [1], [0, 0, 1, 1], [], []>} : vector<32x288xbf16>, vector<288x200xbf16>, vector<32x200xf32> -> vector<32x200xf32>
    %c0_95 = arith.constant 0 : index
    %c0_96 = arith.constant 0 : index
    %242 = vector.load %arg18[%c0_95, %c0_96] : memref<1x200xf32, #tpu.memory_space<vmem>>, vector<1x200xf32>
    %243 = vector.broadcast %242 : vector<1x200xf32> to vector<32x200xf32>
    %244 = arith.mulf %241, %243 : vector<32x200xf32>
    %cst_97 = arith.constant dense<0.000000e+00> : vector<32xf32>
    %245 = vector.multi_reduction <add>, %244, %cst_97 [1] : vector<32x200xf32> to vector<32xf32>
    %246 = vector.shape_cast %245 : vector<32xf32> to vector<32x1xf32>
    %cst_98 = arith.constant 7.812500e-03 : f32
    %247 = vector.broadcast %cst_98 : f32 to vector<32x1xf32>
    %248 = arith.mulf %246, %247 : vector<32x1xf32>
    %249 = arith.mulf %241, %241 : vector<32x200xf32>
    %250 = vector.broadcast %242 : vector<1x200xf32> to vector<32x200xf32>
    %251 = arith.mulf %249, %250 : vector<32x200xf32>
    %cst_99 = arith.constant dense<0.000000e+00> : vector<32xf32>
    %252 = vector.multi_reduction <add>, %251, %cst_99 [1] : vector<32x200xf32> to vector<32xf32>
    %253 = vector.shape_cast %252 : vector<32xf32> to vector<32x1xf32>
    %cst_100 = arith.constant 7.812500e-03 : f32
    %254 = vector.broadcast %cst_100 : f32 to vector<32x1xf32>
    %255 = arith.mulf %253, %254 : vector<32x1xf32>
    %256 = arith.mulf %248, %248 : vector<32x1xf32>
    %257 = arith.subf %255, %256 : vector<32x1xf32>
    %c0_101 = arith.constant 0 : index
    %c0_102 = arith.constant 0 : index
    %258 = vector.load %arg14[%c0_101, %c0_102] : memref<32x1xf32, #tpu.memory_space<vmem>>, vector<32x1xf32>
    %cst_103 = arith.constant 9.99999974E-6 : f32
    %259 = vector.broadcast %cst_103 : f32 to vector<32x1xf32>
    %260 = arith.addf %257, %259 : vector<32x1xf32>
    %261 = math.rsqrt %260 : vector<32x1xf32>
    %262 = arith.mulf %258, %261 : vector<32x1xf32>
    %263 = vector.broadcast %262 : vector<32x1xf32> to vector<32x200xf32>
    %264 = arith.mulf %241, %263 : vector<32x200xf32>
    %c0_104 = arith.constant 0 : index
    %c0_105 = arith.constant 0 : index
    %265 = vector.load %arg15[%c0_104, %c0_105] : memref<32x1xf32, #tpu.memory_space<vmem>>, vector<32x1xf32>
    %266 = arith.mulf %248, %262 : vector<32x1xf32>
    %267 = arith.subf %265, %266 : vector<32x1xf32>
    %268 = vector.broadcast %267 : vector<32x1xf32> to vector<32x200xf32>
    %269 = arith.addf %264, %268 : vector<32x200xf32>
    %270 = vector.extract_strided_slice %228 {offsets = [0, 11], sizes = [32, 200], strides = [1, 1]} : vector<32x256xf32> to vector<32x200xf32>
    %271 = arith.addf %269, %270 : vector<32x200xf32>
    %cst_106 = arith.constant 0.000000e+00 : f32
    %272 = vector.broadcast %cst_106 : f32 to vector<32x200xf32>
    %273 = arith.maximumf %271, %272 : vector<32x200xf32>
    %c0_107 = arith.constant 0 : index
    %c0_108 = arith.constant 0 : index
    %274 = vector.load %arg18[%c0_107, %c0_108] : memref<1x200xf32, #tpu.memory_space<vmem>>, vector<1x200xf32>
    %275 = vector.broadcast %274 : vector<1x200xf32> to vector<32x200xf32>
    %276 = arith.mulf %273, %275 : vector<32x200xf32>
    %cst_109 = arith.constant 0.000000e+00 : f32
    %277 = vector.broadcast %cst_109 : f32 to vector<32x11xf32>
    %cst_110 = arith.constant 0.000000e+00 : f32
    %278 = vector.broadcast %cst_110 : f32 to vector<32x45xf32>
    %279 = tpu.concatenate %277, %276, %278 in 1 : vector<32x11xf32>, vector<32x200xf32>, vector<32x45xf32> -> vector<32x256xf32>
    %280 = vector.extract_strided_slice %279 {offsets = [0, 0], sizes = [32, 200], strides = [1, 1]} : vector<32x256xf32> to vector<32x200xf32>
    %281 = vector.extract_strided_slice %279 {offsets = [0, 1], sizes = [32, 200], strides = [1, 1]} : vector<32x256xf32> to vector<32x200xf32>
    %282 = vector.extract_strided_slice %279 {offsets = [0, 2], sizes = [32, 200], strides = [1, 1]} : vector<32x256xf32> to vector<32x200xf32>
    %283 = vector.extract_strided_slice %279 {offsets = [0, 10], sizes = [32, 200], strides = [1, 1]} : vector<32x256xf32> to vector<32x200xf32>
    %284 = vector.extract_strided_slice %279 {offsets = [0, 11], sizes = [32, 200], strides = [1, 1]} : vector<32x256xf32> to vector<32x200xf32>
    %285 = vector.extract_strided_slice %279 {offsets = [0, 12], sizes = [32, 200], strides = [1, 1]} : vector<32x256xf32> to vector<32x200xf32>
    %286 = vector.extract_strided_slice %279 {offsets = [0, 20], sizes = [32, 200], strides = [1, 1]} : vector<32x256xf32> to vector<32x200xf32>
    %287 = vector.extract_strided_slice %279 {offsets = [0, 21], sizes = [32, 200], strides = [1, 1]} : vector<32x256xf32> to vector<32x200xf32>
    %288 = vector.extract_strided_slice %279 {offsets = [0, 22], sizes = [32, 200], strides = [1, 1]} : vector<32x256xf32> to vector<32x200xf32>
    %289 = tpu.concatenate %280, %281, %282, %283, %284, %285, %286, %287, %288 in 0 : vector<32x200xf32>, vector<32x200xf32>, vector<32x200xf32>, vector<32x200xf32>, vector<32x200xf32>, vector<32x200xf32>, vector<32x200xf32>, vector<32x200xf32>, vector<32x200xf32> -> vector<288x200xf32>
    %c0_111 = arith.constant 0 : index
    %c0_112 = arith.constant 0 : index
    %290 = vector.load %arg25[%c0_111, %c0_112] : memref<64x288xbf16, #tpu.memory_space<vmem>>, vector<64x288xbf16>
    %291 = arith.truncf %289 : vector<288x200xf32> to vector<288x200xbf16>
    %cst_113 = arith.constant dense<0.000000e+00> : vector<64x200xf32>
    %292 = tpu.matmul %290, %291, %cst_113 {dimension_numbers = #tpu.dot_dimension_numbers<[1], [0], [0], [1], [0, 0, 1, 1], [], []>} : vector<64x288xbf16>, vector<288x200xbf16>, vector<64x200xf32> -> vector<64x200xf32>
    %c0_114 = arith.constant 0 : index
    %c0_115 = arith.constant 0 : index
    %293 = vector.load %arg29[%c0_114, %c0_115] : memref<1x200xf32, #tpu.memory_space<vmem>>, vector<1x200xf32>
    %294 = vector.broadcast %293 : vector<1x200xf32> to vector<64x200xf32>
    %295 = arith.mulf %292, %294 : vector<64x200xf32>
    %cst_116 = arith.constant dense<0.000000e+00> : vector<64xf32>
    %296 = vector.multi_reduction <add>, %295, %cst_116 [1] : vector<64x200xf32> to vector<64xf32>
    %297 = vector.shape_cast %296 : vector<64xf32> to vector<64x1xf32>
    %cst_117 = arith.constant 3.125000e-02 : f32
    %298 = vector.broadcast %cst_117 : f32 to vector<64x1xf32>
    %299 = arith.mulf %297, %298 : vector<64x1xf32>
    %300 = arith.mulf %292, %292 : vector<64x200xf32>
    %301 = vector.broadcast %293 : vector<1x200xf32> to vector<64x200xf32>
    %302 = arith.mulf %300, %301 : vector<64x200xf32>
    %cst_118 = arith.constant dense<0.000000e+00> : vector<64xf32>
    %303 = vector.multi_reduction <add>, %302, %cst_118 [1] : vector<64x200xf32> to vector<64xf32>
    %304 = vector.shape_cast %303 : vector<64xf32> to vector<64x1xf32>
    %cst_119 = arith.constant 3.125000e-02 : f32
    %305 = vector.broadcast %cst_119 : f32 to vector<64x1xf32>
    %306 = arith.mulf %304, %305 : vector<64x1xf32>
    %307 = arith.mulf %299, %299 : vector<64x1xf32>
    %308 = arith.subf %306, %307 : vector<64x1xf32>
    %c0_120 = arith.constant 0 : index
    %c0_121 = arith.constant 0 : index
    %309 = vector.load %arg23[%c0_120, %c0_121] : memref<64x1xf32, #tpu.memory_space<vmem>>, vector<64x1xf32>
    %cst_122 = arith.constant 9.99999974E-6 : f32
    %310 = vector.broadcast %cst_122 : f32 to vector<64x1xf32>
    %311 = arith.addf %308, %310 : vector<64x1xf32>
    %312 = math.rsqrt %311 : vector<64x1xf32>
    %313 = arith.mulf %309, %312 : vector<64x1xf32>
    %314 = vector.broadcast %313 : vector<64x1xf32> to vector<64x200xf32>
    %315 = arith.mulf %292, %314 : vector<64x200xf32>
    %c0_123 = arith.constant 0 : index
    %c0_124 = arith.constant 0 : index
    %316 = vector.load %arg24[%c0_123, %c0_124] : memref<64x1xf32, #tpu.memory_space<vmem>>, vector<64x1xf32>
    %317 = arith.mulf %299, %313 : vector<64x1xf32>
    %318 = arith.subf %316, %317 : vector<64x1xf32>
    %319 = vector.broadcast %318 : vector<64x1xf32> to vector<64x200xf32>
    %320 = arith.addf %315, %319 : vector<64x200xf32>
    %cst_125 = arith.constant 0.000000e+00 : f32
    %321 = vector.broadcast %cst_125 : f32 to vector<64x200xf32>
    %322 = arith.maximumf %320, %321 : vector<64x200xf32>
    %c0_126 = arith.constant 0 : index
    %c0_127 = arith.constant 0 : index
    %323 = vector.load %arg34[%c0_126, %c0_127] : memref<200x128xf32, #tpu.memory_space<vmem>>, vector<200x128xf32>
    %cst_128 = arith.constant dense<0.000000e+00> : vector<64x128xf32>
    %324 = tpu.matmul %322, %323, %cst_128 {dimension_numbers = #tpu.dot_dimension_numbers<[1], [0], [0], [1], [0, 0, 1, 1], [], []>} : vector<64x200xf32>, vector<200x128xf32>, vector<64x128xf32> -> vector<64x128xf32>
    %325 = vector.extract_strided_slice %279 {offsets = [0, 11], sizes = [32, 200], strides = [1, 1]} : vector<32x256xf32> to vector<32x200xf32>
    %c0_129 = arith.constant 0 : index
    %c0_130 = arith.constant 0 : index
    %326 = vector.load %arg33[%c0_129, %c0_130] : memref<64x32xbf16, #tpu.memory_space<vmem>>, vector<64x32xbf16>
    %327 = arith.truncf %325 : vector<32x200xf32> to vector<32x200xbf16>
    %cst_131 = arith.constant dense<0.000000e+00> : vector<64x200xf32>
    %328 = tpu.matmul %326, %327, %cst_131 {dimension_numbers = #tpu.dot_dimension_numbers<[1], [0], [0], [1], [0, 0, 1, 1], [], []>} : vector<64x32xbf16>, vector<32x200xbf16>, vector<64x200xf32> -> vector<64x200xf32>
    %c0_132 = arith.constant 0 : index
    %c0_133 = arith.constant 0 : index
    %329 = vector.load %arg29[%c0_132, %c0_133] : memref<1x200xf32, #tpu.memory_space<vmem>>, vector<1x200xf32>
    %330 = vector.broadcast %329 : vector<1x200xf32> to vector<64x200xf32>
    %331 = arith.mulf %328, %330 : vector<64x200xf32>
    %cst_134 = arith.constant dense<0.000000e+00> : vector<64xf32>
    %332 = vector.multi_reduction <add>, %331, %cst_134 [1] : vector<64x200xf32> to vector<64xf32>
    %333 = vector.shape_cast %332 : vector<64xf32> to vector<64x1xf32>
    %cst_135 = arith.constant 3.125000e-02 : f32
    %334 = vector.broadcast %cst_135 : f32 to vector<64x1xf32>
    %335 = arith.mulf %333, %334 : vector<64x1xf32>
    %336 = arith.mulf %328, %328 : vector<64x200xf32>
    %337 = vector.broadcast %329 : vector<1x200xf32> to vector<64x200xf32>
    %338 = arith.mulf %336, %337 : vector<64x200xf32>
    %cst_136 = arith.constant dense<0.000000e+00> : vector<64xf32>
    %339 = vector.multi_reduction <add>, %338, %cst_136 [1] : vector<64x200xf32> to vector<64xf32>
    %340 = vector.shape_cast %339 : vector<64xf32> to vector<64x1xf32>
    %cst_137 = arith.constant 3.125000e-02 : f32
    %341 = vector.broadcast %cst_137 : f32 to vector<64x1xf32>
    %342 = arith.mulf %340, %341 : vector<64x1xf32>
    %343 = arith.mulf %335, %335 : vector<64x1xf32>
    %344 = arith.subf %342, %343 : vector<64x1xf32>
    %c0_138 = arith.constant 0 : index
    %c0_139 = arith.constant 0 : index
    %345 = vector.load %arg31[%c0_138, %c0_139] : memref<64x1xf32, #tpu.memory_space<vmem>>, vector<64x1xf32>
    %cst_140 = arith.constant 9.99999974E-6 : f32
    %346 = vector.broadcast %cst_140 : f32 to vector<64x1xf32>
    %347 = arith.addf %344, %346 : vector<64x1xf32>
    %348 = math.rsqrt %347 : vector<64x1xf32>
    %349 = arith.mulf %345, %348 : vector<64x1xf32>
    %350 = vector.broadcast %349 : vector<64x1xf32> to vector<64x200xf32>
    %351 = arith.mulf %328, %350 : vector<64x200xf32>
    %c0_141 = arith.constant 0 : index
    %c0_142 = arith.constant 0 : index
    %352 = vector.load %arg32[%c0_141, %c0_142] : memref<64x1xf32, #tpu.memory_space<vmem>>, vector<64x1xf32>
    %353 = arith.mulf %335, %349 : vector<64x1xf32>
    %354 = arith.subf %352, %353 : vector<64x1xf32>
    %355 = vector.broadcast %354 : vector<64x1xf32> to vector<64x200xf32>
    %356 = arith.addf %351, %355 : vector<64x200xf32>
    %c0_143 = arith.constant 0 : index
    %c0_144 = arith.constant 0 : index
    %357 = vector.load %arg34[%c0_143, %c0_144] : memref<200x128xf32, #tpu.memory_space<vmem>>, vector<200x128xf32>
    %cst_145 = arith.constant dense<0.000000e+00> : vector<64x128xf32>
    %358 = tpu.matmul %356, %357, %cst_145 {dimension_numbers = #tpu.dot_dimension_numbers<[1], [0], [0], [1], [0, 0, 1, 1], [], []>} : vector<64x200xf32>, vector<200x128xf32>, vector<64x128xf32> -> vector<64x128xf32>
    %359 = vector.extract_strided_slice %324 {offsets = [0, 0], sizes = [64, 72], strides = [1, 1]} : vector<64x128xf32> to vector<64x72xf32>
    %360 = vector.extract_strided_slice %324 {offsets = [0, 1], sizes = [64, 72], strides = [1, 1]} : vector<64x128xf32> to vector<64x72xf32>
    %361 = vector.extract_strided_slice %324 {offsets = [0, 2], sizes = [64, 72], strides = [1, 1]} : vector<64x128xf32> to vector<64x72xf32>
    %362 = vector.extract_strided_slice %324 {offsets = [0, 6], sizes = [64, 72], strides = [1, 1]} : vector<64x128xf32> to vector<64x72xf32>
    %363 = vector.extract_strided_slice %324 {offsets = [0, 7], sizes = [64, 72], strides = [1, 1]} : vector<64x128xf32> to vector<64x72xf32>
    %364 = vector.extract_strided_slice %324 {offsets = [0, 8], sizes = [64, 72], strides = [1, 1]} : vector<64x128xf32> to vector<64x72xf32>
    %365 = vector.extract_strided_slice %324 {offsets = [0, 12], sizes = [64, 72], strides = [1, 1]} : vector<64x128xf32> to vector<64x72xf32>
    %366 = vector.extract_strided_slice %324 {offsets = [0, 13], sizes = [64, 72], strides = [1, 1]} : vector<64x128xf32> to vector<64x72xf32>
    %367 = vector.extract_strided_slice %324 {offsets = [0, 14], sizes = [64, 72], strides = [1, 1]} : vector<64x128xf32> to vector<64x72xf32>
    %368 = tpu.concatenate %359, %360, %361, %362, %363, %364, %365, %366, %367 in 0 : vector<64x72xf32>, vector<64x72xf32>, vector<64x72xf32>, vector<64x72xf32>, vector<64x72xf32>, vector<64x72xf32>, vector<64x72xf32>, vector<64x72xf32>, vector<64x72xf32> -> vector<576x72xf32>
    %c0_146 = arith.constant 0 : index
    %c0_147 = arith.constant 0 : index
    %369 = vector.load %arg28[%c0_146, %c0_147] : memref<64x576xbf16, #tpu.memory_space<vmem>>, vector<64x576xbf16>
    %370 = arith.truncf %368 : vector<576x72xf32> to vector<576x72xbf16>
    %cst_148 = arith.constant dense<0.000000e+00> : vector<64x72xf32>
    %371 = tpu.matmul %369, %370, %cst_148 {dimension_numbers = #tpu.dot_dimension_numbers<[1], [0], [0], [1], [0, 0, 1, 1], [], []>} : vector<64x576xbf16>, vector<576x72xbf16>, vector<64x72xf32> -> vector<64x72xf32>
    %c0_149 = arith.constant 0 : index
    %c0_150 = arith.constant 0 : index
    %372 = vector.load %arg30[%c0_149, %c0_150] : memref<1x72xf32, #tpu.memory_space<vmem>>, vector<1x72xf32>
    %373 = vector.broadcast %372 : vector<1x72xf32> to vector<64x72xf32>
    %374 = arith.mulf %371, %373 : vector<64x72xf32>
    %cst_151 = arith.constant dense<0.000000e+00> : vector<64xf32>
    %375 = vector.multi_reduction <add>, %374, %cst_151 [1] : vector<64x72xf32> to vector<64xf32>
    %376 = vector.shape_cast %375 : vector<64xf32> to vector<64x1xf32>
    %cst_152 = arith.constant 3.125000e-02 : f32
    %377 = vector.broadcast %cst_152 : f32 to vector<64x1xf32>
    %378 = arith.mulf %376, %377 : vector<64x1xf32>
    %379 = arith.mulf %371, %371 : vector<64x72xf32>
    %380 = vector.broadcast %372 : vector<1x72xf32> to vector<64x72xf32>
    %381 = arith.mulf %379, %380 : vector<64x72xf32>
    %cst_153 = arith.constant dense<0.000000e+00> : vector<64xf32>
    %382 = vector.multi_reduction <add>, %381, %cst_153 [1] : vector<64x72xf32> to vector<64xf32>
    %383 = vector.shape_cast %382 : vector<64xf32> to vector<64x1xf32>
    %cst_154 = arith.constant 3.125000e-02 : f32
    %384 = vector.broadcast %cst_154 : f32 to vector<64x1xf32>
    %385 = arith.mulf %383, %384 : vector<64x1xf32>
    %386 = arith.mulf %378, %378 : vector<64x1xf32>
    %387 = arith.subf %385, %386 : vector<64x1xf32>
    %c0_155 = arith.constant 0 : index
    %c0_156 = arith.constant 0 : index
    %388 = vector.load %arg26[%c0_155, %c0_156] : memref<64x1xf32, #tpu.memory_space<vmem>>, vector<64x1xf32>
    %cst_157 = arith.constant 9.99999974E-6 : f32
    %389 = vector.broadcast %cst_157 : f32 to vector<64x1xf32>
    %390 = arith.addf %387, %389 : vector<64x1xf32>
    %391 = math.rsqrt %390 : vector<64x1xf32>
    %392 = arith.mulf %388, %391 : vector<64x1xf32>
    %393 = vector.broadcast %392 : vector<64x1xf32> to vector<64x72xf32>
    %394 = arith.mulf %371, %393 : vector<64x72xf32>
    %c0_158 = arith.constant 0 : index
    %c0_159 = arith.constant 0 : index
    %395 = vector.load %arg27[%c0_158, %c0_159] : memref<64x1xf32, #tpu.memory_space<vmem>>, vector<64x1xf32>
    %396 = arith.mulf %378, %392 : vector<64x1xf32>
    %397 = arith.subf %395, %396 : vector<64x1xf32>
    %398 = vector.broadcast %397 : vector<64x1xf32> to vector<64x72xf32>
    %399 = arith.addf %394, %398 : vector<64x72xf32>
    %400 = vector.extract_strided_slice %358 {offsets = [0, 7], sizes = [64, 72], strides = [1, 1]} : vector<64x128xf32> to vector<64x72xf32>
    %401 = arith.addf %399, %400 : vector<64x72xf32>
    %cst_160 = arith.constant 0.000000e+00 : f32
    %402 = vector.broadcast %cst_160 : f32 to vector<64x72xf32>
    %403 = arith.maximumf %401, %402 : vector<64x72xf32>
    %c0_161 = arith.constant 0 : index
    %c0_162 = arith.constant 0 : index
    %404 = vector.load %arg35[%c0_161, %c0_162] : memref<72x2xf32, #tpu.memory_space<vmem>>, vector<72x2xf32>
    %cst_163 = arith.constant dense<0.000000e+00> : vector<64x2xf32>
    %405 = tpu.matmul %403, %404, %cst_163 {dimension_numbers = #tpu.dot_dimension_numbers<[1], [0], [0], [1], [0, 0, 1, 1], [], []>} : vector<64x72xf32>, vector<72x2xf32>, vector<64x2xf32> -> vector<64x2xf32>
    %c0_164 = arith.constant 0 : index
    %c0_165 = arith.constant 0 : index
    %406 = vector.load %arg36[%c0_164, %c0_165] : memref<10x64xf32, #tpu.memory_space<vmem>>, vector<10x64xf32>
    %cst_166 = arith.constant dense<0.000000e+00> : vector<10x2xf32>
    %407 = tpu.matmul %406, %405, %cst_166 {dimension_numbers = #tpu.dot_dimension_numbers<[1], [0], [0], [1], [0, 0, 1, 1], [], []>} : vector<10x64xf32>, vector<64x2xf32>, vector<10x2xf32> -> vector<10x2xf32>
    %c0_167 = arith.constant 0 : index
    %c0_168 = arith.constant 0 : index
    %408 = vector.load %arg37[%c0_167, %c0_168] : memref<10x1xf32, #tpu.memory_space<vmem>>, vector<10x1xf32>
    %409 = vector.broadcast %408 : vector<10x1xf32> to vector<10x2xf32>
    %410 = arith.addf %407, %409 : vector<10x2xf32>
    %c0_169 = arith.constant 0 : index
    %c0_170 = arith.constant 0 : index
    %411 = vector.load %arg38[%c0_169, %c0_170] : memref<10x2xf32, #tpu.memory_space<vmem>>, vector<10x2xf32>
    tpu.vector_store %arg38[%c0_169, %c0_170], %410 {strides = array<i32>} : memref<10x2xf32, #tpu.memory_space<vmem>>, vector<10x2xf32>,
    return
  }
}

</mosaic_0001>

<llo_original>
// kernel: resnet_forward.1
$region0: #{resnet_forward.1}
  #allocation0 [shape = 'u32[]', space=smem, size = 0x4, offset = 0x4, fixed_abs, tag = 'smem constant byte address 0x4 - core index']
  #allocation1 [shape = 'u32[144,128]{1,0:T(1,128)}', space=vmem, size = 0x12000, scoped, tag = 'internal scratch']
  %s0 = inlined_call_operand.smem [shape: u32[39], index: -1, kind: input, shape index: {}]
  %s1 = sld [smem:[%s0]]
  %s2 = scalar_lea.smem %s0, 1
  %s3 = sld [smem:[%s2]]
  %s4 = scalar_lea.smem %s0, 2
  %s5 = sld [smem:[%s4]]
  %s6 = scalar_lea.smem %s0, 3
  %s7 = sld [smem:[%s6]]
  %s8 = scalar_lea.smem %s0, 4
  %s9 = sld [smem:[%s8]]
  %s10 = scalar_lea.smem %s0, 5
  %s11 = sld [smem:[%s10]]
  %s12 = scalar_lea.smem %s0, 6
  %s13 = sld [smem:[%s12]]
  %s14 = scalar_lea.smem %s0, 7
  %s15 = sld [smem:[%s14]]
  %s16 = scalar_lea.smem %s0, 8
  %s17 = sld [smem:[%s16]]
  %s18 = scalar_lea.smem %s0, 9
  %s19 = sld [smem:[%s18]]
  %s20 = scalar_lea.smem %s0, 10
  %s21 = sld [smem:[%s20]]
  %s22 = scalar_lea.smem %s0, 11
  %s23 = sld [smem:[%s22]]
  %s24 = scalar_lea.smem %s0, 12
  %s25 = sld [smem:[%s24]]
  %s26 = scalar_lea.smem %s0, 13
  %s27 = sld [smem:[%s26]]
  %s28 = scalar_lea.smem %s0, 14
  %s29 = sld [smem:[%s28]]
  %s30 = scalar_lea.smem %s0, 15
  %s31 = sld [smem:[%s30]]
  %s32 = scalar_lea.smem %s0, 16
  %s33 = sld [smem:[%s32]]
  %s34 = scalar_lea.smem %s0, 17
  %s35 = sld [smem:[%s34]]
  %s36 = scalar_lea.smem %s0, 18
  %s37 = sld [smem:[%s36]]
  %s38 = scalar_lea.smem %s0, 19
  %s39 = sld [smem:[%s38]]
  %s40 = scalar_lea.smem %s0, 20
  %s41 = sld [smem:[%s40]]
  %s42 = scalar_lea.smem %s0, 21
  %s43 = sld [smem:[%s42]]
  %s44 = scalar_lea.smem %s0, 22
  %s45 = sld [smem:[%s44]]
  %s46 = scalar_lea.smem %s0, 23
  %s47 = sld [smem:[%s46]]
  %s48 = scalar_lea.smem %s0, 24
  %s49 = sld [smem:[%s48]]
  %s50 = scalar_lea.smem %s0, 25
  %s51 = sld [smem:[%s50]]
  %s52 = scalar_lea.smem %s0, 26
  %s53 = sld [smem:[%s52]]
  %s54 = scalar_lea.smem %s0, 27
  %s55 = sld [smem:[%s54]]
  %s56 = scalar_lea.smem %s0, 28
  %s57 = sld [smem:[%s56]]
  %s58 = scalar_lea.smem %s0, 29
  %s59 = sld [smem:[%s58]]
  %s60 = scalar_lea.smem %s0, 30
  %s61 = sld [smem:[%s60]]
  %s62 = scalar_lea.smem %s0, 31
  %s63 = sld [smem:[%s62]]
  %s64 = scalar_lea.smem %s0, 32
  %s65 = sld [smem:[%s64]]
  %s66 = scalar_lea.smem %s0, 33
  %s67 = sld [smem:[%s66]]
  %s68 = scalar_lea.smem %s0, 34
  %s69 = sld [smem:[%s68]]
  %s70 = scalar_lea.smem %s0, 35
  %s71 = sld [smem:[%s70]]
  %s72 = scalar_lea.smem %s0, 36
  %s73 = sld [smem:[%s72]]
  %s74 = scalar_lea.smem %s0, 37
  %s75 = sld [smem:[%s74]]
  %s76 = scalar_lea.smem %s0, 38
  %s77 = sld [smem:[%s76]]
  %s78 = sld [smem:[#allocation0]]
  $region162: #{resnet_forward.1} parent=0
    _
  %s80 = ssub.s32 1, %s78
  %s81 = scalar_select 0, %s80, %s78
  // Predicated region
  $region2: #{resnet_forward.1} parent=0 // pred_check
    _
  $region3: #{resnet_forward.1} parent=0 // pred_check_branch
    %83 = sbr.rel (0) target = $region5
  $region4: #{resnet_forward.1} parent=0 // pred_region
    _
  $region5: #{resnet_forward.1} parent=0 // pred_fallthru
    _
  // Predicated region
  $region6: #{resnet_forward.1} parent=0 // pred_check
    _
  $region7: #{resnet_forward.1} parent=0 // pred_check_branch
    %85 = sbr.rel (0) target = $region9
  $region8: #{resnet_forward.1} parent=0 // pred_region
    _
  $region9: #{resnet_forward.1} parent=0 // pred_fallthru
    _
  // Predicated region
  $region10: #{resnet_forward.1} parent=0 // pred_check
    _
  $region11: #{resnet_forward.1} parent=0 // pred_check_branch
    %87 = sbr.rel (0) target = $region13
  $region12: #{resnet_forward.1} parent=0 // pred_region
    _
  $region13: #{resnet_forward.1} parent=0 // pred_fallthru
    _
  // Predicated region
  $region14: #{resnet_forward.1} parent=0 // pred_check
    _
  $region15: #{resnet_forward.1} parent=0 // pred_check_branch
    %89 = sbr.rel (0) target = $region17
  $region16: #{resnet_forward.1} parent=0 // pred_region
    _
  $region17: #{resnet_forward.1} parent=0 // pred_fallthru
    _
  // Predicated region
  $region18: #{resnet_forward.1} parent=0 // pred_check
    _
  $region19: #{resnet_forward.1} parent=0 // pred_check_branch
    %91 = sbr.rel (0) target = $region21
  $region20: #{resnet_forward.1} parent=0 // pred_region
    _
  $region21: #{resnet_forward.1} parent=0 // pred_fallthru
    _
  // Predicated region
  $region22: #{resnet_forward.1} parent=0 // pred_check
    _
  $region23: #{resnet_forward.1} parent=0 // pred_check_branch
    %93 = sbr.rel (0) target = $region25
  $region24: #{resnet_forward.1} parent=0 // pred_region
    _
  $region25: #{resnet_forward.1} parent=0 // pred_fallthru
    _
  // Predicated region
  $region26: #{resnet_forward.1} parent=0 // pred_check
    _
  $region27: #{resnet_forward.1} parent=0 // pred_check_branch
    %95 = sbr.rel (0) target = $region29
  $region28: #{resnet_forward.1} parent=0 // pred_region
    _
  $region29: #{resnet_forward.1} parent=0 // pred_fallthru
    _
  // Predicated region
  $region30: #{resnet_forward.1} parent=0 // pred_check
    _
  $region31: #{resnet_forward.1} parent=0 // pred_check_branch
    %97 = sbr.rel (0) target = $region33
  $region32: #{resnet_forward.1} parent=0 // pred_region
    _
  $region33: #{resnet_forward.1} parent=0 // pred_fallthru
    _
  // Predicated region
  $region34: #{resnet_forward.1} parent=0 // pred_check
    _
  $region35: #{resnet_forward.1} parent=0 // pred_check_branch
    %99 = sbr.rel (0) target = $region37
  $region36: #{resnet_forward.1} parent=0 // pred_region
    _
  $region37: #{resnet_forward.1} parent=0 // pred_fallthru
    _
  // Predicated region
  $region38: #{resnet_forward.1} parent=0 // pred_check
    _
  $region39: #{resnet_forward.1} parent=0 // pred_check_branch
    %101 = sbr.rel (0) target = $region41
  $region40: #{resnet_forward.1} parent=0 // pred_region
    _
  $region41: #{resnet_forward.1} parent=0 // pred_fallthru
    _
  // Predicated region
  $region42: #{resnet_forward.1} parent=0 // pred_check
    _
  $region43: #{resnet_forward.1} parent=0 // pred_check_branch
    %103 = sbr.rel (0) target = $region45
  $region44: #{resnet_forward.1} parent=0 // pred_region
    _
  $region45: #{resnet_forward.1} parent=0 // pred_fallthru
    _
  // Predicated region
  $region46: #{resnet_forward.1} parent=0 // pred_check
    _
  $region47: #{resnet_forward.1} parent=0 // pred_check_branch
    %105 = sbr.rel (0) target = $region49
  $region48: #{resnet_forward.1} parent=0 // pred_region
    _
  $region49: #{resnet_forward.1} parent=0 // pred_fallthru
    _
  // Predicated region
  $region50: #{resnet_forward.1} parent=0 // pred_check
    _
  $region51: #{resnet_forward.1} parent=0 // pred_check_branch
    %107 = sbr.rel (0) target = $region53
  $region52: #{resnet_forward.1} parent=0 // pred_region
    _
  $region53: #{resnet_forward.1} parent=0 // pred_fallthru
    _
  // Predicated region
  $region54: #{resnet_forward.1} parent=0 // pred_check
    _
  $region55: #{resnet_forward.1} parent=0 // pred_check_branch
    %109 = sbr.rel (0) target = $region57
  $region56: #{resnet_forward.1} parent=0 // pred_region
    _
  $region57: #{resnet_forward.1} parent=0 // pred_fallthru
    _
  // Predicated region
  $region58: #{resnet_forward.1} parent=0 // pred_check
    _
  $region59: #{resnet_forward.1} parent=0 // pred_check_branch
    %111 = sbr.rel (0) target = $region61
  $region60: #{resnet_forward.1} parent=0 // pred_region
    _
  $region61: #{resnet_forward.1} parent=0 // pred_fallthru
    _
  // Predicated region
  $region62: #{resnet_forward.1} parent=0 // pred_check
    _
  $region63: #{resnet_forward.1} parent=0 // pred_check_branch
    %113 = sbr.rel (0) target = $region65
  $region64: #{resnet_forward.1} parent=0 // pred_region
    _
  $region65: #{resnet_forward.1} parent=0 // pred_fallthru
    _
  // Predicated region
  $region66: #{resnet_forward.1} parent=0 // pred_check
    _
  $region67: #{resnet_forward.1} parent=0 // pred_check_branch
    %115 = sbr.rel (0) target = $region69
  $region68: #{resnet_forward.1} parent=0 // pred_region
    _
  $region69: #{resnet_forward.1} parent=0 // pred_fallthru
    _
  // Predicated region
  $region70: #{resnet_forward.1} parent=0 // pred_check
    _
  $region71: #{resnet_forward.1} parent=0 // pred_check_branch
    %117 = sbr.rel (0) target = $region73
  $region72: #{resnet_forward.1} parent=0 // pred_region
    _
  $region73: #{resnet_forward.1} parent=0 // pred_fallthru
    _
  // Predicated region
  $region74: #{resnet_forward.1} parent=0 // pred_check
    _
  $region75: #{resnet_forward.1} parent=0 // pred_check_branch
    %119 = sbr.rel (0) target = $region77
  $region76: #{resnet_forward.1} parent=0 // pred_region
    _
  $region77: #{resnet_forward.1} parent=0 // pred_fallthru
    _
  // Predicated region
  $region78: #{resnet_forward.1} parent=0 // pred_check
    _
  $region79: #{resnet_forward.1} parent=0 // pred_check_branch
    %121 = sbr.rel (0) target = $region81
  $region80: #{resnet_forward.1} parent=0 // pred_region
    _
  $region81: #{resnet_forward.1} parent=0 // pred_fallthru
    _
  // Predicated region
  $region82: #{resnet_forward.1} parent=0 // pred_check
    _
  $region83: #{resnet_forward.1} parent=0 // pred_check_branch
    %123 = sbr.rel (0) target = $region85
  $region84: #{resnet_forward.1} parent=0 // pred_region
    _
  $region85: #{resnet_forward.1} parent=0 // pred_fallthru
    _
  // Predicated region
  $region86: #{resnet_forward.1} parent=0 // pred_check
    _
  $region87: #{resnet_forward.1} parent=0 // pred_check_branch
    %125 = sbr.rel (0) target = $region89
  $region88: #{resnet_forward.1} parent=0 // pred_region
    _
  $region89: #{resnet_forward.1} parent=0 // pred_fallthru
    _
  // Predicated region
  $region90: #{resnet_forward.1} parent=0 // pred_check
    _
  $region91: #{resnet_forward.1} parent=0 // pred_check_branch
    %127 = sbr.rel (0) target = $region93
  $region92: #{resnet_forward.1} parent=0 // pred_region
    _
  $region93: #{resnet_forward.1} parent=0 // pred_fallthru
    _
  // Predicated region
  $region94: #{resnet_forward.1} parent=0 // pred_check
    _
  $region95: #{resnet_forward.1} parent=0 // pred_check_branch
    %129 = sbr.rel (0) target = $region97
  $region96: #{resnet_forward.1} parent=0 // pred_region
    _
  $region97: #{resnet_forward.1} parent=0 // pred_fallthru
    _
  // Predicated region
  $region98: #{resnet_forward.1} parent=0 // pred_check
    _
  $region99: #{resnet_forward.1} parent=0 // pred_check_branch
    %131 = sbr.rel (0) target = $region101
  $region100: #{resnet_forward.1} parent=0 // pred_region
    _
  $region101: #{resnet_forward.1} parent=0 // pred_fallthru
    _
  // Predicated region
  $region102: #{resnet_forward.1} parent=0 // pred_check
    _
  $region103: #{resnet_forward.1} parent=0 // pred_check_branch
    %133 = sbr.rel (0) target = $region105
  $region104: #{resnet_forward.1} parent=0 // pred_region
    _
  $region105: #{resnet_forward.1} parent=0 // pred_fallthru
    _
  // Predicated region
  $region106: #{resnet_forward.1} parent=0 // pred_check
    _
  $region107: #{resnet_forward.1} parent=0 // pred_check_branch
    %135 = sbr.rel (0) target = $region109
  $region108: #{resnet_forward.1} parent=0 // pred_region
    _
  $region109: #{resnet_forward.1} parent=0 // pred_fallthru
    _
  // Predicated region
  $region110: #{resnet_forward.1} parent=0 // pred_check
    _
  $region111: #{resnet_forward.1} parent=0 // pred_check_branch
    %137 = sbr.rel (0) target = $region113
  $region112: #{resnet_forward.1} parent=0 // pred_region
    _
  $region113: #{resnet_forward.1} parent=0 // pred_fallthru
    _
  // Predicated region
  $region114: #{resnet_forward.1} parent=0 // pred_check
    _
  $region115: #{resnet_forward.1} parent=0 // pred_check_branch
    %139 = sbr.rel (0) target = $region117
  $region116: #{resnet_forward.1} parent=0 // pred_region
    _
  $region117: #{resnet_forward.1} parent=0 // pred_fallthru
    _
  // Predicated region
  $region118: #{resnet_forward.1} parent=0 // pred_check
    _
  $region119: #{resnet_forward.1} parent=0 // pred_check_branch
    %141 = sbr.rel (0) target = $region121
  $region120: #{resnet_forward.1} parent=0 // pred_region
    _
  $region121: #{resnet_forward.1} parent=0 // pred_fallthru
    _
  // Predicated region
  $region122: #{resnet_forward.1} parent=0 // pred_check
    _
  $region123: #{resnet_forward.1} parent=0 // pred_check_branch
    %143 = sbr.rel (0) target = $region125
  $region124: #{resnet_forward.1} parent=0 // pred_region
    _
  $region125: #{resnet_forward.1} parent=0 // pred_fallthru
    _
  // Predicated region
  $region126: #{resnet_forward.1} parent=0 // pred_check
    _
  $region127: #{resnet_forward.1} parent=0 // pred_check_branch
    %145 = sbr.rel (0) target = $region129
  $region128: #{resnet_forward.1} parent=0 // pred_region
    _
  $region129: #{resnet_forward.1} parent=0 // pred_fallthru
    _
  // Predicated region
  $region130: #{resnet_forward.1} parent=0 // pred_check
    _
  $region131: #{resnet_forward.1} parent=0 // pred_check_branch
    %147 = sbr.rel (0) target = $region133
  $region132: #{resnet_forward.1} parent=0 // pred_region
    _
  $region133: #{resnet_forward.1} parent=0 // pred_fallthru
    _
  // Predicated region
  $region134: #{resnet_forward.1} parent=0 // pred_check
    _
  $region135: #{resnet_forward.1} parent=0 // pred_check_branch
    %149 = sbr.rel (0) target = $region137
  $region136: #{resnet_forward.1} parent=0 // pred_region
    _
  $region137: #{resnet_forward.1} parent=0 // pred_fallthru
    _
  // Predicated region
  $region138: #{resnet_forward.1} parent=0 // pred_check
    _
  $region139: #{resnet_forward.1} parent=0 // pred_check_branch
    %151 = sbr.rel (0) target = $region141
  $region140: #{resnet_forward.1} parent=0 // pred_region
    _
  $region141: #{resnet_forward.1} parent=0 // pred_fallthru
    _
  // Predicated region
  $region142: #{resnet_forward.1} parent=0 // pred_check
    _
  $region143: #{resnet_forward.1} parent=0 // pred_check_branch
    %153 = sbr.rel (0) target = $region145
  $region144: #{resnet_forward.1} parent=0 // pred_region
    _
  $region145: #{resnet_forward.1} parent=0 // pred_fallthru
    _
  // Predicated region
  $region146: #{resnet_forward.1} parent=0 // pred_check
    _
  $region147: #{resnet_forward.1} parent=0 // pred_check_branch
    %155 = sbr.rel (0) target = $region149
  $region148: #{resnet_forward.1} parent=0 // pred_region
    _
  $region149: #{resnet_forward.1} parent=0 // pred_fallthru
    _
  // Predicated region
  $region150: #{resnet_forward.1} parent=0 // pred_check
    _
  $region151: #{resnet_forward.1} parent=0 // pred_check_branch
    %157 = sbr.rel (0) target = $region153
  $region152: #{resnet_forward.1} parent=0 // pred_region
    _
  $region153: #{resnet_forward.1} parent=0 // pred_fallthru
    _
  %v159 = vld [vmem:[%s1] sm:$0xff]
  %v160 = vld [vmem:[%s1 + $0x8] sm:$0xff]
  %v161 = vld [vmem:[%s1 + $0x10] sm:$0xff]
  %v162 = vld [vmem:[%s1 + $0x18] sm:$0xff]
  %v163 = vld [vmem:[%s1 + $0x20] sm:$0xff]
  %v164 = vld [vmem:[%s1 + $0x28] sm:$0xff]
  %171 = vrot.lane.b32.xlu0 %v159, 127
  %v172 = vpop.permute.xlu0 %171
  %173 = vrot.lane.b32.xlu0 %v160, 127
  %v174 = vpop.permute.xlu0 %173
  %175 = vrot.lane.b32.xlu0 %v161, 127
  %v176 = vpop.permute.xlu0 %175
  %177 = vrot.lane.b32.xlu0 %v162, 127
  %v178 = vpop.permute.xlu0 %177
  %179 = vrot.lane.b32.xlu0 %v163, 127
  %v180 = vpop.permute.xlu0 %179
  %181 = vrot.lane.b32.xlu0 %v164, 127
  %v182 = vpop.permute.xlu0 %181
  %vm183 = vcmask 1039360
  %v184 = vsel %vm183, %v172, %v174
  %v185 = vsel %vm183, %v174, %v176
  %v186 = vsel %vm183, %v176, %v178
  %v187 = vsel %vm183, %v178, %v180
  %v188 = vsel %vm183, %v180, %v182
  %195 = vrot.lane.b32.xlu0 %v159, 126
  %v196 = vpop.permute.xlu0 %195
  %197 = vrot.lane.b32.xlu0 %v160, 126
  %v198 = vpop.permute.xlu0 %197
  %199 = vrot.lane.b32.xlu0 %v161, 126
  %v200 = vpop.permute.xlu0 %199
  %201 = vrot.lane.b32.xlu0 %v162, 126
  %v202 = vpop.permute.xlu0 %201
  %203 = vrot.lane.b32.xlu0 %v163, 126
  %v204 = vpop.permute.xlu0 %203
  %205 = vrot.lane.b32.xlu0 %v164, 126
  %v206 = vpop.permute.xlu0 %205
  %vm207 = vcmask 1031168
  %v208 = vsel %vm207, %v196, %v198
  %v209 = vsel %vm207, %v198, %v200
  %v210 = vsel %vm207, %v200, %v202
  %v211 = vsel %vm207, %v202, %v204
  %v212 = vsel %vm207, %v204, %v206
  %219 = vrot.lane.b32.xlu0 %v159, 110
  %v220 = vpop.permute.xlu0 %219
  %221 = vrot.lane.b32.xlu0 %v160, 110
  %v222 = vpop.permute.xlu0 %221
  %223 = vrot.lane.b32.xlu0 %v161, 110
  %v224 = vpop.permute.xlu0 %223
  %225 = vrot.lane.b32.xlu0 %v162, 110
  %v226 = vpop.permute.xlu0 %225
  %227 = vrot.lane.b32.xlu0 %v163, 110
  %v228 = vpop.permute.xlu0 %227
  %229 = vrot.lane.b32.xlu0 %v164, 110
  %v230 = vpop.permute.xlu0 %229
  %vm231 = vcmask 900096
  %v232 = vsel %vm231, %v220, %v222
  %v233 = vsel %vm231, %v222, %v224
  %v234 = vsel %vm231, %v224, %v226
  %v235 = vsel %vm231, %v226, %v228
  %v236 = vsel %vm231, %v228, %v230
  %243 = vrot.lane.b32.xlu0 %v159, 109
  %v244 = vpop.permute.xlu0 %243
  %245 = vrot.lane.b32.xlu0 %v160, 109
  %v246 = vpop.permute.xlu0 %245
  %247 = vrot.lane.b32.xlu0 %v161, 109
  %v248 = vpop.permute.xlu0 %247
  %249 = vrot.lane.b32.xlu0 %v162, 109
  %v250 = vpop.permute.xlu0 %249
  %251 = vrot.lane.b32.xlu0 %v163, 109
  %v252 = vpop.permute.xlu0 %251
  %253 = vrot.lane.b32.xlu0 %v164, 109
  %v254 = vpop.permute.xlu0 %253
  %vm255 = vcmask 891904
  %v256 = vsel %vm255, %v244, %v246
  %v257 = vsel %vm255, %v246, %v248
  %v258 = vsel %vm255, %v248, %v250
  %v259 = vsel %vm255, %v250, %v252
  %v260 = vsel %vm255, %v252, %v254
  %267 = vrot.lane.b32.xlu0 %v159, 108
  %v268 = vpop.permute.xlu0 %267
  %269 = vrot.lane.b32.xlu0 %v160, 108
  %v270 = vpop.permute.xlu0 %269
  %271 = vrot.lane.b32.xlu0 %v161, 108
  %v272 = vpop.permute.xlu0 %271
  %273 = vrot.lane.b32.xlu0 %v162, 108
  %v274 = vpop.permute.xlu0 %273
  %275 = vrot.lane.b32.xlu0 %v163, 108
  %v276 = vpop.permute.xlu0 %275
  %277 = vrot.lane.b32.xlu0 %v164, 108
  %v278 = vpop.permute.xlu0 %277
  %vm279 = vcmask 883712
  %v280 = vsel %vm279, %v268, %v270
  %v281 = vsel %vm279, %v270, %v272
  %v282 = vsel %vm279, %v272, %v274
  %v283 = vsel %vm279, %v274, %v276
  %v284 = vsel %vm279, %v276, %v278
  %291 = vrot.lane.b32.xlu0 %v159, 92
  %v292 = vpop.permute.xlu0 %291
  %293 = vrot.lane.b32.xlu0 %v160, 92
  %v294 = vpop.permute.xlu0 %293
  %295 = vrot.lane.b32.xlu0 %v161, 92
  %v296 = vpop.permute.xlu0 %295
  %297 = vrot.lane.b32.xlu0 %v162, 92
  %v298 = vpop.permute.xlu0 %297
  %299 = vrot.lane.b32.xlu0 %v163, 92
  %v300 = vpop.permute.xlu0 %299
  %301 = vrot.lane.b32.xlu0 %v164, 92
  %v302 = vpop.permute.xlu0 %301
  %vm303 = vcmask 752640
  %v304 = vsel %vm303, %v292, %v294
  %v305 = vsel %vm303, %v294, %v296
  %v306 = vsel %vm303, %v296, %v298
  %v307 = vsel %vm303, %v298, %v300
  %v308 = vsel %vm303, %v300, %v302
  %315 = vrot.lane.b32.xlu0 %v159, 91
  %v316 = vpop.permute.xlu0 %315
  %317 = vrot.lane.b32.xlu0 %v160, 91
  %v318 = vpop.permute.xlu0 %317
  %319 = vrot.lane.b32.xlu0 %v161, 91
  %v320 = vpop.permute.xlu0 %319
  %321 = vrot.lane.b32.xlu0 %v162, 91
  %v322 = vpop.permute.xlu0 %321
  %323 = vrot.lane.b32.xlu0 %v163, 91
  %v324 = vpop.permute.xlu0 %323
  %325 = vrot.lane.b32.xlu0 %v164, 91
  %v326 = vpop.permute.xlu0 %325
  %vm327 = vcmask 744448
  %v328 = vsel %vm327, %v316, %v318
  %v329 = vsel %vm327, %v318, %v320
  %v330 = vsel %vm327, %v320, %v322
  %v331 = vsel %vm327, %v322, %v324
  %v332 = vsel %vm327, %v324, %v326
  %339 = vrot.lane.b32.xlu0 %v159, 90
  %v340 = vpop.permute.xlu0 %339
  %341 = vrot.lane.b32.xlu0 %v160, 90
  %v342 = vpop.permute.xlu0 %341
  %343 = vrot.lane.b32.xlu0 %v161, 90
  %v344 = vpop.permute.xlu0 %343
  %345 = vrot.lane.b32.xlu0 %v162, 90
  %v346 = vpop.permute.xlu0 %345
  %347 = vrot.lane.b32.xlu0 %v163, 90
  %v348 = vpop.permute.xlu0 %347
  %349 = vrot.lane.b32.xlu0 %v164, 90
  %v350 = vpop.permute.xlu0 %349
  %vm351 = vcmask 736256
  %v352 = vsel %vm351, %v340, %v342
  %v353 = vsel %vm351, %v342, %v344
  %v354 = vsel %vm351, %v344, %v346
  %v355 = vsel %vm351, %v346, %v348
  %v356 = vsel %vm351, %v348, %v350
  %v363 = vld [vmem:[%s7] sm:$0xf]
  %v364 = vld [vmem:[%s7 + $0x4] sm:$0xf]
  %v365 = vpack.c.bf16 %v184, %v159
  %v366 = vpack.c.bf16 %v185, %v160
  %v367 = vpack.c.bf16 %v186, %v161
  %v368 = vpack.c.bf16 %v187, %v162
  %v369 = vpack.c.bf16 %v188, %v163
  %v370 = vpack.c.bf16 %v182, %v164
  %v371 = vpack.c.bf16 %v232, %v208
  %v372 = vpack.c.bf16 %v233, %v209
  %v373 = vpack.c.bf16 %v234, %v210
  %v374 = vpack.c.bf16 %v235, %v211
  %v375 = vpack.c.bf16 %v236, %v212
  %v376 = vpack.c.bf16 %v230, %v206
  %v377 = vpack.c.bf16 %v280, %v256
  %v378 = vpack.c.bf16 %v281, %v257
  %v379 = vpack.c.bf16 %v282, %v258
  %v380 = vpack.c.bf16 %v283, %v259
  %v381 = vpack.c.bf16 %v284, %v260
  %v382 = vpack.c.bf16 %v278, %v254
  %v383 = vpack.c.bf16 %v328, %v304
  %v384 = vpack.c.bf16 %v329, %v305
  %v385 = vpack.c.bf16 %v330, %v306
  %v386 = vpack.c.bf16 %v331, %v307
  %v387 = vpack.c.bf16 %v332, %v308
  %v388 = vpack.c.bf16 %v326, %v302
  %v389 = vpack.c.bf16 %v352, %v352
  %v390 = vpack.c.bf16 %v353, %v353
  %v391 = vpack.c.bf16 %v354, %v354
  %v392 = vpack.c.bf16 %v355, %v355
  %v393 = vpack.c.bf16 %v356, %v356
  %v394 = vpack.c.bf16 %v350, %v350
  %v397 = vunpack.c.l.b16 %v363
  %v398 = vunpack.c.l.b16 %v364
  %v399 = vpack.c.b16 %v398, %v397
  %vm400 = vcmask 588800
  %v402 = vsel %vm400, %v399, 0
  %vm404 = vcmask 1043456
  %v406 = vsel %vm404, %v389, 0
  %v409 = vsel %vm404, %v390, 0
  %v412 = vsel %vm404, %v391, 0
  %v415 = vsel %vm404, %v392, 0
  %v418 = vsel %vm404, %v393, 0
  %v421 = vsel %vm404, %v394, 0
  %423 = vmatprep.subr.bf16.mxu0 %v366
  %424 = vmatpush1.bf16.msra.mxu0 %v365
  %425 = vmatprep.subr.bf16.mxu0 %v372
  %426 = vmatpush1.bf16.msra.mxu0 %v371
  %427 = vmatprep.subr.bf16.mxu0 %v378
  %428 = vmatpush1.bf16.msra.mxu0 %v377
  %429 = vmatprep.subr.bf16.mxu0 %v384
  %430 = vmatpush1.bf16.msra.mxu0 %v383
  %431 = vmatprep.subr.bf16.mxu0 %v409
  %432 = vmatpush1.bf16.msra.mxu0 %v406
  %433 = vmatprep.subr.bf16.mxu0 0
  %434 = vmatpush1.bf16.msra.mxu0 0
  %435 = vmatprep.subr.bf16.mxu0 0
  %436 = vmatpush1.bf16.msra.mxu0 0
  %437 = vmatprep.subr.bf16.mxu0 0
  %438 = vmatpush1.bf16.msra.mxu0 0
  %439 = vmatprep.subr.bf16.mxu0 0
  %440 = vmatpush1.bf16.msra.mxu0 0
  %441 = vmatprep.subr.bf16.mxu0 0
  %442 = vmatpush1.bf16.msra.mxu0 0
  %443 = vmatprep.subr.bf16.mxu0 0
  %444 = vmatpush1.bf16.msra.mxu0 0
  %445 = vmatprep.subr.bf16.mxu0 0
  %446 = vmatpush1.bf16.msra.mxu0 0
  %447 = vmatprep.subr.bf16.mxu0 0
  %448 = vmatpush1.bf16.msra.mxu0 0
  %449 = vmatprep.subr.bf16.mxu0 0
  %450 = vmatpush1.bf16.msra.mxu0 0
  %451 = vmatprep.subr.bf16.mxu0 0
  %452 = vmatpush1.bf16.msra.mxu0 0
  %453 = vmatprep.subr.bf16.mxu0 0
  %454 = vmatpush1.bf16.msra.mxu0 0
  %455 = vmatprep.mubr.bf16.mxu0 0
  %456 = vmatmul.mubr.bf16.gmra.mrb[0].mxu0 %v402
  %v457 = vpop.f32.mrb[0].mxu0
  %v458 = vadd.f32 0.0, %v457
  %v459 = vpop.f32.mrb[0].mxu0
  %v460 = vadd.f32 0.0, %v459
  %v461 = vpop.f32.mrb[0].mxu0
  %v462 = vadd.f32 0.0, %v461
  %v463 = vpop.f32.mrb[0].mxu0
  %v464 = vadd.f32 0.0, %v463
  %465 = vdwg.mxu0
  %466 = vmatprep.subr.bf16.mxu0 %v368
  %467 = vmatpush1.bf16.msra.mxu0 %v367
  %468 = vmatprep.subr.bf16.mxu0 %v374
  %469 = vmatpush1.bf16.msra.mxu0 %v373
  %470 = vmatprep.subr.bf16.mxu0 %v380
  %471 = vmatpush1.bf16.msra.mxu0 %v379
  %472 = vmatprep.subr.bf16.mxu0 %v386
  %473 = vmatpush1.bf16.msra.mxu0 %v385
  %474 = vmatprep.subr.bf16.mxu0 %v415
  %475 = vmatpush1.bf16.msra.mxu0 %v412
  %476 = vmatprep.subr.bf16.mxu0 0
  %477 = vmatpush1.bf16.msra.mxu0 0
  %478 = vmatprep.subr.bf16.mxu0 0
  %479 = vmatpush1.bf16.msra.mxu0 0
  %480 = vmatprep.subr.bf16.mxu0 0
  %481 = vmatpush1.bf16.msra.mxu0 0
  %482 = vmatprep.subr.bf16.mxu0 0
  %483 = vmatpush1.bf16.msra.mxu0 0
  %484 = vmatprep.subr.bf16.mxu0 0
  %485 = vmatpush1.bf16.msra.mxu0 0
  %486 = vmatprep.subr.bf16.mxu0 0
  %487 = vmatpush1.bf16.msra.mxu0 0
  %488 = vmatprep.subr.bf16.mxu0 0
  %489 = vmatpush1.bf16.msra.mxu0 0
  %490 = vmatprep.subr.bf16.mxu0 0
  %491 = vmatpush1.bf16.msra.mxu0 0
  %492 = vmatprep.subr.bf16.mxu0 0
  %493 = vmatpush1.bf16.msra.mxu0 0
  %494 = vmatprep.subr.bf16.mxu0 0
  %495 = vmatpush1.bf16.msra.mxu0 0
  %496 = vmatprep.subr.bf16.mxu0 0
  %497 = vmatpush1.bf16.msra.mxu0 0
  %498 = vmatprep.mubr.bf16.mxu0 0
  %499 = vmatmul.mubr.bf16.gmra.mrb[0].mxu0 %v402
  %v500 = vpop.f32.mrb[0].mxu0
  %v501 = vadd.f32 0.0, %v500
  %v502 = vpop.f32.mrb[0].mxu0
  %v503 = vadd.f32 0.0, %v502
  %v504 = vpop.f32.mrb[0].mxu0
  %v505 = vadd.f32 0.0, %v504
  %v506 = vpop.f32.mrb[0].mxu0
  %v507 = vadd.f32 0.0, %v506
  %508 = vdwg.mxu0
  %509 = vmatprep.subr.bf16.mxu0 %v370
  %510 = vmatpush1.bf16.msra.mxu0 %v369
  %511 = vmatprep.subr.bf16.mxu0 %v376
  %512 = vmatpush1.bf16.msra.mxu0 %v375
  %513 = vmatprep.subr.bf16.mxu0 %v382
  %514 = vmatpush1.bf16.msra.mxu0 %v381
  %515 = vmatprep.subr.bf16.mxu0 %v388
  %516 = vmatpush1.bf16.msra.mxu0 %v387
  %517 = vmatprep.subr.bf16.mxu0 %v421
  %518 = vmatpush1.bf16.msra.mxu0 %v418
  %519 = vmatprep.subr.bf16.mxu0 0
  %520 = vmatpush1.bf16.msra.mxu0 0
  %521 = vmatprep.subr.bf16.mxu0 0
  %522 = vmatpush1.bf16.msra.mxu0 0
  %523 = vmatprep.subr.bf16.mxu0 0
  %524 = vmatpush1.bf16.msra.mxu0 0
  %525 = vmatprep.subr.bf16.mxu0 0
  %526 = vmatpush1.bf16.msra.mxu0 0
  %527 = vmatprep.subr.bf16.mxu0 0
  %528 = vmatpush1.bf16.msra.mxu0 0
  %529 = vmatprep.subr.bf16.mxu0 0
  %530 = vmatpush1.bf16.msra.mxu0 0
  %531 = vmatprep.subr.bf16.mxu0 0
  %532 = vmatpush1.bf16.msra.mxu0 0
  %533 = vmatprep.subr.bf16.mxu0 0
  %534 = vmatpush1.bf16.msra.mxu0 0
  %535 = vmatprep.subr.bf16.mxu0 0
  %536 = vmatpush1.bf16.msra.mxu0 0
  %537 = vmatprep.subr.bf16.mxu0 0
  %538 = vmatpush1.bf16.msra.mxu0 0
  %539 = vmatprep.subr.bf16.mxu0 0
  %540 = vmatpush1.bf16.msra.mxu0 0
  %541 = vmatprep.mubr.bf16.mxu0 0
  %542 = vmatmul.mubr.bf16.gmra.mrb[0].mxu0 %v402
  %v543 = vpop.f32.mrb[0].mxu0
  %v544 = vadd.f32 0.0, %v543
  %v545 = vpop.f32.mrb[0].mxu0
  %v546 = vadd.f32 0.0, %v545
  %v547 = vpop.f32.mrb[0].mxu0
  %v548 = vadd.f32 0.0, %v547
  %v549 = vpop.f32.mrb[0].mxu0
  %v550 = vadd.f32 0.0, %v549
  %551 = vdwg.mxu0
  %v552 = vld [vmem:[%s9] sm:$0x3f]
  %v554 = vlaneseq
  %v555 = vshrl.u32 %v554, 7
  %v556 = vsub.s32 0, %v555
  %v557 = vrot.slane %v552, %v556
  %v558 = vlaneseq
  %v559 = vshrl.u32 %v558, 7
  %v560 = vsub.s32 1, %v559
  %v561 = vrot.slane %v552, %v560
  %v562 = vlaneseq
  %v563 = vshrl.u32 %v562, 7
  %v564 = vsub.s32 2, %v563
  %v565 = vrot.slane %v552, %v564
  %v566 = vlaneseq
  %v567 = vshrl.u32 %v566, 7
  %v568 = vsub.s32 3, %v567
  %v569 = vrot.slane %v552, %v568
  %v570 = vlaneseq
  %v571 = vshrl.u32 %v570, 7
  %v572 = vsub.s32 4, %v571
  %v573 = vrot.slane %v552, %v572
  %v574 = vlaneseq
  %v575 = vshrl.u32 %v574, 7
  %v576 = vsub.s32 5, %v575
  %v577 = vrot.slane %v552, %v576
  %v584 = vmul.f32 %v458, %v557
  %v585 = vmul.f32 %v460, %v561
  %v586 = vmul.f32 %v501, %v565
  %v587 = vmul.f32 %v503, %v569
  %v588 = vmul.f32 %v544, %v573
  %v589 = vmul.f32 %v546, %v577
  %v590 = vmul.f32 %v462, %v557
  %v591 = vmul.f32 %v464, %v561
  %v592 = vmul.f32 %v505, %v565
  %v593 = vmul.f32 %v507, %v569
  %v594 = vmul.f32 %v548, %v573
  %v595 = vmul.f32 %v550, %v577
  %v596 = vadd.f32 %v584, %v585
  %v597 = vadd.f32 %v596, %v586
  %v598 = vadd.f32 %v597, %v587
  %v599 = vadd.f32 %v598, %v588
  %vm600 = vcmask 64512
  %v601 = vsel %vm600, %v589, 0.0
  %v602 = vadd.f32 %v599, %v601
  %603 = vadd.xlane.f32.xlu0 %v602
  %v604 = vpop.xlane.xlu0 %603
  %v605 = vadd.f32 %v590, %v591
  %v606 = vadd.f32 %v605, %v592
  %v607 = vadd.f32 %v606, %v593
  %v608 = vadd.f32 %v607, %v594
  %v609 = vsel %vm600, %v595, 0.0
  %v610 = vadd.f32 %v608, %v609
  %611 = vadd.xlane.f32.xlu0 %v610
  %v612 = vpop.xlane.xlu0 %611
  %v613 = vmul.f32 %v604, 0.001953125
  %v614 = vmul.f32 %v612, 0.001953125
  %v615 = vmul.f32 %v458, %v458
  %v616 = vmul.f32 %v460, %v460
  %v617 = vmul.f32 %v501, %v501
  %v618 = vmul.f32 %v503, %v503
  %v619 = vmul.f32 %v544, %v544
  %v620 = vmul.f32 %v546, %v546
  %v621 = vmul.f32 %v462, %v462
  %v622 = vmul.f32 %v464, %v464
  %v623 = vmul.f32 %v505, %v505
  %v624 = vmul.f32 %v507, %v507
  %v625 = vmul.f32 %v548, %v548
  %v626 = vmul.f32 %v550, %v550
  %v627 = vmul.f32 %v615, %v557
  %v628 = vmul.f32 %v616, %v561
  %v629 = vmul.f32 %v617, %v565
  %v630 = vmul.f32 %v618, %v569
  %v631 = vmul.f32 %v619, %v573
  %v632 = vmul.f32 %v620, %v577
  %v633 = vmul.f32 %v621, %v557
  %v634 = vmul.f32 %v622, %v561
  %v635 = vmul.f32 %v623, %v565
  %v636 = vmul.f32 %v624, %v569
  %v637 = vmul.f32 %v625, %v573
  %v638 = vmul.f32 %v626, %v577
  %v639 = vadd.f32 %v627, %v628
  %v640 = vadd.f32 %v639, %v629
  %v641 = vadd.f32 %v640, %v630
  %v642 = vadd.f32 %v641, %v631
  %v643 = vsel %vm600, %v632, 0.0
  %v644 = vadd.f32 %v642, %v643
  %645 = vadd.xlane.f32.xlu0 %v644
  %v646 = vpop.xlane.xlu0 %645
  %v647 = vadd.f32 %v633, %v634
  %v648 = vadd.f32 %v647, %v635
  %v649 = vadd.f32 %v648, %v636
  %v650 = vadd.f32 %v649, %v637
  %v651 = vsel %vm600, %v638, 0.0
  %v652 = vadd.f32 %v650, %v651
  %653 = vadd.xlane.f32.xlu0 %v652
  %v654 = vpop.xlane.xlu0 %653
  %v655 = vmul.f32 %v646, 0.001953125
  %v656 = vmul.f32 %v654, 0.001953125
  %v657 = vmul.f32 %v613, %v613
  %v658 = vmul.f32 %v614, %v614
  %v659 = vsub.f32 %v655, %v657
  %v660 = vsub.f32 %v656, %v658
  %v661 = vld [vmem:[%s3] sm:$0xff]
  %v662 = vld [vmem:[%s3 + $0x8] sm:$0xff]
  %v663 = vadd.f32 %v659, 1e-05
  %v664 = vadd.f32 %v660, 1e-05
  %v665 = vrsqrt.pop %v663
  %v666 = vrsqrt.pop %v664
  %v667 = vmul.f32 %v661, %v665
  %v668 = vmul.f32 %v662, %v666
  %670 = vset.pattern.permute.xlu0 0
  %671 = vperm.xlu0 %670, %v667
  %v672 = vpop.permute.xlu0 %671
  %675 = vset.pattern.permute.xlu0 0
  %676 = vperm.xlu0 %675, %v668
  %v677 = vpop.permute.xlu0 %676
  %v679 = vmul.f32 %v458, %v672
  %v680 = vmul.f32 %v460, %v672
  %v681 = vmul.f32 %v501, %v672
  %v682 = vmul.f32 %v503, %v672
  %v683 = vmul.f32 %v544, %v672
  %v684 = vmul.f32 %v546, %v672
  %v685 = vmul.f32 %v462, %v677
  %v686 = vmul.f32 %v464, %v677
  %v687 = vmul.f32 %v505, %v677
  %v688 = vmul.f32 %v507, %v677
  %v689 = vmul.f32 %v548, %v677
  %v690 = vmul.f32 %v550, %v677
  %v691 = vld [vmem:[%s5] sm:$0xff]
  %v692 = vld [vmem:[%s5 + $0x8] sm:$0xff]
  %v693 = vmul.f32 %v613, %v667
  %v694 = vmul.f32 %v614, %v668
  %v695 = vsub.f32 %v691, %v693
  %v696 = vsub.f32 %v692, %v694
  %698 = vset.pattern.permute.xlu0 0
  %699 = vperm.xlu0 %698, %v695
  %v700 = vpop.permute.xlu0 %699
  %703 = vset.pattern.permute.xlu0 0
  %704 = vperm.xlu0 %703, %v696
  %v705 = vpop.permute.xlu0 %704
  %v707 = vadd.f32 %v679, %v700
  %v708 = vadd.f32 %v680, %v700
  %v709 = vadd.f32 %v681, %v700
  %v710 = vadd.f32 %v682, %v700
  %v711 = vadd.f32 %v683, %v700
  %v712 = vadd.f32 %v684, %v700
  %v713 = vadd.f32 %v685, %v705
  %v714 = vadd.f32 %v686, %v705
  %v715 = vadd.f32 %v687, %v705
  %v716 = vadd.f32 %v688, %v705
  %v717 = vadd.f32 %v689, %v705
  %v718 = vadd.f32 %v690, %v705
  %v719 = vmax.f32 %v707, 0.0
  %v720 = vmax.f32 %v708, 0.0
  %v721 = vmax.f32 %v709, 0.0
  %v722 = vmax.f32 %v710, 0.0
  %v723 = vmax.f32 %v711, 0.0
  %v724 = vmax.f32 %v712, 0.0
  %v725 = vmax.f32 %v713, 0.0
  %v726 = vmax.f32 %v714, 0.0
  %v727 = vmax.f32 %v715, 0.0
  %v728 = vmax.f32 %v716, 0.0
  %v729 = vmax.f32 %v717, 0.0
  %v730 = vmax.f32 %v718, 0.0
  %v731 = vmul.f32 %v719, %v557
  %v732 = vmul.f32 %v720, %v561
  %v733 = vmul.f32 %v721, %v565
  %v734 = vmul.f32 %v722, %v569
  %v735 = vmul.f32 %v723, %v573
  %v736 = vmul.f32 %v724, %v577
  %v737 = vmul.f32 %v725, %v557
  %v738 = vmul.f32 %v726, %v561
  %v739 = vmul.f32 %v727, %v565
  %v740 = vmul.f32 %v728, %v569
  %v741 = vmul.f32 %v729, %v573
  %v742 = vmul.f32 %v730, %v577
  %755 = vrot.lane.b32.xlu0 %v731, 19
  %v756 = vpop.permute.xlu0 %755
  %757 = vrot.lane.b32.xlu0 %v732, 19
  %v758 = vpop.permute.xlu0 %757
  %759 = vrot.lane.b32.xlu0 %v733, 19
  %v760 = vpop.permute.xlu0 %759
  %761 = vrot.lane.b32.xlu0 %v734, 19
  %v762 = vpop.permute.xlu0 %761
  %763 = vrot.lane.b32.xlu0 %v735, 19
  %v764 = vpop.permute.xlu0 %763
  %765 = vrot.lane.b32.xlu0 %v736, 19
  %v766 = vpop.permute.xlu0 %765
  %767 = vrot.lane.b32.xlu0 %v737, 19
  %v768 = vpop.permute.xlu0 %767
  %769 = vrot.lane.b32.xlu0 %v738, 19
  %v770 = vpop.permute.xlu0 %769
  %771 = vrot.lane.b32.xlu0 %v739, 19
  %v772 = vpop.permute.xlu0 %771
  %773 = vrot.lane.b32.xlu0 %v740, 19
  %v774 = vpop.permute.xlu0 %773
  %775 = vrot.lane.b32.xlu0 %v741, 19
  %v776 = vpop.permute.xlu0 %775
  %777 = vrot.lane.b32.xlu0 %v742, 19
  %v778 = vpop.permute.xlu0 %777
  %vm779 = vcmask 154624
  %v780 = vsel %vm779, %v756, %v758
  %v781 = vsel %vm779, %v758, %v760
  %v782 = vsel %vm779, %v760, %v762
  %v783 = vsel %vm779, %v762, %v764
  %v784 = vsel %vm779, %v764, %v766
  %v785 = vsel %vm779, %v768, %v770
  %v786 = vsel %vm779, %v770, %v772
  %v787 = vsel %vm779, %v772, %v774
  %v788 = vsel %vm779, %v774, %v776
  %v789 = vsel %vm779, %v776, %v778
  %v802 = vsel %vm779, 0.0, %v756
  %v803 = vsel %vm779, 0.0, %v768
  %vm804 = vcmask 220160
  %v805 = vsel %vm804, %v784, 0.0
  %v806 = vsel %vm804, %v789, 0.0
  %811 = vrot.lane.b32.xlu0 %v802, 127
  %v812 = vpop.permute.xlu0 %811
  %813 = vrot.lane.b32.xlu0 %v780, 127
  %v814 = vpop.permute.xlu0 %813
  %815 = vrot.lane.b32.xlu0 %v781, 127
  %v816 = vpop.permute.xlu0 %815
  %817 = vrot.lane.b32.xlu0 %v782, 127
  %v818 = vpop.permute.xlu0 %817
  %819 = vrot.lane.b32.xlu0 %v783, 127
  %v820 = vpop.permute.xlu0 %819
  %821 = vrot.lane.b32.xlu0 %v805, 127
  %v822 = vpop.permute.xlu0 %821
  %823 = vrot.lane.b32.xlu0 %v803, 127
  %v824 = vpop.permute.xlu0 %823
  %825 = vrot.lane.b32.xlu0 %v785, 127
  %v826 = vpop.permute.xlu0 %825
  %827 = vrot.lane.b32.xlu0 %v786, 127
  %v828 = vpop.permute.xlu0 %827
  %829 = vrot.lane.b32.xlu0 %v787, 127
  %v830 = vpop.permute.xlu0 %829
  %831 = vrot.lane.b32.xlu0 %v788, 127
  %v832 = vpop.permute.xlu0 %831
  %833 = vrot.lane.b32.xlu0 %v806, 127
  %v834 = vpop.permute.xlu0 %833
  %v835 = vsel %vm183, %v812, %v814
  %v836 = vsel %vm183, %v814, %v816
  %v837 = vsel %vm183, %v816, %v818
  %v838 = vsel %vm183, %v818, %v820
  %v839 = vsel %vm183, %v820, %v822
  %v840 = vsel %vm183, %v824, %v826
  %v841 = vsel %vm183, %v826, %v828
  %v842 = vsel %vm183, %v828, %v830
  %v843 = vsel %vm183, %v830, %v832
  %v844 = vsel %vm183, %v832, %v834
  %857 = vrot.lane.b32.xlu0 %v802, 126
  %v858 = vpop.permute.xlu0 %857
  %859 = vrot.lane.b32.xlu0 %v780, 126
  %v860 = vpop.permute.xlu0 %859
  %861 = vrot.lane.b32.xlu0 %v781, 126
  %v862 = vpop.permute.xlu0 %861
  %863 = vrot.lane.b32.xlu0 %v782, 126
  %v864 = vpop.permute.xlu0 %863
  %865 = vrot.lane.b32.xlu0 %v783, 126
  %v866 = vpop.permute.xlu0 %865
  %867 = vrot.lane.b32.xlu0 %v805, 126
  %v868 = vpop.permute.xlu0 %867
  %869 = vrot.lane.b32.xlu0 %v803, 126
  %v870 = vpop.permute.xlu0 %869
  %871 = vrot.lane.b32.xlu0 %v785, 126
  %v872 = vpop.permute.xlu0 %871
  %873 = vrot.lane.b32.xlu0 %v786, 126
  %v874 = vpop.permute.xlu0 %873
  %875 = vrot.lane.b32.xlu0 %v787, 126
  %v876 = vpop.permute.xlu0 %875
  %877 = vrot.lane.b32.xlu0 %v788, 126
  %v878 = vpop.permute.xlu0 %877
  %879 = vrot.lane.b32.xlu0 %v806, 126
  %v880 = vpop.permute.xlu0 %879
  %v881 = vsel %vm207, %v858, %v860
  %v882 = vsel %vm207, %v860, %v862
  %v883 = vsel %vm207, %v862, %v864
  %v884 = vsel %vm207, %v864, %v866
  %v885 = vsel %vm207, %v866, %v868
  %v886 = vsel %vm207, %v870, %v872
  %v887 = vsel %vm207, %v872, %v874
  %v888 = vsel %vm207, %v874, %v876
  %v889 = vsel %vm207, %v876, %v878
  %v890 = vsel %vm207, %v878, %v880
  %903 = vrot.lane.b32.xlu0 %v802, 110
  %v904 = vpop.permute.xlu0 %903
  %905 = vrot.lane.b32.xlu0 %v780, 110
  %v906 = vpop.permute.xlu0 %905
  %907 = vrot.lane.b32.xlu0 %v781, 110
  %v908 = vpop.permute.xlu0 %907
  %909 = vrot.lane.b32.xlu0 %v782, 110
  %v910 = vpop.permute.xlu0 %909
  %911 = vrot.lane.b32.xlu0 %v783, 110
  %v912 = vpop.permute.xlu0 %911
  %913 = vrot.lane.b32.xlu0 %v805, 110
  %v914 = vpop.permute.xlu0 %913
  %915 = vrot.lane.b32.xlu0 %v803, 110
  %v916 = vpop.permute.xlu0 %915
  %917 = vrot.lane.b32.xlu0 %v785, 110
  %v918 = vpop.permute.xlu0 %917
  %919 = vrot.lane.b32.xlu0 %v786, 110
  %v920 = vpop.permute.xlu0 %919
  %921 = vrot.lane.b32.xlu0 %v787, 110
  %v922 = vpop.permute.xlu0 %921
  %923 = vrot.lane.b32.xlu0 %v788, 110
  %v924 = vpop.permute.xlu0 %923
  %925 = vrot.lane.b32.xlu0 %v806, 110
  %v926 = vpop.permute.xlu0 %925
  %v927 = vsel %vm231, %v904, %v906
  %v928 = vsel %vm231, %v906, %v908
  %v929 = vsel %vm231, %v908, %v910
  %v930 = vsel %vm231, %v910, %v912
  %v931 = vsel %vm231, %v912, %v914
  %v932 = vsel %vm231, %v916, %v918
  %v933 = vsel %vm231, %v918, %v920
  %v934 = vsel %vm231, %v920, %v922
  %v935 = vsel %vm231, %v922, %v924
  %v936 = vsel %vm231, %v924, %v926
  %949 = vrot.lane.b32.xlu0 %v802, 109
  %v950 = vpop.permute.xlu0 %949
  %951 = vrot.lane.b32.xlu0 %v780, 109
  %v952 = vpop.permute.xlu0 %951
  %953 = vrot.lane.b32.xlu0 %v781, 109
  %v954 = vpop.permute.xlu0 %953
  %955 = vrot.lane.b32.xlu0 %v782, 109
  %v956 = vpop.permute.xlu0 %955
  %957 = vrot.lane.b32.xlu0 %v783, 109
  %v958 = vpop.permute.xlu0 %957
  %959 = vrot.lane.b32.xlu0 %v805, 109
  %v960 = vpop.permute.xlu0 %959
  %961 = vrot.lane.b32.xlu0 %v803, 109
  %v962 = vpop.permute.xlu0 %961
  %963 = vrot.lane.b32.xlu0 %v785, 109
  %v964 = vpop.permute.xlu0 %963
  %965 = vrot.lane.b32.xlu0 %v786, 109
  %v966 = vpop.permute.xlu0 %965
  %967 = vrot.lane.b32.xlu0 %v787, 109
  %v968 = vpop.permute.xlu0 %967
  %969 = vrot.lane.b32.xlu0 %v788, 109
  %v970 = vpop.permute.xlu0 %969
  %971 = vrot.lane.b32.xlu0 %v806, 109
  %v972 = vpop.permute.xlu0 %971
  %v973 = vsel %vm255, %v950, %v952
  %v974 = vsel %vm255, %v952, %v954
  %v975 = vsel %vm255, %v954, %v956
  %v976 = vsel %vm255, %v956, %v958
  %v977 = vsel %vm255, %v958, %v960
  %v978 = vsel %vm255, %v962, %v964
  %v979 = vsel %vm255, %v964, %v966
  %v980 = vsel %vm255, %v966, %v968
  %v981 = vsel %vm255, %v968, %v970
  %v982 = vsel %vm255, %v970, %v972
  %995 = vrot.lane.b32.xlu0 %v802, 108
  %v996 = vpop.permute.xlu0 %995
  %997 = vrot.lane.b32.xlu0 %v780, 108
  %v998 = vpop.permute.xlu0 %997
  %999 = vrot.lane.b32.xlu0 %v781, 108
  %v1000 = vpop.permute.xlu0 %999
  %1001 = vrot.lane.b32.xlu0 %v782, 108
  %v1002 = vpop.permute.xlu0 %1001
  %1003 = vrot.lane.b32.xlu0 %v783, 108
  %v1004 = vpop.permute.xlu0 %1003
  %1005 = vrot.lane.b32.xlu0 %v805, 108
  %v1006 = vpop.permute.xlu0 %1005
  %1007 = vrot.lane.b32.xlu0 %v803, 108
  %v1008 = vpop.permute.xlu0 %1007
  %1009 = vrot.lane.b32.xlu0 %v785, 108
  %v1010 = vpop.permute.xlu0 %1009
  %1011 = vrot.lane.b32.xlu0 %v786, 108
  %v1012 = vpop.permute.xlu0 %1011
  %1013 = vrot.lane.b32.xlu0 %v787, 108
  %v1014 = vpop.permute.xlu0 %1013
  %1015 = vrot.lane.b32.xlu0 %v788, 108
  %v1016 = vpop.permute.xlu0 %1015
  %1017 = vrot.lane.b32.xlu0 %v806, 108
  %v1018 = vpop.permute.xlu0 %1017
  %v1019 = vsel %vm279, %v996, %v998
  %v1020 = vsel %vm279, %v998, %v1000
  %v1021 = vsel %vm279, %v1000, %v1002
  %v1022 = vsel %vm279, %v1002, %v1004
  %v1023 = vsel %vm279, %v1004, %v1006
  %v1024 = vsel %vm279, %v1008, %v1010
  %v1025 = vsel %vm279, %v1010, %v1012
  %v1026 = vsel %vm279, %v1012, %v1014
  %v1027 = vsel %vm279, %v1014, %v1016
  %v1028 = vsel %vm279, %v1016, %v1018
  %1041 = vrot.lane.b32.xlu0 %v802, 92
  %v1042 = vpop.permute.xlu0 %1041
  %1043 = vrot.lane.b32.xlu0 %v780, 92
  %v1044 = vpop.permute.xlu0 %1043
  %1045 = vrot.lane.b32.xlu0 %v781, 92
  %v1046 = vpop.permute.xlu0 %1045
  %1047 = vrot.lane.b32.xlu0 %v782, 92
  %v1048 = vpop.permute.xlu0 %1047
  %1049 = vrot.lane.b32.xlu0 %v783, 92
  %v1050 = vpop.permute.xlu0 %1049
  %1051 = vrot.lane.b32.xlu0 %v805, 92
  %v1052 = vpop.permute.xlu0 %1051
  %1053 = vrot.lane.b32.xlu0 %v803, 92
  %v1054 = vpop.permute.xlu0 %1053
  %1055 = vrot.lane.b32.xlu0 %v785, 92
  %v1056 = vpop.permute.xlu0 %1055
  %1057 = vrot.lane.b32.xlu0 %v786, 92
  %v1058 = vpop.permute.xlu0 %1057
  %1059 = vrot.lane.b32.xlu0 %v787, 92
  %v1060 = vpop.permute.xlu0 %1059
  %1061 = vrot.lane.b32.xlu0 %v788, 92
  %v1062 = vpop.permute.xlu0 %1061
  %1063 = vrot.lane.b32.xlu0 %v806, 92
  %v1064 = vpop.permute.xlu0 %1063
  %v1065 = vsel %vm303, %v1042, %v1044
  %v1066 = vsel %vm303, %v1044, %v1046
  %v1067 = vsel %vm303, %v1046, %v1048
  %v1068 = vsel %vm303, %v1048, %v1050
  %v1069 = vsel %vm303, %v1050, %v1052
  %v1070 = vsel %vm303, %v1054, %v1056
  %v1071 = vsel %vm303, %v1056, %v1058
  %v1072 = vsel %vm303, %v1058, %v1060
  %v1073 = vsel %vm303, %v1060, %v1062
  %v1074 = vsel %vm303, %v1062, %v1064
  %1087 = vrot.lane.b32.xlu0 %v802, 91
  %v1088 = vpop.permute.xlu0 %1087
  %1089 = vrot.lane.b32.xlu0 %v780, 91
  %v1090 = vpop.permute.xlu0 %1089
  %1091 = vrot.lane.b32.xlu0 %v781, 91
  %v1092 = vpop.permute.xlu0 %1091
  %1093 = vrot.lane.b32.xlu0 %v782, 91
  %v1094 = vpop.permute.xlu0 %1093
  %1095 = vrot.lane.b32.xlu0 %v783, 91
  %v1096 = vpop.permute.xlu0 %1095
  %1097 = vrot.lane.b32.xlu0 %v805, 91
  %v1098 = vpop.permute.xlu0 %1097
  %1099 = vrot.lane.b32.xlu0 %v803, 91
  %v1100 = vpop.permute.xlu0 %1099
  %1101 = vrot.lane.b32.xlu0 %v785, 91
  %v1102 = vpop.permute.xlu0 %1101
  %1103 = vrot.lane.b32.xlu0 %v786, 91
  %v1104 = vpop.permute.xlu0 %1103
  %1105 = vrot.lane.b32.xlu0 %v787, 91
  %v1106 = vpop.permute.xlu0 %1105
  %1107 = vrot.lane.b32.xlu0 %v788, 91
  %v1108 = vpop.permute.xlu0 %1107
  %1109 = vrot.lane.b32.xlu0 %v806, 91
  %v1110 = vpop.permute.xlu0 %1109
  %v1111 = vsel %vm327, %v1088, %v1090
  %v1112 = vsel %vm327, %v1090, %v1092
  %v1113 = vsel %vm327, %v1092, %v1094
  %v1114 = vsel %vm327, %v1094, %v1096
  %v1115 = vsel %vm327, %v1096, %v1098
  %v1116 = vsel %vm327, %v1100, %v1102
  %v1117 = vsel %vm327, %v1102, %v1104
  %v1118 = vsel %vm327, %v1104, %v1106
  %v1119 = vsel %vm327, %v1106, %v1108
  %v1120 = vsel %vm327, %v1108, %v1110
  %1133 = vrot.lane.b32.xlu0 %v802, 90
  %v1134 = vpop.permute.xlu0 %1133
  %1135 = vrot.lane.b32.xlu0 %v780, 90
  %v1136 = vpop.permute.xlu0 %1135
  %1137 = vrot.lane.b32.xlu0 %v781, 90
  %v1138 = vpop.permute.xlu0 %1137
  %1139 = vrot.lane.b32.xlu0 %v782, 90
  %v1140 = vpop.permute.xlu0 %1139
  %1141 = vrot.lane.b32.xlu0 %v783, 90
  %v1142 = vpop.permute.xlu0 %1141
  %1143 = vrot.lane.b32.xlu0 %v805, 90
  %v1144 = vpop.permute.xlu0 %1143
  %1145 = vrot.lane.b32.xlu0 %v803, 90
  %v1146 = vpop.permute.xlu0 %1145
  %1147 = vrot.lane.b32.xlu0 %v785, 90
  %v1148 = vpop.permute.xlu0 %1147
  %1149 = vrot.lane.b32.xlu0 %v786, 90
  %v1150 = vpop.permute.xlu0 %1149
  %1151 = vrot.lane.b32.xlu0 %v787, 90
  %v1152 = vpop.permute.xlu0 %1151
  %1153 = vrot.lane.b32.xlu0 %v788, 90
  %v1154 = vpop.permute.xlu0 %1153
  %1155 = vrot.lane.b32.xlu0 %v806, 90
  %v1156 = vpop.permute.xlu0 %1155
  %v1157 = vsel %vm351, %v1134, %v1136
  %v1158 = vsel %vm351, %v1136, %v1138
  %v1159 = vsel %vm351, %v1138, %v1140
  %v1160 = vsel %vm351, %v1140, %v1142
  %v1161 = vsel %vm351, %v1142, %v1144
  %v1162 = vsel %vm351, %v1146, %v1148
  %v1163 = vsel %vm351, %v1148, %v1150
  %v1164 = vsel %vm351, %v1150, %v1152
  %v1165 = vsel %vm351, %v1152, %v1154
  %v1166 = vsel %vm351, %v1154, %v1156
  %v1179 = vld [vmem:[%s15] sm:$0xff]
  %v1180 = vld [vmem:[%s15 + $0x8] sm:$0xff]
  %v1181 = vpack.c.bf16 %v803, %v802
  %v1182 = vpack.c.bf16 %v785, %v780
  %v1183 = vpack.c.bf16 %v786, %v781
  %v1184 = vpack.c.bf16 %v787, %v782
  %v1185 = vpack.c.bf16 %v788, %v783
  %v1186 = vpack.c.bf16 %v806, %v805
  %v1187 = vpack.c.bf16 %v840, %v835
  %v1188 = vpack.c.bf16 %v841, %v836
  %v1189 = vpack.c.bf16 %v842, %v837
  %v1190 = vpack.c.bf16 %v843, %v838
  %v1191 = vpack.c.bf16 %v844, %v839
  %v1192 = vpack.c.bf16 %v834, %v822
  %v1193 = vpack.c.bf16 %v886, %v881
  %v1194 = vpack.c.bf16 %v887, %v882
  %v1195 = vpack.c.bf16 %v888, %v883
  %v1196 = vpack.c.bf16 %v889, %v884
  %v1197 = vpack.c.bf16 %v890, %v885
  %v1198 = vpack.c.bf16 %v880, %v868
  %v1199 = vpack.c.bf16 %v932, %v927
  %v1200 = vpack.c.bf16 %v933, %v928
  %v1201 = vpack.c.bf16 %v934, %v929
  %v1202 = vpack.c.bf16 %v935, %v930
  %v1203 = vpack.c.bf16 %v936, %v931
  %v1204 = vpack.c.bf16 %v926, %v914
  %v1205 = vpack.c.bf16 %v978, %v973
  %v1206 = vpack.c.bf16 %v979, %v974
  %v1207 = vpack.c.bf16 %v980, %v975
  %v1208 = vpack.c.bf16 %v981, %v976
  %v1209 = vpack.c.bf16 %v982, %v977
  %v1210 = vpack.c.bf16 %v972, %v960
  %v1211 = vpack.c.bf16 %v1024, %v1019
  %v1212 = vpack.c.bf16 %v1025, %v1020
  %v1213 = vpack.c.bf16 %v1026, %v1021
  %v1214 = vpack.c.bf16 %v1027, %v1022
  %v1215 = vpack.c.bf16 %v1028, %v1023
  %v1216 = vpack.c.bf16 %v1018, %v1006
  %v1217 = vpack.c.bf16 %v1070, %v1065
  %v1218 = vpack.c.bf16 %v1071, %v1066
  %v1219 = vpack.c.bf16 %v1072, %v1067
  %v1220 = vpack.c.bf16 %v1073, %v1068
  %v1221 = vpack.c.bf16 %v1074, %v1069
  %v1222 = vpack.c.bf16 %v1064, %v1052
  %v1223 = vpack.c.bf16 %v1116, %v1111
  %v1224 = vpack.c.bf16 %v1117, %v1112
  %v1225 = vpack.c.bf16 %v1118, %v1113
  %v1226 = vpack.c.bf16 %v1119, %v1114
  %v1227 = vpack.c.bf16 %v1120, %v1115
  %v1228 = vpack.c.bf16 %v1110, %v1098
  %v1229 = vpack.c.bf16 %v1162, %v1157
  %v1230 = vpack.c.bf16 %v1163, %v1158
  %v1231 = vpack.c.bf16 %v1164, %v1159
  %v1232 = vpack.c.bf16 %v1165, %v1160
  %v1233 = vpack.c.bf16 %v1166, %v1161
  %v1234 = vpack.c.bf16 %v1156, %v1144
  %v1237 = vunpack.c.l.b16 %v1179
  %v1238 = vunpack.c.h.b16 %v1179
  %v1239 = vunpack.c.l.b16 %v1180
  %v1240 = vunpack.c.h.b16 %v1180
  %v1241 = vpack.c.b16 %v1239, %v1237
  %v1242 = vpack.c.b16 %v1240, %v1238
  %vm1244 = vcmask 130048
  %v1246 = vsel %vm1244, %v1242, 0
  %1248 = vmatprep.subr.bf16.mxu0 %v1182
  %1249 = vmatpush1.bf16.msra.mxu0 %v1181
  %1250 = vmatprep.subr.bf16.mxu0 %v1188
  %1251 = vmatpush1.bf16.msra.mxu0 %v1187
  %1252 = vmatprep.subr.bf16.mxu0 %v1194
  %1253 = vmatpush1.bf16.msra.mxu0 %v1193
  %1254 = vmatprep.subr.bf16.mxu0 %v1200
  %1255 = vmatpush1.bf16.msra.mxu0 %v1199
  %1256 = vmatprep.subr.bf16.mxu0 %v1206
  %1257 = vmatpush1.bf16.msra.mxu0 %v1205
  %1258 = vmatprep.subr.bf16.mxu0 %v1212
  %1259 = vmatpush1.bf16.msra.mxu0 %v1211
  %1260 = vmatprep.subr.bf16.mxu0 %v1218
  %1261 = vmatpush1.bf16.msra.mxu0 %v1217
  %1262 = vmatprep.subr.bf16.mxu0 %v1224
  %1263 = vmatpush1.bf16.msra.mxu0 %v1223
  %1264 = vmatprep.subr.bf16.mxu0 %v1230
  %1265 = vmatpush1.bf16.msra.mxu0 %v1229
  %1266 = vmatprep.subr.bf16.mxu0 0
  %1267 = vmatpush1.bf16.msra.mxu0 0
  %1268 = vmatprep.subr.bf16.mxu0 0
  %1269 = vmatpush1.bf16.msra.mxu0 0
  %1270 = vmatprep.subr.bf16.mxu0 0
  %1271 = vmatpush1.bf16.msra.mxu0 0
  %1272 = vmatprep.subr.bf16.mxu0 0
  %1273 = vmatpush1.bf16.msra.mxu0 0
  %1274 = vmatprep.subr.bf16.mxu0 0
  %1275 = vmatpush1.bf16.msra.mxu0 0
  %1276 = vmatprep.subr.bf16.mxu0 0
  %1277 = vmatpush1.bf16.msra.mxu0 0
  %1278 = vmatprep.subr.bf16.mxu0 0
  %1279 = vmatpush1.bf16.msra.mxu0 0
  %1280 = vmatprep.mubr.bf16.mxu0 %v1246
  %1281 = vmatmul.mubr.bf16.gmra.mrb[0].mxu0 %v1241
  %v1282 = vpop.f32.mrb[0].mxu0
  %v1283 = vadd.f32 0.0, %v1282
  %v1284 = vpop.f32.mrb[0].mxu0
  %v1285 = vadd.f32 0.0, %v1284
  %v1286 = vpop.f32.mrb[0].mxu0
  %v1287 = vadd.f32 0.0, %v1286
  %v1288 = vpop.f32.mrb[0].mxu0
  %v1289 = vadd.f32 0.0, %v1288
  %1290 = vdwg.mxu0
  %1291 = vmatprep.subr.bf16.mxu0 %v1184
  %1292 = vmatpush1.bf16.msra.mxu0 %v1183
  %1293 = vmatprep.subr.bf16.mxu0 %v1190
  %1294 = vmatpush1.bf16.msra.mxu0 %v1189
  %1295 = vmatprep.subr.bf16.mxu0 %v1196
  %1296 = vmatpush1.bf16.msra.mxu0 %v1195
  %1297 = vmatprep.subr.bf16.mxu0 %v1202
  %1298 = vmatpush1.bf16.msra.mxu0 %v1201
  %1299 = vmatprep.subr.bf16.mxu0 %v1208
  %1300 = vmatpush1.bf16.msra.mxu0 %v1207
  %1301 = vmatprep.subr.bf16.mxu0 %v1214
  %1302 = vmatpush1.bf16.msra.mxu0 %v1213
  %1303 = vmatprep.subr.bf16.mxu0 %v1220
  %1304 = vmatpush1.bf16.msra.mxu0 %v1219
  %1305 = vmatprep.subr.bf16.mxu0 %v1226
  %1306 = vmatpush1.bf16.msra.mxu0 %v1225
  %1307 = vmatprep.subr.bf16.mxu0 %v1232
  %1308 = vmatpush1.bf16.msra.mxu0 %v1231
  %1309 = vmatprep.subr.bf16.mxu0 0
  %1310 = vmatpush1.bf16.msra.mxu0 0
  %1311 = vmatprep.subr.bf16.mxu0 0
  %1312 = vmatpush1.bf16.msra.mxu0 0
  %1313 = vmatprep.subr.bf16.mxu0 0
  %1314 = vmatpush1.bf16.msra.mxu0 0
  %1315 = vmatprep.subr.bf16.mxu0 0
  %1316 = vmatpush1.bf16.msra.mxu0 0
  %1317 = vmatprep.subr.bf16.mxu0 0
  %1318 = vmatpush1.bf16.msra.mxu0 0
  %1319 = vmatprep.subr.bf16.mxu0 0
  %1320 = vmatpush1.bf16.msra.mxu0 0
  %1321 = vmatprep.subr.bf16.mxu0 0
  %1322 = vmatpush1.bf16.msra.mxu0 0
  %1323 = vmatprep.mubr.bf16.mxu0 %v1246
  %1324 = vmatmul.mubr.bf16.gmra.mrb[0].mxu0 %v1241
  %v1325 = vpop.f32.mrb[0].mxu0
  %v1326 = vadd.f32 0.0, %v1325
  %v1327 = vpop.f32.mrb[0].mxu0
  %v1328 = vadd.f32 0.0, %v1327
  %v1329 = vpop.f32.mrb[0].mxu0
  %v1330 = vadd.f32 0.0, %v1329
  %v1331 = vpop.f32.mrb[0].mxu0
  %v1332 = vadd.f32 0.0, %v1331
  %1333 = vdwg.mxu0
  %1334 = vmatprep.subr.bf16.mxu0 %v1186
  %1335 = vmatpush1.bf16.msra.mxu0 %v1185
  %1336 = vmatprep.subr.bf16.mxu0 %v1192
  %1337 = vmatpush1.bf16.msra.mxu0 %v1191
  %1338 = vmatprep.subr.bf16.mxu0 %v1198
  %1339 = vmatpush1.bf16.msra.mxu0 %v1197
  %1340 = vmatprep.subr.bf16.mxu0 %v1204
  %1341 = vmatpush1.bf16.msra.mxu0 %v1203
  %1342 = vmatprep.subr.bf16.mxu0 %v1210
  %1343 = vmatpush1.bf16.msra.mxu0 %v1209
  %1344 = vmatprep.subr.bf16.mxu0 %v1216
  %1345 = vmatpush1.bf16.msra.mxu0 %v1215
  %1346 = vmatprep.subr.bf16.mxu0 %v1222
  %1347 = vmatpush1.bf16.msra.mxu0 %v1221
  %1348 = vmatprep.subr.bf16.mxu0 %v1228
  %1349 = vmatpush1.bf16.msra.mxu0 %v1227
  %1350 = vmatprep.subr.bf16.mxu0 %v1234
  %1351 = vmatpush1.bf16.msra.mxu0 %v1233
  %1352 = vmatprep.subr.bf16.mxu0 0
  %1353 = vmatpush1.bf16.msra.mxu0 0
  %1354 = vmatprep.subr.bf16.mxu0 0
  %1355 = vmatpush1.bf16.msra.mxu0 0
  %1356 = vmatprep.subr.bf16.mxu0 0
  %1357 = vmatpush1.bf16.msra.mxu0 0
  %1358 = vmatprep.subr.bf16.mxu0 0
  %1359 = vmatpush1.bf16.msra.mxu0 0
  %1360 = vmatprep.subr.bf16.mxu0 0
  %1361 = vmatpush1.bf16.msra.mxu0 0
  %1362 = vmatprep.subr.bf16.mxu0 0
  %1363 = vmatpush1.bf16.msra.mxu0 0
  %1364 = vmatprep.subr.bf16.mxu0 0
  %1365 = vmatpush1.bf16.msra.mxu0 0
  %1366 = vmatprep.mubr.bf16.mxu0 %v1246
  %1367 = vmatmul.mubr.bf16.gmra.mrb[0].mxu0 %v1241
  %v1368 = vpop.f32.mrb[0].mxu0
  %v1369 = vadd.f32 0.0, %v1368
  %v1370 = vpop.f32.mrb[0].mxu0
  %v1371 = vadd.f32 0.0, %v1370
  %v1372 = vpop.f32.mrb[0].mxu0
  %v1373 = vadd.f32 0.0, %v1372
  %v1374 = vpop.f32.mrb[0].mxu0
  %v1375 = vadd.f32 0.0, %v1374
  %1376 = vdwg.mxu0
  %v1377 = vmul.f32 %v1283, %v557
  %v1378 = vmul.f32 %v1285, %v561
  %v1379 = vmul.f32 %v1326, %v565
  %v1380 = vmul.f32 %v1328, %v569
  %v1381 = vmul.f32 %v1369, %v573
  %v1382 = vmul.f32 %v1371, %v577
  %v1383 = vmul.f32 %v1287, %v557
  %v1384 = vmul.f32 %v1289, %v561
  %v1385 = vmul.f32 %v1330, %v565
  %v1386 = vmul.f32 %v1332, %v569
  %v1387 = vmul.f32 %v1373, %v573
  %v1388 = vmul.f32 %v1375, %v577
  %v1389 = vadd.f32 %v1377, %v1378
  %v1390 = vadd.f32 %v1389, %v1379
  %v1391 = vadd.f32 %v1390, %v1380
  %v1392 = vadd.f32 %v1391, %v1381
  %v1393 = vsel %vm600, %v1382, 0.0
  %v1394 = vadd.f32 %v1392, %v1393
  %1395 = vadd.xlane.f32.xlu0 %v1394
  %v1396 = vpop.xlane.xlu0 %1395
  %v1397 = vadd.f32 %v1383, %v1384
  %v1398 = vadd.f32 %v1397, %v1385
  %v1399 = vadd.f32 %v1398, %v1386
  %v1400 = vadd.f32 %v1399, %v1387
  %v1401 = vsel %vm600, %v1388, 0.0
  %v1402 = vadd.f32 %v1400, %v1401
  %1403 = vadd.xlane.f32.xlu0 %v1402
  %v1404 = vpop.xlane.xlu0 %1403
  %v1405 = vmul.f32 %v1396, 0.001953125
  %v1406 = vmul.f32 %v1404, 0.001953125
  %v1407 = vmul.f32 %v1283, %v1283
  %v1408 = vmul.f32 %v1285, %v1285
  %v1409 = vmul.f32 %v1326, %v1326
  %v1410 = vmul.f32 %v1328, %v1328
  %v1411 = vmul.f32 %v1369, %v1369
  %v1412 = vmul.f32 %v1371, %v1371
  %v1413 = vmul.f32 %v1287, %v1287
  %v1414 = vmul.f32 %v1289, %v1289
  %v1415 = vmul.f32 %v1330, %v1330
  %v1416 = vmul.f32 %v1332, %v1332
  %v1417 = vmul.f32 %v1373, %v1373
  %v1418 = vmul.f32 %v1375, %v1375
  %v1419 = vmul.f32 %v1407, %v557
  %v1420 = vmul.f32 %v1408, %v561
  %v1421 = vmul.f32 %v1409, %v565
  %v1422 = vmul.f32 %v1410, %v569
  %v1423 = vmul.f32 %v1411, %v573
  %v1424 = vmul.f32 %v1412, %v577
  %v1425 = vmul.f32 %v1413, %v557
  %v1426 = vmul.f32 %v1414, %v561
  %v1427 = vmul.f32 %v1415, %v565
  %v1428 = vmul.f32 %v1416, %v569
  %v1429 = vmul.f32 %v1417, %v573
  %v1430 = vmul.f32 %v1418, %v577
  %v1431 = vadd.f32 %v1419, %v1420
  %v1432 = vadd.f32 %v1431, %v1421
  %v1433 = vadd.f32 %v1432, %v1422
  %v1434 = vadd.f32 %v1433, %v1423
  %v1435 = vsel %vm600, %v1424, 0.0
  %v1436 = vadd.f32 %v1434, %v1435
  %1437 = vadd.xlane.f32.xlu0 %v1436
  %v1438 = vpop.xlane.xlu0 %1437
  %v1439 = vadd.f32 %v1425, %v1426
  %v1440 = vadd.f32 %v1439, %v1427
  %v1441 = vadd.f32 %v1440, %v1428
  %v1442 = vadd.f32 %v1441, %v1429
  %v1443 = vsel %vm600, %v1430, 0.0
  %v1444 = vadd.f32 %v1442, %v1443
  %1445 = vadd.xlane.f32.xlu0 %v1444
  %v1446 = vpop.xlane.xlu0 %1445
  %v1447 = vmul.f32 %v1438, 0.001953125
  %v1448 = vmul.f32 %v1446, 0.001953125
  %v1449 = vmul.f32 %v1405, %v1405
  %v1450 = vmul.f32 %v1406, %v1406
  %v1451 = vsub.f32 %v1447, %v1449
  %v1452 = vsub.f32 %v1448, %v1450
  %v1453 = vld [vmem:[%s11] sm:$0xff]
  %v1454 = vld [vmem:[%s11 + $0x8] sm:$0xff]
  %v1455 = vadd.f32 %v1451, 1e-05
  %v1456 = vadd.f32 %v1452, 1e-05
  %v1457 = vrsqrt.pop %v1455
  %v1458 = vrsqrt.pop %v1456
  %v1459 = vmul.f32 %v1453, %v1457
  %v1460 = vmul.f32 %v1454, %v1458
  %1462 = vset.pattern.permute.xlu0 0
  %1463 = vperm.xlu0 %1462, %v1459
  %v1464 = vpop.permute.xlu0 %1463
  %1467 = vset.pattern.permute.xlu0 0
  %1468 = vperm.xlu0 %1467, %v1460
  %v1469 = vpop.permute.xlu0 %1468
  %v1471 = vmul.f32 %v1283, %v1464
  %v1472 = vmul.f32 %v1285, %v1464
  %v1473 = vmul.f32 %v1326, %v1464
  %v1474 = vmul.f32 %v1328, %v1464
  %v1475 = vmul.f32 %v1369, %v1464
  %v1476 = vmul.f32 %v1371, %v1464
  %v1477 = vmul.f32 %v1287, %v1469
  %v1478 = vmul.f32 %v1289, %v1469
  %v1479 = vmul.f32 %v1330, %v1469
  %v1480 = vmul.f32 %v1332, %v1469
  %v1481 = vmul.f32 %v1373, %v1469
  %v1482 = vmul.f32 %v1375, %v1469
  %v1483 = vld [vmem:[%s13] sm:$0xff]
  %v1484 = vld [vmem:[%s13 + $0x8] sm:$0xff]
  %v1485 = vmul.f32 %v1405, %v1459
  %v1486 = vmul.f32 %v1406, %v1460
  %v1487 = vsub.f32 %v1483, %v1485
  %v1488 = vsub.f32 %v1484, %v1486
  %1490 = vset.pattern.permute.xlu0 0
  %1491 = vperm.xlu0 %1490, %v1487
  %v1492 = vpop.permute.xlu0 %1491
  %1495 = vset.pattern.permute.xlu0 0
  %1496 = vperm.xlu0 %1495, %v1488
  %v1497 = vpop.permute.xlu0 %1496
  %v1499 = vadd.f32 %v1471, %v1492
  %v1500 = vadd.f32 %v1472, %v1492
  %v1501 = vadd.f32 %v1473, %v1492
  %v1502 = vadd.f32 %v1474, %v1492
  %v1503 = vadd.f32 %v1475, %v1492
  %v1504 = vadd.f32 %v1476, %v1492
  %v1505 = vadd.f32 %v1477, %v1497
  %v1506 = vadd.f32 %v1478, %v1497
  %v1507 = vadd.f32 %v1479, %v1497
  %v1508 = vadd.f32 %v1480, %v1497
  %v1509 = vadd.f32 %v1481, %v1497
  %v1510 = vadd.f32 %v1482, %v1497
  %v1511 = vmax.f32 %v1499, 0.0
  %v1512 = vmax.f32 %v1500, 0.0
  %v1513 = vmax.f32 %v1501, 0.0
  %v1514 = vmax.f32 %v1502, 0.0
  %v1515 = vmax.f32 %v1503, 0.0
  %v1516 = vmax.f32 %v1504, 0.0
  %v1517 = vmax.f32 %v1505, 0.0
  %v1518 = vmax.f32 %v1506, 0.0
  %v1519 = vmax.f32 %v1507, 0.0
  %v1520 = vmax.f32 %v1508, 0.0
  %v1521 = vmax.f32 %v1509, 0.0
  %v1522 = vmax.f32 %v1510, 0.0
  %v1523 = vmul.f32 %v1511, %v557
  %v1524 = vmul.f32 %v1512, %v561
  %v1525 = vmul.f32 %v1513, %v565
  %v1526 = vmul.f32 %v1514, %v569
  %v1527 = vmul.f32 %v1515, %v573
  %v1528 = vmul.f32 %v1516, %v577
  %v1529 = vmul.f32 %v1517, %v557
  %v1530 = vmul.f32 %v1518, %v561
  %v1531 = vmul.f32 %v1519, %v565
  %v1532 = vmul.f32 %v1520, %v569
  %v1533 = vmul.f32 %v1521, %v573
  %v1534 = vmul.f32 %v1522, %v577
  %1547 = vrot.lane.b32.xlu0 %v1523, 19
  %v1548 = vpop.permute.xlu0 %1547
  %1549 = vrot.lane.b32.xlu0 %v1524, 19
  %v1550 = vpop.permute.xlu0 %1549
  %1551 = vrot.lane.b32.xlu0 %v1525, 19
  %v1552 = vpop.permute.xlu0 %1551
  %1553 = vrot.lane.b32.xlu0 %v1526, 19
  %v1554 = vpop.permute.xlu0 %1553
  %1555 = vrot.lane.b32.xlu0 %v1527, 19
  %v1556 = vpop.permute.xlu0 %1555
  %1557 = vrot.lane.b32.xlu0 %v1528, 19
  %v1558 = vpop.permute.xlu0 %1557
  %1559 = vrot.lane.b32.xlu0 %v1529, 19
  %v1560 = vpop.permute.xlu0 %1559
  %1561 = vrot.lane.b32.xlu0 %v1530, 19
  %v1562 = vpop.permute.xlu0 %1561
  %1563 = vrot.lane.b32.xlu0 %v1531, 19
  %v1564 = vpop.permute.xlu0 %1563
  %1565 = vrot.lane.b32.xlu0 %v1532, 19
  %v1566 = vpop.permute.xlu0 %1565
  %1567 = vrot.lane.b32.xlu0 %v1533, 19
  %v1568 = vpop.permute.xlu0 %1567
  %1569 = vrot.lane.b32.xlu0 %v1534, 19
  %v1570 = vpop.permute.xlu0 %1569
  %v1571 = vsel %vm779, %v1548, %v1550
  %v1572 = vsel %vm779, %v1550, %v1552
  %v1573 = vsel %vm779, %v1552, %v1554
  %v1574 = vsel %vm779, %v1554, %v1556
  %v1575 = vsel %vm779, %v1556, %v1558
  %v1576 = vsel %vm779, %v1560, %v1562
  %v1577 = vsel %vm779, %v1562, %v1564
  %v1578 = vsel %vm779, %v1564, %v1566
  %v1579 = vsel %vm779, %v1566, %v1568
  %v1580 = vsel %vm779, %v1568, %v1570
  %v1593 = vsel %vm779, 0.0, %v1548
  %v1594 = vsel %vm779, 0.0, %v1560
  %v1595 = vsel %vm804, %v1575, 0.0
  %v1596 = vsel %vm804, %v1580, 0.0
  %1601 = vrot.lane.b32.xlu0 %v1593, 127
  %v1602 = vpop.permute.xlu0 %1601
  %1603 = vrot.lane.b32.xlu0 %v1571, 127
  %v1604 = vpop.permute.xlu0 %1603
  %1605 = vrot.lane.b32.xlu0 %v1572, 127
  %v1606 = vpop.permute.xlu0 %1605
  %1607 = vrot.lane.b32.xlu0 %v1573, 127
  %v1608 = vpop.permute.xlu0 %1607
  %1609 = vrot.lane.b32.xlu0 %v1574, 127
  %v1610 = vpop.permute.xlu0 %1609
  %1611 = vrot.lane.b32.xlu0 %v1595, 127
  %v1612 = vpop.permute.xlu0 %1611
  %1613 = vrot.lane.b32.xlu0 %v1594, 127
  %v1614 = vpop.permute.xlu0 %1613
  %1615 = vrot.lane.b32.xlu0 %v1576, 127
  %v1616 = vpop.permute.xlu0 %1615
  %1617 = vrot.lane.b32.xlu0 %v1577, 127
  %v1618 = vpop.permute.xlu0 %1617
  %1619 = vrot.lane.b32.xlu0 %v1578, 127
  %v1620 = vpop.permute.xlu0 %1619
  %1621 = vrot.lane.b32.xlu0 %v1579, 127
  %v1622 = vpop.permute.xlu0 %1621
  %1623 = vrot.lane.b32.xlu0 %v1596, 127
  %v1624 = vpop.permute.xlu0 %1623
  %v1625 = vsel %vm183, %v1602, %v1604
  %v1626 = vsel %vm183, %v1604, %v1606
  %v1627 = vsel %vm183, %v1606, %v1608
  %v1628 = vsel %vm183, %v1608, %v1610
  %v1629 = vsel %vm183, %v1610, %v1612
  %v1630 = vsel %vm183, %v1614, %v1616
  %v1631 = vsel %vm183, %v1616, %v1618
  %v1632 = vsel %vm183, %v1618, %v1620
  %v1633 = vsel %vm183, %v1620, %v1622
  %v1634 = vsel %vm183, %v1622, %v1624
  %1647 = vrot.lane.b32.xlu0 %v1593, 126
  %v1648 = vpop.permute.xlu0 %1647
  %1649 = vrot.lane.b32.xlu0 %v1571, 126
  %v1650 = vpop.permute.xlu0 %1649
  %1651 = vrot.lane.b32.xlu0 %v1572, 126
  %v1652 = vpop.permute.xlu0 %1651
  %1653 = vrot.lane.b32.xlu0 %v1573, 126
  %v1654 = vpop.permute.xlu0 %1653
  %1655 = vrot.lane.b32.xlu0 %v1574, 126
  %v1656 = vpop.permute.xlu0 %1655
  %1657 = vrot.lane.b32.xlu0 %v1595, 126
  %v1658 = vpop.permute.xlu0 %1657
  %1659 = vrot.lane.b32.xlu0 %v1594, 126
  %v1660 = vpop.permute.xlu0 %1659
  %1661 = vrot.lane.b32.xlu0 %v1576, 126
  %v1662 = vpop.permute.xlu0 %1661
  %1663 = vrot.lane.b32.xlu0 %v1577, 126
  %v1664 = vpop.permute.xlu0 %1663
  %1665 = vrot.lane.b32.xlu0 %v1578, 126
  %v1666 = vpop.permute.xlu0 %1665
  %1667 = vrot.lane.b32.xlu0 %v1579, 126
  %v1668 = vpop.permute.xlu0 %1667
  %1669 = vrot.lane.b32.xlu0 %v1596, 126
  %v1670 = vpop.permute.xlu0 %1669
  %v1671 = vsel %vm207, %v1648, %v1650
  %v1672 = vsel %vm207, %v1650, %v1652
  %v1673 = vsel %vm207, %v1652, %v1654
  %v1674 = vsel %vm207, %v1654, %v1656
  %v1675 = vsel %vm207, %v1656, %v1658
  %v1676 = vsel %vm207, %v1660, %v1662
  %v1677 = vsel %vm207, %v1662, %v1664
  %v1678 = vsel %vm207, %v1664, %v1666
  %v1679 = vsel %vm207, %v1666, %v1668
  %v1680 = vsel %vm207, %v1668, %v1670
  %1693 = vrot.lane.b32.xlu0 %v1593, 110
  %v1694 = vpop.permute.xlu0 %1693
  %1695 = vrot.lane.b32.xlu0 %v1571, 110
  %v1696 = vpop.permute.xlu0 %1695
  %1697 = vrot.lane.b32.xlu0 %v1572, 110
  %v1698 = vpop.permute.xlu0 %1697
  %1699 = vrot.lane.b32.xlu0 %v1573, 110
  %v1700 = vpop.permute.xlu0 %1699
  %1701 = vrot.lane.b32.xlu0 %v1574, 110
  %v1702 = vpop.permute.xlu0 %1701
  %1703 = vrot.lane.b32.xlu0 %v1595, 110
  %v1704 = vpop.permute.xlu0 %1703
  %1705 = vrot.lane.b32.xlu0 %v1594, 110
  %v1706 = vpop.permute.xlu0 %1705
  %1707 = vrot.lane.b32.xlu0 %v1576, 110
  %v1708 = vpop.permute.xlu0 %1707
  %1709 = vrot.lane.b32.xlu0 %v1577, 110
  %v1710 = vpop.permute.xlu0 %1709
  %1711 = vrot.lane.b32.xlu0 %v1578, 110
  %v1712 = vpop.permute.xlu0 %1711
  %1713 = vrot.lane.b32.xlu0 %v1579, 110
  %v1714 = vpop.permute.xlu0 %1713
  %1715 = vrot.lane.b32.xlu0 %v1596, 110
  %v1716 = vpop.permute.xlu0 %1715
  %v1717 = vsel %vm231, %v1694, %v1696
  %v1718 = vsel %vm231, %v1696, %v1698
  %v1719 = vsel %vm231, %v1698, %v1700
  %v1720 = vsel %vm231, %v1700, %v1702
  %v1721 = vsel %vm231, %v1702, %v1704
  %v1722 = vsel %vm231, %v1706, %v1708
  %v1723 = vsel %vm231, %v1708, %v1710
  %v1724 = vsel %vm231, %v1710, %v1712
  %v1725 = vsel %vm231, %v1712, %v1714
  %v1726 = vsel %vm231, %v1714, %v1716
  %1739 = vrot.lane.b32.xlu0 %v1593, 109
  %v1740 = vpop.permute.xlu0 %1739
  %1741 = vrot.lane.b32.xlu0 %v1571, 109
  %v1742 = vpop.permute.xlu0 %1741
  %1743 = vrot.lane.b32.xlu0 %v1572, 109
  %v1744 = vpop.permute.xlu0 %1743
  %1745 = vrot.lane.b32.xlu0 %v1573, 109
  %v1746 = vpop.permute.xlu0 %1745
  %1747 = vrot.lane.b32.xlu0 %v1574, 109
  %v1748 = vpop.permute.xlu0 %1747
  %1749 = vrot.lane.b32.xlu0 %v1595, 109
  %v1750 = vpop.permute.xlu0 %1749
  %1751 = vrot.lane.b32.xlu0 %v1594, 109
  %v1752 = vpop.permute.xlu0 %1751
  %1753 = vrot.lane.b32.xlu0 %v1576, 109
  %v1754 = vpop.permute.xlu0 %1753
  %1755 = vrot.lane.b32.xlu0 %v1577, 109
  %v1756 = vpop.permute.xlu0 %1755
  %1757 = vrot.lane.b32.xlu0 %v1578, 109
  %v1758 = vpop.permute.xlu0 %1757
  %1759 = vrot.lane.b32.xlu0 %v1579, 109
  %v1760 = vpop.permute.xlu0 %1759
  %1761 = vrot.lane.b32.xlu0 %v1596, 109
  %v1762 = vpop.permute.xlu0 %1761
  %v1763 = vsel %vm255, %v1740, %v1742
  %v1764 = vsel %vm255, %v1742, %v1744
  %v1765 = vsel %vm255, %v1744, %v1746
  %v1766 = vsel %vm255, %v1746, %v1748
  %v1767 = vsel %vm255, %v1748, %v1750
  %v1768 = vsel %vm255, %v1752, %v1754
  %v1769 = vsel %vm255, %v1754, %v1756
  %v1770 = vsel %vm255, %v1756, %v1758
  %v1771 = vsel %vm255, %v1758, %v1760
  %v1772 = vsel %vm255, %v1760, %v1762
  %1785 = vrot.lane.b32.xlu0 %v1593, 108
  %v1786 = vpop.permute.xlu0 %1785
  %1787 = vrot.lane.b32.xlu0 %v1571, 108
  %v1788 = vpop.permute.xlu0 %1787
  %1789 = vrot.lane.b32.xlu0 %v1572, 108
  %v1790 = vpop.permute.xlu0 %1789
  %1791 = vrot.lane.b32.xlu0 %v1573, 108
  %v1792 = vpop.permute.xlu0 %1791
  %1793 = vrot.lane.b32.xlu0 %v1574, 108
  %v1794 = vpop.permute.xlu0 %1793
  %1795 = vrot.lane.b32.xlu0 %v1595, 108
  %v1796 = vpop.permute.xlu0 %1795
  %1797 = vrot.lane.b32.xlu0 %v1594, 108
  %v1798 = vpop.permute.xlu0 %1797
  %1799 = vrot.lane.b32.xlu0 %v1576, 108
  %v1800 = vpop.permute.xlu0 %1799
  %1801 = vrot.lane.b32.xlu0 %v1577, 108
  %v1802 = vpop.permute.xlu0 %1801
  %1803 = vrot.lane.b32.xlu0 %v1578, 108
  %v1804 = vpop.permute.xlu0 %1803
  %1805 = vrot.lane.b32.xlu0 %v1579, 108
  %v1806 = vpop.permute.xlu0 %1805
  %1807 = vrot.lane.b32.xlu0 %v1596, 108
  %v1808 = vpop.permute.xlu0 %1807
  %v1809 = vsel %vm279, %v1786, %v1788
  %v1810 = vsel %vm279, %v1788, %v1790
  %v1811 = vsel %vm279, %v1790, %v1792
  %v1812 = vsel %vm279, %v1792, %v1794
  %v1813 = vsel %vm279, %v1794, %v1796
  %v1814 = vsel %vm279, %v1798, %v1800
  %v1815 = vsel %vm279, %v1800, %v1802
  %v1816 = vsel %vm279, %v1802, %v1804
  %v1817 = vsel %vm279, %v1804, %v1806
  %v1818 = vsel %vm279, %v1806, %v1808
  %1831 = vrot.lane.b32.xlu0 %v1593, 92
  %v1832 = vpop.permute.xlu0 %1831
  %1833 = vrot.lane.b32.xlu0 %v1571, 92
  %v1834 = vpop.permute.xlu0 %1833
  %1835 = vrot.lane.b32.xlu0 %v1572, 92
  %v1836 = vpop.permute.xlu0 %1835
  %1837 = vrot.lane.b32.xlu0 %v1573, 92
  %v1838 = vpop.permute.xlu0 %1837
  %1839 = vrot.lane.b32.xlu0 %v1574, 92
  %v1840 = vpop.permute.xlu0 %1839
  %1841 = vrot.lane.b32.xlu0 %v1595, 92
  %v1842 = vpop.permute.xlu0 %1841
  %1843 = vrot.lane.b32.xlu0 %v1594, 92
  %v1844 = vpop.permute.xlu0 %1843
  %1845 = vrot.lane.b32.xlu0 %v1576, 92
  %v1846 = vpop.permute.xlu0 %1845
  %1847 = vrot.lane.b32.xlu0 %v1577, 92
  %v1848 = vpop.permute.xlu0 %1847
  %1849 = vrot.lane.b32.xlu0 %v1578, 92
  %v1850 = vpop.permute.xlu0 %1849
  %1851 = vrot.lane.b32.xlu0 %v1579, 92
  %v1852 = vpop.permute.xlu0 %1851
  %1853 = vrot.lane.b32.xlu0 %v1596, 92
  %v1854 = vpop.permute.xlu0 %1853
  %v1855 = vsel %vm303, %v1832, %v1834
  %v1856 = vsel %vm303, %v1834, %v1836
  %v1857 = vsel %vm303, %v1836, %v1838
  %v1858 = vsel %vm303, %v1838, %v1840
  %v1859 = vsel %vm303, %v1840, %v1842
  %v1860 = vsel %vm303, %v1844, %v1846
  %v1861 = vsel %vm303, %v1846, %v1848
  %v1862 = vsel %vm303, %v1848, %v1850
  %v1863 = vsel %vm303, %v1850, %v1852
  %v1864 = vsel %vm303, %v1852, %v1854
  %1877 = vrot.lane.b32.xlu0 %v1593, 91
  %v1878 = vpop.permute.xlu0 %1877
  %1879 = vrot.lane.b32.xlu0 %v1571, 91
  %v1880 = vpop.permute.xlu0 %1879
  %1881 = vrot.lane.b32.xlu0 %v1572, 91
  %v1882 = vpop.permute.xlu0 %1881
  %1883 = vrot.lane.b32.xlu0 %v1573, 91
  %v1884 = vpop.permute.xlu0 %1883
  %1885 = vrot.lane.b32.xlu0 %v1574, 91
  %v1886 = vpop.permute.xlu0 %1885
  %1887 = vrot.lane.b32.xlu0 %v1595, 91
  %v1888 = vpop.permute.xlu0 %1887
  %1889 = vrot.lane.b32.xlu0 %v1594, 91
  %v1890 = vpop.permute.xlu0 %1889
  %1891 = vrot.lane.b32.xlu0 %v1576, 91
  %v1892 = vpop.permute.xlu0 %1891
  %1893 = vrot.lane.b32.xlu0 %v1577, 91
  %v1894 = vpop.permute.xlu0 %1893
  %1895 = vrot.lane.b32.xlu0 %v1578, 91
  %v1896 = vpop.permute.xlu0 %1895
  %1897 = vrot.lane.b32.xlu0 %v1579, 91
  %v1898 = vpop.permute.xlu0 %1897
  %1899 = vrot.lane.b32.xlu0 %v1596, 91
  %v1900 = vpop.permute.xlu0 %1899
  %v1901 = vsel %vm327, %v1878, %v1880
  %v1902 = vsel %vm327, %v1880, %v1882
  %v1903 = vsel %vm327, %v1882, %v1884
  %v1904 = vsel %vm327, %v1884, %v1886
  %v1905 = vsel %vm327, %v1886, %v1888
  %v1906 = vsel %vm327, %v1890, %v1892
  %v1907 = vsel %vm327, %v1892, %v1894
  %v1908 = vsel %vm327, %v1894, %v1896
  %v1909 = vsel %vm327, %v1896, %v1898
  %v1910 = vsel %vm327, %v1898, %v1900
  %1923 = vrot.lane.b32.xlu0 %v1593, 90
  %v1924 = vpop.permute.xlu0 %1923
  %1925 = vrot.lane.b32.xlu0 %v1571, 90
  %v1926 = vpop.permute.xlu0 %1925
  %1927 = vrot.lane.b32.xlu0 %v1572, 90
  %v1928 = vpop.permute.xlu0 %1927
  %1929 = vrot.lane.b32.xlu0 %v1573, 90
  %v1930 = vpop.permute.xlu0 %1929
  %1931 = vrot.lane.b32.xlu0 %v1574, 90
  %v1932 = vpop.permute.xlu0 %1931
  %1933 = vrot.lane.b32.xlu0 %v1595, 90
  %v1934 = vpop.permute.xlu0 %1933
  %1935 = vrot.lane.b32.xlu0 %v1594, 90
  %v1936 = vpop.permute.xlu0 %1935
  %1937 = vrot.lane.b32.xlu0 %v1576, 90
  %v1938 = vpop.permute.xlu0 %1937
  %1939 = vrot.lane.b32.xlu0 %v1577, 90
  %v1940 = vpop.permute.xlu0 %1939
  %1941 = vrot.lane.b32.xlu0 %v1578, 90
  %v1942 = vpop.permute.xlu0 %1941
  %1943 = vrot.lane.b32.xlu0 %v1579, 90
  %v1944 = vpop.permute.xlu0 %1943
  %1945 = vrot.lane.b32.xlu0 %v1596, 90
  %v1946 = vpop.permute.xlu0 %1945
  %v1947 = vsel %vm351, %v1924, %v1926
  %v1948 = vsel %vm351, %v1926, %v1928
  %v1949 = vsel %vm351, %v1928, %v1930
  %v1950 = vsel %vm351, %v1930, %v1932
  %v1951 = vsel %vm351, %v1932, %v1934
  %v1952 = vsel %vm351, %v1936, %v1938
  %v1953 = vsel %vm351, %v1938, %v1940
  %v1954 = vsel %vm351, %v1940, %v1942
  %v1955 = vsel %vm351, %v1942, %v1944
  %v1956 = vsel %vm351, %v1944, %v1946
  %v1969 = vld [vmem:[%s21] sm:$0xff]
  %v1970 = vld [vmem:[%s21 + $0x8] sm:$0xff]
  %v1971 = vpack.c.bf16 %v1594, %v1593
  %v1972 = vpack.c.bf16 %v1576, %v1571
  %v1973 = vpack.c.bf16 %v1577, %v1572
  %v1974 = vpack.c.bf16 %v1578, %v1573
  %v1975 = vpack.c.bf16 %v1579, %v1574
  %v1976 = vpack.c.bf16 %v1596, %v1595
  %v1977 = vpack.c.bf16 %v1630, %v1625
  %v1978 = vpack.c.bf16 %v1631, %v1626
  %v1979 = vpack.c.bf16 %v1632, %v1627
  %v1980 = vpack.c.bf16 %v1633, %v1628
  %v1981 = vpack.c.bf16 %v1634, %v1629
  %v1982 = vpack.c.bf16 %v1624, %v1612
  %v1983 = vpack.c.bf16 %v1676, %v1671
  %v1984 = vpack.c.bf16 %v1677, %v1672
  %v1985 = vpack.c.bf16 %v1678, %v1673
  %v1986 = vpack.c.bf16 %v1679, %v1674
  %v1987 = vpack.c.bf16 %v1680, %v1675
  %v1988 = vpack.c.bf16 %v1670, %v1658
  %v1989 = vpack.c.bf16 %v1722, %v1717
  %v1990 = vpack.c.bf16 %v1723, %v1718
  %v1991 = vpack.c.bf16 %v1724, %v1719
  %v1992 = vpack.c.bf16 %v1725, %v1720
  %v1993 = vpack.c.bf16 %v1726, %v1721
  %v1994 = vpack.c.bf16 %v1716, %v1704
  %v1995 = vpack.c.bf16 %v1768, %v1763
  %v1996 = vpack.c.bf16 %v1769, %v1764
  %v1997 = vpack.c.bf16 %v1770, %v1765
  %v1998 = vpack.c.bf16 %v1771, %v1766
  %v1999 = vpack.c.bf16 %v1772, %v1767
  %v2000 = vpack.c.bf16 %v1762, %v1750
  %v2001 = vpack.c.bf16 %v1814, %v1809
  %v2002 = vpack.c.bf16 %v1815, %v1810
  %v2003 = vpack.c.bf16 %v1816, %v1811
  %v2004 = vpack.c.bf16 %v1817, %v1812
  %v2005 = vpack.c.bf16 %v1818, %v1813
  %v2006 = vpack.c.bf16 %v1808, %v1796
  %v2007 = vpack.c.bf16 %v1860, %v1855
  %v2008 = vpack.c.bf16 %v1861, %v1856
  %v2009 = vpack.c.bf16 %v1862, %v1857
  %v2010 = vpack.c.bf16 %v1863, %v1858
  %v2011 = vpack.c.bf16 %v1864, %v1859
  %v2012 = vpack.c.bf16 %v1854, %v1842
  %v2013 = vpack.c.bf16 %v1906, %v1901
  %v2014 = vpack.c.bf16 %v1907, %v1902
  %v2015 = vpack.c.bf16 %v1908, %v1903
  %v2016 = vpack.c.bf16 %v1909, %v1904
  %v2017 = vpack.c.bf16 %v1910, %v1905
  %v2018 = vpack.c.bf16 %v1900, %v1888
  %v2019 = vpack.c.bf16 %v1952, %v1947
  %v2020 = vpack.c.bf16 %v1953, %v1948
  %v2021 = vpack.c.bf16 %v1954, %v1949
  %v2022 = vpack.c.bf16 %v1955, %v1950
  %v2023 = vpack.c.bf16 %v1956, %v1951
  %v2024 = vpack.c.bf16 %v1946, %v1934
  %v2027 = vunpack.c.l.b16 %v1969
  %v2028 = vunpack.c.h.b16 %v1969
  %v2029 = vunpack.c.l.b16 %v1970
  %v2030 = vunpack.c.h.b16 %v1970
  %v2031 = vpack.c.b16 %v2029, %v2027
  %v2032 = vpack.c.b16 %v2030, %v2028
  %v2035 = vsel %vm1244, %v2032, 0
  %2037 = vmatprep.subr.bf16.mxu0 %v1972
  %2038 = vmatpush1.bf16.msra.mxu0 %v1971
  %2039 = vmatprep.subr.bf16.mxu0 %v1978
  %2040 = vmatpush1.bf16.msra.mxu0 %v1977
  %2041 = vmatprep.subr.bf16.mxu0 %v1984
  %2042 = vmatpush1.bf16.msra.mxu0 %v1983
  %2043 = vmatprep.subr.bf16.mxu0 %v1990
  %2044 = vmatpush1.bf16.msra.mxu0 %v1989
  %2045 = vmatprep.subr.bf16.mxu0 %v1996
  %2046 = vmatpush1.bf16.msra.mxu0 %v1995
  %2047 = vmatprep.subr.bf16.mxu0 %v2002
  %2048 = vmatpush1.bf16.msra.mxu0 %v2001
  %2049 = vmatprep.subr.bf16.mxu0 %v2008
  %2050 = vmatpush1.bf16.msra.mxu0 %v2007
  %2051 = vmatprep.subr.bf16.mxu0 %v2014
  %2052 = vmatpush1.bf16.msra.mxu0 %v2013
  %2053 = vmatprep.subr.bf16.mxu0 %v2020
  %2054 = vmatpush1.bf16.msra.mxu0 %v2019
  %2055 = vmatprep.subr.bf16.mxu0 0
  %2056 = vmatpush1.bf16.msra.mxu0 0
  %2057 = vmatprep.subr.bf16.mxu0 0
  %2058 = vmatpush1.bf16.msra.mxu0 0
  %2059 = vmatprep.subr.bf16.mxu0 0
  %2060 = vmatpush1.bf16.msra.mxu0 0
  %2061 = vmatprep.subr.bf16.mxu0 0
  %2062 = vmatpush1.bf16.msra.mxu0 0
  %2063 = vmatprep.subr.bf16.mxu0 0
  %2064 = vmatpush1.bf16.msra.mxu0 0
  %2065 = vmatprep.subr.bf16.mxu0 0
  %2066 = vmatpush1.bf16.msra.mxu0 0
  %2067 = vmatprep.subr.bf16.mxu0 0
  %2068 = vmatpush1.bf16.msra.mxu0 0
  %2069 = vmatprep.mubr.bf16.mxu0 %v2035
  %2070 = vmatmul.mubr.bf16.gmra.mrb[0].mxu0 %v2031
  %v2071 = vpop.f32.mrb[0].mxu0
  %v2072 = vadd.f32 0.0, %v2071
  %v2073 = vpop.f32.mrb[0].mxu0
  %v2074 = vadd.f32 0.0, %v2073
  %v2075 = vpop.f32.mrb[0].mxu0
  %v2076 = vadd.f32 0.0, %v2075
  %v2077 = vpop.f32.mrb[0].mxu0
  %v2078 = vadd.f32 0.0, %v2077
  %2079 = vdwg.mxu0
  %2080 = vmatprep.subr.bf16.mxu0 %v1974
  %2081 = vmatpush1.bf16.msra.mxu0 %v1973
  %2082 = vmatprep.subr.bf16.mxu0 %v1980
  %2083 = vmatpush1.bf16.msra.mxu0 %v1979
  %2084 = vmatprep.subr.bf16.mxu0 %v1986
  %2085 = vmatpush1.bf16.msra.mxu0 %v1985
  %2086 = vmatprep.subr.bf16.mxu0 %v1992
  %2087 = vmatpush1.bf16.msra.mxu0 %v1991
  %2088 = vmatprep.subr.bf16.mxu0 %v1998
  %2089 = vmatpush1.bf16.msra.mxu0 %v1997
  %2090 = vmatprep.subr.bf16.mxu0 %v2004
  %2091 = vmatpush1.bf16.msra.mxu0 %v2003
  %2092 = vmatprep.subr.bf16.mxu0 %v2010
  %2093 = vmatpush1.bf16.msra.mxu0 %v2009
  %2094 = vmatprep.subr.bf16.mxu0 %v2016
  %2095 = vmatpush1.bf16.msra.mxu0 %v2015
  %2096 = vmatprep.subr.bf16.mxu0 %v2022
  %2097 = vmatpush1.bf16.msra.mxu0 %v2021
  %2098 = vmatprep.subr.bf16.mxu0 0
  %2099 = vmatpush1.bf16.msra.mxu0 0
  %2100 = vmatprep.subr.bf16.mxu0 0
  %2101 = vmatpush1.bf16.msra.mxu0 0
  %2102 = vmatprep.subr.bf16.mxu0 0
  %2103 = vmatpush1.bf16.msra.mxu0 0
  %2104 = vmatprep.subr.bf16.mxu0 0
  %2105 = vmatpush1.bf16.msra.mxu0 0
  %2106 = vmatprep.subr.bf16.mxu0 0
  %2107 = vmatpush1.bf16.msra.mxu0 0
  %2108 = vmatprep.subr.bf16.mxu0 0
  %2109 = vmatpush1.bf16.msra.mxu0 0
  %2110 = vmatprep.subr.bf16.mxu0 0
  %2111 = vmatpush1.bf16.msra.mxu0 0
  %2112 = vmatprep.mubr.bf16.mxu0 %v2035
  %2113 = vmatmul.mubr.bf16.gmra.mrb[0].mxu0 %v2031
  %v2114 = vpop.f32.mrb[0].mxu0
  %v2115 = vadd.f32 0.0, %v2114
  %v2116 = vpop.f32.mrb[0].mxu0
  %v2117 = vadd.f32 0.0, %v2116
  %v2118 = vpop.f32.mrb[0].mxu0
  %v2119 = vadd.f32 0.0, %v2118
  %v2120 = vpop.f32.mrb[0].mxu0
  %v2121 = vadd.f32 0.0, %v2120
  %2122 = vdwg.mxu0
  %2123 = vmatprep.subr.bf16.mxu0 %v1976
  %2124 = vmatpush1.bf16.msra.mxu0 %v1975
  %2125 = vmatprep.subr.bf16.mxu0 %v1982
  %2126 = vmatpush1.bf16.msra.mxu0 %v1981
  %2127 = vmatprep.subr.bf16.mxu0 %v1988
  %2128 = vmatpush1.bf16.msra.mxu0 %v1987
  %2129 = vmatprep.subr.bf16.mxu0 %v1994
  %2130 = vmatpush1.bf16.msra.mxu0 %v1993
  %2131 = vmatprep.subr.bf16.mxu0 %v2000
  %2132 = vmatpush1.bf16.msra.mxu0 %v1999
  %2133 = vmatprep.subr.bf16.mxu0 %v2006
  %2134 = vmatpush1.bf16.msra.mxu0 %v2005
  %2135 = vmatprep.subr.bf16.mxu0 %v2012
  %2136 = vmatpush1.bf16.msra.mxu0 %v2011
  %2137 = vmatprep.subr.bf16.mxu0 %v2018
  %2138 = vmatpush1.bf16.msra.mxu0 %v2017
  %2139 = vmatprep.subr.bf16.mxu0 %v2024
  %2140 = vmatpush1.bf16.msra.mxu0 %v2023
  %2141 = vmatprep.subr.bf16.mxu0 0
  %2142 = vmatpush1.bf16.msra.mxu0 0
  %2143 = vmatprep.subr.bf16.mxu0 0
  %2144 = vmatpush1.bf16.msra.mxu0 0
  %2145 = vmatprep.subr.bf16.mxu0 0
  %2146 = vmatpush1.bf16.msra.mxu0 0
  %2147 = vmatprep.subr.bf16.mxu0 0
  %2148 = vmatpush1.bf16.msra.mxu0 0
  %2149 = vmatprep.subr.bf16.mxu0 0
  %2150 = vmatpush1.bf16.msra.mxu0 0
  %2151 = vmatprep.subr.bf16.mxu0 0
  %2152 = vmatpush1.bf16.msra.mxu0 0
  %2153 = vmatprep.subr.bf16.mxu0 0
  %2154 = vmatpush1.bf16.msra.mxu0 0
  %2155 = vmatprep.mubr.bf16.mxu0 %v2035
  %2156 = vmatmul.mubr.bf16.gmra.mrb[0].mxu0 %v2031
  %v2157 = vpop.f32.mrb[0].mxu0
  %v2158 = vadd.f32 0.0, %v2157
  %v2159 = vpop.f32.mrb[0].mxu0
  %v2160 = vadd.f32 0.0, %v2159
  %v2161 = vpop.f32.mrb[0].mxu0
  %v2162 = vadd.f32 0.0, %v2161
  %v2163 = vpop.f32.mrb[0].mxu0
  %v2164 = vadd.f32 0.0, %v2163
  %2165 = vdwg.mxu0
  %v2166 = vmul.f32 %v2072, %v557
  %v2167 = vmul.f32 %v2074, %v561
  %v2168 = vmul.f32 %v2115, %v565
  %v2169 = vmul.f32 %v2117, %v569
  %v2170 = vmul.f32 %v2158, %v573
  %v2171 = vmul.f32 %v2160, %v577
  %v2172 = vmul.f32 %v2076, %v557
  %v2173 = vmul.f32 %v2078, %v561
  %v2174 = vmul.f32 %v2119, %v565
  %v2175 = vmul.f32 %v2121, %v569
  %v2176 = vmul.f32 %v2162, %v573
  %v2177 = vmul.f32 %v2164, %v577
  %v2178 = vadd.f32 %v2166, %v2167
  %v2179 = vadd.f32 %v2178, %v2168
  %v2180 = vadd.f32 %v2179, %v2169
  %v2181 = vadd.f32 %v2180, %v2170
  %v2182 = vsel %vm600, %v2171, 0.0
  %v2183 = vadd.f32 %v2181, %v2182
  %2184 = vadd.xlane.f32.xlu0 %v2183
  %v2185 = vpop.xlane.xlu0 %2184
  %v2186 = vadd.f32 %v2172, %v2173
  %v2187 = vadd.f32 %v2186, %v2174
  %v2188 = vadd.f32 %v2187, %v2175
  %v2189 = vadd.f32 %v2188, %v2176
  %v2190 = vsel %vm600, %v2177, 0.0
  %v2191 = vadd.f32 %v2189, %v2190
  %2192 = vadd.xlane.f32.xlu0 %v2191
  %v2193 = vpop.xlane.xlu0 %2192
  %v2194 = vmul.f32 %v2185, 0.001953125
  %v2195 = vmul.f32 %v2193, 0.001953125
  %v2196 = vmul.f32 %v2072, %v2072
  %v2197 = vmul.f32 %v2074, %v2074
  %v2198 = vmul.f32 %v2115, %v2115
  %v2199 = vmul.f32 %v2117, %v2117
  %v2200 = vmul.f32 %v2158, %v2158
  %v2201 = vmul.f32 %v2160, %v2160
  %v2202 = vmul.f32 %v2076, %v2076
  %v2203 = vmul.f32 %v2078, %v2078
  %v2204 = vmul.f32 %v2119, %v2119
  %v2205 = vmul.f32 %v2121, %v2121
  %v2206 = vmul.f32 %v2162, %v2162
  %v2207 = vmul.f32 %v2164, %v2164
  %v2208 = vmul.f32 %v2196, %v557
  %v2209 = vmul.f32 %v2197, %v561
  %v2210 = vmul.f32 %v2198, %v565
  %v2211 = vmul.f32 %v2199, %v569
  %v2212 = vmul.f32 %v2200, %v573
  %v2213 = vmul.f32 %v2201, %v577
  %v2214 = vmul.f32 %v2202, %v557
  %v2215 = vmul.f32 %v2203, %v561
  %v2216 = vmul.f32 %v2204, %v565
  %v2217 = vmul.f32 %v2205, %v569
  %v2218 = vmul.f32 %v2206, %v573
  %v2219 = vmul.f32 %v2207, %v577
  %v2220 = vadd.f32 %v2208, %v2209
  %v2221 = vadd.f32 %v2220, %v2210
  %v2222 = vadd.f32 %v2221, %v2211
  %v2223 = vadd.f32 %v2222, %v2212
  %v2224 = vsel %vm600, %v2213, 0.0
  %v2225 = vadd.f32 %v2223, %v2224
  %2226 = vadd.xlane.f32.xlu0 %v2225
  %v2227 = vpop.xlane.xlu0 %2226
  %v2228 = vadd.f32 %v2214, %v2215
  %v2229 = vadd.f32 %v2228, %v2216
  %v2230 = vadd.f32 %v2229, %v2217
  %v2231 = vadd.f32 %v2230, %v2218
  %v2232 = vsel %vm600, %v2219, 0.0
  %v2233 = vadd.f32 %v2231, %v2232
  %2234 = vadd.xlane.f32.xlu0 %v2233
  %v2235 = vpop.xlane.xlu0 %2234
  %v2236 = vmul.f32 %v2227, 0.001953125
  %v2237 = vmul.f32 %v2235, 0.001953125
  %v2238 = vmul.f32 %v2194, %v2194
  %v2239 = vmul.f32 %v2195, %v2195
  %v2240 = vsub.f32 %v2236, %v2238
  %v2241 = vsub.f32 %v2237, %v2239
  %v2242 = vld [vmem:[%s17] sm:$0xff]
  %v2243 = vld [vmem:[%s17 + $0x8] sm:$0xff]
  %v2244 = vadd.f32 %v2240, 1e-05
  %v2245 = vadd.f32 %v2241, 1e-05
  %v2246 = vrsqrt.pop %v2244
  %v2247 = vrsqrt.pop %v2245
  %v2248 = vmul.f32 %v2242, %v2246
  %v2249 = vmul.f32 %v2243, %v2247
  %2251 = vset.pattern.permute.xlu0 0
  %2252 = vperm.xlu0 %2251, %v2248
  %v2253 = vpop.permute.xlu0 %2252
  %2256 = vset.pattern.permute.xlu0 0
  %2257 = vperm.xlu0 %2256, %v2249
  %v2258 = vpop.permute.xlu0 %2257
  %v2260 = vmul.f32 %v2072, %v2253
  %v2261 = vmul.f32 %v2074, %v2253
  %v2262 = vmul.f32 %v2115, %v2253
  %v2263 = vmul.f32 %v2117, %v2253
  %v2264 = vmul.f32 %v2158, %v2253
  %v2265 = vmul.f32 %v2160, %v2253
  %v2266 = vmul.f32 %v2076, %v2258
  %v2267 = vmul.f32 %v2078, %v2258
  %v2268 = vmul.f32 %v2119, %v2258
  %v2269 = vmul.f32 %v2121, %v2258
  %v2270 = vmul.f32 %v2162, %v2258
  %v2271 = vmul.f32 %v2164, %v2258
  %v2272 = vld [vmem:[%s19] sm:$0xff]
  %v2273 = vld [vmem:[%s19 + $0x8] sm:$0xff]
  %v2274 = vmul.f32 %v2194, %v2248
  %v2275 = vmul.f32 %v2195, %v2249
  %v2276 = vsub.f32 %v2272, %v2274
  %v2277 = vsub.f32 %v2273, %v2275
  %2279 = vset.pattern.permute.xlu0 0
  %2280 = vperm.xlu0 %2279, %v2276
  %v2281 = vpop.permute.xlu0 %2280
  %2284 = vset.pattern.permute.xlu0 0
  %2285 = vperm.xlu0 %2284, %v2277
  %v2286 = vpop.permute.xlu0 %2285
  %v2288 = vadd.f32 %v2260, %v2281
  %v2289 = vadd.f32 %v2261, %v2281
  %v2290 = vadd.f32 %v2262, %v2281
  %v2291 = vadd.f32 %v2263, %v2281
  %v2292 = vadd.f32 %v2264, %v2281
  %v2293 = vadd.f32 %v2265, %v2281
  %v2294 = vadd.f32 %v2266, %v2286
  %v2295 = vadd.f32 %v2267, %v2286
  %v2296 = vadd.f32 %v2268, %v2286
  %v2297 = vadd.f32 %v2269, %v2286
  %v2298 = vadd.f32 %v2270, %v2286
  %v2299 = vadd.f32 %v2271, %v2286
  %v2300 = vadd.f32 %v2288, %v973
  %v2301 = vadd.f32 %v2289, %v974
  %v2302 = vadd.f32 %v2290, %v975
  %v2303 = vadd.f32 %v2291, %v976
  %v2304 = vadd.f32 %v2292, %v977
  %v2305 = vadd.f32 %v2293, %v960
  %v2306 = vadd.f32 %v2294, %v978
  %v2307 = vadd.f32 %v2295, %v979
  %v2308 = vadd.f32 %v2296, %v980
  %v2309 = vadd.f32 %v2297, %v981
  %v2310 = vadd.f32 %v2298, %v982
  %v2311 = vadd.f32 %v2299, %v972
  %v2312 = vmax.f32 %v2300, 0.0
  %v2313 = vmax.f32 %v2301, 0.0
  %v2314 = vmax.f32 %v2302, 0.0
  %v2315 = vmax.f32 %v2303, 0.0
  %v2316 = vmax.f32 %v2304, 0.0
  %v2317 = vmax.f32 %v2305, 0.0
  %v2318 = vmax.f32 %v2306, 0.0
  %v2319 = vmax.f32 %v2307, 0.0
  %v2320 = vmax.f32 %v2308, 0.0
  %v2321 = vmax.f32 %v2309, 0.0
  %v2322 = vmax.f32 %v2310, 0.0
  %v2323 = vmax.f32 %v2311, 0.0
  %v2324 = vmul.f32 %v2312, %v557
  %v2325 = vmul.f32 %v2313, %v561
  %v2326 = vmul.f32 %v2314, %v565
  %v2327 = vmul.f32 %v2315, %v569
  %v2328 = vmul.f32 %v2316, %v573
  %v2329 = vmul.f32 %v2317, %v577
  %v2330 = vmul.f32 %v2318, %v557
  %v2331 = vmul.f32 %v2319, %v561
  %v2332 = vmul.f32 %v2320, %v565
  %v2333 = vmul.f32 %v2321, %v569
  %v2334 = vmul.f32 %v2322, %v573
  %v2335 = vmul.f32 %v2323, %v577
  %2348 = vrot.lane.b32.xlu0 %v2324, 19
  %v2349 = vpop.permute.xlu0 %2348
  %2350 = vrot.lane.b32.xlu0 %v2325, 19
  %v2351 = vpop.permute.xlu0 %2350
  %2352 = vrot.lane.b32.xlu0 %v2326, 19
  %v2353 = vpop.permute.xlu0 %2352
  %2354 = vrot.lane.b32.xlu0 %v2327, 19
  %v2355 = vpop.permute.xlu0 %2354
  %2356 = vrot.lane.b32.xlu0 %v2328, 19
  %v2357 = vpop.permute.xlu0 %2356
  %2358 = vrot.lane.b32.xlu0 %v2329, 19
  %v2359 = vpop.permute.xlu0 %2358
  %2360 = vrot.lane.b32.xlu0 %v2330, 19
  %v2361 = vpop.permute.xlu0 %2360
  %2362 = vrot.lane.b32.xlu0 %v2331, 19
  %v2363 = vpop.permute.xlu0 %2362
  %2364 = vrot.lane.b32.xlu0 %v2332, 19
  %v2365 = vpop.permute.xlu0 %2364
  %2366 = vrot.lane.b32.xlu0 %v2333, 19
  %v2367 = vpop.permute.xlu0 %2366
  %2368 = vrot.lane.b32.xlu0 %v2334, 19
  %v2369 = vpop.permute.xlu0 %2368
  %2370 = vrot.lane.b32.xlu0 %v2335, 19
  %v2371 = vpop.permute.xlu0 %2370
  %v2372 = vsel %vm779, %v2349, %v2351
  %v2373 = vsel %vm779, %v2351, %v2353
  %v2374 = vsel %vm779, %v2353, %v2355
  %v2375 = vsel %vm779, %v2355, %v2357
  %v2376 = vsel %vm779, %v2357, %v2359
  %v2377 = vsel %vm779, %v2361, %v2363
  %v2378 = vsel %vm779, %v2363, %v2365
  %v2379 = vsel %vm779, %v2365, %v2367
  %v2380 = vsel %vm779, %v2367, %v2369
  %v2381 = vsel %vm779, %v2369, %v2371
  %v2394 = vsel %vm779, 0.0, %v2349
  %v2395 = vsel %vm779, 0.0, %v2361
  %v2396 = vsel %vm804, %v2376, 0.0
  %v2397 = vsel %vm804, %v2381, 0.0
  %2402 = vrot.lane.b32.xlu0 %v2394, 127
  %v2403 = vpop.permute.xlu0 %2402
  %2404 = vrot.lane.b32.xlu0 %v2372, 127
  %v2405 = vpop.permute.xlu0 %2404
  %2406 = vrot.lane.b32.xlu0 %v2373, 127
  %v2407 = vpop.permute.xlu0 %2406
  %2408 = vrot.lane.b32.xlu0 %v2374, 127
  %v2409 = vpop.permute.xlu0 %2408
  %2410 = vrot.lane.b32.xlu0 %v2375, 127
  %v2411 = vpop.permute.xlu0 %2410
  %2412 = vrot.lane.b32.xlu0 %v2396, 127
  %v2413 = vpop.permute.xlu0 %2412
  %2414 = vrot.lane.b32.xlu0 %v2395, 127
  %v2415 = vpop.permute.xlu0 %2414
  %2416 = vrot.lane.b32.xlu0 %v2377, 127
  %v2417 = vpop.permute.xlu0 %2416
  %2418 = vrot.lane.b32.xlu0 %v2378, 127
  %v2419 = vpop.permute.xlu0 %2418
  %2420 = vrot.lane.b32.xlu0 %v2379, 127
  %v2421 = vpop.permute.xlu0 %2420
  %2422 = vrot.lane.b32.xlu0 %v2380, 127
  %v2423 = vpop.permute.xlu0 %2422
  %2424 = vrot.lane.b32.xlu0 %v2397, 127
  %v2425 = vpop.permute.xlu0 %2424
  %v2426 = vsel %vm183, %v2403, %v2405
  %v2427 = vsel %vm183, %v2405, %v2407
  %v2428 = vsel %vm183, %v2407, %v2409
  %v2429 = vsel %vm183, %v2409, %v2411
  %v2430 = vsel %vm183, %v2411, %v2413
  %v2431 = vsel %vm183, %v2415, %v2417
  %v2432 = vsel %vm183, %v2417, %v2419
  %v2433 = vsel %vm183, %v2419, %v2421
  %v2434 = vsel %vm183, %v2421, %v2423
  %v2435 = vsel %vm183, %v2423, %v2425
  %2448 = vrot.lane.b32.xlu0 %v2394, 126
  %v2449 = vpop.permute.xlu0 %2448
  %2450 = vrot.lane.b32.xlu0 %v2372, 126
  %v2451 = vpop.permute.xlu0 %2450
  %2452 = vrot.lane.b32.xlu0 %v2373, 126
  %v2453 = vpop.permute.xlu0 %2452
  %2454 = vrot.lane.b32.xlu0 %v2374, 126
  %v2455 = vpop.permute.xlu0 %2454
  %2456 = vrot.lane.b32.xlu0 %v2375, 126
  %v2457 = vpop.permute.xlu0 %2456
  %2458 = vrot.lane.b32.xlu0 %v2396, 126
  %v2459 = vpop.permute.xlu0 %2458
  %2460 = vrot.lane.b32.xlu0 %v2395, 126
  %v2461 = vpop.permute.xlu0 %2460
  %2462 = vrot.lane.b32.xlu0 %v2377, 126
  %v2463 = vpop.permute.xlu0 %2462
  %2464 = vrot.lane.b32.xlu0 %v2378, 126
  %v2465 = vpop.permute.xlu0 %2464
  %2466 = vrot.lane.b32.xlu0 %v2379, 126
  %v2467 = vpop.permute.xlu0 %2466
  %2468 = vrot.lane.b32.xlu0 %v2380, 126
  %v2469 = vpop.permute.xlu0 %2468
  %2470 = vrot.lane.b32.xlu0 %v2397, 126
  %v2471 = vpop.permute.xlu0 %2470
  %v2472 = vsel %vm207, %v2449, %v2451
  %v2473 = vsel %vm207, %v2451, %v2453
  %v2474 = vsel %vm207, %v2453, %v2455
  %v2475 = vsel %vm207, %v2455, %v2457
  %v2476 = vsel %vm207, %v2457, %v2459
  %v2477 = vsel %vm207, %v2461, %v2463
  %v2478 = vsel %vm207, %v2463, %v2465
  %v2479 = vsel %vm207, %v2465, %v2467
  %v2480 = vsel %vm207, %v2467, %v2469
  %v2481 = vsel %vm207, %v2469, %v2471
  %2494 = vrot.lane.b32.xlu0 %v2394, 110
  %v2495 = vpop.permute.xlu0 %2494
  %2496 = vrot.lane.b32.xlu0 %v2372, 110
  %v2497 = vpop.permute.xlu0 %2496
  %2498 = vrot.lane.b32.xlu0 %v2373, 110
  %v2499 = vpop.permute.xlu0 %2498
  %2500 = vrot.lane.b32.xlu0 %v2374, 110
  %v2501 = vpop.permute.xlu0 %2500
  %2502 = vrot.lane.b32.xlu0 %v2375, 110
  %v2503 = vpop.permute.xlu0 %2502
  %2504 = vrot.lane.b32.xlu0 %v2396, 110
  %v2505 = vpop.permute.xlu0 %2504
  %2506 = vrot.lane.b32.xlu0 %v2395, 110
  %v2507 = vpop.permute.xlu0 %2506
  %2508 = vrot.lane.b32.xlu0 %v2377, 110
  %v2509 = vpop.permute.xlu0 %2508
  %2510 = vrot.lane.b32.xlu0 %v2378, 110
  %v2511 = vpop.permute.xlu0 %2510
  %2512 = vrot.lane.b32.xlu0 %v2379, 110
  %v2513 = vpop.permute.xlu0 %2512
  %2514 = vrot.lane.b32.xlu0 %v2380, 110
  %v2515 = vpop.permute.xlu0 %2514
  %2516 = vrot.lane.b32.xlu0 %v2397, 110
  %v2517 = vpop.permute.xlu0 %2516
  %v2518 = vsel %vm231, %v2495, %v2497
  %v2519 = vsel %vm231, %v2497, %v2499
  %v2520 = vsel %vm231, %v2499, %v2501
  %v2521 = vsel %vm231, %v2501, %v2503
  %v2522 = vsel %vm231, %v2503, %v2505
  %v2523 = vsel %vm231, %v2507, %v2509
  %v2524 = vsel %vm231, %v2509, %v2511
  %v2525 = vsel %vm231, %v2511, %v2513
  %v2526 = vsel %vm231, %v2513, %v2515
  %v2527 = vsel %vm231, %v2515, %v2517
  %2540 = vrot.lane.b32.xlu0 %v2394, 109
  %v2541 = vpop.permute.xlu0 %2540
  %2542 = vrot.lane.b32.xlu0 %v2372, 109
  %v2543 = vpop.permute.xlu0 %2542
  %2544 = vrot.lane.b32.xlu0 %v2373, 109
  %v2545 = vpop.permute.xlu0 %2544
  %2546 = vrot.lane.b32.xlu0 %v2374, 109
  %v2547 = vpop.permute.xlu0 %2546
  %2548 = vrot.lane.b32.xlu0 %v2375, 109
  %v2549 = vpop.permute.xlu0 %2548
  %2550 = vrot.lane.b32.xlu0 %v2396, 109
  %v2551 = vpop.permute.xlu0 %2550
  %2552 = vrot.lane.b32.xlu0 %v2395, 109
  %v2553 = vpop.permute.xlu0 %2552
  %2554 = vrot.lane.b32.xlu0 %v2377, 109
  %v2555 = vpop.permute.xlu0 %2554
  %2556 = vrot.lane.b32.xlu0 %v2378, 109
  %v2557 = vpop.permute.xlu0 %2556
  %2558 = vrot.lane.b32.xlu0 %v2379, 109
  %v2559 = vpop.permute.xlu0 %2558
  %2560 = vrot.lane.b32.xlu0 %v2380, 109
  %v2561 = vpop.permute.xlu0 %2560
  %2562 = vrot.lane.b32.xlu0 %v2397, 109
  %v2563 = vpop.permute.xlu0 %2562
  %v2564 = vsel %vm255, %v2541, %v2543
  %v2565 = vsel %vm255, %v2543, %v2545
  %v2566 = vsel %vm255, %v2545, %v2547
  %v2567 = vsel %vm255, %v2547, %v2549
  %v2568 = vsel %vm255, %v2549, %v2551
  %v2569 = vsel %vm255, %v2553, %v2555
  %v2570 = vsel %vm255, %v2555, %v2557
  %v2571 = vsel %vm255, %v2557, %v2559
  %v2572 = vsel %vm255, %v2559, %v2561
  %v2573 = vsel %vm255, %v2561, %v2563
  %2586 = vrot.lane.b32.xlu0 %v2394, 108
  %v2587 = vpop.permute.xlu0 %2586
  %2588 = vrot.lane.b32.xlu0 %v2372, 108
  %v2589 = vpop.permute.xlu0 %2588
  %2590 = vrot.lane.b32.xlu0 %v2373, 108
  %v2591 = vpop.permute.xlu0 %2590
  %2592 = vrot.lane.b32.xlu0 %v2374, 108
  %v2593 = vpop.permute.xlu0 %2592
  %2594 = vrot.lane.b32.xlu0 %v2375, 108
  %v2595 = vpop.permute.xlu0 %2594
  %2596 = vrot.lane.b32.xlu0 %v2396, 108
  %v2597 = vpop.permute.xlu0 %2596
  %2598 = vrot.lane.b32.xlu0 %v2395, 108
  %v2599 = vpop.permute.xlu0 %2598
  %2600 = vrot.lane.b32.xlu0 %v2377, 108
  %v2601 = vpop.permute.xlu0 %2600
  %2602 = vrot.lane.b32.xlu0 %v2378, 108
  %v2603 = vpop.permute.xlu0 %2602
  %2604 = vrot.lane.b32.xlu0 %v2379, 108
  %v2605 = vpop.permute.xlu0 %2604
  %2606 = vrot.lane.b32.xlu0 %v2380, 108
  %v2607 = vpop.permute.xlu0 %2606
  %2608 = vrot.lane.b32.xlu0 %v2397, 108
  %v2609 = vpop.permute.xlu0 %2608
  %v2610 = vsel %vm279, %v2587, %v2589
  %v2611 = vsel %vm279, %v2589, %v2591
  %v2612 = vsel %vm279, %v2591, %v2593
  %v2613 = vsel %vm279, %v2593, %v2595
  %v2614 = vsel %vm279, %v2595, %v2597
  %v2615 = vsel %vm279, %v2599, %v2601
  %v2616 = vsel %vm279, %v2601, %v2603
  %v2617 = vsel %vm279, %v2603, %v2605
  %v2618 = vsel %vm279, %v2605, %v2607
  %v2619 = vsel %vm279, %v2607, %v2609
  %2632 = vrot.lane.b32.xlu0 %v2394, 92
  %v2633 = vpop.permute.xlu0 %2632
  %2634 = vrot.lane.b32.xlu0 %v2372, 92
  %v2635 = vpop.permute.xlu0 %2634
  %2636 = vrot.lane.b32.xlu0 %v2373, 92
  %v2637 = vpop.permute.xlu0 %2636
  %2638 = vrot.lane.b32.xlu0 %v2374, 92
  %v2639 = vpop.permute.xlu0 %2638
  %2640 = vrot.lane.b32.xlu0 %v2375, 92
  %v2641 = vpop.permute.xlu0 %2640
  %2642 = vrot.lane.b32.xlu0 %v2396, 92
  %v2643 = vpop.permute.xlu0 %2642
  %2644 = vrot.lane.b32.xlu0 %v2395, 92
  %v2645 = vpop.permute.xlu0 %2644
  %2646 = vrot.lane.b32.xlu0 %v2377, 92
  %v2647 = vpop.permute.xlu0 %2646
  %2648 = vrot.lane.b32.xlu0 %v2378, 92
  %v2649 = vpop.permute.xlu0 %2648
  %2650 = vrot.lane.b32.xlu0 %v2379, 92
  %v2651 = vpop.permute.xlu0 %2650
  %2652 = vrot.lane.b32.xlu0 %v2380, 92
  %v2653 = vpop.permute.xlu0 %2652
  %2654 = vrot.lane.b32.xlu0 %v2397, 92
  %v2655 = vpop.permute.xlu0 %2654
  %v2656 = vsel %vm303, %v2633, %v2635
  %v2657 = vsel %vm303, %v2635, %v2637
  %v2658 = vsel %vm303, %v2637, %v2639
  %v2659 = vsel %vm303, %v2639, %v2641
  %v2660 = vsel %vm303, %v2641, %v2643
  %v2661 = vsel %vm303, %v2645, %v2647
  %v2662 = vsel %vm303, %v2647, %v2649
  %v2663 = vsel %vm303, %v2649, %v2651
  %v2664 = vsel %vm303, %v2651, %v2653
  %v2665 = vsel %vm303, %v2653, %v2655
  %2678 = vrot.lane.b32.xlu0 %v2394, 91
  %v2679 = vpop.permute.xlu0 %2678
  %2680 = vrot.lane.b32.xlu0 %v2372, 91
  %v2681 = vpop.permute.xlu0 %2680
  %2682 = vrot.lane.b32.xlu0 %v2373, 91
  %v2683 = vpop.permute.xlu0 %2682
  %2684 = vrot.lane.b32.xlu0 %v2374, 91
  %v2685 = vpop.permute.xlu0 %2684
  %2686 = vrot.lane.b32.xlu0 %v2375, 91
  %v2687 = vpop.permute.xlu0 %2686
  %2688 = vrot.lane.b32.xlu0 %v2396, 91
  %v2689 = vpop.permute.xlu0 %2688
  %2690 = vrot.lane.b32.xlu0 %v2395, 91
  %v2691 = vpop.permute.xlu0 %2690
  %2692 = vrot.lane.b32.xlu0 %v2377, 91
  %v2693 = vpop.permute.xlu0 %2692
  %2694 = vrot.lane.b32.xlu0 %v2378, 91
  %v2695 = vpop.permute.xlu0 %2694
  %2696 = vrot.lane.b32.xlu0 %v2379, 91
  %v2697 = vpop.permute.xlu0 %2696
  %2698 = vrot.lane.b32.xlu0 %v2380, 91
  %v2699 = vpop.permute.xlu0 %2698
  %2700 = vrot.lane.b32.xlu0 %v2397, 91
  %v2701 = vpop.permute.xlu0 %2700
  %v2702 = vsel %vm327, %v2679, %v2681
  %v2703 = vsel %vm327, %v2681, %v2683
  %v2704 = vsel %vm327, %v2683, %v2685
  %v2705 = vsel %vm327, %v2685, %v2687
  %v2706 = vsel %vm327, %v2687, %v2689
  %v2707 = vsel %vm327, %v2691, %v2693
  %v2708 = vsel %vm327, %v2693, %v2695
  %v2709 = vsel %vm327, %v2695, %v2697
  %v2710 = vsel %vm327, %v2697, %v2699
  %v2711 = vsel %vm327, %v2699, %v2701
  %2724 = vrot.lane.b32.xlu0 %v2394, 90
  %v2725 = vpop.permute.xlu0 %2724
  %2726 = vrot.lane.b32.xlu0 %v2372, 90
  %v2727 = vpop.permute.xlu0 %2726
  %2728 = vrot.lane.b32.xlu0 %v2373, 90
  %v2729 = vpop.permute.xlu0 %2728
  %2730 = vrot.lane.b32.xlu0 %v2374, 90
  %v2731 = vpop.permute.xlu0 %2730
  %2732 = vrot.lane.b32.xlu0 %v2375, 90
  %v2733 = vpop.permute.xlu0 %2732
  %2734 = vrot.lane.b32.xlu0 %v2396, 90
  %v2735 = vpop.permute.xlu0 %2734
  %2736 = vrot.lane.b32.xlu0 %v2395, 90
  %v2737 = vpop.permute.xlu0 %2736
  %2738 = vrot.lane.b32.xlu0 %v2377, 90
  %v2739 = vpop.permute.xlu0 %2738
  %2740 = vrot.lane.b32.xlu0 %v2378, 90
  %v2741 = vpop.permute.xlu0 %2740
  %2742 = vrot.lane.b32.xlu0 %v2379, 90
  %v2743 = vpop.permute.xlu0 %2742
  %2744 = vrot.lane.b32.xlu0 %v2380, 90
  %v2745 = vpop.permute.xlu0 %2744
  %2746 = vrot.lane.b32.xlu0 %v2397, 90
  %v2747 = vpop.permute.xlu0 %2746
  %v2748 = vsel %vm351, %v2725, %v2727
  %v2749 = vsel %vm351, %v2727, %v2729
  %v2750 = vsel %vm351, %v2729, %v2731
  %v2751 = vsel %vm351, %v2731, %v2733
  %v2752 = vsel %vm351, %v2733, %v2735
  %v2753 = vsel %vm351, %v2737, %v2739
  %v2754 = vsel %vm351, %v2739, %v2741
  %v2755 = vsel %vm351, %v2741, %v2743
  %v2756 = vsel %vm351, %v2743, %v2745
  %v2757 = vsel %vm351, %v2745, %v2747
  %v2770 = vld [vmem:[%s27] sm:$0xff]
  %v2771 = vld [vmem:[%s27 + $0x8] sm:$0xff]
  %v2772 = vld [vmem:[%s27 + $0x10] sm:$0xff]
  %v2773 = vld [vmem:[%s27 + $0x18] sm:$0xff]
  %v2774 = vpack.c.bf16 %v2395, %v2394
  %v2775 = vpack.c.bf16 %v2377, %v2372
  %v2776 = vpack.c.bf16 %v2378, %v2373
  %v2777 = vpack.c.bf16 %v2379, %v2374
  %v2778 = vpack.c.bf16 %v2380, %v2375
  %v2779 = vpack.c.bf16 %v2397, %v2396
  %v2780 = vpack.c.bf16 %v2431, %v2426
  %v2781 = vpack.c.bf16 %v2432, %v2427
  %v2782 = vpack.c.bf16 %v2433, %v2428
  %v2783 = vpack.c.bf16 %v2434, %v2429
  %v2784 = vpack.c.bf16 %v2435, %v2430
  %v2785 = vpack.c.bf16 %v2425, %v2413
  %v2786 = vpack.c.bf16 %v2477, %v2472
  %v2787 = vpack.c.bf16 %v2478, %v2473
  %v2788 = vpack.c.bf16 %v2479, %v2474
  %v2789 = vpack.c.bf16 %v2480, %v2475
  %v2790 = vpack.c.bf16 %v2481, %v2476
  %v2791 = vpack.c.bf16 %v2471, %v2459
  %v2792 = vpack.c.bf16 %v2523, %v2518
  %v2793 = vpack.c.bf16 %v2524, %v2519
  %v2794 = vpack.c.bf16 %v2525, %v2520
  %v2795 = vpack.c.bf16 %v2526, %v2521
  %v2796 = vpack.c.bf16 %v2527, %v2522
  %v2797 = vpack.c.bf16 %v2517, %v2505
  %v2798 = vpack.c.bf16 %v2569, %v2564
  %v2799 = vpack.c.bf16 %v2570, %v2565
  %v2800 = vpack.c.bf16 %v2571, %v2566
  %v2801 = vpack.c.bf16 %v2572, %v2567
  %v2802 = vpack.c.bf16 %v2573, %v2568
  %v2803 = vpack.c.bf16 %v2563, %v2551
  %v2804 = vpack.c.bf16 %v2615, %v2610
  %v2805 = vpack.c.bf16 %v2616, %v2611
  %v2806 = vpack.c.bf16 %v2617, %v2612
  %v2807 = vpack.c.bf16 %v2618, %v2613
  %v2808 = vpack.c.bf16 %v2619, %v2614
  %v2809 = vpack.c.bf16 %v2609, %v2597
  %v2810 = vpack.c.bf16 %v2661, %v2656
  %v2811 = vpack.c.bf16 %v2662, %v2657
  %v2812 = vpack.c.bf16 %v2663, %v2658
  %v2813 = vpack.c.bf16 %v2664, %v2659
  %v2814 = vpack.c.bf16 %v2665, %v2660
  %v2815 = vpack.c.bf16 %v2655, %v2643
  %v2816 = vpack.c.bf16 %v2707, %v2702
  %v2817 = vpack.c.bf16 %v2708, %v2703
  %v2818 = vpack.c.bf16 %v2709, %v2704
  %v2819 = vpack.c.bf16 %v2710, %v2705
  %v2820 = vpack.c.bf16 %v2711, %v2706
  %v2821 = vpack.c.bf16 %v2701, %v2689
  %v2822 = vpack.c.bf16 %v2753, %v2748
  %v2823 = vpack.c.bf16 %v2754, %v2749
  %v2824 = vpack.c.bf16 %v2755, %v2750
  %v2825 = vpack.c.bf16 %v2756, %v2751
  %v2826 = vpack.c.bf16 %v2757, %v2752
  %v2827 = vpack.c.bf16 %v2747, %v2735
  %v2832 = vunpack.c.l.b16 %v2770
  %v2833 = vunpack.c.h.b16 %v2770
  %v2834 = vunpack.c.l.b16 %v2771
  %v2835 = vunpack.c.h.b16 %v2771
  %v2836 = vunpack.c.l.b16 %v2772
  %v2837 = vunpack.c.h.b16 %v2772
  %v2838 = vunpack.c.l.b16 %v2773
  %v2839 = vunpack.c.h.b16 %v2773
  %v2840 = vpack.c.b16 %v2834, %v2832
  %v2841 = vpack.c.b16 %v2835, %v2833
  %v2842 = vpack.c.b16 %v2838, %v2836
  %v2843 = vpack.c.b16 %v2839, %v2837
  %v2847 = vsel %vm1244, %v2841, 0
  %v2850 = vsel %vm1244, %v2843, 0
  %2852 = vmatprep.subr.bf16.mxu0 %v2775
  %2853 = vmatpush1.bf16.msra.mxu0 %v2774
  %2854 = vmatprep.subr.bf16.mxu0 %v2781
  %2855 = vmatpush1.bf16.msra.mxu0 %v2780
  %2856 = vmatprep.subr.bf16.mxu0 %v2787
  %2857 = vmatpush1.bf16.msra.mxu0 %v2786
  %2858 = vmatprep.subr.bf16.mxu0 %v2793
  %2859 = vmatpush1.bf16.msra.mxu0 %v2792
  %2860 = vmatprep.subr.bf16.mxu0 %v2799
  %2861 = vmatpush1.bf16.msra.mxu0 %v2798
  %2862 = vmatprep.subr.bf16.mxu0 %v2805
  %2863 = vmatpush1.bf16.msra.mxu0 %v2804
  %2864 = vmatprep.subr.bf16.mxu0 %v2811
  %2865 = vmatpush1.bf16.msra.mxu0 %v2810
  %2866 = vmatprep.subr.bf16.mxu0 %v2817
  %2867 = vmatpush1.bf16.msra.mxu0 %v2816
  %2868 = vmatprep.subr.bf16.mxu0 %v2823
  %2869 = vmatpush1.bf16.msra.mxu0 %v2822
  %2870 = vmatprep.subr.bf16.mxu0 0
  %2871 = vmatpush1.bf16.msra.mxu0 0
  %2872 = vmatprep.subr.bf16.mxu0 0
  %2873 = vmatpush1.bf16.msra.mxu0 0
  %2874 = vmatprep.subr.bf16.mxu0 0
  %2875 = vmatpush1.bf16.msra.mxu0 0
  %2876 = vmatprep.subr.bf16.mxu0 0
  %2877 = vmatpush1.bf16.msra.mxu0 0
  %2878 = vmatprep.subr.bf16.mxu0 0
  %2879 = vmatpush1.bf16.msra.mxu0 0
  %2880 = vmatprep.subr.bf16.mxu0 0
  %2881 = vmatpush1.bf16.msra.mxu0 0
  %2882 = vmatprep.subr.bf16.mxu0 0
  %2883 = vmatpush1.bf16.msra.mxu0 0
  %2884 = vmatprep.mubr.bf16.mxu0 %v2847
  %2885 = vmatmul.mubr.bf16.gmra.mrb[0].mxu0 %v2840
  %v2886 = vpop.f32.mrb[0].mxu0
  %v2887 = vadd.f32 0.0, %v2886
  %v2888 = vpop.f32.mrb[0].mxu0
  %v2889 = vadd.f32 0.0, %v2888
  %v2890 = vpop.f32.mrb[0].mxu0
  %v2891 = vadd.f32 0.0, %v2890
  %v2892 = vpop.f32.mrb[0].mxu0
  %v2893 = vadd.f32 0.0, %v2892
  %2894 = vmatprep.mubr.bf16.mxu0 %v2850
  %2895 = vmatmul.mubr.bf16.gmra.mrb[0].mxu0 %v2842
  %v2896 = vpop.f32.mrb[0].mxu0
  %v2897 = vadd.f32 0.0, %v2896
  %v2898 = vpop.f32.mrb[0].mxu0
  %v2899 = vadd.f32 0.0, %v2898
  %v2900 = vpop.f32.mrb[0].mxu0
  %v2901 = vadd.f32 0.0, %v2900
  %v2902 = vpop.f32.mrb[0].mxu0
  %v2903 = vadd.f32 0.0, %v2902
  %2904 = vdwg.mxu0
  %2905 = vmatprep.subr.bf16.mxu0 %v2777
  %2906 = vmatpush1.bf16.msra.mxu0 %v2776
  %2907 = vmatprep.subr.bf16.mxu0 %v2783
  %2908 = vmatpush1.bf16.msra.mxu0 %v2782
  %2909 = vmatprep.subr.bf16.mxu0 %v2789
  %2910 = vmatpush1.bf16.msra.mxu0 %v2788
  %2911 = vmatprep.subr.bf16.mxu0 %v2795
  %2912 = vmatpush1.bf16.msra.mxu0 %v2794
  %2913 = vmatprep.subr.bf16.mxu0 %v2801
  %2914 = vmatpush1.bf16.msra.mxu0 %v2800
  %2915 = vmatprep.subr.bf16.mxu0 %v2807
  %2916 = vmatpush1.bf16.msra.mxu0 %v2806
  %2917 = vmatprep.subr.bf16.mxu0 %v2813
  %2918 = vmatpush1.bf16.msra.mxu0 %v2812
  %2919 = vmatprep.subr.bf16.mxu0 %v2819
  %2920 = vmatpush1.bf16.msra.mxu0 %v2818
  %2921 = vmatprep.subr.bf16.mxu0 %v2825
  %2922 = vmatpush1.bf16.msra.mxu0 %v2824
  %2923 = vmatprep.subr.bf16.mxu0 0
  %2924 = vmatpush1.bf16.msra.mxu0 0
  %2925 = vmatprep.subr.bf16.mxu0 0
  %2926 = vmatpush1.bf16.msra.mxu0 0
  %2927 = vmatprep.subr.bf16.mxu0 0
  %2928 = vmatpush1.bf16.msra.mxu0 0
  %2929 = vmatprep.subr.bf16.mxu0 0
  %2930 = vmatpush1.bf16.msra.mxu0 0
  %2931 = vmatprep.subr.bf16.mxu0 0
  %2932 = vmatpush1.bf16.msra.mxu0 0
  %2933 = vmatprep.subr.bf16.mxu0 0
  %2934 = vmatpush1.bf16.msra.mxu0 0
  %2935 = vmatprep.subr.bf16.mxu0 0
  %2936 = vmatpush1.bf16.msra.mxu0 0
  %2937 = vmatprep.mubr.bf16.mxu0 %v2847
  %2938 = vmatmul.mubr.bf16.gmra.mrb[0].mxu0 %v2840
  %v2939 = vpop.f32.mrb[0].mxu0
  %v2940 = vadd.f32 0.0, %v2939
  %v2941 = vpop.f32.mrb[0].mxu0
  %v2942 = vadd.f32 0.0, %v2941
  %v2943 = vpop.f32.mrb[0].mxu0
  %v2944 = vadd.f32 0.0, %v2943
  %v2945 = vpop.f32.mrb[0].mxu0
  %v2946 = vadd.f32 0.0, %v2945
  %2947 = vmatprep.mubr.bf16.mxu0 %v2850
  %2948 = vmatmul.mubr.bf16.gmra.mrb[0].mxu0 %v2842
  %v2949 = vpop.f32.mrb[0].mxu0
  %v2950 = vadd.f32 0.0, %v2949
  %v2951 = vpop.f32.mrb[0].mxu0
  %v2952 = vadd.f32 0.0, %v2951
  %v2953 = vpop.f32.mrb[0].mxu0
  %v2954 = vadd.f32 0.0, %v2953
  %v2955 = vpop.f32.mrb[0].mxu0
  %v2956 = vadd.f32 0.0, %v2955
  %2957 = vdwg.mxu0
  %2958 = vmatprep.subr.bf16.mxu0 %v2779
  %2959 = vmatpush1.bf16.msra.mxu0 %v2778
  %2960 = vmatprep.subr.bf16.mxu0 %v2785
  %2961 = vmatpush1.bf16.msra.mxu0 %v2784
  %2962 = vmatprep.subr.bf16.mxu0 %v2791
  %2963 = vmatpush1.bf16.msra.mxu0 %v2790
  %2964 = vmatprep.subr.bf16.mxu0 %v2797
  %2965 = vmatpush1.bf16.msra.mxu0 %v2796
  %2966 = vmatprep.subr.bf16.mxu0 %v2803
  %2967 = vmatpush1.bf16.msra.mxu0 %v2802
  %2968 = vmatprep.subr.bf16.mxu0 %v2809
  %2969 = vmatpush1.bf16.msra.mxu0 %v2808
  %2970 = vmatprep.subr.bf16.mxu0 %v2815
  %2971 = vmatpush1.bf16.msra.mxu0 %v2814
  %2972 = vmatprep.subr.bf16.mxu0 %v2821
  %2973 = vmatpush1.bf16.msra.mxu0 %v2820
  %2974 = vmatprep.subr.bf16.mxu0 %v2827
  %2975 = vmatpush1.bf16.msra.mxu0 %v2826
  %2976 = vmatprep.subr.bf16.mxu0 0
  %2977 = vmatpush1.bf16.msra.mxu0 0
  %2978 = vmatprep.subr.bf16.mxu0 0
  %2979 = vmatpush1.bf16.msra.mxu0 0
  %2980 = vmatprep.subr.bf16.mxu0 0
  %2981 = vmatpush1.bf16.msra.mxu0 0
  %2982 = vmatprep.subr.bf16.mxu0 0
  %2983 = vmatpush1.bf16.msra.mxu0 0
  %2984 = vmatprep.subr.bf16.mxu0 0
  %2985 = vmatpush1.bf16.msra.mxu0 0
  %2986 = vmatprep.subr.bf16.mxu0 0
  %2987 = vmatpush1.bf16.msra.mxu0 0
  %2988 = vmatprep.subr.bf16.mxu0 0
  %2989 = vmatpush1.bf16.msra.mxu0 0
  %2990 = vmatprep.mubr.bf16.mxu0 %v2847
  %2991 = vmatmul.mubr.bf16.gmra.mrb[0].mxu0 %v2840
  %v2992 = vpop.f32.mrb[0].mxu0
  %v2993 = vadd.f32 0.0, %v2992
  %v2994 = vpop.f32.mrb[0].mxu0
  %v2995 = vadd.f32 0.0, %v2994
  %v2996 = vpop.f32.mrb[0].mxu0
  %v2997 = vadd.f32 0.0, %v2996
  %v2998 = vpop.f32.mrb[0].mxu0
  %v2999 = vadd.f32 0.0, %v2998
  %3000 = vmatprep.mubr.bf16.mxu0 %v2850
  %3001 = vmatmul.mubr.bf16.gmra.mrb[0].mxu0 %v2842
  %v3002 = vpop.f32.mrb[0].mxu0
  %v3003 = vadd.f32 0.0, %v3002
  %v3004 = vpop.f32.mrb[0].mxu0
  %v3005 = vadd.f32 0.0, %v3004
  %v3006 = vpop.f32.mrb[0].mxu0
  %v3007 = vadd.f32 0.0, %v3006
  %v3008 = vpop.f32.mrb[0].mxu0
  %v3009 = vadd.f32 0.0, %v3008
  %3010 = vdwg.mxu0
  %v3011 = vld [vmem:[%s35] sm:$0x3f]
  %v3013 = vlaneseq
  %v3014 = vshrl.u32 %v3013, 7
  %v3015 = vsub.s32 0, %v3014
  %v3016 = vrot.slane %v3011, %v3015
  %v3017 = vlaneseq
  %v3018 = vshrl.u32 %v3017, 7
  %v3019 = vsub.s32 1, %v3018
  %v3020 = vrot.slane %v3011, %v3019
  %v3021 = vlaneseq
  %v3022 = vshrl.u32 %v3021, 7
  %v3023 = vsub.s32 2, %v3022
  %v3024 = vrot.slane %v3011, %v3023
  %v3025 = vlaneseq
  %v3026 = vshrl.u32 %v3025, 7
  %v3027 = vsub.s32 3, %v3026
  %v3028 = vrot.slane %v3011, %v3027
  %v3029 = vlaneseq
  %v3030 = vshrl.u32 %v3029, 7
  %v3031 = vsub.s32 4, %v3030
  %v3032 = vrot.slane %v3011, %v3031
  %v3033 = vlaneseq
  %v3034 = vshrl.u32 %v3033, 7
  %v3035 = vsub.s32 5, %v3034
  %v3036 = vrot.slane %v3011, %v3035
  %v3043 = vmul.f32 %v2887, %v3016
  %v3044 = vmul.f32 %v2889, %v3020
  %v3045 = vmul.f32 %v2940, %v3024
  %v3046 = vmul.f32 %v2942, %v3028
  %v3047 = vmul.f32 %v2993, %v3032
  %v3048 = vmul.f32 %v2995, %v3036
  %v3049 = vmul.f32 %v2891, %v3016
  %v3050 = vmul.f32 %v2893, %v3020
  %v3051 = vmul.f32 %v2944, %v3024
  %v3052 = vmul.f32 %v2946, %v3028
  %v3053 = vmul.f32 %v2997, %v3032
  %v3054 = vmul.f32 %v2999, %v3036
  %v3055 = vmul.f32 %v2897, %v3016
  %v3056 = vmul.f32 %v2899, %v3020
  %v3057 = vmul.f32 %v2950, %v3024
  %v3058 = vmul.f32 %v2952, %v3028
  %v3059 = vmul.f32 %v3003, %v3032
  %v3060 = vmul.f32 %v3005, %v3036
  %v3061 = vmul.f32 %v2901, %v3016
  %v3062 = vmul.f32 %v2903, %v3020
  %v3063 = vmul.f32 %v2954, %v3024
  %v3064 = vmul.f32 %v2956, %v3028
  %v3065 = vmul.f32 %v3007, %v3032
  %v3066 = vmul.f32 %v3009, %v3036
  %v3067 = vadd.f32 %v3043, %v3044
  %v3068 = vadd.f32 %v3067, %v3045
  %v3069 = vadd.f32 %v3068, %v3046
  %v3070 = vadd.f32 %v3069, %v3047
  %v3071 = vsel %vm600, %v3048, 0.0
  %v3072 = vadd.f32 %v3070, %v3071
  %3073 = vadd.xlane.f32.xlu0 %v3072
  %v3074 = vpop.xlane.xlu0 %3073
  %v3075 = vadd.f32 %v3049, %v3050
  %v3076 = vadd.f32 %v3075, %v3051
  %v3077 = vadd.f32 %v3076, %v3052
  %v3078 = vadd.f32 %v3077, %v3053
  %v3079 = vsel %vm600, %v3054, 0.0
  %v3080 = vadd.f32 %v3078, %v3079
  %3081 = vadd.xlane.f32.xlu0 %v3080
  %v3082 = vpop.xlane.xlu0 %3081
  %v3083 = vadd.f32 %v3055, %v3056
  %v3084 = vadd.f32 %v3083, %v3057
  %v3085 = vadd.f32 %v3084, %v3058
  %v3086 = vadd.f32 %v3085, %v3059
  %v3087 = vsel %vm600, %v3060, 0.0
  %v3088 = vadd.f32 %v3086, %v3087
  %3089 = vadd.xlane.f32.xlu0 %v3088
  %v3090 = vpop.xlane.xlu0 %3089
  %v3091 = vadd.f32 %v3061, %v3062
  %v3092 = vadd.f32 %v3091, %v3063
  %v3093 = vadd.f32 %v3092, %v3064
  %v3094 = vadd.f32 %v3093, %v3065
  %v3095 = vsel %vm600, %v3066, 0.0
  %v3096 = vadd.f32 %v3094, %v3095
  %3097 = vadd.xlane.f32.xlu0 %v3096
  %v3098 = vpop.xlane.xlu0 %3097
  %v3099 = vmul.f32 %v3074, 0.0078125
  %v3100 = vmul.f32 %v3082, 0.0078125
  %v3101 = vmul.f32 %v3090, 0.0078125
  %v3102 = vmul.f32 %v3098, 0.0078125
  %v3103 = vmul.f32 %v2887, %v2887
  %v3104 = vmul.f32 %v2889, %v2889
  %v3105 = vmul.f32 %v2940, %v2940
  %v3106 = vmul.f32 %v2942, %v2942
  %v3107 = vmul.f32 %v2993, %v2993
  %v3108 = vmul.f32 %v2995, %v2995
  %v3109 = vmul.f32 %v2891, %v2891
  %v3110 = vmul.f32 %v2893, %v2893
  %v3111 = vmul.f32 %v2944, %v2944
  %v3112 = vmul.f32 %v2946, %v2946
  %v3113 = vmul.f32 %v2997, %v2997
  %v3114 = vmul.f32 %v2999, %v2999
  %v3115 = vmul.f32 %v2897, %v2897
  %v3116 = vmul.f32 %v2899, %v2899
  %v3117 = vmul.f32 %v2950, %v2950
  %v3118 = vmul.f32 %v2952, %v2952
  %v3119 = vmul.f32 %v3003, %v3003
  %v3120 = vmul.f32 %v3005, %v3005
  %v3121 = vmul.f32 %v2901, %v2901
  %v3122 = vmul.f32 %v2903, %v2903
  %v3123 = vmul.f32 %v2954, %v2954
  %v3124 = vmul.f32 %v2956, %v2956
  %v3125 = vmul.f32 %v3007, %v3007
  %v3126 = vmul.f32 %v3009, %v3009
  %v3127 = vmul.f32 %v3103, %v3016
  %v3128 = vmul.f32 %v3104, %v3020
  %v3129 = vmul.f32 %v3105, %v3024
  %v3130 = vmul.f32 %v3106, %v3028
  %v3131 = vmul.f32 %v3107, %v3032
  %v3132 = vmul.f32 %v3108, %v3036
  %v3133 = vmul.f32 %v3109, %v3016
  %v3134 = vmul.f32 %v3110, %v3020
  %v3135 = vmul.f32 %v3111, %v3024
  %v3136 = vmul.f32 %v3112, %v3028
  %v3137 = vmul.f32 %v3113, %v3032
  %v3138 = vmul.f32 %v3114, %v3036
  %v3139 = vmul.f32 %v3115, %v3016
  %v3140 = vmul.f32 %v3116, %v3020
  %v3141 = vmul.f32 %v3117, %v3024
  %v3142 = vmul.f32 %v3118, %v3028
  %v3143 = vmul.f32 %v3119, %v3032
  %v3144 = vmul.f32 %v3120, %v3036
  %v3145 = vmul.f32 %v3121, %v3016
  %v3146 = vmul.f32 %v3122, %v3020
  %v3147 = vmul.f32 %v3123, %v3024
  %v3148 = vmul.f32 %v3124, %v3028
  %v3149 = vmul.f32 %v3125, %v3032
  %v3150 = vmul.f32 %v3126, %v3036
  %v3151 = vadd.f32 %v3127, %v3128
  %v3152 = vadd.f32 %v3151, %v3129
  %v3153 = vadd.f32 %v3152, %v3130
  %v3154 = vadd.f32 %v3153, %v3131
  %v3155 = vsel %vm600, %v3132, 0.0
  %v3156 = vadd.f32 %v3154, %v3155
  %3157 = vadd.xlane.f32.xlu0 %v3156
  %v3158 = vpop.xlane.xlu0 %3157
  %v3159 = vadd.f32 %v3133, %v3134
  %v3160 = vadd.f32 %v3159, %v3135
  %v3161 = vadd.f32 %v3160, %v3136
  %v3162 = vadd.f32 %v3161, %v3137
  %v3163 = vsel %vm600, %v3138, 0.0
  %v3164 = vadd.f32 %v3162, %v3163
  %3165 = vadd.xlane.f32.xlu0 %v3164
  %v3166 = vpop.xlane.xlu0 %3165
  %v3167 = vadd.f32 %v3139, %v3140
  %v3168 = vadd.f32 %v3167, %v3141
  %v3169 = vadd.f32 %v3168, %v3142
  %v3170 = vadd.f32 %v3169, %v3143
  %v3171 = vsel %vm600, %v3144, 0.0
  %v3172 = vadd.f32 %v3170, %v3171
  %3173 = vadd.xlane.f32.xlu0 %v3172
  %v3174 = vpop.xlane.xlu0 %3173
  %v3175 = vadd.f32 %v3145, %v3146
  %v3176 = vadd.f32 %v3175, %v3147
  %v3177 = vadd.f32 %v3176, %v3148
  %v3178 = vadd.f32 %v3177, %v3149
  %v3179 = vsel %vm600, %v3150, 0.0
  %v3180 = vadd.f32 %v3178, %v3179
  %3181 = vadd.xlane.f32.xlu0 %v3180
  %v3182 = vpop.xlane.xlu0 %3181
  %v3183 = vmul.f32 %v3158, 0.0078125
  %v3184 = vmul.f32 %v3166, 0.0078125
  %v3185 = vmul.f32 %v3174, 0.0078125
  %v3186 = vmul.f32 %v3182, 0.0078125
  %v3187 = vmul.f32 %v3099, %v3099
  %v3188 = vmul.f32 %v3100, %v3100
  %v3189 = vmul.f32 %v3101, %v3101
  %v3190 = vmul.f32 %v3102, %v3102
  %v3191 = vsub.f32 %v3183, %v3187
  %v3192 = vsub.f32 %v3184, %v3188
  %v3193 = vsub.f32 %v3185, %v3189
  %v3194 = vsub.f32 %v3186, %v3190
  %v3195 = vld [vmem:[%s23] sm:$0xff]
  %v3196 = vld [vmem:[%s23 + $0x8] sm:$0xff]
  %v3197 = vld [vmem:[%s23 + $0x10] sm:$0xff]
  %v3198 = vld [vmem:[%s23 + $0x18] sm:$0xff]
  %v3199 = vadd.f32 %v3191, 1e-05
  %v3200 = vadd.f32 %v3192, 1e-05
  %v3201 = vadd.f32 %v3193, 1e-05
  %v3202 = vadd.f32 %v3194, 1e-05
  %v3203 = vrsqrt.pop %v3199
  %v3204 = vrsqrt.pop %v3200
  %v3205 = vrsqrt.pop %v3201
  %v3206 = vrsqrt.pop %v3202
  %v3207 = vmul.f32 %v3195, %v3203
  %v3208 = vmul.f32 %v3196, %v3204
  %v3209 = vmul.f32 %v3197, %v3205
  %v3210 = vmul.f32 %v3198, %v3206
  %3212 = vset.pattern.permute.xlu0 0
  %3213 = vperm.xlu0 %3212, %v3207
  %v3214 = vpop.permute.xlu0 %3213
  %3217 = vset.pattern.permute.xlu0 0
  %3218 = vperm.xlu0 %3217, %v3208
  %v3219 = vpop.permute.xlu0 %3218
  %3222 = vset.pattern.permute.xlu0 0
  %3223 = vperm.xlu0 %3222, %v3209
  %v3224 = vpop.permute.xlu0 %3223
  %3227 = vset.pattern.permute.xlu0 0
  %3228 = vperm.xlu0 %3227, %v3210
  %v3229 = vpop.permute.xlu0 %3228
  %v3231 = vmul.f32 %v2887, %v3214
  %v3232 = vmul.f32 %v2889, %v3214
  %v3233 = vmul.f32 %v2940, %v3214
  %v3234 = vmul.f32 %v2942, %v3214
  %v3235 = vmul.f32 %v2993, %v3214
  %v3236 = vmul.f32 %v2995, %v3214
  %v3237 = vmul.f32 %v2891, %v3219
  %v3238 = vmul.f32 %v2893, %v3219
  %v3239 = vmul.f32 %v2944, %v3219
  %v3240 = vmul.f32 %v2946, %v3219
  %v3241 = vmul.f32 %v2997, %v3219
  %v3242 = vmul.f32 %v2999, %v3219
  %v3243 = vmul.f32 %v2897, %v3224
  %v3244 = vmul.f32 %v2899, %v3224
  %v3245 = vmul.f32 %v2950, %v3224
  %v3246 = vmul.f32 %v2952, %v3224
  %v3247 = vmul.f32 %v3003, %v3224
  %v3248 = vmul.f32 %v3005, %v3224
  %v3249 = vmul.f32 %v2901, %v3229
  %v3250 = vmul.f32 %v2903, %v3229
  %v3251 = vmul.f32 %v2954, %v3229
  %v3252 = vmul.f32 %v2956, %v3229
  %v3253 = vmul.f32 %v3007, %v3229
  %v3254 = vmul.f32 %v3009, %v3229
  %v3255 = vld [vmem:[%s25] sm:$0xff]
  %v3256 = vld [vmem:[%s25 + $0x8] sm:$0xff]
  %v3257 = vld [vmem:[%s25 + $0x10] sm:$0xff]
  %v3258 = vld [vmem:[%s25 + $0x18] sm:$0xff]
  %v3259 = vmul.f32 %v3099, %v3207
  %v3260 = vmul.f32 %v3100, %v3208
  %v3261 = vmul.f32 %v3101, %v3209
  %v3262 = vmul.f32 %v3102, %v3210
  %v3263 = vsub.f32 %v3255, %v3259
  %v3264 = vsub.f32 %v3256, %v3260
  %v3265 = vsub.f32 %v3257, %v3261
  %v3266 = vsub.f32 %v3258, %v3262
  %3268 = vset.pattern.permute.xlu0 0
  %3269 = vperm.xlu0 %3268, %v3263
  %v3270 = vpop.permute.xlu0 %3269
  %3273 = vset.pattern.permute.xlu0 0
  %3274 = vperm.xlu0 %3273, %v3264
  %v3275 = vpop.permute.xlu0 %3274
  %3278 = vset.pattern.permute.xlu0 0
  %3279 = vperm.xlu0 %3278, %v3265
  %v3280 = vpop.permute.xlu0 %3279
  %3283 = vset.pattern.permute.xlu0 0
  %3284 = vperm.xlu0 %3283, %v3266
  %v3285 = vpop.permute.xlu0 %3284
  %v3287 = vadd.f32 %v3231, %v3270
  %v3288 = vadd.f32 %v3232, %v3270
  %v3289 = vadd.f32 %v3233, %v3270
  %v3290 = vadd.f32 %v3234, %v3270
  %v3291 = vadd.f32 %v3235, %v3270
  %v3292 = vadd.f32 %v3236, %v3270
  %v3293 = vadd.f32 %v3237, %v3275
  %v3294 = vadd.f32 %v3238, %v3275
  %v3295 = vadd.f32 %v3239, %v3275
  %v3296 = vadd.f32 %v3240, %v3275
  %v3297 = vadd.f32 %v3241, %v3275
  %v3298 = vadd.f32 %v3242, %v3275
  %v3299 = vadd.f32 %v3243, %v3280
  %v3300 = vadd.f32 %v3244, %v3280
  %v3301 = vadd.f32 %v3245, %v3280
  %v3302 = vadd.f32 %v3246, %v3280
  %v3303 = vadd.f32 %v3247, %v3280
  %v3304 = vadd.f32 %v3248, %v3280
  %v3305 = vadd.f32 %v3249, %v3285
  %v3306 = vadd.f32 %v3250, %v3285
  %v3307 = vadd.f32 %v3251, %v3285
  %v3308 = vadd.f32 %v3252, %v3285
  %v3309 = vadd.f32 %v3253, %v3285
  %v3310 = vadd.f32 %v3254, %v3285
  %v3311 = vmax.f32 %v3287, 0.0
  %v3312 = vmax.f32 %v3288, 0.0
  %v3313 = vmax.f32 %v3289, 0.0
  %v3314 = vmax.f32 %v3290, 0.0
  %v3315 = vmax.f32 %v3291, 0.0
  %v3316 = vmax.f32 %v3292, 0.0
  %v3317 = vmax.f32 %v3293, 0.0
  %v3318 = vmax.f32 %v3294, 0.0
  %v3319 = vmax.f32 %v3295, 0.0
  %v3320 = vmax.f32 %v3296, 0.0
  %v3321 = vmax.f32 %v3297, 0.0
  %v3322 = vmax.f32 %v3298, 0.0
  %v3323 = vmax.f32 %v3299, 0.0
  %v3324 = vmax.f32 %v3300, 0.0
  %v3325 = vmax.f32 %v3301, 0.0
  %v3326 = vmax.f32 %v3302, 0.0
  %v3327 = vmax.f32 %v3303, 0.0
  %v3328 = vmax.f32 %v3304, 0.0
  %v3329 = vmax.f32 %v3305, 0.0
  %v3330 = vmax.f32 %v3306, 0.0
  %v3331 = vmax.f32 %v3307, 0.0
  %v3332 = vmax.f32 %v3308, 0.0
  %v3333 = vmax.f32 %v3309, 0.0
  %v3334 = vmax.f32 %v3310, 0.0
  %v3335 = vld [vmem:[%s45] sm:$0xff]
  %v3336 = vld [vmem:[%s45 + $0x8] sm:$0xff]
  %v3337 = vld [vmem:[%s45 + $0x10] sm:$0xff]
  %v3338 = vld [vmem:[%s45 + $0x18] sm:$0xff]
  %v3339 = vld [vmem:[%s45 + $0x20] sm:$0xff]
  %v3340 = vld [vmem:[%s45 + $0x28] sm:$0xff]
  %v3341 = vld [vmem:[%s45 + $0x30] sm:$0xff]
  %v3342 = vld [vmem:[%s45 + $0x38] sm:$0xff]
  %v3343 = vld [vmem:[%s45 + $0x40] sm:$0xff]
  %v3344 = vld [vmem:[%s45 + $0x48] sm:$0xff]
  %v3345 = vld [vmem:[%s45 + $0x50] sm:$0xff]
  %v3346 = vld [vmem:[%s45 + $0x58] sm:$0xff]
  %v3347 = vld [vmem:[%s45 + $0x60] sm:$0xff]
  %v3348 = vld [vmem:[%s45 + $0x68] sm:$0xff]
  %v3349 = vld [vmem:[%s45 + $0x70] sm:$0xff]
  %v3350 = vld [vmem:[%s45 + $0x78] sm:$0xff]
  %v3351 = vld [vmem:[%s45 + $0x80] sm:$0xff]
  %v3352 = vld [vmem:[%s45 + $0x88] sm:$0xff]
  %v3353 = vld [vmem:[%s45 + $0x90] sm:$0xff]
  %v3354 = vld [vmem:[%s45 + $0x98] sm:$0xff]
  %v3355 = vld [vmem:[%s45 + $0xa0] sm:$0xff]
  %v3356 = vld [vmem:[%s45 + $0xa8] sm:$0xff]
  %v3357 = vld [vmem:[%s45 + $0xb0] sm:$0xff]
  %v3358 = vld [vmem:[%s45 + $0xb8] sm:$0xff]
  %v3359 = vld [vmem:[%s45 + $0xc0] sm:$0xff]
  %v3360 = vld [vmem:[%s45 + $0xc8] sm:$0xff]
  %v3361 = vld [vmem:[%s45 + $0xd0] sm:$0xff]
  %v3362 = vld [vmem:[%s45 + $0xd8] sm:$0xff]
  %v3363 = vld [vmem:[%s45 + $0xe0] sm:$0xff]
  %v3364 = vld [vmem:[%s45 + $0xe8] sm:$0xff]
  %v3365 = vld [vmem:[%s45 + $0xf0] sm:$0xff]
  %v3366 = vld [vmem:[%s45 + $0xf8] sm:$0xff]
  %v3367 = vld [vmem:[%s45 + $0x100] sm:$0xff]
  %v3368 = vld [vmem:[%s45 + $0x108] sm:$0xff]
  %v3369 = vld [vmem:[%s45 + $0x110] sm:$0xff]
  %v3370 = vld [vmem:[%s45 + $0x118] sm:$0xff]
  %v3371 = vld [vmem:[%s45 + $0x120] sm:$0xff]
  %v3372 = vld [vmem:[%s45 + $0x128] sm:$0xff]
  %v3373 = vld [vmem:[%s45 + $0x130] sm:$0xff]
  %v3374 = vld [vmem:[%s45 + $0x138] sm:$0xff]
  %v3375 = vld [vmem:[%s45 + $0x140] sm:$0xff]
  %v3376 = vld [vmem:[%s45 + $0x148] sm:$0xff]
  %v3377 = vld [vmem:[%s45 + $0x150] sm:$0xff]
  %v3378 = vld [vmem:[%s45 + $0x158] sm:$0xff]
  %v3379 = vld [vmem:[%s45 + $0x160] sm:$0xff]
  %v3380 = vld [vmem:[%s45 + $0x168] sm:$0xff]
  %v3381 = vld [vmem:[%s45 + $0x170] sm:$0xff]
  %v3382 = vld [vmem:[%s45 + $0x178] sm:$0xff]
  %v3383 = vld [vmem:[%s45 + $0x180] sm:$0xff]
  %v3384 = vld [vmem:[%s45 + $0x188] sm:$0xff]
  %v3385 = vld [vmem:[%s45 + $0x190] sm:$0xff]
  %v3386 = vld [vmem:[%s45 + $0x198] sm:$0xff]
  %v3387 = vld [vmem:[%s45 + $0x1a0] sm:$0xff]
  %v3388 = vld [vmem:[%s45 + $0x1a8] sm:$0xff]
  %v3389 = vld [vmem:[%s45 + $0x1b0] sm:$0xff]
  %v3390 = vld [vmem:[%s45 + $0x1b8] sm:$0xff]
  %v3391 = vld [vmem:[%s45 + $0x1c0] sm:$0xff]
  %v3392 = vld [vmem:[%s45 + $0x1c8] sm:$0xff]
  %v3393 = vld [vmem:[%s45 + $0x1d0] sm:$0xff]
  %v3394 = vld [vmem:[%s45 + $0x1d8] sm:$0xff]
  %v3395 = vld [vmem:[%s45 + $0x1e0] sm:$0xff]
  %v3396 = vld [vmem:[%s45 + $0x1e8] sm:$0xff]
  %v3397 = vld [vmem:[%s45 + $0x1f0] sm:$0xff]
  %v3398 = vld [vmem:[%s45 + $0x1f8] sm:$0xff]
  %v3399 = vld [vmem:[%s45 + $0x200] sm:$0xff]
  %v3400 = vld [vmem:[%s45 + $0x208] sm:$0xff]
  %v3401 = vld [vmem:[%s45 + $0x210] sm:$0xff]
  %v3402 = vld [vmem:[%s45 + $0x218] sm:$0xff]
  %v3403 = vld [vmem:[%s45 + $0x220] sm:$0xff]
  %v3404 = vld [vmem:[%s45 + $0x228] sm:$0xff]
  %v3405 = vld [vmem:[%s45 + $0x230] sm:$0xff]
  %v3406 = vld [vmem:[%s45 + $0x238] sm:$0xff]
  %v3407 = vld [vmem:[%s45 + $0x240] sm:$0xff]
  %v3408 = vld [vmem:[%s45 + $0x248] sm:$0xff]
  %v3409 = vld [vmem:[%s45 + $0x250] sm:$0xff]
  %v3410 = vld [vmem:[%s45 + $0x258] sm:$0xff]
  %v3411 = vld [vmem:[%s45 + $0x260] sm:$0xff]
  %v3412 = vld [vmem:[%s45 + $0x268] sm:$0xff]
  %v3413 = vld [vmem:[%s45 + $0x270] sm:$0xff]
  %v3414 = vld [vmem:[%s45 + $0x278] sm:$0xff]
  %v3415 = vld [vmem:[%s45 + $0x280] sm:$0xff]
  %v3416 = vld [vmem:[%s45 + $0x288] sm:$0xff]
  %v3417 = vld [vmem:[%s45 + $0x290] sm:$0xff]
  %v3418 = vld [vmem:[%s45 + $0x298] sm:$0xff]
  %v3419 = vld [vmem:[%s45 + $0x2a0] sm:$0xff]
  %v3420 = vld [vmem:[%s45 + $0x2a8] sm:$0xff]
  %v3421 = vld [vmem:[%s45 + $0x2b0] sm:$0xff]
  %v3422 = vld [vmem:[%s45 + $0x2b8] sm:$0xff]
  %v3423 = vld [vmem:[%s45 + $0x2c0] sm:$0xff]
  %v3424 = vld [vmem:[%s45 + $0x2c8] sm:$0xff]
  %v3425 = vld [vmem:[%s45 + $0x2d0] sm:$0xff]
  %v3426 = vld [vmem:[%s45 + $0x2d8] sm:$0xff]
  %v3427 = vld [vmem:[%s45 + $0x2e0] sm:$0xff]
  %v3428 = vld [vmem:[%s45 + $0x2e8] sm:$0xff]
  %v3429 = vld [vmem:[%s45 + $0x2f0] sm:$0xff]
  %v3430 = vld [vmem:[%s45 + $0x2f8] sm:$0xff]
  %v3431 = vld [vmem:[%s45 + $0x300] sm:$0xff]
  %v3432 = vld [vmem:[%s45 + $0x308] sm:$0xff]
  %v3433 = vld [vmem:[%s45 + $0x310] sm:$0xff]
  %v3434 = vld [vmem:[%s45 + $0x318] sm:$0xff]
  %v3435 = vld [vmem:[%s45 + $0x320] sm:$0xff]
  %v3436 = vld [vmem:[%s45 + $0x328] sm:$0xff]
  %v3437 = vld [vmem:[%s45 + $0x330] sm:$0xff]
  %v3438 = vld [vmem:[%s45 + $0x338] sm:$0xff]
  %v3439 = vld [vmem:[%s45 + $0x340] sm:$0xff]
  %v3440 = vld [vmem:[%s45 + $0x348] sm:$0xff]
  %v3441 = vld [vmem:[%s45 + $0x350] sm:$0xff]
  %v3442 = vld [vmem:[%s45 + $0x358] sm:$0xff]
  %v3443 = vld [vmem:[%s45 + $0x360] sm:$0xff]
  %v3444 = vld [vmem:[%s45 + $0x368] sm:$0xff]
  %v3445 = vld [vmem:[%s45 + $0x370] sm:$0xff]
  %v3446 = vld [vmem:[%s45 + $0x378] sm:$0xff]
  %v3447 = vld [vmem:[%s45 + $0x380] sm:$0xff]
  %v3448 = vld [vmem:[%s45 + $0x388] sm:$0xff]
  %v3449 = vld [vmem:[%s45 + $0x390] sm:$0xff]
  %v3450 = vld [vmem:[%s45 + $0x398] sm:$0xff]
  %v3451 = vld [vmem:[%s45 + $0x3a0] sm:$0xff]
  %v3452 = vld [vmem:[%s45 + $0x3a8] sm:$0xff]
  %v3453 = vld [vmem:[%s45 + $0x3b0] sm:$0xff]
  %v3454 = vld [vmem:[%s45 + $0x3b8] sm:$0xff]
  %v3455 = vld [vmem:[%s45 + $0x3c0] sm:$0xff]
  %v3456 = vld [vmem:[%s45 + $0x3c8] sm:$0xff]
  %v3457 = vld [vmem:[%s45 + $0x3d0] sm:$0xff]
  %v3458 = vld [vmem:[%s45 + $0x3d8] sm:$0xff]
  %v3459 = vld [vmem:[%s45 + $0x3e0] sm:$0xff]
  %v3460 = vld [vmem:[%s45 + $0x3e8] sm:$0xff]
  %v3461 = vld [vmem:[%s45 + $0x3f0] sm:$0xff]
  %v3462 = vld [vmem:[%s45 + $0x3f8] sm:$0xff]
  %v3463 = vld [vmem:[%s45 + $0x400] sm:$0xff]
  %v3464 = vld [vmem:[%s45 + $0x408] sm:$0xff]
  %v3465 = vld [vmem:[%s45 + $0x410] sm:$0xff]
  %v3466 = vld [vmem:[%s45 + $0x418] sm:$0xff]
  %v3467 = vld [vmem:[%s45 + $0x420] sm:$0xff]
  %v3468 = vld [vmem:[%s45 + $0x428] sm:$0xff]
  %v3469 = vld [vmem:[%s45 + $0x430] sm:$0xff]
  %v3470 = vld [vmem:[%s45 + $0x438] sm:$0xff]
  %v3471 = vld [vmem:[%s45 + $0x440] sm:$0xff]
  %v3472 = vld [vmem:[%s45 + $0x448] sm:$0xff]
  %v3473 = vld [vmem:[%s45 + $0x450] sm:$0xff]
  %v3474 = vld [vmem:[%s45 + $0x458] sm:$0xff]
  %v3475 = vld [vmem:[%s45 + $0x460] sm:$0xff]
  %v3476 = vld [vmem:[%s45 + $0x468] sm:$0xff]
  %v3477 = vld [vmem:[%s45 + $0x470] sm:$0xff]
  %v3478 = vld [vmem:[%s45 + $0x478] sm:$0xff]
  %v3479 = vld [vmem:[%s45 + $0x480] sm:$0xff]
  %v3480 = vld [vmem:[%s45 + $0x488] sm:$0xff]
  %v3481 = vld [vmem:[%s45 + $0x490] sm:$0xff]
  %v3482 = vld [vmem:[%s45 + $0x498] sm:$0xff]
  %v3483 = vld [vmem:[%s45 + $0x4a0] sm:$0xff]
  %v3484 = vld [vmem:[%s45 + $0x4a8] sm:$0xff]
  %v3485 = vld [vmem:[%s45 + $0x4b0] sm:$0xff]
  %v3486 = vld [vmem:[%s45 + $0x4b8] sm:$0xff]
  %v3487 = vld [vmem:[%s45 + $0x4c0] sm:$0xff]
  %v3488 = vld [vmem:[%s45 + $0x4c8] sm:$0xff]
  %v3489 = vld [vmem:[%s45 + $0x4d0] sm:$0xff]
  %v3490 = vld [vmem:[%s45 + $0x4d8] sm:$0xff]
  %v3491 = vld [vmem:[%s45 + $0x4e0] sm:$0xff]
  %v3492 = vld [vmem:[%s45 + $0x4e8] sm:$0xff]
  %v3493 = vld [vmem:[%s45 + $0x4f0] sm:$0xff]
  %v3494 = vld [vmem:[%s45 + $0x4f8] sm:$0xff]
  %v3495 = vld [vmem:[%s45 + $0x500] sm:$0xff]
  %v3496 = vld [vmem:[%s45 + $0x508] sm:$0xff]
  %v3498 = vsel %vm600, %v3316, 0
  %v3501 = vsel %vm600, %v3322, 0
  %v3504 = vsel %vm600, %v3328, 0
  %v3507 = vsel %vm600, %v3334, 0
  %3509 = vmatprep.subr.mxu0 %v3336
  %3510 = vmatpush1.msra.mxu0 %v3335
  %3511 = vmatprep.subr.mxu0 %v3338
  %3512 = vmatpush1.msra.mxu0 %v3337
  %3513 = vmatprep.subr.mxu0 %v3340
  %3514 = vmatpush1.msra.mxu0 %v3339
  %3515 = vmatprep.subr.mxu0 %v3342
  %3516 = vmatpush1.msra.mxu0 %v3341
  %3517 = vmatprep.subr.mxu0 %v3344
  %3518 = vmatpush1.msra.mxu0 %v3343
  %3519 = vmatprep.subr.mxu0 %v3346
  %3520 = vmatpush1.msra.mxu0 %v3345
  %3521 = vmatprep.subr.mxu0 %v3348
  %3522 = vmatpush1.msra.mxu0 %v3347
  %3523 = vmatprep.subr.mxu0 %v3350
  %3524 = vmatpush1.msra.mxu0 %v3349
  %3525 = vmatprep.subr.mxu0 %v3352
  %3526 = vmatpush1.msra.mxu0 %v3351
  %3527 = vmatprep.subr.mxu0 %v3354
  %3528 = vmatpush1.msra.mxu0 %v3353
  %3529 = vmatprep.subr.mxu0 %v3356
  %3530 = vmatpush1.msra.mxu0 %v3355
  %3531 = vmatprep.subr.mxu0 %v3358
  %3532 = vmatpush1.msra.mxu0 %v3357
  %3533 = vmatprep.subr.mxu0 %v3360
  %3534 = vmatpush1.msra.mxu0 %v3359
  %3535 = vmatprep.subr.mxu0 %v3362
  %3536 = vmatpush1.msra.mxu0 %v3361
  %3537 = vmatprep.subr.mxu0 %v3364
  %3538 = vmatpush1.msra.mxu0 %v3363
  %3539 = vmatprep.subr.mxu0 %v3366
  %3540 = vmatpush1.msra.mxu0 %v3365
  %3541 = vmatprep.subr.mxu0 %v3368
  %3542 = vmatpush1.msra.mxu0 %v3367
  %3543 = vmatprep.subr.mxu0 %v3370
  %3544 = vmatpush1.msra.mxu0 %v3369
  %3545 = vmatprep.subr.mxu0 %v3372
  %3546 = vmatpush1.msra.mxu0 %v3371
  %3547 = vmatprep.subr.mxu0 %v3374
  %3548 = vmatpush1.msra.mxu0 %v3373
  %3549 = vmatprep.subr.mxu0 %v3376
  %3550 = vmatpush1.msra.mxu0 %v3375
  %3551 = vmatprep.subr.mxu0 %v3378
  %3552 = vmatpush1.msra.mxu0 %v3377
  %3553 = vmatprep.subr.mxu0 %v3380
  %3554 = vmatpush1.msra.mxu0 %v3379
  %3555 = vmatprep.subr.mxu0 %v3382
  %3556 = vmatpush1.msra.mxu0 %v3381
  %3557 = vmatprep.subr.mxu0 %v3384
  %3558 = vmatpush1.msra.mxu0 %v3383
  %3559 = vmatprep.subr.mxu0 %v3386
  %3560 = vmatpush1.msra.mxu0 %v3385
  %3561 = vmatprep.subr.mxu0 %v3388
  %3562 = vmatpush1.msra.mxu0 %v3387
  %3563 = vmatprep.subr.mxu0 %v3390
  %3564 = vmatpush1.msra.mxu0 %v3389
  %3565 = vmatprep.subr.mxu0 %v3392
  %3566 = vmatpush1.msra.mxu0 %v3391
  %3567 = vmatprep.subr.mxu0 %v3394
  %3568 = vmatpush1.msra.mxu0 %v3393
  %3569 = vmatprep.subr.mxu0 %v3396
  %3570 = vmatpush1.msra.mxu0 %v3395
  %3571 = vmatprep.subr.mxu0 %v3398
  %3572 = vmatpush1.msra.mxu0 %v3397
  %3573 = vmatprep.mubr.f32.mxu0 %v3312
  %3574 = vmatmul.mubr.f32.gmra.mrb[0].mxu0 %v3311
  %v3575 = vpop.f32.mrb[0].mxu0
  %v3576 = vadd.f32 0.0, %v3575
  %v3577 = vpop.f32.mrb[0].mxu0
  %v3578 = vadd.f32 0.0, %v3577
  %3579 = vmatprep.mubr.f32.mxu0 %v3318
  %3580 = vmatmul.mubr.f32.gmra.mrb[0].mxu0 %v3317
  %v3581 = vpop.f32.mrb[0].mxu0
  %v3582 = vadd.f32 0.0, %v3581
  %v3583 = vpop.f32.mrb[0].mxu0
  %v3584 = vadd.f32 0.0, %v3583
  %3585 = vmatprep.mubr.f32.mxu0 %v3324
  %3586 = vmatmul.mubr.f32.gmra.mrb[0].mxu0 %v3323
  %v3587 = vpop.f32.mrb[0].mxu0
  %v3588 = vadd.f32 0.0, %v3587
  %v3589 = vpop.f32.mrb[0].mxu0
  %v3590 = vadd.f32 0.0, %v3589
  %3591 = vmatprep.mubr.f32.mxu0 %v3330
  %3592 = vmatmul.mubr.f32.gmra.mrb[0].mxu0 %v3329
  %v3593 = vpop.f32.mrb[0].mxu0
  %v3594 = vadd.f32 0.0, %v3593
  %v3595 = vpop.f32.mrb[0].mxu0
  %v3596 = vadd.f32 0.0, %v3595
  %3597 = vdwg.mxu0
  %3598 = vmatprep.subr.mxu0 %v3400
  %3599 = vmatpush1.msra.mxu0 %v3399
  %3600 = vmatprep.subr.mxu0 %v3402
  %3601 = vmatpush1.msra.mxu0 %v3401
  %3602 = vmatprep.subr.mxu0 %v3404
  %3603 = vmatpush1.msra.mxu0 %v3403
  %3604 = vmatprep.subr.mxu0 %v3406
  %3605 = vmatpush1.msra.mxu0 %v3405
  %3606 = vmatprep.subr.mxu0 %v3408
  %3607 = vmatpush1.msra.mxu0 %v3407
  %3608 = vmatprep.subr.mxu0 %v3410
  %3609 = vmatpush1.msra.mxu0 %v3409
  %3610 = vmatprep.subr.mxu0 %v3412
  %3611 = vmatpush1.msra.mxu0 %v3411
  %3612 = vmatprep.subr.mxu0 %v3414
  %3613 = vmatpush1.msra.mxu0 %v3413
  %3614 = vmatprep.subr.mxu0 %v3416
  %3615 = vmatpush1.msra.mxu0 %v3415
  %3616 = vmatprep.subr.mxu0 %v3418
  %3617 = vmatpush1.msra.mxu0 %v3417
  %3618 = vmatprep.subr.mxu0 %v3420
  %3619 = vmatpush1.msra.mxu0 %v3419
  %3620 = vmatprep.subr.mxu0 %v3422
  %3621 = vmatpush1.msra.mxu0 %v3421
  %3622 = vmatprep.subr.mxu0 %v3424
  %3623 = vmatpush1.msra.mxu0 %v3423
  %3624 = vmatprep.subr.mxu0 %v3426
  %3625 = vmatpush1.msra.mxu0 %v3425
  %3626 = vmatprep.subr.mxu0 %v3428
  %3627 = vmatpush1.msra.mxu0 %v3427
  %3628 = vmatprep.subr.mxu0 %v3430
  %3629 = vmatpush1.msra.mxu0 %v3429
  %3630 = vmatprep.subr.mxu0 %v3432
  %3631 = vmatpush1.msra.mxu0 %v3431
  %3632 = vmatprep.subr.mxu0 %v3434
  %3633 = vmatpush1.msra.mxu0 %v3433
  %3634 = vmatprep.subr.mxu0 %v3436
  %3635 = vmatpush1.msra.mxu0 %v3435
  %3636 = vmatprep.subr.mxu0 %v3438
  %3637 = vmatpush1.msra.mxu0 %v3437
  %3638 = vmatprep.subr.mxu0 %v3440
  %3639 = vmatpush1.msra.mxu0 %v3439
  %3640 = vmatprep.subr.mxu0 %v3442
  %3641 = vmatpush1.msra.mxu0 %v3441
  %3642 = vmatprep.subr.mxu0 %v3444
  %3643 = vmatpush1.msra.mxu0 %v3443
  %3644 = vmatprep.subr.mxu0 %v3446
  %3645 = vmatpush1.msra.mxu0 %v3445
  %3646 = vmatprep.subr.mxu0 %v3448
  %3647 = vmatpush1.msra.mxu0 %v3447
  %3648 = vmatprep.subr.mxu0 %v3450
  %3649 = vmatpush1.msra.mxu0 %v3449
  %3650 = vmatprep.subr.mxu0 %v3452
  %3651 = vmatpush1.msra.mxu0 %v3451
  %3652 = vmatprep.subr.mxu0 %v3454
  %3653 = vmatpush1.msra.mxu0 %v3453
  %3654 = vmatprep.subr.mxu0 %v3456
  %3655 = vmatpush1.msra.mxu0 %v3455
  %3656 = vmatprep.subr.mxu0 %v3458
  %3657 = vmatpush1.msra.mxu0 %v3457
  %3658 = vmatprep.subr.mxu0 %v3460
  %3659 = vmatpush1.msra.mxu0 %v3459
  %3660 = vmatprep.subr.mxu0 %v3462
  %3661 = vmatpush1.msra.mxu0 %v3461
  %3662 = vmatprep.mubr.f32.mxu0 %v3314
  %3663 = vmatmul.mubr.f32.gmra.mrb[0].mxu0 %v3313
  %v3664 = vpop.f32.mrb[0].mxu0
  %v3665 = vadd.f32 %v3576, %v3664
  %v3666 = vpop.f32.mrb[0].mxu0
  %v3667 = vadd.f32 %v3578, %v3666
  %3668 = vmatprep.mubr.f32.mxu0 %v3320
  %3669 = vmatmul.mubr.f32.gmra.mrb[0].mxu0 %v3319
  %v3670 = vpop.f32.mrb[0].mxu0
  %v3671 = vadd.f32 %v3582, %v3670
  %v3672 = vpop.f32.mrb[0].mxu0
  %v3673 = vadd.f32 %v3584, %v3672
  %3674 = vmatprep.mubr.f32.mxu0 %v3326
  %3675 = vmatmul.mubr.f32.gmra.mrb[0].mxu0 %v3325
  %v3676 = vpop.f32.mrb[0].mxu0
  %v3677 = vadd.f32 %v3588, %v3676
  %v3678 = vpop.f32.mrb[0].mxu0
  %v3679 = vadd.f32 %v3590, %v3678
  %3680 = vmatprep.mubr.f32.mxu0 %v3332
  %3681 = vmatmul.mubr.f32.gmra.mrb[0].mxu0 %v3331
  %v3682 = vpop.f32.mrb[0].mxu0
  %v3683 = vadd.f32 %v3594, %v3682
  %v3684 = vpop.f32.mrb[0].mxu0
  %v3685 = vadd.f32 %v3596, %v3684
  %3686 = vdwg.mxu0
  %3687 = vmatprep.subr.mxu0 %v3464
  %3688 = vmatpush1.msra.mxu0 %v3463
  %3689 = vmatprep.subr.mxu0 %v3466
  %3690 = vmatpush1.msra.mxu0 %v3465
  %3691 = vmatprep.subr.mxu0 %v3468
  %3692 = vmatpush1.msra.mxu0 %v3467
  %3693 = vmatprep.subr.mxu0 %v3470
  %3694 = vmatpush1.msra.mxu0 %v3469
  %3695 = vmatprep.subr.mxu0 %v3472
  %3696 = vmatpush1.msra.mxu0 %v3471
  %3697 = vmatprep.subr.mxu0 %v3474
  %3698 = vmatpush1.msra.mxu0 %v3473
  %3699 = vmatprep.subr.mxu0 %v3476
  %3700 = vmatpush1.msra.mxu0 %v3475
  %3701 = vmatprep.subr.mxu0 %v3478
  %3702 = vmatpush1.msra.mxu0 %v3477
  %3703 = vmatprep.subr.mxu0 %v3480
  %3704 = vmatpush1.msra.mxu0 %v3479
  %3705 = vmatprep.subr.mxu0 %v3482
  %3706 = vmatpush1.msra.mxu0 %v3481
  %3707 = vmatprep.subr.mxu0 %v3484
  %3708 = vmatpush1.msra.mxu0 %v3483
  %3709 = vmatprep.subr.mxu0 %v3486
  %3710 = vmatpush1.msra.mxu0 %v3485
  %3711 = vmatprep.subr.mxu0 %v3488
  %3712 = vmatpush1.msra.mxu0 %v3487
  %3713 = vmatprep.subr.mxu0 %v3490
  %3714 = vmatpush1.msra.mxu0 %v3489
  %3715 = vmatprep.subr.mxu0 %v3492
  %3716 = vmatpush1.msra.mxu0 %v3491
  %3717 = vmatprep.subr.mxu0 %v3494
  %3718 = vmatpush1.msra.mxu0 %v3493
  %3719 = vmatprep.subr.mxu0 %v3496
  %3720 = vmatpush1.msra.mxu0 %v3495
  %3721 = vmatprep.subr.mxu0 0.0
  %3722 = vmatpush1.msra.mxu0 0.0
  %3723 = vmatprep.subr.mxu0 0.0
  %3724 = vmatpush1.msra.mxu0 0.0
  %3725 = vmatprep.subr.mxu0 0.0
  %3726 = vmatpush1.msra.mxu0 0.0
  %3727 = vmatprep.subr.mxu0 0.0
  %3728 = vmatpush1.msra.mxu0 0.0
  %3729 = vmatprep.subr.mxu0 0.0
  %3730 = vmatpush1.msra.mxu0 0.0
  %3731 = vmatprep.subr.mxu0 0.0
  %3732 = vmatpush1.msra.mxu0 0.0
  %3733 = vmatprep.subr.mxu0 0.0
  %3734 = vmatpush1.msra.mxu0 0.0
  %3735 = vmatprep.subr.mxu0 0.0
  %3736 = vmatpush1.msra.mxu0 0.0
  %3737 = vmatprep.subr.mxu0 0.0
  %3738 = vmatpush1.msra.mxu0 0.0
  %3739 = vmatprep.subr.mxu0 0.0
  %3740 = vmatpush1.msra.mxu0 0.0
  %3741 = vmatprep.subr.mxu0 0.0
  %3742 = vmatpush1.msra.mxu0 0.0
  %3743 = vmatprep.subr.mxu0 0.0
  %3744 = vmatpush1.msra.mxu0 0.0
  %3745 = vmatprep.subr.mxu0 0.0
  %3746 = vmatpush1.msra.mxu0 0.0
  %3747 = vmatprep.subr.mxu0 0.0
  %3748 = vmatpush1.msra.mxu0 0.0
  %3749 = vmatprep.subr.mxu0 0.0
  %3750 = vmatpush1.msra.mxu0 0.0
  %3751 = vmatprep.mubr.f32.mxu0 %v3498
  %3752 = vmatmul.mubr.f32.gmra.mrb[0].mxu0 %v3315
  %v3753 = vpop.f32.mrb[0].mxu0
  %v3754 = vadd.f32 %v3665, %v3753
  %v3755 = vpop.f32.mrb[0].mxu0
  %v3756 = vadd.f32 %v3667, %v3755
  %3757 = vmatprep.mubr.f32.mxu0 %v3501
  %3758 = vmatmul.mubr.f32.gmra.mrb[0].mxu0 %v3321
  %v3759 = vpop.f32.mrb[0].mxu0
  %v3760 = vadd.f32 %v3671, %v3759
  %v3761 = vpop.f32.mrb[0].mxu0
  %v3762 = vadd.f32 %v3673, %v3761
  %3763 = vmatprep.mubr.f32.mxu0 %v3504
  %3764 = vmatmul.mubr.f32.gmra.mrb[0].mxu0 %v3327
  %v3765 = vpop.f32.mrb[0].mxu0
  %v3766 = vadd.f32 %v3677, %v3765
  %v3767 = vpop.f32.mrb[0].mxu0
  %v3768 = vadd.f32 %v3679, %v3767
  %3769 = vmatprep.mubr.f32.mxu0 %v3507
  %3770 = vmatmul.mubr.f32.gmra.mrb[0].mxu0 %v3333
  %v3771 = vpop.f32.mrb[0].mxu0
  %v3772 = vadd.f32 %v3683, %v3771
  %v3773 = vpop.f32.mrb[0].mxu0
  %v3774 = vadd.f32 %v3685, %v3773
  %3775 = vdwg.mxu0
  %v3776 = vld [vmem:[%s43] sm:$0xf]
  %v3777 = vld [vmem:[%s43 + $0x4] sm:$0xf]
  %v3778 = vld [vmem:[%s43 + $0x8] sm:$0xf]
  %v3779 = vld [vmem:[%s43 + $0xc] sm:$0xf]
  %v3784 = vunpack.c.l.b16 %v3776
  %v3785 = vunpack.c.l.b16 %v3777
  %v3786 = vunpack.c.l.b16 %v3778
  %v3787 = vunpack.c.l.b16 %v3779
  %v3788 = vpack.c.b16 %v3785, %v3784
  %v3789 = vpack.c.b16 %v3787, %v3786
  %3796 = vrot.lane.b32.xlu0 %v2774, 109
  %v3797 = vpop.permute.xlu0 %3796
  %3798 = vrot.lane.b32.xlu0 %v2775, 109
  %v3799 = vpop.permute.xlu0 %3798
  %3800 = vrot.lane.b32.xlu0 %v2776, 109
  %v3801 = vpop.permute.xlu0 %3800
  %3802 = vrot.lane.b32.xlu0 %v2777, 109
  %v3803 = vpop.permute.xlu0 %3802
  %3804 = vrot.lane.b32.xlu0 %v2778, 109
  %v3805 = vpop.permute.xlu0 %3804
  %3806 = vrot.lane.b32.xlu0 %v2779, 109
  %v3807 = vpop.permute.xlu0 %3806
  %vm3808 = vcmask 891904
  %v3809 = vsel %vm3808, %v3797, %v3799
  %v3810 = vsel %vm3808, %v3799, %v3801
  %v3811 = vsel %vm3808, %v3801, %v3803
  %v3812 = vsel %vm3808, %v3803, %v3805
  %v3813 = vsel %vm3808, %v3805, %v3807
  %v3821 = vsel %vm1244, %v3788, 0
  %v3824 = vsel %vm1244, %v3789, 0
  %3826 = vmatprep.subr.bf16.mxu0 %v3810
  %3827 = vmatpush1.bf16.msra.mxu0 %v3809
  %3828 = vmatprep.subr.bf16.mxu0 0
  %3829 = vmatpush1.bf16.msra.mxu0 0
  %3830 = vmatprep.subr.bf16.mxu0 0
  %3831 = vmatpush1.bf16.msra.mxu0 0
  %3832 = vmatprep.subr.bf16.mxu0 0
  %3833 = vmatpush1.bf16.msra.mxu0 0
  %3834 = vmatprep.subr.bf16.mxu0 0
  %3835 = vmatpush1.bf16.msra.mxu0 0
  %3836 = vmatprep.subr.bf16.mxu0 0
  %3837 = vmatpush1.bf16.msra.mxu0 0
  %3838 = vmatprep.subr.bf16.mxu0 0
  %3839 = vmatpush1.bf16.msra.mxu0 0
  %3840 = vmatprep.subr.bf16.mxu0 0
  %3841 = vmatpush1.bf16.msra.mxu0 0
  %3842 = vmatprep.subr.bf16.mxu0 0
  %3843 = vmatpush1.bf16.msra.mxu0 0
  %3844 = vmatprep.subr.bf16.mxu0 0
  %3845 = vmatpush1.bf16.msra.mxu0 0
  %3846 = vmatprep.subr.bf16.mxu0 0
  %3847 = vmatpush1.bf16.msra.mxu0 0
  %3848 = vmatprep.subr.bf16.mxu0 0
  %3849 = vmatpush1.bf16.msra.mxu0 0
  %3850 = vmatprep.subr.bf16.mxu0 0
  %3851 = vmatpush1.bf16.msra.mxu0 0
  %3852 = vmatprep.subr.bf16.mxu0 0
  %3853 = vmatpush1.bf16.msra.mxu0 0
  %3854 = vmatprep.subr.bf16.mxu0 0
  %3855 = vmatpush1.bf16.msra.mxu0 0
  %3856 = vmatprep.subr.bf16.mxu0 0
  %3857 = vmatpush1.bf16.msra.mxu0 0
  %3858 = vmatprep.mubr.bf16.mxu0 0
  %3859 = vmatmul.mubr.bf16.gmra.mrb[0].mxu0 %v3821
  %v3860 = vpop.f32.mrb[0].mxu0
  %v3861 = vadd.f32 0.0, %v3860
  %v3862 = vpop.f32.mrb[0].mxu0
  %v3863 = vadd.f32 0.0, %v3862
  %v3864 = vpop.f32.mrb[0].mxu0
  %v3865 = vadd.f32 0.0, %v3864
  %v3866 = vpop.f32.mrb[0].mxu0
  %v3867 = vadd.f32 0.0, %v3866
  %3868 = vmatprep.mubr.bf16.mxu0 0
  %3869 = vmatmul.mubr.bf16.gmra.mrb[0].mxu0 %v3824
  %v3870 = vpop.f32.mrb[0].mxu0
  %v3871 = vadd.f32 0.0, %v3870
  %v3872 = vpop.f32.mrb[0].mxu0
  %v3873 = vadd.f32 0.0, %v3872
  %v3874 = vpop.f32.mrb[0].mxu0
  %v3875 = vadd.f32 0.0, %v3874
  %v3876 = vpop.f32.mrb[0].mxu0
  %v3877 = vadd.f32 0.0, %v3876
  %3878 = vdwg.mxu0
  %3879 = vmatprep.subr.bf16.mxu0 %v3812
  %3880 = vmatpush1.bf16.msra.mxu0 %v3811
  %3881 = vmatprep.subr.bf16.mxu0 0
  %3882 = vmatpush1.bf16.msra.mxu0 0
  %3883 = vmatprep.subr.bf16.mxu0 0
  %3884 = vmatpush1.bf16.msra.mxu0 0
  %3885 = vmatprep.subr.bf16.mxu0 0
  %3886 = vmatpush1.bf16.msra.mxu0 0
  %3887 = vmatprep.subr.bf16.mxu0 0
  %3888 = vmatpush1.bf16.msra.mxu0 0
  %3889 = vmatprep.subr.bf16.mxu0 0
  %3890 = vmatpush1.bf16.msra.mxu0 0
  %3891 = vmatprep.subr.bf16.mxu0 0
  %3892 = vmatpush1.bf16.msra.mxu0 0
  %3893 = vmatprep.subr.bf16.mxu0 0
  %3894 = vmatpush1.bf16.msra.mxu0 0
  %3895 = vmatprep.subr.bf16.mxu0 0
  %3896 = vmatpush1.bf16.msra.mxu0 0
  %3897 = vmatprep.subr.bf16.mxu0 0
  %3898 = vmatpush1.bf16.msra.mxu0 0
  %3899 = vmatprep.subr.bf16.mxu0 0
  %3900 = vmatpush1.bf16.msra.mxu0 0
  %3901 = vmatprep.subr.bf16.mxu0 0
  %3902 = vmatpush1.bf16.msra.mxu0 0
  %3903 = vmatprep.subr.bf16.mxu0 0
  %3904 = vmatpush1.bf16.msra.mxu0 0
  %3905 = vmatprep.subr.bf16.mxu0 0
  %3906 = vmatpush1.bf16.msra.mxu0 0
  %3907 = vmatprep.subr.bf16.mxu0 0
  %3908 = vmatpush1.bf16.msra.mxu0 0
  %3909 = vmatprep.subr.bf16.mxu0 0
  %3910 = vmatpush1.bf16.msra.mxu0 0
  %3911 = vmatprep.mubr.bf16.mxu0 0
  %3912 = vmatmul.mubr.bf16.gmra.mrb[0].mxu0 %v3821
  %v3913 = vpop.f32.mrb[0].mxu0
  %v3914 = vadd.f32 0.0, %v3913
  %v3915 = vpop.f32.mrb[0].mxu0
  %v3916 = vadd.f32 0.0, %v3915
  %v3917 = vpop.f32.mrb[0].mxu0
  %v3918 = vadd.f32 0.0, %v3917
  %v3919 = vpop.f32.mrb[0].mxu0
  %v3920 = vadd.f32 0.0, %v3919
  %3921 = vmatprep.mubr.bf16.mxu0 0
  %3922 = vmatmul.mubr.bf16.gmra.mrb[0].mxu0 %v3824
  %v3923 = vpop.f32.mrb[0].mxu0
  %v3924 = vadd.f32 0.0, %v3923
  %v3925 = vpop.f32.mrb[0].mxu0
  %v3926 = vadd.f32 0.0, %v3925
  %v3927 = vpop.f32.mrb[0].mxu0
  %v3928 = vadd.f32 0.0, %v3927
  %v3929 = vpop.f32.mrb[0].mxu0
  %v3930 = vadd.f32 0.0, %v3929
  %3931 = vdwg.mxu0
  %3932 = vmatprep.subr.bf16.mxu0 %v3807
  %3933 = vmatpush1.bf16.msra.mxu0 %v3813
  %3934 = vmatprep.subr.bf16.mxu0 0
  %3935 = vmatpush1.bf16.msra.mxu0 0
  %3936 = vmatprep.subr.bf16.mxu0 0
  %3937 = vmatpush1.bf16.msra.mxu0 0
  %3938 = vmatprep.subr.bf16.mxu0 0
  %3939 = vmatpush1.bf16.msra.mxu0 0
  %3940 = vmatprep.subr.bf16.mxu0 0
  %3941 = vmatpush1.bf16.msra.mxu0 0
  %3942 = vmatprep.subr.bf16.mxu0 0
  %3943 = vmatpush1.bf16.msra.mxu0 0
  %3944 = vmatprep.subr.bf16.mxu0 0
  %3945 = vmatpush1.bf16.msra.mxu0 0
  %3946 = vmatprep.subr.bf16.mxu0 0
  %3947 = vmatpush1.bf16.msra.mxu0 0
  %3948 = vmatprep.subr.bf16.mxu0 0
  %3949 = vmatpush1.bf16.msra.mxu0 0
  %3950 = vmatprep.subr.bf16.mxu0 0
  %3951 = vmatpush1.bf16.msra.mxu0 0
  %3952 = vmatprep.subr.bf16.mxu0 0
  %3953 = vmatpush1.bf16.msra.mxu0 0
  %3954 = vmatprep.subr.bf16.mxu0 0
  %3955 = vmatpush1.bf16.msra.mxu0 0
  %3956 = vmatprep.subr.bf16.mxu0 0
  %3957 = vmatpush1.bf16.msra.mxu0 0
  %3958 = vmatprep.subr.bf16.mxu0 0
  %3959 = vmatpush1.bf16.msra.mxu0 0
  %3960 = vmatprep.subr.bf16.mxu0 0
  %3961 = vmatpush1.bf16.msra.mxu0 0
  %3962 = vmatprep.subr.bf16.mxu0 0
  %3963 = vmatpush1.bf16.msra.mxu0 0
  %3964 = vmatprep.mubr.bf16.mxu0 0
  %3965 = vmatmul.mubr.bf16.gmra.mrb[0].mxu0 %v3821
  %v3966 = vpop.f32.mrb[0].mxu0
  %v3967 = vadd.f32 0.0, %v3966
  %v3968 = vpop.f32.mrb[0].mxu0
  %v3969 = vadd.f32 0.0, %v3968
  %v3970 = vpop.f32.mrb[0].mxu0
  %v3971 = vadd.f32 0.0, %v3970
  %v3972 = vpop.f32.mrb[0].mxu0
  %v3973 = vadd.f32 0.0, %v3972
  %3974 = vmatprep.mubr.bf16.mxu0 0
  %3975 = vmatmul.mubr.bf16.gmra.mrb[0].mxu0 %v3824
  %v3976 = vpop.f32.mrb[0].mxu0
  %v3977 = vadd.f32 0.0, %v3976
  %v3978 = vpop.f32.mrb[0].mxu0
  %v3979 = vadd.f32 0.0, %v3978
  %v3980 = vpop.f32.mrb[0].mxu0
  %v3981 = vadd.f32 0.0, %v3980
  %v3982 = vpop.f32.mrb[0].mxu0
  %v3983 = vadd.f32 0.0, %v3982
  %3984 = vdwg.mxu0
  %v3985 = vmul.f32 %v3861, %v3016
  %v3986 = vmul.f32 %v3863, %v3020
  %v3987 = vmul.f32 %v3914, %v3024
  %v3988 = vmul.f32 %v3916, %v3028
  %v3989 = vmul.f32 %v3967, %v3032
  %v3990 = vmul.f32 %v3969, %v3036
  %v3991 = vmul.f32 %v3865, %v3016
  %v3992 = vmul.f32 %v3867, %v3020
  %v3993 = vmul.f32 %v3918, %v3024
  %v3994 = vmul.f32 %v3920, %v3028
  %v3995 = vmul.f32 %v3971, %v3032
  %v3996 = vmul.f32 %v3973, %v3036
  %v3997 = vmul.f32 %v3871, %v3016
  %v3998 = vmul.f32 %v3873, %v3020
  %v3999 = vmul.f32 %v3924, %v3024
  %v4000 = vmul.f32 %v3926, %v3028
  %v4001 = vmul.f32 %v3977, %v3032
  %v4002 = vmul.f32 %v3979, %v3036
  %v4003 = vmul.f32 %v3875, %v3016
  %v4004 = vmul.f32 %v3877, %v3020
  %v4005 = vmul.f32 %v3928, %v3024
  %v4006 = vmul.f32 %v3930, %v3028
  %v4007 = vmul.f32 %v3981, %v3032
  %v4008 = vmul.f32 %v3983, %v3036
  %v4009 = vadd.f32 %v3985, %v3986
  %v4010 = vadd.f32 %v4009, %v3987
  %v4011 = vadd.f32 %v4010, %v3988
  %v4012 = vadd.f32 %v4011, %v3989
  %v4013 = vsel %vm600, %v3990, 0.0
  %v4014 = vadd.f32 %v4012, %v4013
  %4015 = vadd.xlane.f32.xlu0 %v4014
  %v4016 = vpop.xlane.xlu0 %4015
  %v4017 = vadd.f32 %v3991, %v3992
  %v4018 = vadd.f32 %v4017, %v3993
  %v4019 = vadd.f32 %v4018, %v3994
  %v4020 = vadd.f32 %v4019, %v3995
  %v4021 = vsel %vm600, %v3996, 0.0
  %v4022 = vadd.f32 %v4020, %v4021
  %4023 = vadd.xlane.f32.xlu0 %v4022
  %v4024 = vpop.xlane.xlu0 %4023
  %v4025 = vadd.f32 %v3997, %v3998
  %v4026 = vadd.f32 %v4025, %v3999
  %v4027 = vadd.f32 %v4026, %v4000
  %v4028 = vadd.f32 %v4027, %v4001
  %v4029 = vsel %vm600, %v4002, 0.0
  %v4030 = vadd.f32 %v4028, %v4029
  %4031 = vadd.xlane.f32.xlu0 %v4030
  %v4032 = vpop.xlane.xlu0 %4031
  %v4033 = vadd.f32 %v4003, %v4004
  %v4034 = vadd.f32 %v4033, %v4005
  %v4035 = vadd.f32 %v4034, %v4006
  %v4036 = vadd.f32 %v4035, %v4007
  %v4037 = vsel %vm600, %v4008, 0.0
  %v4038 = vadd.f32 %v4036, %v4037
  %4039 = vadd.xlane.f32.xlu0 %v4038
  %v4040 = vpop.xlane.xlu0 %4039
  %v4041 = vmul.f32 %v4016, 0.0078125
  %v4042 = vmul.f32 %v4024, 0.0078125
  %v4043 = vmul.f32 %v4032, 0.0078125
  %v4044 = vmul.f32 %v4040, 0.0078125
  %v4045 = vmul.f32 %v3861, %v3861
  %v4046 = vmul.f32 %v3863, %v3863
  %v4047 = vmul.f32 %v3914, %v3914
  %v4048 = vmul.f32 %v3916, %v3916
  %v4049 = vmul.f32 %v3967, %v3967
  %v4050 = vmul.f32 %v3969, %v3969
  %v4051 = vmul.f32 %v3865, %v3865
  %v4052 = vmul.f32 %v3867, %v3867
  %v4053 = vmul.f32 %v3918, %v3918
  %v4054 = vmul.f32 %v3920, %v3920
  %v4055 = vmul.f32 %v3971, %v3971
  %v4056 = vmul.f32 %v3973, %v3973
  %v4057 = vmul.f32 %v3871, %v3871
  %v4058 = vmul.f32 %v3873, %v3873
  %v4059 = vmul.f32 %v3924, %v3924
  %v4060 = vmul.f32 %v3926, %v3926
  %v4061 = vmul.f32 %v3977, %v3977
  %v4062 = vmul.f32 %v3979, %v3979
  %v4063 = vmul.f32 %v3875, %v3875
  %v4064 = vmul.f32 %v3877, %v3877
  %v4065 = vmul.f32 %v3928, %v3928
  %v4066 = vmul.f32 %v3930, %v3930
  %v4067 = vmul.f32 %v3981, %v3981
  %v4068 = vmul.f32 %v3983, %v3983
  %v4069 = vmul.f32 %v4045, %v3016
  %v4070 = vmul.f32 %v4046, %v3020
  %v4071 = vmul.f32 %v4047, %v3024
  %v4072 = vmul.f32 %v4048, %v3028
  %v4073 = vmul.f32 %v4049, %v3032
  %v4074 = vmul.f32 %v4050, %v3036
  %v4075 = vmul.f32 %v4051, %v3016
  %v4076 = vmul.f32 %v4052, %v3020
  %v4077 = vmul.f32 %v4053, %v3024
  %v4078 = vmul.f32 %v4054, %v3028
  %v4079 = vmul.f32 %v4055, %v3032
  %v4080 = vmul.f32 %v4056, %v3036
  %v4081 = vmul.f32 %v4057, %v3016
  %v4082 = vmul.f32 %v4058, %v3020
  %v4083 = vmul.f32 %v4059, %v3024
  %v4084 = vmul.f32 %v4060, %v3028
  %v4085 = vmul.f32 %v4061, %v3032
  %v4086 = vmul.f32 %v4062, %v3036
  %v4087 = vmul.f32 %v4063, %v3016
  %v4088 = vmul.f32 %v4064, %v3020
  %v4089 = vmul.f32 %v4065, %v3024
  %v4090 = vmul.f32 %v4066, %v3028
  %v4091 = vmul.f32 %v4067, %v3032
  %v4092 = vmul.f32 %v4068, %v3036
  %v4093 = vadd.f32 %v4069, %v4070
  %v4094 = vadd.f32 %v4093, %v4071
  %v4095 = vadd.f32 %v4094, %v4072
  %v4096 = vadd.f32 %v4095, %v4073
  %v4097 = vsel %vm600, %v4074, 0.0
  %v4098 = vadd.f32 %v4096, %v4097
  %4099 = vadd.xlane.f32.xlu0 %v4098
  %v4100 = vpop.xlane.xlu0 %4099
  %v4101 = vadd.f32 %v4075, %v4076
  %v4102 = vadd.f32 %v4101, %v4077
  %v4103 = vadd.f32 %v4102, %v4078
  %v4104 = vadd.f32 %v4103, %v4079
  %v4105 = vsel %vm600, %v4080, 0.0
  %v4106 = vadd.f32 %v4104, %v4105
  %4107 = vadd.xlane.f32.xlu0 %v4106
  %v4108 = vpop.xlane.xlu0 %4107
  %v4109 = vadd.f32 %v4081, %v4082
  %v4110 = vadd.f32 %v4109, %v4083
  %v4111 = vadd.f32 %v4110, %v4084
  %v4112 = vadd.f32 %v4111, %v4085
  %v4113 = vsel %vm600, %v4086, 0.0
  %v4114 = vadd.f32 %v4112, %v4113
  %4115 = vadd.xlane.f32.xlu0 %v4114
  %v4116 = vpop.xlane.xlu0 %4115
  %v4117 = vadd.f32 %v4087, %v4088
  %v4118 = vadd.f32 %v4117, %v4089
  %v4119 = vadd.f32 %v4118, %v4090
  %v4120 = vadd.f32 %v4119, %v4091
  %v4121 = vsel %vm600, %v4092, 0.0
  %v4122 = vadd.f32 %v4120, %v4121
  %4123 = vadd.xlane.f32.xlu0 %v4122
  %v4124 = vpop.xlane.xlu0 %4123
  %v4125 = vmul.f32 %v4100, 0.0078125
  %v4126 = vmul.f32 %v4108, 0.0078125
  %v4127 = vmul.f32 %v4116, 0.0078125
  %v4128 = vmul.f32 %v4124, 0.0078125
  %v4129 = vmul.f32 %v4041, %v4041
  %v4130 = vmul.f32 %v4042, %v4042
  %v4131 = vmul.f32 %v4043, %v4043
  %v4132 = vmul.f32 %v4044, %v4044
  %v4133 = vsub.f32 %v4125, %v4129
  %v4134 = vsub.f32 %v4126, %v4130
  %v4135 = vsub.f32 %v4127, %v4131
  %v4136 = vsub.f32 %v4128, %v4132
  %v4137 = vld [vmem:[%s39] sm:$0xff]
  %v4138 = vld [vmem:[%s39 + $0x8] sm:$0xff]
  %v4139 = vld [vmem:[%s39 + $0x10] sm:$0xff]
  %v4140 = vld [vmem:[%s39 + $0x18] sm:$0xff]
  %v4141 = vadd.f32 %v4133, 1e-05
  %v4142 = vadd.f32 %v4134, 1e-05
  %v4143 = vadd.f32 %v4135, 1e-05
  %v4144 = vadd.f32 %v4136, 1e-05
  %v4145 = vrsqrt.pop %v4141
  %v4146 = vrsqrt.pop %v4142
  %v4147 = vrsqrt.pop %v4143
  %v4148 = vrsqrt.pop %v4144
  %v4149 = vmul.f32 %v4137, %v4145
  %v4150 = vmul.f32 %v4138, %v4146
  %v4151 = vmul.f32 %v4139, %v4147
  %v4152 = vmul.f32 %v4140, %v4148
  %4154 = vset.pattern.permute.xlu0 0
  %4155 = vperm.xlu0 %4154, %v4149
  %v4156 = vpop.permute.xlu0 %4155
  %4159 = vset.pattern.permute.xlu0 0
  %4160 = vperm.xlu0 %4159, %v4150
  %v4161 = vpop.permute.xlu0 %4160
  %4164 = vset.pattern.permute.xlu0 0
  %4165 = vperm.xlu0 %4164, %v4151
  %v4166 = vpop.permute.xlu0 %4165
  %4169 = vset.pattern.permute.xlu0 0
  %4170 = vperm.xlu0 %4169, %v4152
  %v4171 = vpop.permute.xlu0 %4170
  %v4173 = vmul.f32 %v3861, %v4156
  %v4174 = vmul.f32 %v3863, %v4156
  %v4175 = vmul.f32 %v3914, %v4156
  %v4176 = vmul.f32 %v3916, %v4156
  %v4177 = vmul.f32 %v3967, %v4156
  %v4178 = vmul.f32 %v3969, %v4156
  %v4179 = vmul.f32 %v3865, %v4161
  %v4180 = vmul.f32 %v3867, %v4161
  %v4181 = vmul.f32 %v3918, %v4161
  %v4182 = vmul.f32 %v3920, %v4161
  %v4183 = vmul.f32 %v3971, %v4161
  %v4184 = vmul.f32 %v3973, %v4161
  %v4185 = vmul.f32 %v3871, %v4166
  %v4186 = vmul.f32 %v3873, %v4166
  %v4187 = vmul.f32 %v3924, %v4166
  %v4188 = vmul.f32 %v3926, %v4166
  %v4189 = vmul.f32 %v3977, %v4166
  %v4190 = vmul.f32 %v3979, %v4166
  %v4191 = vmul.f32 %v3875, %v4171
  %v4192 = vmul.f32 %v3877, %v4171
  %v4193 = vmul.f32 %v3928, %v4171
  %v4194 = vmul.f32 %v3930, %v4171
  %v4195 = vmul.f32 %v3981, %v4171
  %v4196 = vmul.f32 %v3983, %v4171
  %v4197 = vld [vmem:[%s41] sm:$0xff]
  %v4198 = vld [vmem:[%s41 + $0x8] sm:$0xff]
  %v4199 = vld [vmem:[%s41 + $0x10] sm:$0xff]
  %v4200 = vld [vmem:[%s41 + $0x18] sm:$0xff]
  %v4201 = vmul.f32 %v4041, %v4149
  %v4202 = vmul.f32 %v4042, %v4150
  %v4203 = vmul.f32 %v4043, %v4151
  %v4204 = vmul.f32 %v4044, %v4152
  %v4205 = vsub.f32 %v4197, %v4201
  %v4206 = vsub.f32 %v4198, %v4202
  %v4207 = vsub.f32 %v4199, %v4203
  %v4208 = vsub.f32 %v4200, %v4204
  %4210 = vset.pattern.permute.xlu0 0
  %4211 = vperm.xlu0 %4210, %v4205
  %v4212 = vpop.permute.xlu0 %4211
  %4215 = vset.pattern.permute.xlu0 0
  %4216 = vperm.xlu0 %4215, %v4206
  %v4217 = vpop.permute.xlu0 %4216
  %4220 = vset.pattern.permute.xlu0 0
  %4221 = vperm.xlu0 %4220, %v4207
  %v4222 = vpop.permute.xlu0 %4221
  %4225 = vset.pattern.permute.xlu0 0
  %4226 = vperm.xlu0 %4225, %v4208
  %v4227 = vpop.permute.xlu0 %4226
  %v4229 = vadd.f32 %v4173, %v4212
  %v4230 = vadd.f32 %v4174, %v4212
  %v4231 = vadd.f32 %v4175, %v4212
  %v4232 = vadd.f32 %v4176, %v4212
  %v4233 = vadd.f32 %v4177, %v4212
  %v4234 = vadd.f32 %v4178, %v4212
  %v4235 = vadd.f32 %v4179, %v4217
  %v4236 = vadd.f32 %v4180, %v4217
  %v4237 = vadd.f32 %v4181, %v4217
  %v4238 = vadd.f32 %v4182, %v4217
  %v4239 = vadd.f32 %v4183, %v4217
  %v4240 = vadd.f32 %v4184, %v4217
  %v4241 = vadd.f32 %v4185, %v4222
  %v4242 = vadd.f32 %v4186, %v4222
  %v4243 = vadd.f32 %v4187, %v4222
  %v4244 = vadd.f32 %v4188, %v4222
  %v4245 = vadd.f32 %v4189, %v4222
  %v4246 = vadd.f32 %v4190, %v4222
  %v4247 = vadd.f32 %v4191, %v4227
  %v4248 = vadd.f32 %v4192, %v4227
  %v4249 = vadd.f32 %v4193, %v4227
  %v4250 = vadd.f32 %v4194, %v4227
  %v4251 = vadd.f32 %v4195, %v4227
  %v4252 = vadd.f32 %v4196, %v4227
  %v4254 = vsel %vm600, %v4234, 0
  %v4257 = vsel %vm600, %v4240, 0
  %v4260 = vsel %vm600, %v4246, 0
  %v4263 = vsel %vm600, %v4252, 0
  %4265 = vmatprep.subr.mxu0 %v3336
  %4266 = vmatpush1.msra.mxu0 %v3335
  %4267 = vmatprep.subr.mxu0 %v3338
  %4268 = vmatpush1.msra.mxu0 %v3337
  %4269 = vmatprep.subr.mxu0 %v3340
  %4270 = vmatpush1.msra.mxu0 %v3339
  %4271 = vmatprep.subr.mxu0 %v3342
  %4272 = vmatpush1.msra.mxu0 %v3341
  %4273 = vmatprep.subr.mxu0 %v3344
  %4274 = vmatpush1.msra.mxu0 %v3343
  %4275 = vmatprep.subr.mxu0 %v3346
  %4276 = vmatpush1.msra.mxu0 %v3345
  %4277 = vmatprep.subr.mxu0 %v3348
  %4278 = vmatpush1.msra.mxu0 %v3347
  %4279 = vmatprep.subr.mxu0 %v3350
  %4280 = vmatpush1.msra.mxu0 %v3349
  %4281 = vmatprep.subr.mxu0 %v3352
  %4282 = vmatpush1.msra.mxu0 %v3351
  %4283 = vmatprep.subr.mxu0 %v3354
  %4284 = vmatpush1.msra.mxu0 %v3353
  %4285 = vmatprep.subr.mxu0 %v3356
  %4286 = vmatpush1.msra.mxu0 %v3355
  %4287 = vmatprep.subr.mxu0 %v3358
  %4288 = vmatpush1.msra.mxu0 %v3357
  %4289 = vmatprep.subr.mxu0 %v3360
  %4290 = vmatpush1.msra.mxu0 %v3359
  %4291 = vmatprep.subr.mxu0 %v3362
  %4292 = vmatpush1.msra.mxu0 %v3361
  %4293 = vmatprep.subr.mxu0 %v3364
  %4294 = vmatpush1.msra.mxu0 %v3363
  %4295 = vmatprep.subr.mxu0 %v3366
  %4296 = vmatpush1.msra.mxu0 %v3365
  %4297 = vmatprep.subr.mxu0 %v3368
  %4298 = vmatpush1.msra.mxu0 %v3367
  %4299 = vmatprep.subr.mxu0 %v3370
  %4300 = vmatpush1.msra.mxu0 %v3369
  %4301 = vmatprep.subr.mxu0 %v3372
  %4302 = vmatpush1.msra.mxu0 %v3371
  %4303 = vmatprep.subr.mxu0 %v3374
  %4304 = vmatpush1.msra.mxu0 %v3373
  %4305 = vmatprep.subr.mxu0 %v3376
  %4306 = vmatpush1.msra.mxu0 %v3375
  %4307 = vmatprep.subr.mxu0 %v3378
  %4308 = vmatpush1.msra.mxu0 %v3377
  %4309 = vmatprep.subr.mxu0 %v3380
  %4310 = vmatpush1.msra.mxu0 %v3379
  %4311 = vmatprep.subr.mxu0 %v3382
  %4312 = vmatpush1.msra.mxu0 %v3381
  %4313 = vmatprep.subr.mxu0 %v3384
  %4314 = vmatpush1.msra.mxu0 %v3383
  %4315 = vmatprep.subr.mxu0 %v3386
  %4316 = vmatpush1.msra.mxu0 %v3385
  %4317 = vmatprep.subr.mxu0 %v3388
  %4318 = vmatpush1.msra.mxu0 %v3387
  %4319 = vmatprep.subr.mxu0 %v3390
  %4320 = vmatpush1.msra.mxu0 %v3389
  %4321 = vmatprep.subr.mxu0 %v3392
  %4322 = vmatpush1.msra.mxu0 %v3391
  %4323 = vmatprep.subr.mxu0 %v3394
  %4324 = vmatpush1.msra.mxu0 %v3393
  %4325 = vmatprep.subr.mxu0 %v3396
  %4326 = vmatpush1.msra.mxu0 %v3395
  %4327 = vmatprep.subr.mxu0 %v3398
  %4328 = vmatpush1.msra.mxu0 %v3397
  %4329 = vmatprep.mubr.f32.mxu0 %v4230
  %4330 = vmatmul.mubr.f32.gmra.mrb[0].mxu0 %v4229
  %v4331 = vpop.f32.mrb[0].mxu0
  %v4332 = vadd.f32 0.0, %v4331
  %v4333 = vpop.f32.mrb[0].mxu0
  %v4334 = vadd.f32 0.0, %v4333
  %4335 = vmatprep.mubr.f32.mxu0 %v4236
  %4336 = vmatmul.mubr.f32.gmra.mrb[0].mxu0 %v4235
  %v4337 = vpop.f32.mrb[0].mxu0
  %v4338 = vadd.f32 0.0, %v4337
  %v4339 = vpop.f32.mrb[0].mxu0
  %v4340 = vadd.f32 0.0, %v4339
  %4341 = vmatprep.mubr.f32.mxu0 %v4242
  %4342 = vmatmul.mubr.f32.gmra.mrb[0].mxu0 %v4241
  %v4343 = vpop.f32.mrb[0].mxu0
  %v4344 = vadd.f32 0.0, %v4343
  %v4345 = vpop.f32.mrb[0].mxu0
  %v4346 = vadd.f32 0.0, %v4345
  %4347 = vmatprep.mubr.f32.mxu0 %v4248
  %4348 = vmatmul.mubr.f32.gmra.mrb[0].mxu0 %v4247
  %v4349 = vpop.f32.mrb[0].mxu0
  %v4350 = vadd.f32 0.0, %v4349
  %v4351 = vpop.f32.mrb[0].mxu0
  %v4352 = vadd.f32 0.0, %v4351
  %4353 = vdwg.mxu0
  %4354 = vmatprep.subr.mxu0 %v3400
  %4355 = vmatpush1.msra.mxu0 %v3399
  %4356 = vmatprep.subr.mxu0 %v3402
  %4357 = vmatpush1.msra.mxu0 %v3401
  %4358 = vmatprep.subr.mxu0 %v3404
  %4359 = vmatpush1.msra.mxu0 %v3403
  %4360 = vmatprep.subr.mxu0 %v3406
  %4361 = vmatpush1.msra.mxu0 %v3405
  %4362 = vmatprep.subr.mxu0 %v3408
  %4363 = vmatpush1.msra.mxu0 %v3407
  %4364 = vmatprep.subr.mxu0 %v3410
  %4365 = vmatpush1.msra.mxu0 %v3409
  %4366 = vmatprep.subr.mxu0 %v3412
  %4367 = vmatpush1.msra.mxu0 %v3411
  %4368 = vmatprep.subr.mxu0 %v3414
  %4369 = vmatpush1.msra.mxu0 %v3413
  %4370 = vmatprep.subr.mxu0 %v3416
  %4371 = vmatpush1.msra.mxu0 %v3415
  %4372 = vmatprep.subr.mxu0 %v3418
  %4373 = vmatpush1.msra.mxu0 %v3417
  %4374 = vmatprep.subr.mxu0 %v3420
  %4375 = vmatpush1.msra.mxu0 %v3419
  %4376 = vmatprep.subr.mxu0 %v3422
  %4377 = vmatpush1.msra.mxu0 %v3421
  %4378 = vmatprep.subr.mxu0 %v3424
  %4379 = vmatpush1.msra.mxu0 %v3423
  %4380 = vmatprep.subr.mxu0 %v3426
  %4381 = vmatpush1.msra.mxu0 %v3425
  %4382 = vmatprep.subr.mxu0 %v3428
  %4383 = vmatpush1.msra.mxu0 %v3427
  %4384 = vmatprep.subr.mxu0 %v3430
  %4385 = vmatpush1.msra.mxu0 %v3429
  %4386 = vmatprep.subr.mxu0 %v3432
  %4387 = vmatpush1.msra.mxu0 %v3431
  %4388 = vmatprep.subr.mxu0 %v3434
  %4389 = vmatpush1.msra.mxu0 %v3433
  %4390 = vmatprep.subr.mxu0 %v3436
  %4391 = vmatpush1.msra.mxu0 %v3435
  %4392 = vmatprep.subr.mxu0 %v3438
  %4393 = vmatpush1.msra.mxu0 %v3437
  %4394 = vmatprep.subr.mxu0 %v3440
  %4395 = vmatpush1.msra.mxu0 %v3439
  %4396 = vmatprep.subr.mxu0 %v3442
  %4397 = vmatpush1.msra.mxu0 %v3441
  %4398 = vmatprep.subr.mxu0 %v3444
  %4399 = vmatpush1.msra.mxu0 %v3443
  %4400 = vmatprep.subr.mxu0 %v3446
  %4401 = vmatpush1.msra.mxu0 %v3445
  %4402 = vmatprep.subr.mxu0 %v3448
  %4403 = vmatpush1.msra.mxu0 %v3447
  %4404 = vmatprep.subr.mxu0 %v3450
  %4405 = vmatpush1.msra.mxu0 %v3449
  %4406 = vmatprep.subr.mxu0 %v3452
  %4407 = vmatpush1.msra.mxu0 %v3451
  %4408 = vmatprep.subr.mxu0 %v3454
  %4409 = vmatpush1.msra.mxu0 %v3453
  %4410 = vmatprep.subr.mxu0 %v3456
  %4411 = vmatpush1.msra.mxu0 %v3455
  %4412 = vmatprep.subr.mxu0 %v3458
  %4413 = vmatpush1.msra.mxu0 %v3457
  %4414 = vmatprep.subr.mxu0 %v3460
  %4415 = vmatpush1.msra.mxu0 %v3459
  %4416 = vmatprep.subr.mxu0 %v3462
  %4417 = vmatpush1.msra.mxu0 %v3461
  %4418 = vmatprep.mubr.f32.mxu0 %v4232
  %4419 = vmatmul.mubr.f32.gmra.mrb[0].mxu0 %v4231
  %v4420 = vpop.f32.mrb[0].mxu0
  %v4421 = vadd.f32 %v4332, %v4420
  %v4422 = vpop.f32.mrb[0].mxu0
  %v4423 = vadd.f32 %v4334, %v4422
  %4424 = vmatprep.mubr.f32.mxu0 %v4238
  %4425 = vmatmul.mubr.f32.gmra.mrb[0].mxu0 %v4237
  %v4426 = vpop.f32.mrb[0].mxu0
  %v4427 = vadd.f32 %v4338, %v4426
  %v4428 = vpop.f32.mrb[0].mxu0
  %v4429 = vadd.f32 %v4340, %v4428
  %4430 = vmatprep.mubr.f32.mxu0 %v4244
  %4431 = vmatmul.mubr.f32.gmra.mrb[0].mxu0 %v4243
  %v4432 = vpop.f32.mrb[0].mxu0
  %v4433 = vadd.f32 %v4344, %v4432
  %v4434 = vpop.f32.mrb[0].mxu0
  %v4435 = vadd.f32 %v4346, %v4434
  %4436 = vmatprep.mubr.f32.mxu0 %v4250
  %4437 = vmatmul.mubr.f32.gmra.mrb[0].mxu0 %v4249
  %v4438 = vpop.f32.mrb[0].mxu0
  %v4439 = vadd.f32 %v4350, %v4438
  %v4440 = vpop.f32.mrb[0].mxu0
  %v4441 = vadd.f32 %v4352, %v4440
  %4442 = vdwg.mxu0
  %4443 = vmatprep.subr.mxu0 %v3464
  %4444 = vmatpush1.msra.mxu0 %v3463
  %4445 = vmatprep.subr.mxu0 %v3466
  %4446 = vmatpush1.msra.mxu0 %v3465
  %4447 = vmatprep.subr.mxu0 %v3468
  %4448 = vmatpush1.msra.mxu0 %v3467
  %4449 = vmatprep.subr.mxu0 %v3470
  %4450 = vmatpush1.msra.mxu0 %v3469
  %4451 = vmatprep.subr.mxu0 %v3472
  %4452 = vmatpush1.msra.mxu0 %v3471
  %4453 = vmatprep.subr.mxu0 %v3474
  %4454 = vmatpush1.msra.mxu0 %v3473
  %4455 = vmatprep.subr.mxu0 %v3476
  %4456 = vmatpush1.msra.mxu0 %v3475
  %4457 = vmatprep.subr.mxu0 %v3478
  %4458 = vmatpush1.msra.mxu0 %v3477
  %4459 = vmatprep.subr.mxu0 %v3480
  %4460 = vmatpush1.msra.mxu0 %v3479
  %4461 = vmatprep.subr.mxu0 %v3482
  %4462 = vmatpush1.msra.mxu0 %v3481
  %4463 = vmatprep.subr.mxu0 %v3484
  %4464 = vmatpush1.msra.mxu0 %v3483
  %4465 = vmatprep.subr.mxu0 %v3486
  %4466 = vmatpush1.msra.mxu0 %v3485
  %4467 = vmatprep.subr.mxu0 %v3488
  %4468 = vmatpush1.msra.mxu0 %v3487
  %4469 = vmatprep.subr.mxu0 %v3490
  %4470 = vmatpush1.msra.mxu0 %v3489
  %4471 = vmatprep.subr.mxu0 %v3492
  %4472 = vmatpush1.msra.mxu0 %v3491
  %4473 = vmatprep.subr.mxu0 %v3494
  %4474 = vmatpush1.msra.mxu0 %v3493
  %4475 = vmatprep.subr.mxu0 %v3496
  %4476 = vmatpush1.msra.mxu0 %v3495
  %4477 = vmatprep.subr.mxu0 0.0
  %4478 = vmatpush1.msra.mxu0 0.0
  %4479 = vmatprep.subr.mxu0 0.0
  %4480 = vmatpush1.msra.mxu0 0.0
  %4481 = vmatprep.subr.mxu0 0.0
  %4482 = vmatpush1.msra.mxu0 0.0
  %4483 = vmatprep.subr.mxu0 0.0
  %4484 = vmatpush1.msra.mxu0 0.0
  %4485 = vmatprep.subr.mxu0 0.0
  %4486 = vmatpush1.msra.mxu0 0.0
  %4487 = vmatprep.subr.mxu0 0.0
  %4488 = vmatpush1.msra.mxu0 0.0
  %4489 = vmatprep.subr.mxu0 0.0
  %4490 = vmatpush1.msra.mxu0 0.0
  %4491 = vmatprep.subr.mxu0 0.0
  %4492 = vmatpush1.msra.mxu0 0.0
  %4493 = vmatprep.subr.mxu0 0.0
  %4494 = vmatpush1.msra.mxu0 0.0
  %4495 = vmatprep.subr.mxu0 0.0
  %4496 = vmatpush1.msra.mxu0 0.0
  %4497 = vmatprep.subr.mxu0 0.0
  %4498 = vmatpush1.msra.mxu0 0.0
  %4499 = vmatprep.subr.mxu0 0.0
  %4500 = vmatpush1.msra.mxu0 0.0
  %4501 = vmatprep.subr.mxu0 0.0
  %4502 = vmatpush1.msra.mxu0 0.0
  %4503 = vmatprep.subr.mxu0 0.0
  %4504 = vmatpush1.msra.mxu0 0.0
  %4505 = vmatprep.subr.mxu0 0.0
  %4506 = vmatpush1.msra.mxu0 0.0
  %4507 = vmatprep.mubr.f32.mxu0 %v4254
  %4508 = vmatmul.mubr.f32.gmra.mrb[0].mxu0 %v4233
  %v4509 = vpop.f32.mrb[0].mxu0
  %v4510 = vadd.f32 %v4421, %v4509
  %v4511 = vpop.f32.mrb[0].mxu0
  %v4512 = vadd.f32 %v4423, %v4511
  %4513 = vmatprep.mubr.f32.mxu0 %v4257
  %4514 = vmatmul.mubr.f32.gmra.mrb[0].mxu0 %v4239
  %v4515 = vpop.f32.mrb[0].mxu0
  %v4516 = vadd.f32 %v4427, %v4515
  %v4517 = vpop.f32.mrb[0].mxu0
  %v4518 = vadd.f32 %v4429, %v4517
  %4519 = vmatprep.mubr.f32.mxu0 %v4260
  %4520 = vmatmul.mubr.f32.gmra.mrb[0].mxu0 %v4245
  %v4521 = vpop.f32.mrb[0].mxu0
  %v4522 = vadd.f32 %v4433, %v4521
  %v4523 = vpop.f32.mrb[0].mxu0
  %v4524 = vadd.f32 %v4435, %v4523
  %4525 = vmatprep.mubr.f32.mxu0 %v4263
  %4526 = vmatmul.mubr.f32.gmra.mrb[0].mxu0 %v4251
  %v4527 = vpop.f32.mrb[0].mxu0
  %v4528 = vadd.f32 %v4439, %v4527
  %v4529 = vpop.f32.mrb[0].mxu0
  %v4530 = vadd.f32 %v4441, %v4529
  %4531 = vdwg.mxu0
  %4540 = vrot.lane.b32.xlu0 %v3754, 127
  %v4541 = vpop.permute.xlu0 %4540
  %4542 = vrot.lane.b32.xlu0 %v3756, 127
  %v4543 = vpop.permute.xlu0 %4542
  %4544 = vrot.lane.b32.xlu0 %v3760, 127
  %v4545 = vpop.permute.xlu0 %4544
  %4546 = vrot.lane.b32.xlu0 %v3762, 127
  %v4547 = vpop.permute.xlu0 %4546
  %4548 = vrot.lane.b32.xlu0 %v3766, 127
  %v4549 = vpop.permute.xlu0 %4548
  %4550 = vrot.lane.b32.xlu0 %v3768, 127
  %v4551 = vpop.permute.xlu0 %4550
  %4552 = vrot.lane.b32.xlu0 %v3772, 127
  %v4553 = vpop.permute.xlu0 %4552
  %4554 = vrot.lane.b32.xlu0 %v3774, 127
  %v4555 = vpop.permute.xlu0 %4554
  %v4556 = vsel %vm183, %v4541, %v4543
  %v4557 = vsel %vm183, %v4545, %v4547
  %v4558 = vsel %vm183, %v4549, %v4551
  %v4559 = vsel %vm183, %v4553, %v4555
  %4568 = vrot.lane.b32.xlu0 %v3754, 126
  %v4569 = vpop.permute.xlu0 %4568
  %4570 = vrot.lane.b32.xlu0 %v3756, 126
  %v4571 = vpop.permute.xlu0 %4570
  %4572 = vrot.lane.b32.xlu0 %v3760, 126
  %v4573 = vpop.permute.xlu0 %4572
  %4574 = vrot.lane.b32.xlu0 %v3762, 126
  %v4575 = vpop.permute.xlu0 %4574
  %4576 = vrot.lane.b32.xlu0 %v3766, 126
  %v4577 = vpop.permute.xlu0 %4576
  %4578 = vrot.lane.b32.xlu0 %v3768, 126
  %v4579 = vpop.permute.xlu0 %4578
  %4580 = vrot.lane.b32.xlu0 %v3772, 126
  %v4581 = vpop.permute.xlu0 %4580
  %4582 = vrot.lane.b32.xlu0 %v3774, 126
  %v4583 = vpop.permute.xlu0 %4582
  %v4584 = vsel %vm207, %v4569, %v4571
  %v4585 = vsel %vm207, %v4573, %v4575
  %v4586 = vsel %vm207, %v4577, %v4579
  %v4587 = vsel %vm207, %v4581, %v4583
  %4596 = vrot.lane.b32.xlu0 %v3754, 118
  %v4597 = vpop.permute.xlu0 %4596
  %4598 = vrot.lane.b32.xlu0 %v3756, 118
  %v4599 = vpop.permute.xlu0 %4598
  %4600 = vrot.lane.b32.xlu0 %v3760, 118
  %v4601 = vpop.permute.xlu0 %4600
  %4602 = vrot.lane.b32.xlu0 %v3762, 118
  %v4603 = vpop.permute.xlu0 %4602
  %4604 = vrot.lane.b32.xlu0 %v3766, 118
  %v4605 = vpop.permute.xlu0 %4604
  %4606 = vrot.lane.b32.xlu0 %v3768, 118
  %v4607 = vpop.permute.xlu0 %4606
  %4608 = vrot.lane.b32.xlu0 %v3772, 118
  %v4609 = vpop.permute.xlu0 %4608
  %4610 = vrot.lane.b32.xlu0 %v3774, 118
  %v4611 = vpop.permute.xlu0 %4610
  %vm4612 = vcmask 965632
  %v4613 = vsel %vm4612, %v4597, %v4599
  %v4614 = vsel %vm4612, %v4601, %v4603
  %v4615 = vsel %vm4612, %v4605, %v4607
  %v4616 = vsel %vm4612, %v4609, %v4611
  %4625 = vrot.lane.b32.xlu0 %v3754, 117
  %v4626 = vpop.permute.xlu0 %4625
  %4627 = vrot.lane.b32.xlu0 %v3756, 117
  %v4628 = vpop.permute.xlu0 %4627
  %4629 = vrot.lane.b32.xlu0 %v3760, 117
  %v4630 = vpop.permute.xlu0 %4629
  %4631 = vrot.lane.b32.xlu0 %v3762, 117
  %v4632 = vpop.permute.xlu0 %4631
  %4633 = vrot.lane.b32.xlu0 %v3766, 117
  %v4634 = vpop.permute.xlu0 %4633
  %4635 = vrot.lane.b32.xlu0 %v3768, 117
  %v4636 = vpop.permute.xlu0 %4635
  %4637 = vrot.lane.b32.xlu0 %v3772, 117
  %v4638 = vpop.permute.xlu0 %4637
  %4639 = vrot.lane.b32.xlu0 %v3774, 117
  %v4640 = vpop.permute.xlu0 %4639
  %vm4641 = vcmask 957440
  %v4642 = vsel %vm4641, %v4626, %v4628
  %v4643 = vsel %vm4641, %v4630, %v4632
  %v4644 = vsel %vm4641, %v4634, %v4636
  %v4645 = vsel %vm4641, %v4638, %v4640
  %4654 = vrot.lane.b32.xlu0 %v3754, 116
  %v4655 = vpop.permute.xlu0 %4654
  %4656 = vrot.lane.b32.xlu0 %v3756, 116
  %v4657 = vpop.permute.xlu0 %4656
  %4658 = vrot.lane.b32.xlu0 %v3760, 116
  %v4659 = vpop.permute.xlu0 %4658
  %4660 = vrot.lane.b32.xlu0 %v3762, 116
  %v4661 = vpop.permute.xlu0 %4660
  %4662 = vrot.lane.b32.xlu0 %v3766, 116
  %v4663 = vpop.permute.xlu0 %4662
  %4664 = vrot.lane.b32.xlu0 %v3768, 116
  %v4665 = vpop.permute.xlu0 %4664
  %4666 = vrot.lane.b32.xlu0 %v3772, 116
  %v4667 = vpop.permute.xlu0 %4666
  %4668 = vrot.lane.b32.xlu0 %v3774, 116
  %v4669 = vpop.permute.xlu0 %4668
  %vm4670 = vcmask 949248
  %v4671 = vsel %vm4670, %v4655, %v4657
  %v4672 = vsel %vm4670, %v4659, %v4661
  %v4673 = vsel %vm4670, %v4663, %v4665
  %v4674 = vsel %vm4670, %v4667, %v4669
  %4683 = vrot.lane.b32.xlu0 %v3754, 108
  %v4684 = vpop.permute.xlu0 %4683
  %4685 = vrot.lane.b32.xlu0 %v3756, 108
  %v4686 = vpop.permute.xlu0 %4685
  %4687 = vrot.lane.b32.xlu0 %v3760, 108
  %v4688 = vpop.permute.xlu0 %4687
  %4689 = vrot.lane.b32.xlu0 %v3762, 108
  %v4690 = vpop.permute.xlu0 %4689
  %4691 = vrot.lane.b32.xlu0 %v3766, 108
  %v4692 = vpop.permute.xlu0 %4691
  %4693 = vrot.lane.b32.xlu0 %v3768, 108
  %v4694 = vpop.permute.xlu0 %4693
  %4695 = vrot.lane.b32.xlu0 %v3772, 108
  %v4696 = vpop.permute.xlu0 %4695
  %4697 = vrot.lane.b32.xlu0 %v3774, 108
  %v4698 = vpop.permute.xlu0 %4697
  %v4699 = vsel %vm279, %v4684, %v4686
  %v4700 = vsel %vm279, %v4688, %v4690
  %v4701 = vsel %vm279, %v4692, %v4694
  %v4702 = vsel %vm279, %v4696, %v4698
  %4711 = vrot.lane.b32.xlu0 %v3754, 107
  %v4712 = vpop.permute.xlu0 %4711
  %4713 = vrot.lane.b32.xlu0 %v3756, 107
  %v4714 = vpop.permute.xlu0 %4713
  %4715 = vrot.lane.b32.xlu0 %v3760, 107
  %v4716 = vpop.permute.xlu0 %4715
  %4717 = vrot.lane.b32.xlu0 %v3762, 107
  %v4718 = vpop.permute.xlu0 %4717
  %4719 = vrot.lane.b32.xlu0 %v3766, 107
  %v4720 = vpop.permute.xlu0 %4719
  %4721 = vrot.lane.b32.xlu0 %v3768, 107
  %v4722 = vpop.permute.xlu0 %4721
  %4723 = vrot.lane.b32.xlu0 %v3772, 107
  %v4724 = vpop.permute.xlu0 %4723
  %4725 = vrot.lane.b32.xlu0 %v3774, 107
  %v4726 = vpop.permute.xlu0 %4725
  %vm4727 = vcmask 875520
  %v4728 = vsel %vm4727, %v4712, %v4714
  %v4729 = vsel %vm4727, %v4716, %v4718
  %v4730 = vsel %vm4727, %v4720, %v4722
  %v4731 = vsel %vm4727, %v4724, %v4726
  %4740 = vrot.lane.b32.xlu0 %v3754, 106
  %v4741 = vpop.permute.xlu0 %4740
  %4742 = vrot.lane.b32.xlu0 %v3756, 106
  %v4743 = vpop.permute.xlu0 %4742
  %4744 = vrot.lane.b32.xlu0 %v3760, 106
  %v4745 = vpop.permute.xlu0 %4744
  %4746 = vrot.lane.b32.xlu0 %v3762, 106
  %v4747 = vpop.permute.xlu0 %4746
  %4748 = vrot.lane.b32.xlu0 %v3766, 106
  %v4749 = vpop.permute.xlu0 %4748
  %4750 = vrot.lane.b32.xlu0 %v3768, 106
  %v4751 = vpop.permute.xlu0 %4750
  %4752 = vrot.lane.b32.xlu0 %v3772, 106
  %v4753 = vpop.permute.xlu0 %4752
  %4754 = vrot.lane.b32.xlu0 %v3774, 106
  %v4755 = vpop.permute.xlu0 %4754
  %vm4756 = vcmask 867328
  %v4757 = vsel %vm4756, %v4741, %v4743
  %v4758 = vsel %vm4756, %v4745, %v4747
  %v4759 = vsel %vm4756, %v4749, %v4751
  %v4760 = vsel %vm4756, %v4753, %v4755
  %v4769 = vld [vmem:[%s33] sm:$0xff]
  %v4770 = vld [vmem:[%s33 + $0x8] sm:$0xf]
  %v4771 = vld [vmem:[%s33 + $0xc] sm:$0xff]
  %v4772 = vld [vmem:[%s33 + $0x14] sm:$0xf]
  %v4773 = vld [vmem:[%s33 + $0x18] sm:$0xff]
  %v4774 = vld [vmem:[%s33 + $0x20] sm:$0xf]
  %v4775 = vld [vmem:[%s33 + $0x24] sm:$0xff]
  %v4776 = vld [vmem:[%s33 + $0x2c] sm:$0xf]
  %v4777 = vpack.c.bf16 %v3760, %v3754
  %v4778 = vpack.c.bf16 %v3762, %v3756
  %v4779 = vpack.c.bf16 %v3772, %v3766
  %v4780 = vpack.c.bf16 %v3774, %v3768
  %v4781 = vpack.c.bf16 %v4557, %v4556
  %v4782 = vpack.c.bf16 %v4547, %v4543
  %v4783 = vpack.c.bf16 %v4559, %v4558
  %v4784 = vpack.c.bf16 %v4555, %v4551
  %v4785 = vpack.c.bf16 %v4585, %v4584
  %v4786 = vpack.c.bf16 %v4575, %v4571
  %v4787 = vpack.c.bf16 %v4587, %v4586
  %v4788 = vpack.c.bf16 %v4583, %v4579
  %v4789 = vpack.c.bf16 %v4614, %v4613
  %v4790 = vpack.c.bf16 %v4603, %v4599
  %v4791 = vpack.c.bf16 %v4616, %v4615
  %v4792 = vpack.c.bf16 %v4611, %v4607
  %v4793 = vpack.c.bf16 %v4643, %v4642
  %v4794 = vpack.c.bf16 %v4632, %v4628
  %v4795 = vpack.c.bf16 %v4645, %v4644
  %v4796 = vpack.c.bf16 %v4640, %v4636
  %v4797 = vpack.c.bf16 %v4672, %v4671
  %v4798 = vpack.c.bf16 %v4661, %v4657
  %v4799 = vpack.c.bf16 %v4674, %v4673
  %v4800 = vpack.c.bf16 %v4669, %v4665
  %v4801 = vpack.c.bf16 %v4700, %v4699
  %v4802 = vpack.c.bf16 %v4690, %v4686
  %v4803 = vpack.c.bf16 %v4702, %v4701
  %v4804 = vpack.c.bf16 %v4698, %v4694
  %v4805 = vpack.c.bf16 %v4729, %v4728
  %v4806 = vpack.c.bf16 %v4718, %v4714
  %v4807 = vpack.c.bf16 %v4731, %v4730
  %v4808 = vpack.c.bf16 %v4726, %v4722
  %v4809 = vpack.c.bf16 %v4758, %v4757
  %v4810 = vpack.c.bf16 %v4747, %v4743
  %v4811 = vpack.c.bf16 %v4760, %v4759
  %v4812 = vpack.c.bf16 %v4755, %v4751
  %v4821 = vunpack.c.l.b16 %v4769
  %v4822 = vunpack.c.h.b16 %v4769
  %v4823 = vunpack.c.l.b16 %v4770
  %v4824 = vunpack.c.l.b16 %v4771
  %v4825 = vunpack.c.h.b16 %v4771
  %v4826 = vunpack.c.l.b16 %v4772
  %v4827 = vunpack.c.l.b16 %v4773
  %v4828 = vunpack.c.h.b16 %v4773
  %v4829 = vunpack.c.l.b16 %v4774
  %v4830 = vunpack.c.l.b16 %v4775
  %v4831 = vunpack.c.h.b16 %v4775
  %v4832 = vunpack.c.l.b16 %v4776
  %v4833 = vpack.c.b16 %v4824, %v4821
  %v4834 = vpack.c.b16 %v4825, %v4822
  %v4835 = vpack.c.b16 %v4826, %v4823
  %v4836 = vpack.c.b16 %v4830, %v4827
  %v4837 = vpack.c.b16 %v4831, %v4828
  %v4838 = vpack.c.b16 %v4832, %v4829
  %vm4843 = vcmask 261120
  %v4845 = vsel %vm4843, %v4835, 0
  %v4848 = vsel %vm4843, %v4838, 0
  %4850 = vmatprep.subr.bf16.mxu0 %v4778
  %4851 = vmatpush1.bf16.msra.mxu0 %v4777
  %4852 = vmatprep.subr.bf16.mxu0 %v4780
  %4853 = vmatpush1.bf16.msra.mxu0 %v4779
  %4854 = vmatprep.subr.bf16.mxu0 %v4782
  %4855 = vmatpush1.bf16.msra.mxu0 %v4781
  %4856 = vmatprep.subr.bf16.mxu0 %v4784
  %4857 = vmatpush1.bf16.msra.mxu0 %v4783
  %4858 = vmatprep.subr.bf16.mxu0 %v4786
  %4859 = vmatpush1.bf16.msra.mxu0 %v4785
  %4860 = vmatprep.subr.bf16.mxu0 %v4788
  %4861 = vmatpush1.bf16.msra.mxu0 %v4787
  %4862 = vmatprep.subr.bf16.mxu0 %v4790
  %4863 = vmatpush1.bf16.msra.mxu0 %v4789
  %4864 = vmatprep.subr.bf16.mxu0 %v4792
  %4865 = vmatpush1.bf16.msra.mxu0 %v4791
  %4866 = vmatprep.subr.bf16.mxu0 %v4794
  %4867 = vmatpush1.bf16.msra.mxu0 %v4793
  %4868 = vmatprep.subr.bf16.mxu0 %v4796
  %4869 = vmatpush1.bf16.msra.mxu0 %v4795
  %4870 = vmatprep.subr.bf16.mxu0 %v4798
  %4871 = vmatpush1.bf16.msra.mxu0 %v4797
  %4872 = vmatprep.subr.bf16.mxu0 %v4800
  %4873 = vmatpush1.bf16.msra.mxu0 %v4799
  %4874 = vmatprep.subr.bf16.mxu0 %v4802
  %4875 = vmatpush1.bf16.msra.mxu0 %v4801
  %4876 = vmatprep.subr.bf16.mxu0 %v4804
  %4877 = vmatpush1.bf16.msra.mxu0 %v4803
  %4878 = vmatprep.subr.bf16.mxu0 %v4806
  %4879 = vmatpush1.bf16.msra.mxu0 %v4805
  %4880 = vmatprep.subr.bf16.mxu0 %v4808
  %4881 = vmatpush1.bf16.msra.mxu0 %v4807
  %4882 = vmatprep.mubr.bf16.mxu0 %v4834
  %4883 = vmatmul.mubr.bf16.gmra.mrb[0].mxu0 %v4833
  %v4884 = vpop.f32.mrb[0].mxu0
  %v4885 = vadd.f32 0.0, %v4884
  %v4886 = vpop.f32.mrb[0].mxu0
  %v4887 = vadd.f32 0.0, %v4886
  %v4888 = vpop.f32.mrb[0].mxu0
  %v4889 = vadd.f32 0.0, %v4888
  %v4890 = vpop.f32.mrb[0].mxu0
  %v4891 = vadd.f32 0.0, %v4890
  %4892 = vmatprep.mubr.bf16.mxu0 %v4837
  %4893 = vmatmul.mubr.bf16.gmra.mrb[0].mxu0 %v4836
  %v4894 = vpop.f32.mrb[0].mxu0
  %v4895 = vadd.f32 0.0, %v4894
  %v4896 = vpop.f32.mrb[0].mxu0
  %v4897 = vadd.f32 0.0, %v4896
  %v4898 = vpop.f32.mrb[0].mxu0
  %v4899 = vadd.f32 0.0, %v4898
  %v4900 = vpop.f32.mrb[0].mxu0
  %v4901 = vadd.f32 0.0, %v4900
  %4902 = vdwg.mxu0
  %4903 = vmatprep.subr.bf16.mxu0 %v4810
  %4904 = vmatpush1.bf16.msra.mxu0 %v4809
  %4905 = vmatprep.subr.bf16.mxu0 %v4812
  %4906 = vmatpush1.bf16.msra.mxu0 %v4811
  %4907 = vmatprep.subr.bf16.mxu0 0
  %4908 = vmatpush1.bf16.msra.mxu0 0
  %4909 = vmatprep.subr.bf16.mxu0 0
  %4910 = vmatpush1.bf16.msra.mxu0 0
  %4911 = vmatprep.subr.bf16.mxu0 0
  %4912 = vmatpush1.bf16.msra.mxu0 0
  %4913 = vmatprep.subr.bf16.mxu0 0
  %4914 = vmatpush1.bf16.msra.mxu0 0
  %4915 = vmatprep.subr.bf16.mxu0 0
  %4916 = vmatpush1.bf16.msra.mxu0 0
  %4917 = vmatprep.subr.bf16.mxu0 0
  %4918 = vmatpush1.bf16.msra.mxu0 0
  %4919 = vmatprep.subr.bf16.mxu0 0
  %4920 = vmatpush1.bf16.msra.mxu0 0
  %4921 = vmatprep.subr.bf16.mxu0 0
  %4922 = vmatpush1.bf16.msra.mxu0 0
  %4923 = vmatprep.subr.bf16.mxu0 0
  %4924 = vmatpush1.bf16.msra.mxu0 0
  %4925 = vmatprep.subr.bf16.mxu0 0
  %4926 = vmatpush1.bf16.msra.mxu0 0
  %4927 = vmatprep.subr.bf16.mxu0 0
  %4928 = vmatpush1.bf16.msra.mxu0 0
  %4929 = vmatprep.subr.bf16.mxu0 0
  %4930 = vmatpush1.bf16.msra.mxu0 0
  %4931 = vmatprep.subr.bf16.mxu0 0
  %4932 = vmatpush1.bf16.msra.mxu0 0
  %4933 = vmatprep.subr.bf16.mxu0 0
  %4934 = vmatpush1.bf16.msra.mxu0 0
  %4935 = vmatprep.mubr.bf16.mxu0 0
  %4936 = vmatmul.mubr.bf16.gmra.mrb[0].mxu0 %v4845
  %v4937 = vpop.f32.mrb[0].mxu0
  %v4938 = vadd.f32 %v4885, %v4937
  %v4939 = vpop.f32.mrb[0].mxu0
  %v4940 = vadd.f32 %v4887, %v4939
  %v4941 = vpop.f32.mrb[0].mxu0
  %v4942 = vadd.f32 %v4889, %v4941
  %v4943 = vpop.f32.mrb[0].mxu0
  %v4944 = vadd.f32 %v4891, %v4943
  %4945 = vmatprep.mubr.bf16.mxu0 0
  %4946 = vmatmul.mubr.bf16.gmra.mrb[0].mxu0 %v4848
  %v4947 = vpop.f32.mrb[0].mxu0
  %v4948 = vadd.f32 %v4895, %v4947
  %v4949 = vpop.f32.mrb[0].mxu0
  %v4950 = vadd.f32 %v4897, %v4949
  %v4951 = vpop.f32.mrb[0].mxu0
  %v4952 = vadd.f32 %v4899, %v4951
  %v4953 = vpop.f32.mrb[0].mxu0
  %v4954 = vadd.f32 %v4901, %v4953
  %4955 = vdwg.mxu0
  %v4956 = vld [vmem:[%s37] sm:$0x3]
  %v4958 = vlaneseq
  %v4959 = vshrl.u32 %v4958, 7
  %v4960 = vsub.s32 0, %v4959
  %v4961 = vrot.slane %v4956, %v4960
  %v4962 = vlaneseq
  %v4963 = vshrl.u32 %v4962, 7
  %v4964 = vsub.s32 1, %v4963
  %v4965 = vrot.slane %v4956, %v4964
  %v4968 = vmul.f32 %v4938, %v4961
  %v4969 = vmul.f32 %v4940, %v4965
  %v4970 = vmul.f32 %v4942, %v4961
  %v4971 = vmul.f32 %v4944, %v4965
  %v4972 = vmul.f32 %v4948, %v4961
  %v4973 = vmul.f32 %v4950, %v4965
  %v4974 = vmul.f32 %v4952, %v4961
  %v4975 = vmul.f32 %v4954, %v4965
  %v4976 = vsel %vm400, %v4969, 0.0
  %v4977 = vadd.f32 %v4968, %v4976
  %4978 = vadd.xlane.f32.xlu0 %v4977
  %v4979 = vpop.xlane.xlu0 %4978
  %v4980 = vsel %vm400, %v4971, 0.0
  %v4981 = vadd.f32 %v4970, %v4980
  %4982 = vadd.xlane.f32.xlu0 %v4981
  %v4983 = vpop.xlane.xlu0 %4982
  %v4984 = vsel %vm400, %v4973, 0.0
  %v4985 = vadd.f32 %v4972, %v4984
  %4986 = vadd.xlane.f32.xlu0 %v4985
  %v4987 = vpop.xlane.xlu0 %4986
  %v4988 = vsel %vm400, %v4975, 0.0
  %v4989 = vadd.f32 %v4974, %v4988
  %4990 = vadd.xlane.f32.xlu0 %v4989
  %v4991 = vpop.xlane.xlu0 %4990
  %v4992 = vmul.f32 %v4979, 0.0078125
  %v4993 = vmul.f32 %v4983, 0.0078125
  %v4994 = vmul.f32 %v4987, 0.0078125
  %v4995 = vmul.f32 %v4991, 0.0078125
  %v4996 = vmul.f32 %v4938, %v4938
  %v4997 = vmul.f32 %v4940, %v4940
  %v4998 = vmul.f32 %v4942, %v4942
  %v4999 = vmul.f32 %v4944, %v4944
  %v5000 = vmul.f32 %v4948, %v4948
  %v5001 = vmul.f32 %v4950, %v4950
  %v5002 = vmul.f32 %v4952, %v4952
  %v5003 = vmul.f32 %v4954, %v4954
  %v5004 = vmul.f32 %v4996, %v4961
  %v5005 = vmul.f32 %v4997, %v4965
  %v5006 = vmul.f32 %v4998, %v4961
  %v5007 = vmul.f32 %v4999, %v4965
  %v5008 = vmul.f32 %v5000, %v4961
  %v5009 = vmul.f32 %v5001, %v4965
  %v5010 = vmul.f32 %v5002, %v4961
  %v5011 = vmul.f32 %v5003, %v4965
  %v5012 = vsel %vm400, %v5005, 0.0
  %v5013 = vadd.f32 %v5004, %v5012
  %5014 = vadd.xlane.f32.xlu0 %v5013
  %v5015 = vpop.xlane.xlu0 %5014
  %v5016 = vsel %vm400, %v5007, 0.0
  %v5017 = vadd.f32 %v5006, %v5016
  %5018 = vadd.xlane.f32.xlu0 %v5017
  %v5019 = vpop.xlane.xlu0 %5018
  %v5020 = vsel %vm400, %v5009, 0.0
  %v5021 = vadd.f32 %v5008, %v5020
  %5022 = vadd.xlane.f32.xlu0 %v5021
  %v5023 = vpop.xlane.xlu0 %5022
  %v5024 = vsel %vm400, %v5011, 0.0
  %v5025 = vadd.f32 %v5010, %v5024
  %5026 = vadd.xlane.f32.xlu0 %v5025
  %v5027 = vpop.xlane.xlu0 %5026
  %v5028 = vmul.f32 %v5015, 0.0078125
  %v5029 = vmul.f32 %v5019, 0.0078125
  %v5030 = vmul.f32 %v5023, 0.0078125
  %v5031 = vmul.f32 %v5027, 0.0078125
  %v5032 = vmul.f32 %v4992, %v4992
  %v5033 = vmul.f32 %v4993, %v4993
  %v5034 = vmul.f32 %v4994, %v4994
  %v5035 = vmul.f32 %v4995, %v4995
  %v5036 = vsub.f32 %v5028, %v5032
  %v5037 = vsub.f32 %v5029, %v5033
  %v5038 = vsub.f32 %v5030, %v5034
  %v5039 = vsub.f32 %v5031, %v5035
  %v5040 = vld [vmem:[%s29] sm:$0xff]
  %v5041 = vld [vmem:[%s29 + $0x8] sm:$0xff]
  %v5042 = vld [vmem:[%s29 + $0x10] sm:$0xff]
  %v5043 = vld [vmem:[%s29 + $0x18] sm:$0xff]
  %v5044 = vadd.f32 %v5036, 1e-05
  %v5045 = vadd.f32 %v5037, 1e-05
  %v5046 = vadd.f32 %v5038, 1e-05
  %v5047 = vadd.f32 %v5039, 1e-05
  %v5048 = vrsqrt.pop %v5044
  %v5049 = vrsqrt.pop %v5045
  %v5050 = vrsqrt.pop %v5046
  %v5051 = vrsqrt.pop %v5047
  %v5052 = vmul.f32 %v5040, %v5048
  %v5053 = vmul.f32 %v5041, %v5049
  %v5054 = vmul.f32 %v5042, %v5050
  %v5055 = vmul.f32 %v5043, %v5051
  %5057 = vset.pattern.permute.xlu0 0
  %5058 = vperm.xlu0 %5057, %v5052
  %v5059 = vpop.permute.xlu0 %5058
  %5062 = vset.pattern.permute.xlu0 0
  %5063 = vperm.xlu0 %5062, %v5053
  %v5064 = vpop.permute.xlu0 %5063
  %5067 = vset.pattern.permute.xlu0 0
  %5068 = vperm.xlu0 %5067, %v5054
  %v5069 = vpop.permute.xlu0 %5068
  %5072 = vset.pattern.permute.xlu0 0
  %5073 = vperm.xlu0 %5072, %v5055
  %v5074 = vpop.permute.xlu0 %5073
  %v5076 = vmul.f32 %v4938, %v5059
  %v5077 = vmul.f32 %v4940, %v5059
  %v5078 = vmul.f32 %v4942, %v5064
  %v5079 = vmul.f32 %v4944, %v5064
  %v5080 = vmul.f32 %v4948, %v5069
  %v5081 = vmul.f32 %v4950, %v5069
  %v5082 = vmul.f32 %v4952, %v5074
  %v5083 = vmul.f32 %v4954, %v5074
  %v5084 = vld [vmem:[%s31] sm:$0xff]
  %v5085 = vld [vmem:[%s31 + $0x8] sm:$0xff]
  %v5086 = vld [vmem:[%s31 + $0x10] sm:$0xff]
  %v5087 = vld [vmem:[%s31 + $0x18] sm:$0xff]
  %v5088 = vmul.f32 %v4992, %v5052
  %v5089 = vmul.f32 %v4993, %v5053
  %v5090 = vmul.f32 %v4994, %v5054
  %v5091 = vmul.f32 %v4995, %v5055
  %v5092 = vsub.f32 %v5084, %v5088
  %v5093 = vsub.f32 %v5085, %v5089
  %v5094 = vsub.f32 %v5086, %v5090
  %v5095 = vsub.f32 %v5087, %v5091
  %5097 = vset.pattern.permute.xlu0 0
  %5098 = vperm.xlu0 %5097, %v5092
  %v5099 = vpop.permute.xlu0 %5098
  %5102 = vset.pattern.permute.xlu0 0
  %5103 = vperm.xlu0 %5102, %v5093
  %v5104 = vpop.permute.xlu0 %5103
  %5107 = vset.pattern.permute.xlu0 0
  %5108 = vperm.xlu0 %5107, %v5094
  %v5109 = vpop.permute.xlu0 %5108
  %5112 = vset.pattern.permute.xlu0 0
  %5113 = vperm.xlu0 %5112, %v5095
  %v5114 = vpop.permute.xlu0 %5113
  %v5116 = vadd.f32 %v5076, %v5099
  %v5117 = vadd.f32 %v5077, %v5099
  %v5118 = vadd.f32 %v5078, %v5104
  %v5119 = vadd.f32 %v5079, %v5104
  %v5120 = vadd.f32 %v5080, %v5109
  %v5121 = vadd.f32 %v5081, %v5109
  %v5122 = vadd.f32 %v5082, %v5114
  %v5123 = vadd.f32 %v5083, %v5114
  %5132 = vrot.lane.b32.xlu0 %v4510, 117
  %v5133 = vpop.permute.xlu0 %5132
  %5134 = vrot.lane.b32.xlu0 %v4512, 117
  %v5135 = vpop.permute.xlu0 %5134
  %5136 = vrot.lane.b32.xlu0 %v4516, 117
  %v5137 = vpop.permute.xlu0 %5136
  %5138 = vrot.lane.b32.xlu0 %v4518, 117
  %v5139 = vpop.permute.xlu0 %5138
  %5140 = vrot.lane.b32.xlu0 %v4522, 117
  %v5141 = vpop.permute.xlu0 %5140
  %5142 = vrot.lane.b32.xlu0 %v4524, 117
  %v5143 = vpop.permute.xlu0 %5142
  %5144 = vrot.lane.b32.xlu0 %v4528, 117
  %v5145 = vpop.permute.xlu0 %5144
  %5146 = vrot.lane.b32.xlu0 %v4530, 117
  %v5147 = vpop.permute.xlu0 %5146
  %v5148 = vsel %vm4641, %v5133, %v5135
  %v5149 = vsel %vm4641, %v5137, %v5139
  %v5150 = vsel %vm4641, %v5141, %v5143
  %v5151 = vsel %vm4641, %v5145, %v5147
  %v5160 = vadd.f32 %v5116, %v5148
  %v5161 = vadd.f32 %v5117, %v5135
  %v5162 = vadd.f32 %v5118, %v5149
  %v5163 = vadd.f32 %v5119, %v5139
  %v5164 = vadd.f32 %v5120, %v5150
  %v5165 = vadd.f32 %v5121, %v5143
  %v5166 = vadd.f32 %v5122, %v5151
  %v5167 = vadd.f32 %v5123, %v5147
  %v5168 = vmax.f32 %v5160, 0.0
  %v5169 = vmax.f32 %v5161, 0.0
  %v5170 = vmax.f32 %v5162, 0.0
  %v5171 = vmax.f32 %v5163, 0.0
  %v5172 = vmax.f32 %v5164, 0.0
  %v5173 = vmax.f32 %v5165, 0.0
  %v5174 = vmax.f32 %v5166, 0.0
  %v5175 = vmax.f32 %v5167, 0.0
  %v5176 = vmul.f32 %v5168, %v4961
  %v5177 = vmul.f32 %v5169, %v4965
  %v5178 = vmul.f32 %v5170, %v4961
  %v5179 = vmul.f32 %v5171, %v4965
  %v5180 = vmul.f32 %v5172, %v4961
  %v5181 = vmul.f32 %v5173, %v4965
  %v5182 = vmul.f32 %v5174, %v4961
  %v5183 = vmul.f32 %v5175, %v4965
  %5192 = vrot.lane.b32.xlu0 %v5176, 11
  %v5193 = vpop.permute.xlu0 %5192
  %5194 = vrot.lane.b32.xlu0 %v5177, 11
  %v5195 = vpop.permute.xlu0 %5194
  %5196 = vrot.lane.b32.xlu0 %v5178, 11
  %v5197 = vpop.permute.xlu0 %5196
  %5198 = vrot.lane.b32.xlu0 %v5179, 11
  %v5199 = vpop.permute.xlu0 %5198
  %5200 = vrot.lane.b32.xlu0 %v5180, 11
  %v5201 = vpop.permute.xlu0 %5200
  %5202 = vrot.lane.b32.xlu0 %v5181, 11
  %v5203 = vpop.permute.xlu0 %5202
  %5204 = vrot.lane.b32.xlu0 %v5182, 11
  %v5205 = vpop.permute.xlu0 %5204
  %5206 = vrot.lane.b32.xlu0 %v5183, 11
  %v5207 = vpop.permute.xlu0 %5206
  %vm5208 = vcmask 89088
  %v5209 = vsel %vm5208, %v5193, %v5195
  %v5210 = vsel %vm5208, %v5197, %v5199
  %v5211 = vsel %vm5208, %v5201, %v5203
  %v5212 = vsel %vm5208, %v5205, %v5207
  %v5221 = vsel %vm5208, 0.0, %v5193
  %v5222 = vsel %vm5208, 0.0, %v5197
  %v5223 = vsel %vm5208, 0.0, %v5201
  %v5224 = vsel %vm5208, 0.0, %v5205
  %vm5225 = vcmask 678912
  %v5226 = vsel %vm5225, %v5209, 0.0
  %v5227 = vsel %vm5225, %v5210, 0.0
  %v5228 = vsel %vm5225, %v5211, 0.0
  %v5229 = vsel %vm5225, %v5212, 0.0
  %5238 = vrot.lane.b32.xlu0 %v5221, 127
  %v5239 = vpop.permute.xlu0 %5238
  %5240 = vrot.lane.b32.xlu0 %v5226, 127
  %v5241 = vpop.permute.xlu0 %5240
  %5242 = vrot.lane.b32.xlu0 %v5222, 127
  %v5243 = vpop.permute.xlu0 %5242
  %5244 = vrot.lane.b32.xlu0 %v5227, 127
  %v5245 = vpop.permute.xlu0 %5244
  %5246 = vrot.lane.b32.xlu0 %v5223, 127
  %v5247 = vpop.permute.xlu0 %5246
  %5248 = vrot.lane.b32.xlu0 %v5228, 127
  %v5249 = vpop.permute.xlu0 %5248
  %5250 = vrot.lane.b32.xlu0 %v5224, 127
  %v5251 = vpop.permute.xlu0 %5250
  %5252 = vrot.lane.b32.xlu0 %v5229, 127
  %v5253 = vpop.permute.xlu0 %5252
  %v5254 = vsel %vm183, %v5239, %v5241
  %v5255 = vsel %vm183, %v5243, %v5245
  %v5256 = vsel %vm183, %v5247, %v5249
  %v5257 = vsel %vm183, %v5251, %v5253
  %5266 = vrot.lane.b32.xlu0 %v5221, 126
  %v5267 = vpop.permute.xlu0 %5266
  %5268 = vrot.lane.b32.xlu0 %v5226, 126
  %v5269 = vpop.permute.xlu0 %5268
  %5270 = vrot.lane.b32.xlu0 %v5222, 126
  %v5271 = vpop.permute.xlu0 %5270
  %5272 = vrot.lane.b32.xlu0 %v5227, 126
  %v5273 = vpop.permute.xlu0 %5272
  %5274 = vrot.lane.b32.xlu0 %v5223, 126
  %v5275 = vpop.permute.xlu0 %5274
  %5276 = vrot.lane.b32.xlu0 %v5228, 126
  %v5277 = vpop.permute.xlu0 %5276
  %5278 = vrot.lane.b32.xlu0 %v5224, 126
  %v5279 = vpop.permute.xlu0 %5278
  %5280 = vrot.lane.b32.xlu0 %v5229, 126
  %v5281 = vpop.permute.xlu0 %5280
  %v5282 = vsel %vm207, %v5267, %v5269
  %v5283 = vsel %vm207, %v5271, %v5273
  %v5284 = vsel %vm207, %v5275, %v5277
  %v5285 = vsel %vm207, %v5279, %v5281
  %5294 = vrot.lane.b32.xlu0 %v5221, 118
  %v5295 = vpop.permute.xlu0 %5294
  %5296 = vrot.lane.b32.xlu0 %v5226, 118
  %v5297 = vpop.permute.xlu0 %5296
  %5298 = vrot.lane.b32.xlu0 %v5222, 118
  %v5299 = vpop.permute.xlu0 %5298
  %5300 = vrot.lane.b32.xlu0 %v5227, 118
  %v5301 = vpop.permute.xlu0 %5300
  %5302 = vrot.lane.b32.xlu0 %v5223, 118
  %v5303 = vpop.permute.xlu0 %5302
  %5304 = vrot.lane.b32.xlu0 %v5228, 118
  %v5305 = vpop.permute.xlu0 %5304
  %5306 = vrot.lane.b32.xlu0 %v5224, 118
  %v5307 = vpop.permute.xlu0 %5306
  %5308 = vrot.lane.b32.xlu0 %v5229, 118
  %v5309 = vpop.permute.xlu0 %5308
  %v5310 = vsel %vm4612, %v5295, %v5297
  %v5311 = vsel %vm4612, %v5299, %v5301
  %v5312 = vsel %vm4612, %v5303, %v5305
  %v5313 = vsel %vm4612, %v5307, %v5309
  %5322 = vrot.lane.b32.xlu0 %v5221, 117
  %v5323 = vpop.permute.xlu0 %5322
  %5324 = vrot.lane.b32.xlu0 %v5226, 117
  %v5325 = vpop.permute.xlu0 %5324
  %5326 = vrot.lane.b32.xlu0 %v5222, 117
  %v5327 = vpop.permute.xlu0 %5326
  %5328 = vrot.lane.b32.xlu0 %v5227, 117
  %v5329 = vpop.permute.xlu0 %5328
  %5330 = vrot.lane.b32.xlu0 %v5223, 117
  %v5331 = vpop.permute.xlu0 %5330
  %5332 = vrot.lane.b32.xlu0 %v5228, 117
  %v5333 = vpop.permute.xlu0 %5332
  %5334 = vrot.lane.b32.xlu0 %v5224, 117
  %v5335 = vpop.permute.xlu0 %5334
  %5336 = vrot.lane.b32.xlu0 %v5229, 117
  %v5337 = vpop.permute.xlu0 %5336
  %v5338 = vsel %vm4641, %v5323, %v5325
  %v5339 = vsel %vm4641, %v5327, %v5329
  %v5340 = vsel %vm4641, %v5331, %v5333
  %v5341 = vsel %vm4641, %v5335, %v5337
  %5350 = vrot.lane.b32.xlu0 %v5221, 116
  %v5351 = vpop.permute.xlu0 %5350
  %5352 = vrot.lane.b32.xlu0 %v5226, 116
  %v5353 = vpop.permute.xlu0 %5352
  %5354 = vrot.lane.b32.xlu0 %v5222, 116
  %v5355 = vpop.permute.xlu0 %5354
  %5356 = vrot.lane.b32.xlu0 %v5227, 116
  %v5357 = vpop.permute.xlu0 %5356
  %5358 = vrot.lane.b32.xlu0 %v5223, 116
  %v5359 = vpop.permute.xlu0 %5358
  %5360 = vrot.lane.b32.xlu0 %v5228, 116
  %v5361 = vpop.permute.xlu0 %5360
  %5362 = vrot.lane.b32.xlu0 %v5224, 116
  %v5363 = vpop.permute.xlu0 %5362
  %5364 = vrot.lane.b32.xlu0 %v5229, 116
  %v5365 = vpop.permute.xlu0 %5364
  %v5366 = vsel %vm4670, %v5351, %v5353
  %v5367 = vsel %vm4670, %v5355, %v5357
  %v5368 = vsel %vm4670, %v5359, %v5361
  %v5369 = vsel %vm4670, %v5363, %v5365
  %5378 = vrot.lane.b32.xlu0 %v5221, 108
  %v5379 = vpop.permute.xlu0 %5378
  %5380 = vrot.lane.b32.xlu0 %v5226, 108
  %v5381 = vpop.permute.xlu0 %5380
  %5382 = vrot.lane.b32.xlu0 %v5222, 108
  %v5383 = vpop.permute.xlu0 %5382
  %5384 = vrot.lane.b32.xlu0 %v5227, 108
  %v5385 = vpop.permute.xlu0 %5384
  %5386 = vrot.lane.b32.xlu0 %v5223, 108
  %v5387 = vpop.permute.xlu0 %5386
  %5388 = vrot.lane.b32.xlu0 %v5228, 108
  %v5389 = vpop.permute.xlu0 %5388
  %5390 = vrot.lane.b32.xlu0 %v5224, 108
  %v5391 = vpop.permute.xlu0 %5390
  %5392 = vrot.lane.b32.xlu0 %v5229, 108
  %v5393 = vpop.permute.xlu0 %5392
  %v5394 = vsel %vm279, %v5379, %v5381
  %v5395 = vsel %vm279, %v5383, %v5385
  %v5396 = vsel %vm279, %v5387, %v5389
  %v5397 = vsel %vm279, %v5391, %v5393
  %5406 = vrot.lane.b32.xlu0 %v5221, 107
  %v5407 = vpop.permute.xlu0 %5406
  %5408 = vrot.lane.b32.xlu0 %v5226, 107
  %v5409 = vpop.permute.xlu0 %5408
  %5410 = vrot.lane.b32.xlu0 %v5222, 107
  %v5411 = vpop.permute.xlu0 %5410
  %5412 = vrot.lane.b32.xlu0 %v5227, 107
  %v5413 = vpop.permute.xlu0 %5412
  %5414 = vrot.lane.b32.xlu0 %v5223, 107
  %v5415 = vpop.permute.xlu0 %5414
  %5416 = vrot.lane.b32.xlu0 %v5228, 107
  %v5417 = vpop.permute.xlu0 %5416
  %5418 = vrot.lane.b32.xlu0 %v5224, 107
  %v5419 = vpop.permute.xlu0 %5418
  %5420 = vrot.lane.b32.xlu0 %v5229, 107
  %v5421 = vpop.permute.xlu0 %5420
  %v5422 = vsel %vm4727, %v5407, %v5409
  %v5423 = vsel %vm4727, %v5411, %v5413
  %v5424 = vsel %vm4727, %v5415, %v5417
  %v5425 = vsel %vm4727, %v5419, %v5421
  %5434 = vrot.lane.b32.xlu0 %v5221, 106
  %v5435 = vpop.permute.xlu0 %5434
  %5436 = vrot.lane.b32.xlu0 %v5226, 106
  %v5437 = vpop.permute.xlu0 %5436
  %5438 = vrot.lane.b32.xlu0 %v5222, 106
  %v5439 = vpop.permute.xlu0 %5438
  %5440 = vrot.lane.b32.xlu0 %v5227, 106
  %v5441 = vpop.permute.xlu0 %5440
  %5442 = vrot.lane.b32.xlu0 %v5223, 106
  %v5443 = vpop.permute.xlu0 %5442
  %5444 = vrot.lane.b32.xlu0 %v5228, 106
  %v5445 = vpop.permute.xlu0 %5444
  %5446 = vrot.lane.b32.xlu0 %v5224, 106
  %v5447 = vpop.permute.xlu0 %5446
  %5448 = vrot.lane.b32.xlu0 %v5229, 106
  %v5449 = vpop.permute.xlu0 %5448
  %v5450 = vsel %vm4756, %v5435, %v5437
  %v5451 = vsel %vm4756, %v5439, %v5441
  %v5452 = vsel %vm4756, %v5443, %v5445
  %v5453 = vsel %vm4756, %v5447, %v5449
  %v5462 = vld [vmem:[%s51] sm:$0xff]
  %v5463 = vld [vmem:[%s51 + $0x8] sm:$0xf]
  %v5464 = vld [vmem:[%s51 + $0xc] sm:$0xff]
  %v5465 = vld [vmem:[%s51 + $0x14] sm:$0xf]
  %v5466 = vld [vmem:[%s51 + $0x18] sm:$0xff]
  %v5467 = vld [vmem:[%s51 + $0x20] sm:$0xf]
  %v5468 = vld [vmem:[%s51 + $0x24] sm:$0xff]
  %v5469 = vld [vmem:[%s51 + $0x2c] sm:$0xf]
  %v5470 = vld [vmem:[%s51 + $0x30] sm:$0xff]
  %v5471 = vld [vmem:[%s51 + $0x38] sm:$0xf]
  %v5472 = vld [vmem:[%s51 + $0x3c] sm:$0xff]
  %v5473 = vld [vmem:[%s51 + $0x44] sm:$0xf]
  %v5474 = vld [vmem:[%s51 + $0x48] sm:$0xff]
  %v5475 = vld [vmem:[%s51 + $0x50] sm:$0xf]
  %v5476 = vld [vmem:[%s51 + $0x54] sm:$0xff]
  %v5477 = vld [vmem:[%s51 + $0x5c] sm:$0xf]
  %v5478 = vpack.c.bf16 %v5222, %v5221
  %v5479 = vpack.c.bf16 %v5227, %v5226
  %v5480 = vpack.c.bf16 %v5224, %v5223
  %v5481 = vpack.c.bf16 %v5229, %v5228
  %v5482 = vpack.c.bf16 %v5255, %v5254
  %v5483 = vpack.c.bf16 %v5245, %v5241
  %v5484 = vpack.c.bf16 %v5257, %v5256
  %v5485 = vpack.c.bf16 %v5253, %v5249
  %v5486 = vpack.c.bf16 %v5283, %v5282
  %v5487 = vpack.c.bf16 %v5273, %v5269
  %v5488 = vpack.c.bf16 %v5285, %v5284
  %v5489 = vpack.c.bf16 %v5281, %v5277
  %v5490 = vpack.c.bf16 %v5311, %v5310
  %v5491 = vpack.c.bf16 %v5301, %v5297
  %v5492 = vpack.c.bf16 %v5313, %v5312
  %v5493 = vpack.c.bf16 %v5309, %v5305
  %v5494 = vpack.c.bf16 %v5339, %v5338
  %v5495 = vpack.c.bf16 %v5329, %v5325
  %v5496 = vpack.c.bf16 %v5341, %v5340
  %v5497 = vpack.c.bf16 %v5337, %v5333
  %v5498 = vpack.c.bf16 %v5367, %v5366
  %v5499 = vpack.c.bf16 %v5357, %v5353
  %v5500 = vpack.c.bf16 %v5369, %v5368
  %v5501 = vpack.c.bf16 %v5365, %v5361
  %v5502 = vpack.c.bf16 %v5395, %v5394
  %v5503 = vpack.c.bf16 %v5385, %v5381
  %v5504 = vpack.c.bf16 %v5397, %v5396
  %v5505 = vpack.c.bf16 %v5393, %v5389
  %v5506 = vpack.c.bf16 %v5423, %v5422
  %v5507 = vpack.c.bf16 %v5413, %v5409
  %v5508 = vpack.c.bf16 %v5425, %v5424
  %v5509 = vpack.c.bf16 %v5421, %v5417
  %v5510 = vpack.c.bf16 %v5451, %v5450
  %v5511 = vpack.c.bf16 %v5441, %v5437
  %v5512 = vpack.c.bf16 %v5453, %v5452
  %v5513 = vpack.c.bf16 %v5449, %v5445
  %v5530 = vunpack.c.l.b16 %v5462
  %v5531 = vunpack.c.h.b16 %v5462
  %v5532 = vunpack.c.l.b16 %v5463
  %v5533 = vunpack.c.l.b16 %v5464
  %v5534 = vunpack.c.h.b16 %v5464
  %v5535 = vunpack.c.l.b16 %v5465
  %v5536 = vunpack.c.l.b16 %v5466
  %v5537 = vunpack.c.h.b16 %v5466
  %v5538 = vunpack.c.l.b16 %v5467
  %v5539 = vunpack.c.l.b16 %v5468
  %v5540 = vunpack.c.h.b16 %v5468
  %v5541 = vunpack.c.l.b16 %v5469
  %v5542 = vunpack.c.l.b16 %v5470
  %v5543 = vunpack.c.h.b16 %v5470
  %v5544 = vunpack.c.l.b16 %v5471
  %v5545 = vunpack.c.l.b16 %v5472
  %v5546 = vunpack.c.h.b16 %v5472
  %v5547 = vunpack.c.l.b16 %v5473
  %v5548 = vunpack.c.l.b16 %v5474
  %v5549 = vunpack.c.h.b16 %v5474
  %v5550 = vunpack.c.l.b16 %v5475
  %v5551 = vunpack.c.l.b16 %v5476
  %v5552 = vunpack.c.h.b16 %v5476
  %v5553 = vunpack.c.l.b16 %v5477
  %v5554 = vpack.c.b16 %v5533, %v5530
  %v5555 = vpack.c.b16 %v5534, %v5531
  %v5556 = vpack.c.b16 %v5535, %v5532
  %v5557 = vpack.c.b16 %v5539, %v5536
  %v5558 = vpack.c.b16 %v5540, %v5537
  %v5559 = vpack.c.b16 %v5541, %v5538
  %v5560 = vpack.c.b16 %v5545, %v5542
  %v5561 = vpack.c.b16 %v5546, %v5543
  %v5562 = vpack.c.b16 %v5547, %v5544
  %v5563 = vpack.c.b16 %v5551, %v5548
  %v5564 = vpack.c.b16 %v5552, %v5549
  %v5565 = vpack.c.b16 %v5553, %v5550
  %v5575 = vsel %vm4843, %v5556, 0
  %v5578 = vsel %vm4843, %v5559, 0
  %v5581 = vsel %vm4843, %v5562, 0
  %v5584 = vsel %vm4843, %v5565, 0
  %5586 = vmatprep.subr.bf16.mxu0 %v5479
  %5587 = vmatpush1.bf16.msra.mxu0 %v5478
  %5588 = vmatprep.subr.bf16.mxu0 %v5481
  %5589 = vmatpush1.bf16.msra.mxu0 %v5480
  %5590 = vmatprep.subr.bf16.mxu0 %v5483
  %5591 = vmatpush1.bf16.msra.mxu0 %v5482
  %5592 = vmatprep.subr.bf16.mxu0 %v5485
  %5593 = vmatpush1.bf16.msra.mxu0 %v5484
  %5594 = vmatprep.subr.bf16.mxu0 %v5487
  %5595 = vmatpush1.bf16.msra.mxu0 %v5486
  %5596 = vmatprep.subr.bf16.mxu0 %v5489
  %5597 = vmatpush1.bf16.msra.mxu0 %v5488
  %5598 = vmatprep.subr.bf16.mxu0 %v5491
  %5599 = vmatpush1.bf16.msra.mxu0 %v5490
  %5600 = vmatprep.subr.bf16.mxu0 %v5493
  %5601 = vmatpush1.bf16.msra.mxu0 %v5492
  %5602 = vmatprep.subr.bf16.mxu0 %v5495
  %5603 = vmatpush1.bf16.msra.mxu0 %v5494
  %5604 = vmatprep.subr.bf16.mxu0 %v5497
  %5605 = vmatpush1.bf16.msra.mxu0 %v5496
  %5606 = vmatprep.subr.bf16.mxu0 %v5499
  %5607 = vmatpush1.bf16.msra.mxu0 %v5498
  %5608 = vmatprep.subr.bf16.mxu0 %v5501
  %5609 = vmatpush1.bf16.msra.mxu0 %v5500
  %5610 = vmatprep.subr.bf16.mxu0 %v5503
  %5611 = vmatpush1.bf16.msra.mxu0 %v5502
  %5612 = vmatprep.subr.bf16.mxu0 %v5505
  %5613 = vmatpush1.bf16.msra.mxu0 %v5504
  %5614 = vmatprep.subr.bf16.mxu0 %v5507
  %5615 = vmatpush1.bf16.msra.mxu0 %v5506
  %5616 = vmatprep.subr.bf16.mxu0 %v5509
  %5617 = vmatpush1.bf16.msra.mxu0 %v5508
  %5618 = vmatprep.mubr.bf16.mxu0 %v5555
  %5619 = vmatmul.mubr.bf16.gmra.mrb[0].mxu0 %v5554
  %v5620 = vpop.f32.mrb[0].mxu0
  %v5621 = vadd.f32 0.0, %v5620
  %v5622 = vpop.f32.mrb[0].mxu0
  %v5623 = vadd.f32 0.0, %v5622
  %v5624 = vpop.f32.mrb[0].mxu0
  %v5625 = vadd.f32 0.0, %v5624
  %v5626 = vpop.f32.mrb[0].mxu0
  %v5627 = vadd.f32 0.0, %v5626
  %5628 = vmatprep.mubr.bf16.mxu0 %v5558
  %5629 = vmatmul.mubr.bf16.gmra.mrb[0].mxu0 %v5557
  %v5630 = vpop.f32.mrb[0].mxu0
  %v5631 = vadd.f32 0.0, %v5630
  %v5632 = vpop.f32.mrb[0].mxu0
  %v5633 = vadd.f32 0.0, %v5632
  %v5634 = vpop.f32.mrb[0].mxu0
  %v5635 = vadd.f32 0.0, %v5634
  %v5636 = vpop.f32.mrb[0].mxu0
  %v5637 = vadd.f32 0.0, %v5636
  %5638 = vmatprep.mubr.bf16.mxu0 %v5561
  %5639 = vmatmul.mubr.bf16.gmra.mrb[0].mxu0 %v5560
  %v5640 = vpop.f32.mrb[0].mxu0
  %v5641 = vadd.f32 0.0, %v5640
  %v5642 = vpop.f32.mrb[0].mxu0
  %v5643 = vadd.f32 0.0, %v5642
  %v5644 = vpop.f32.mrb[0].mxu0
  %v5645 = vadd.f32 0.0, %v5644
  %v5646 = vpop.f32.mrb[0].mxu0
  %v5647 = vadd.f32 0.0, %v5646
  %5648 = vmatprep.mubr.bf16.mxu0 %v5564
  %5649 = vmatmul.mubr.bf16.gmra.mrb[0].mxu0 %v5563
  %v5650 = vpop.f32.mrb[0].mxu0
  %v5651 = vadd.f32 0.0, %v5650
  %v5652 = vpop.f32.mrb[0].mxu0
  %v5653 = vadd.f32 0.0, %v5652
  %v5654 = vpop.f32.mrb[0].mxu0
  %v5655 = vadd.f32 0.0, %v5654
  %v5656 = vpop.f32.mrb[0].mxu0
  %v5657 = vadd.f32 0.0, %v5656
  %5658 = vdwg.mxu0
  %5659 = vmatprep.subr.bf16.mxu0 %v5511
  %5660 = vmatpush1.bf16.msra.mxu0 %v5510
  %5661 = vmatprep.subr.bf16.mxu0 %v5513
  %5662 = vmatpush1.bf16.msra.mxu0 %v5512
  %5663 = vmatprep.subr.bf16.mxu0 0
  %5664 = vmatpush1.bf16.msra.mxu0 0
  %5665 = vmatprep.subr.bf16.mxu0 0
  %5666 = vmatpush1.bf16.msra.mxu0 0
  %5667 = vmatprep.subr.bf16.mxu0 0
  %5668 = vmatpush1.bf16.msra.mxu0 0
  %5669 = vmatprep.subr.bf16.mxu0 0
  %5670 = vmatpush1.bf16.msra.mxu0 0
  %5671 = vmatprep.subr.bf16.mxu0 0
  %5672 = vmatpush1.bf16.msra.mxu0 0
  %5673 = vmatprep.subr.bf16.mxu0 0
  %5674 = vmatpush1.bf16.msra.mxu0 0
  %5675 = vmatprep.subr.bf16.mxu0 0
  %5676 = vmatpush1.bf16.msra.mxu0 0
  %5677 = vmatprep.subr.bf16.mxu0 0
  %5678 = vmatpush1.bf16.msra.mxu0 0
  %5679 = vmatprep.subr.bf16.mxu0 0
  %5680 = vmatpush1.bf16.msra.mxu0 0
  %5681 = vmatprep.subr.bf16.mxu0 0
  %5682 = vmatpush1.bf16.msra.mxu0 0
  %5683 = vmatprep.subr.bf16.mxu0 0
  %5684 = vmatpush1.bf16.msra.mxu0 0
  %5685 = vmatprep.subr.bf16.mxu0 0
  %5686 = vmatpush1.bf16.msra.mxu0 0
  %5687 = vmatprep.subr.bf16.mxu0 0
  %5688 = vmatpush1.bf16.msra.mxu0 0
  %5689 = vmatprep.subr.bf16.mxu0 0
  %5690 = vmatpush1.bf16.msra.mxu0 0
  %5691 = vmatprep.mubr.bf16.mxu0 0
  %5692 = vmatmul.mubr.bf16.gmra.mrb[0].mxu0 %v5575
  %v5693 = vpop.f32.mrb[0].mxu0
  %v5694 = vadd.f32 %v5621, %v5693
  %v5695 = vpop.f32.mrb[0].mxu0
  %v5696 = vadd.f32 %v5623, %v5695
  %v5697 = vpop.f32.mrb[0].mxu0
  %v5698 = vadd.f32 %v5625, %v5697
  %v5699 = vpop.f32.mrb[0].mxu0
  %v5700 = vadd.f32 %v5627, %v5699
  %5701 = vmatprep.mubr.bf16.mxu0 0
  %5702 = vmatmul.mubr.bf16.gmra.mrb[0].mxu0 %v5578
  %v5703 = vpop.f32.mrb[0].mxu0
  %v5704 = vadd.f32 %v5631, %v5703
  %v5705 = vpop.f32.mrb[0].mxu0
  %v5706 = vadd.f32 %v5633, %v5705
  %v5707 = vpop.f32.mrb[0].mxu0
  %v5708 = vadd.f32 %v5635, %v5707
  %v5709 = vpop.f32.mrb[0].mxu0
  %v5710 = vadd.f32 %v5637, %v5709
  %5711 = vmatprep.mubr.bf16.mxu0 0
  %5712 = vmatmul.mubr.bf16.gmra.mrb[0].mxu0 %v5581
  %v5713 = vpop.f32.mrb[0].mxu0
  %v5714 = vadd.f32 %v5641, %v5713
  %v5715 = vpop.f32.mrb[0].mxu0
  %v5716 = vadd.f32 %v5643, %v5715
  %v5717 = vpop.f32.mrb[0].mxu0
  %v5718 = vadd.f32 %v5645, %v5717
  %v5719 = vpop.f32.mrb[0].mxu0
  %v5720 = vadd.f32 %v5647, %v5719
  %5721 = vmatprep.mubr.bf16.mxu0 0
  %5722 = vmatmul.mubr.bf16.gmra.mrb[0].mxu0 %v5584
  %v5723 = vpop.f32.mrb[0].mxu0
  %v5724 = vadd.f32 %v5651, %v5723
  %v5725 = vpop.f32.mrb[0].mxu0
  %v5726 = vadd.f32 %v5653, %v5725
  %v5727 = vpop.f32.mrb[0].mxu0
  %v5728 = vadd.f32 %v5655, %v5727
  %v5729 = vpop.f32.mrb[0].mxu0
  %v5730 = vadd.f32 %v5657, %v5729
  %5731 = vdwg.mxu0
  %v5732 = vld [vmem:[%s59] sm:$0x3]
  %v5734 = vlaneseq
  %v5735 = vshrl.u32 %v5734, 7
  %v5736 = vsub.s32 0, %v5735
  %v5737 = vrot.slane %v5732, %v5736
  %v5738 = vlaneseq
  %v5739 = vshrl.u32 %v5738, 7
  %v5740 = vsub.s32 1, %v5739
  %v5741 = vrot.slane %v5732, %v5740
  %v5744 = vmul.f32 %v5694, %v5737
  %v5745 = vmul.f32 %v5696, %v5741
  %v5746 = vmul.f32 %v5698, %v5737
  %v5747 = vmul.f32 %v5700, %v5741
  %v5748 = vmul.f32 %v5704, %v5737
  %v5749 = vmul.f32 %v5706, %v5741
  %v5750 = vmul.f32 %v5708, %v5737
  %v5751 = vmul.f32 %v5710, %v5741
  %v5752 = vmul.f32 %v5714, %v5737
  %v5753 = vmul.f32 %v5716, %v5741
  %v5754 = vmul.f32 %v5718, %v5737
  %v5755 = vmul.f32 %v5720, %v5741
  %v5756 = vmul.f32 %v5724, %v5737
  %v5757 = vmul.f32 %v5726, %v5741
  %v5758 = vmul.f32 %v5728, %v5737
  %v5759 = vmul.f32 %v5730, %v5741
  %v5760 = vsel %vm400, %v5745, 0.0
  %v5761 = vadd.f32 %v5744, %v5760
  %5762 = vadd.xlane.f32.xlu0 %v5761
  %v5763 = vpop.xlane.xlu0 %5762
  %v5764 = vsel %vm400, %v5747, 0.0
  %v5765 = vadd.f32 %v5746, %v5764
  %5766 = vadd.xlane.f32.xlu0 %v5765
  %v5767 = vpop.xlane.xlu0 %5766
  %v5768 = vsel %vm400, %v5749, 0.0
  %v5769 = vadd.f32 %v5748, %v5768
  %5770 = vadd.xlane.f32.xlu0 %v5769
  %v5771 = vpop.xlane.xlu0 %5770
  %v5772 = vsel %vm400, %v5751, 0.0
  %v5773 = vadd.f32 %v5750, %v5772
  %5774 = vadd.xlane.f32.xlu0 %v5773
  %v5775 = vpop.xlane.xlu0 %5774
  %v5776 = vsel %vm400, %v5753, 0.0
  %v5777 = vadd.f32 %v5752, %v5776
  %5778 = vadd.xlane.f32.xlu0 %v5777
  %v5779 = vpop.xlane.xlu0 %5778
  %v5780 = vsel %vm400, %v5755, 0.0
  %v5781 = vadd.f32 %v5754, %v5780
  %5782 = vadd.xlane.f32.xlu0 %v5781
  %v5783 = vpop.xlane.xlu0 %5782
  %v5784 = vsel %vm400, %v5757, 0.0
  %v5785 = vadd.f32 %v5756, %v5784
  %5786 = vadd.xlane.f32.xlu0 %v5785
  %v5787 = vpop.xlane.xlu0 %5786
  %v5788 = vsel %vm400, %v5759, 0.0
  %v5789 = vadd.f32 %v5758, %v5788
  %5790 = vadd.xlane.f32.xlu0 %v5789
  %v5791 = vpop.xlane.xlu0 %5790
  %v5792 = vmul.f32 %v5763, 0.03125
  %v5793 = vmul.f32 %v5767, 0.03125
  %v5794 = vmul.f32 %v5771, 0.03125
  %v5795 = vmul.f32 %v5775, 0.03125
  %v5796 = vmul.f32 %v5779, 0.03125
  %v5797 = vmul.f32 %v5783, 0.03125
  %v5798 = vmul.f32 %v5787, 0.03125
  %v5799 = vmul.f32 %v5791, 0.03125
  %v5800 = vmul.f32 %v5694, %v5694
  %v5801 = vmul.f32 %v5696, %v5696
  %v5802 = vmul.f32 %v5698, %v5698
  %v5803 = vmul.f32 %v5700, %v5700
  %v5804 = vmul.f32 %v5704, %v5704
  %v5805 = vmul.f32 %v5706, %v5706
  %v5806 = vmul.f32 %v5708, %v5708
  %v5807 = vmul.f32 %v5710, %v5710
  %v5808 = vmul.f32 %v5714, %v5714
  %v5809 = vmul.f32 %v5716, %v5716
  %v5810 = vmul.f32 %v5718, %v5718
  %v5811 = vmul.f32 %v5720, %v5720
  %v5812 = vmul.f32 %v5724, %v5724
  %v5813 = vmul.f32 %v5726, %v5726
  %v5814 = vmul.f32 %v5728, %v5728
  %v5815 = vmul.f32 %v5730, %v5730
  %v5816 = vmul.f32 %v5800, %v5737
  %v5817 = vmul.f32 %v5801, %v5741
  %v5818 = vmul.f32 %v5802, %v5737
  %v5819 = vmul.f32 %v5803, %v5741
  %v5820 = vmul.f32 %v5804, %v5737
  %v5821 = vmul.f32 %v5805, %v5741
  %v5822 = vmul.f32 %v5806, %v5737
  %v5823 = vmul.f32 %v5807, %v5741
  %v5824 = vmul.f32 %v5808, %v5737
  %v5825 = vmul.f32 %v5809, %v5741
  %v5826 = vmul.f32 %v5810, %v5737
  %v5827 = vmul.f32 %v5811, %v5741
  %v5828 = vmul.f32 %v5812, %v5737
  %v5829 = vmul.f32 %v5813, %v5741
  %v5830 = vmul.f32 %v5814, %v5737
  %v5831 = vmul.f32 %v5815, %v5741
  %v5832 = vsel %vm400, %v5817, 0.0
  %v5833 = vadd.f32 %v5816, %v5832
  %5834 = vadd.xlane.f32.xlu0 %v5833
  %v5835 = vpop.xlane.xlu0 %5834
  %v5836 = vsel %vm400, %v5819, 0.0
  %v5837 = vadd.f32 %v5818, %v5836
  %5838 = vadd.xlane.f32.xlu0 %v5837
  %v5839 = vpop.xlane.xlu0 %5838
  %v5840 = vsel %vm400, %v5821, 0.0
  %v5841 = vadd.f32 %v5820, %v5840
  %5842 = vadd.xlane.f32.xlu0 %v5841
  %v5843 = vpop.xlane.xlu0 %5842
  %v5844 = vsel %vm400, %v5823, 0.0
  %v5845 = vadd.f32 %v5822, %v5844
  %5846 = vadd.xlane.f32.xlu0 %v5845
  %v5847 = vpop.xlane.xlu0 %5846
  %v5848 = vsel %vm400, %v5825, 0.0
  %v5849 = vadd.f32 %v5824, %v5848
  %5850 = vadd.xlane.f32.xlu0 %v5849
  %v5851 = vpop.xlane.xlu0 %5850
  %v5852 = vsel %vm400, %v5827, 0.0
  %v5853 = vadd.f32 %v5826, %v5852
  %5854 = vadd.xlane.f32.xlu0 %v5853
  %v5855 = vpop.xlane.xlu0 %5854
  %v5856 = vsel %vm400, %v5829, 0.0
  %v5857 = vadd.f32 %v5828, %v5856
  %5858 = vadd.xlane.f32.xlu0 %v5857
  %v5859 = vpop.xlane.xlu0 %5858
  %v5860 = vsel %vm400, %v5831, 0.0
  %v5861 = vadd.f32 %v5830, %v5860
  %5862 = vadd.xlane.f32.xlu0 %v5861
  %v5863 = vpop.xlane.xlu0 %5862
  %v5864 = vmul.f32 %v5835, 0.03125
  %v5865 = vmul.f32 %v5839, 0.03125
  %v5866 = vmul.f32 %v5843, 0.03125
  %v5867 = vmul.f32 %v5847, 0.03125
  %v5868 = vmul.f32 %v5851, 0.03125
  %v5869 = vmul.f32 %v5855, 0.03125
  %v5870 = vmul.f32 %v5859, 0.03125
  %v5871 = vmul.f32 %v5863, 0.03125
  %v5872 = vmul.f32 %v5792, %v5792
  %v5873 = vmul.f32 %v5793, %v5793
  %v5874 = vmul.f32 %v5794, %v5794
  %v5875 = vmul.f32 %v5795, %v5795
  %v5876 = vmul.f32 %v5796, %v5796
  %v5877 = vmul.f32 %v5797, %v5797
  %v5878 = vmul.f32 %v5798, %v5798
  %v5879 = vmul.f32 %v5799, %v5799
  %v5880 = vsub.f32 %v5864, %v5872
  %v5881 = vsub.f32 %v5865, %v5873
  %v5882 = vsub.f32 %v5866, %v5874
  %v5883 = vsub.f32 %v5867, %v5875
  %v5884 = vsub.f32 %v5868, %v5876
  %v5885 = vsub.f32 %v5869, %v5877
  %v5886 = vsub.f32 %v5870, %v5878
  %v5887 = vsub.f32 %v5871, %v5879
  %v5888 = vld [vmem:[%s47] sm:$0xff]
  %v5889 = vld [vmem:[%s47 + $0x8] sm:$0xff]
  %v5890 = vld [vmem:[%s47 + $0x10] sm:$0xff]
  %v5891 = vld [vmem:[%s47 + $0x18] sm:$0xff]
  %v5892 = vld [vmem:[%s47 + $0x20] sm:$0xff]
  %v5893 = vld [vmem:[%s47 + $0x28] sm:$0xff]
  %v5894 = vld [vmem:[%s47 + $0x30] sm:$0xff]
  %v5895 = vld [vmem:[%s47 + $0x38] sm:$0xff]
  %v5896 = vadd.f32 %v5880, 1e-05
  %v5897 = vadd.f32 %v5881, 1e-05
  %v5898 = vadd.f32 %v5882, 1e-05
  %v5899 = vadd.f32 %v5883, 1e-05
  %v5900 = vadd.f32 %v5884, 1e-05
  %v5901 = vadd.f32 %v5885, 1e-05
  %v5902 = vadd.f32 %v5886, 1e-05
  %v5903 = vadd.f32 %v5887, 1e-05
  %v5904 = vrsqrt.pop %v5896
  %v5905 = vrsqrt.pop %v5897
  %v5906 = vrsqrt.pop %v5898
  %v5907 = vrsqrt.pop %v5899
  %v5908 = vrsqrt.pop %v5900
  %v5909 = vrsqrt.pop %v5901
  %v5910 = vrsqrt.pop %v5902
  %v5911 = vrsqrt.pop %v5903
  %v5912 = vmul.f32 %v5888, %v5904
  %v5913 = vmul.f32 %v5889, %v5905
  %v5914 = vmul.f32 %v5890, %v5906
  %v5915 = vmul.f32 %v5891, %v5907
  %v5916 = vmul.f32 %v5892, %v5908
  %v5917 = vmul.f32 %v5893, %v5909
  %v5918 = vmul.f32 %v5894, %v5910
  %v5919 = vmul.f32 %v5895, %v5911
  %5921 = vset.pattern.permute.xlu0 0
  %5922 = vperm.xlu0 %5921, %v5912
  %v5923 = vpop.permute.xlu0 %5922
  %5926 = vset.pattern.permute.xlu0 0
  %5927 = vperm.xlu0 %5926, %v5913
  %v5928 = vpop.permute.xlu0 %5927
  %5931 = vset.pattern.permute.xlu0 0
  %5932 = vperm.xlu0 %5931, %v5914
  %v5933 = vpop.permute.xlu0 %5932
  %5936 = vset.pattern.permute.xlu0 0
  %5937 = vperm.xlu0 %5936, %v5915
  %v5938 = vpop.permute.xlu0 %5937
  %5941 = vset.pattern.permute.xlu0 0
  %5942 = vperm.xlu0 %5941, %v5916
  %v5943 = vpop.permute.xlu0 %5942
  %5946 = vset.pattern.permute.xlu0 0
  %5947 = vperm.xlu0 %5946, %v5917
  %v5948 = vpop.permute.xlu0 %5947
  %5951 = vset.pattern.permute.xlu0 0
  %5952 = vperm.xlu0 %5951, %v5918
  %v5953 = vpop.permute.xlu0 %5952
  %5956 = vset.pattern.permute.xlu0 0
  %5957 = vperm.xlu0 %5956, %v5919
  %v5958 = vpop.permute.xlu0 %5957
  %v5960 = vmul.f32 %v5694, %v5923
  %v5961 = vmul.f32 %v5696, %v5923
  %v5962 = vmul.f32 %v5698, %v5928
  %v5963 = vmul.f32 %v5700, %v5928
  %v5964 = vmul.f32 %v5704, %v5933
  %v5965 = vmul.f32 %v5706, %v5933
  %v5966 = vmul.f32 %v5708, %v5938
  %v5967 = vmul.f32 %v5710, %v5938
  %v5968 = vmul.f32 %v5714, %v5943
  %v5969 = vmul.f32 %v5716, %v5943
  %v5970 = vmul.f32 %v5718, %v5948
  %v5971 = vmul.f32 %v5720, %v5948
  %v5972 = vmul.f32 %v5724, %v5953
  %v5973 = vmul.f32 %v5726, %v5953
  %v5974 = vmul.f32 %v5728, %v5958
  %v5975 = vmul.f32 %v5730, %v5958
  %v5976 = vld [vmem:[%s49] sm:$0xff]
  %v5977 = vld [vmem:[%s49 + $0x8] sm:$0xff]
  %v5978 = vld [vmem:[%s49 + $0x10] sm:$0xff]
  %v5979 = vld [vmem:[%s49 + $0x18] sm:$0xff]
  %v5980 = vld [vmem:[%s49 + $0x20] sm:$0xff]
  %v5981 = vld [vmem:[%s49 + $0x28] sm:$0xff]
  %v5982 = vld [vmem:[%s49 + $0x30] sm:$0xff]
  %v5983 = vld [vmem:[%s49 + $0x38] sm:$0xff]
  %v5984 = vmul.f32 %v5792, %v5912
  %v5985 = vmul.f32 %v5793, %v5913
  %v5986 = vmul.f32 %v5794, %v5914
  %v5987 = vmul.f32 %v5795, %v5915
  %v5988 = vmul.f32 %v5796, %v5916
  %v5989 = vmul.f32 %v5797, %v5917
  %v5990 = vmul.f32 %v5798, %v5918
  %v5991 = vmul.f32 %v5799, %v5919
  %v5992 = vsub.f32 %v5976, %v5984
  %v5993 = vsub.f32 %v5977, %v5985
  %v5994 = vsub.f32 %v5978, %v5986
  %v5995 = vsub.f32 %v5979, %v5987
  %v5996 = vsub.f32 %v5980, %v5988
  %v5997 = vsub.f32 %v5981, %v5989
  %v5998 = vsub.f32 %v5982, %v5990
  %v5999 = vsub.f32 %v5983, %v5991
  %6001 = vset.pattern.permute.xlu0 0
  %6002 = vperm.xlu0 %6001, %v5992
  %v6003 = vpop.permute.xlu0 %6002
  %6006 = vset.pattern.permute.xlu0 0
  %6007 = vperm.xlu0 %6006, %v5993
  %v6008 = vpop.permute.xlu0 %6007
  %6011 = vset.pattern.permute.xlu0 0
  %6012 = vperm.xlu0 %6011, %v5994
  %v6013 = vpop.permute.xlu0 %6012
  %6016 = vset.pattern.permute.xlu0 0
  %6017 = vperm.xlu0 %6016, %v5995
  %v6018 = vpop.permute.xlu0 %6017
  %6021 = vset.pattern.permute.xlu0 0
  %6022 = vperm.xlu0 %6021, %v5996
  %v6023 = vpop.permute.xlu0 %6022
  %6026 = vset.pattern.permute.xlu0 0
  %6027 = vperm.xlu0 %6026, %v5997
  %v6028 = vpop.permute.xlu0 %6027
  %6031 = vset.pattern.permute.xlu0 0
  %6032 = vperm.xlu0 %6031, %v5998
  %v6033 = vpop.permute.xlu0 %6032
  %6036 = vset.pattern.permute.xlu0 0
  %6037 = vperm.xlu0 %6036, %v5999
  %v6038 = vpop.permute.xlu0 %6037
  %v6040 = vadd.f32 %v5960, %v6003
  %v6041 = vadd.f32 %v5961, %v6003
  %v6042 = vadd.f32 %v5962, %v6008
  %v6043 = vadd.f32 %v5963, %v6008
  %v6044 = vadd.f32 %v5964, %v6013
  %v6045 = vadd.f32 %v5965, %v6013
  %v6046 = vadd.f32 %v5966, %v6018
  %v6047 = vadd.f32 %v5967, %v6018
  %v6048 = vadd.f32 %v5968, %v6023
  %v6049 = vadd.f32 %v5969, %v6023
  %v6050 = vadd.f32 %v5970, %v6028
  %v6051 = vadd.f32 %v5971, %v6028
  %v6052 = vadd.f32 %v5972, %v6033
  %v6053 = vadd.f32 %v5973, %v6033
  %v6054 = vadd.f32 %v5974, %v6038
  %v6055 = vadd.f32 %v5975, %v6038
  %v6056 = vmax.f32 %v6040, 0.0
  %v6057 = vmax.f32 %v6041, 0.0
  %v6058 = vmax.f32 %v6042, 0.0
  %v6059 = vmax.f32 %v6043, 0.0
  %v6060 = vmax.f32 %v6044, 0.0
  %v6061 = vmax.f32 %v6045, 0.0
  %v6062 = vmax.f32 %v6046, 0.0
  %v6063 = vmax.f32 %v6047, 0.0
  %v6064 = vmax.f32 %v6048, 0.0
  %v6065 = vmax.f32 %v6049, 0.0
  %v6066 = vmax.f32 %v6050, 0.0
  %v6067 = vmax.f32 %v6051, 0.0
  %v6068 = vmax.f32 %v6052, 0.0
  %v6069 = vmax.f32 %v6053, 0.0
  %v6070 = vmax.f32 %v6054, 0.0
  %v6071 = vmax.f32 %v6055, 0.0
  %v6072 = vld [vmem:[%s69] sm:$0xff]
  %v6073 = vld [vmem:[%s69 + $0x8] sm:$0xff]
  %v6074 = vld [vmem:[%s69 + $0x10] sm:$0xff]
  %v6075 = vld [vmem:[%s69 + $0x18] sm:$0xff]
  %v6076 = vld [vmem:[%s69 + $0x20] sm:$0xff]
  %v6077 = vld [vmem:[%s69 + $0x28] sm:$0xff]
  %v6078 = vld [vmem:[%s69 + $0x30] sm:$0xff]
  %v6079 = vld [vmem:[%s69 + $0x38] sm:$0xff]
  %v6080 = vld [vmem:[%s69 + $0x40] sm:$0xff]
  %v6081 = vld [vmem:[%s69 + $0x48] sm:$0xff]
  %v6082 = vld [vmem:[%s69 + $0x50] sm:$0xff]
  %v6083 = vld [vmem:[%s69 + $0x58] sm:$0xff]
  %v6084 = vld [vmem:[%s69 + $0x60] sm:$0xff]
  %v6085 = vld [vmem:[%s69 + $0x68] sm:$0xff]
  %v6086 = vld [vmem:[%s69 + $0x70] sm:$0xff]
  %v6087 = vld [vmem:[%s69 + $0x78] sm:$0xff]
  %v6088 = vld [vmem:[%s69 + $0x80] sm:$0xff]
  %v6089 = vld [vmem:[%s69 + $0x88] sm:$0xff]
  %v6090 = vld [vmem:[%s69 + $0x90] sm:$0xff]
  %v6091 = vld [vmem:[%s69 + $0x98] sm:$0xff]
  %v6092 = vld [vmem:[%s69 + $0xa0] sm:$0xff]
  %v6093 = vld [vmem:[%s69 + $0xa8] sm:$0xff]
  %v6094 = vld [vmem:[%s69 + $0xb0] sm:$0xff]
  %v6095 = vld [vmem:[%s69 + $0xb8] sm:$0xff]
  %v6096 = vld [vmem:[%s69 + $0xc0] sm:$0xff]
  %v6098 = vsel %vm400, %v6057, 0
  %v6101 = vsel %vm400, %v6059, 0
  %v6104 = vsel %vm400, %v6061, 0
  %v6107 = vsel %vm400, %v6063, 0
  %v6110 = vsel %vm400, %v6065, 0
  %v6113 = vsel %vm400, %v6067, 0
  %v6116 = vsel %vm400, %v6069, 0
  %v6119 = vsel %vm400, %v6071, 0
  %6121 = vmatprep.subr.mxu0 0.0
  %6122 = vmatpush1.msra.mxu0 %v6072
  %6123 = vmatprep.subr.mxu0 0.0
  %6124 = vmatpush1.msra.mxu0 %v6073
  %6125 = vmatprep.subr.mxu0 0.0
  %6126 = vmatpush1.msra.mxu0 %v6074
  %6127 = vmatprep.subr.mxu0 0.0
  %6128 = vmatpush1.msra.mxu0 %v6075
  %6129 = vmatprep.subr.mxu0 0.0
  %6130 = vmatpush1.msra.mxu0 %v6076
  %6131 = vmatprep.subr.mxu0 0.0
  %6132 = vmatpush1.msra.mxu0 %v6077
  %6133 = vmatprep.subr.mxu0 0.0
  %6134 = vmatpush1.msra.mxu0 %v6078
  %6135 = vmatprep.subr.mxu0 0.0
  %6136 = vmatpush1.msra.mxu0 %v6079
  %6137 = vmatprep.subr.mxu0 0.0
  %6138 = vmatpush1.msra.mxu0 %v6080
  %6139 = vmatprep.subr.mxu0 0.0
  %6140 = vmatpush1.msra.mxu0 %v6081
  %6141 = vmatprep.subr.mxu0 0.0
  %6142 = vmatpush1.msra.mxu0 %v6082
  %6143 = vmatprep.subr.mxu0 0.0
  %6144 = vmatpush1.msra.mxu0 %v6083
  %6145 = vmatprep.subr.mxu0 0.0
  %6146 = vmatpush1.msra.mxu0 %v6084
  %6147 = vmatprep.subr.mxu0 0.0
  %6148 = vmatpush1.msra.mxu0 %v6085
  %6149 = vmatprep.subr.mxu0 0.0
  %6150 = vmatpush1.msra.mxu0 %v6086
  %6151 = vmatprep.subr.mxu0 0.0
  %6152 = vmatpush1.msra.mxu0 %v6087
  %6153 = vmatprep.subr.mxu0 0.0
  %6154 = vmatpush1.msra.mxu0 %v6088
  %6155 = vmatprep.subr.mxu0 0.0
  %6156 = vmatpush1.msra.mxu0 %v6089
  %6157 = vmatprep.subr.mxu0 0.0
  %6158 = vmatpush1.msra.mxu0 %v6090
  %6159 = vmatprep.subr.mxu0 0.0
  %6160 = vmatpush1.msra.mxu0 %v6091
  %6161 = vmatprep.subr.mxu0 0.0
  %6162 = vmatpush1.msra.mxu0 %v6092
  %6163 = vmatprep.subr.mxu0 0.0
  %6164 = vmatpush1.msra.mxu0 %v6093
  %6165 = vmatprep.subr.mxu0 0.0
  %6166 = vmatpush1.msra.mxu0 %v6094
  %6167 = vmatprep.subr.mxu0 0.0
  %6168 = vmatpush1.msra.mxu0 %v6095
  %6169 = vmatprep.subr.mxu0 0.0
  %6170 = vmatpush1.msra.mxu0 %v6096
  %6171 = vmatprep.subr.mxu0 0.0
  %6172 = vmatpush1.msra.mxu0 0.0
  %6173 = vmatprep.subr.mxu0 0.0
  %6174 = vmatpush1.msra.mxu0 0.0
  %6175 = vmatprep.subr.mxu0 0.0
  %6176 = vmatpush1.msra.mxu0 0.0
  %6177 = vmatprep.subr.mxu0 0.0
  %6178 = vmatpush1.msra.mxu0 0.0
  %6179 = vmatprep.subr.mxu0 0.0
  %6180 = vmatpush1.msra.mxu0 0.0
  %6181 = vmatprep.subr.mxu0 0.0
  %6182 = vmatpush1.msra.mxu0 0.0
  %6183 = vmatprep.subr.mxu0 0.0
  %6184 = vmatpush1.msra.mxu0 0.0
  %6185 = vmatprep.mubr.f32.mxu0 %v6098
  %6186 = vmatmul.mubr.f32.gmra.mrb[0].mxu0 %v6056
  %v6187 = vpop.f32.mrb[0].mxu0
  %v6188 = vadd.f32 0.0, %v6187
  %v6189 = vpop.f32.mrb[0].mxu0
  %6190 = vmatprep.mubr.f32.mxu0 %v6101
  %6191 = vmatmul.mubr.f32.gmra.mrb[0].mxu0 %v6058
  %v6192 = vpop.f32.mrb[0].mxu0
  %v6193 = vadd.f32 0.0, %v6192
  %v6194 = vpop.f32.mrb[0].mxu0
  %6195 = vmatprep.mubr.f32.mxu0 %v6104
  %6196 = vmatmul.mubr.f32.gmra.mrb[0].mxu0 %v6060
  %v6197 = vpop.f32.mrb[0].mxu0
  %v6198 = vadd.f32 0.0, %v6197
  %v6199 = vpop.f32.mrb[0].mxu0
  %6200 = vmatprep.mubr.f32.mxu0 %v6107
  %6201 = vmatmul.mubr.f32.gmra.mrb[0].mxu0 %v6062
  %v6202 = vpop.f32.mrb[0].mxu0
  %v6203 = vadd.f32 0.0, %v6202
  %v6204 = vpop.f32.mrb[0].mxu0
  %6205 = vmatprep.mubr.f32.mxu0 %v6110
  %6206 = vmatmul.mubr.f32.gmra.mrb[0].mxu0 %v6064
  %v6207 = vpop.f32.mrb[0].mxu0
  %v6208 = vadd.f32 0.0, %v6207
  %v6209 = vpop.f32.mrb[0].mxu0
  %6210 = vmatprep.mubr.f32.mxu0 %v6113
  %6211 = vmatmul.mubr.f32.gmra.mrb[0].mxu0 %v6066
  %v6212 = vpop.f32.mrb[0].mxu0
  %v6213 = vadd.f32 0.0, %v6212
  %v6214 = vpop.f32.mrb[0].mxu0
  %6215 = vmatprep.mubr.f32.mxu0 %v6116
  %6216 = vmatmul.mubr.f32.gmra.mrb[0].mxu0 %v6068
  %v6217 = vpop.f32.mrb[0].mxu0
  %v6218 = vadd.f32 0.0, %v6217
  %v6219 = vpop.f32.mrb[0].mxu0
  %6220 = vmatprep.mubr.f32.mxu0 %v6119
  %6221 = vmatmul.mubr.f32.gmra.mrb[0].mxu0 %v6070
  %v6222 = vpop.f32.mrb[0].mxu0
  %v6223 = vadd.f32 0.0, %v6222
  %v6224 = vpop.f32.mrb[0].mxu0
  %6225 = vdwg.mxu0
  %v6226 = vld [vmem:[%s67] sm:$0xf]
  %v6227 = vld [vmem:[%s67 + $0x4] sm:$0xf]
  %v6228 = vld [vmem:[%s67 + $0x8] sm:$0xf]
  %v6229 = vld [vmem:[%s67 + $0xc] sm:$0xf]
  %v6230 = vld [vmem:[%s67 + $0x10] sm:$0xf]
  %v6231 = vld [vmem:[%s67 + $0x14] sm:$0xf]
  %v6232 = vld [vmem:[%s67 + $0x18] sm:$0xf]
  %v6233 = vld [vmem:[%s67 + $0x1c] sm:$0xf]
  %v6242 = vunpack.c.l.b16 %v6226
  %v6243 = vunpack.c.l.b16 %v6227
  %v6244 = vunpack.c.l.b16 %v6228
  %v6245 = vunpack.c.l.b16 %v6229
  %v6246 = vunpack.c.l.b16 %v6230
  %v6247 = vunpack.c.l.b16 %v6231
  %v6248 = vunpack.c.l.b16 %v6232
  %v6249 = vunpack.c.l.b16 %v6233
  %v6250 = vpack.c.b16 %v6243, %v6242
  %v6251 = vpack.c.b16 %v6245, %v6244
  %v6252 = vpack.c.b16 %v6247, %v6246
  %v6253 = vpack.c.b16 %v6249, %v6248
  %6258 = vrot.lane.b32.xlu0 %v5478, 117
  %v6259 = vpop.permute.xlu0 %6258
  %6260 = vrot.lane.b32.xlu0 %v5479, 117
  %v6261 = vpop.permute.xlu0 %6260
  %6262 = vrot.lane.b32.xlu0 %v5480, 117
  %v6263 = vpop.permute.xlu0 %6262
  %6264 = vrot.lane.b32.xlu0 %v5481, 117
  %v6265 = vpop.permute.xlu0 %6264
  %vm6266 = vcmask 957440
  %v6267 = vsel %vm6266, %v6259, %v6261
  %v6268 = vsel %vm6266, %v6263, %v6265
  %v6274 = vsel %vm4843, %v6250, 0
  %v6277 = vsel %vm4843, %v6251, 0
  %v6280 = vsel %vm4843, %v6252, 0
  %v6283 = vsel %vm4843, %v6253, 0
  %6285 = vmatprep.subr.bf16.mxu0 %v6261
  %6286 = vmatpush1.bf16.msra.mxu0 %v6267
  %6287 = vmatprep.subr.bf16.mxu0 %v6265
  %6288 = vmatpush1.bf16.msra.mxu0 %v6268
  %6289 = vmatprep.subr.bf16.mxu0 0
  %6290 = vmatpush1.bf16.msra.mxu0 0
  %6291 = vmatprep.subr.bf16.mxu0 0
  %6292 = vmatpush1.bf16.msra.mxu0 0
  %6293 = vmatprep.subr.bf16.mxu0 0
  %6294 = vmatpush1.bf16.msra.mxu0 0
  %6295 = vmatprep.subr.bf16.mxu0 0
  %6296 = vmatpush1.bf16.msra.mxu0 0
  %6297 = vmatprep.subr.bf16.mxu0 0
  %6298 = vmatpush1.bf16.msra.mxu0 0
  %6299 = vmatprep.subr.bf16.mxu0 0
  %6300 = vmatpush1.bf16.msra.mxu0 0
  %6301 = vmatprep.subr.bf16.mxu0 0
  %6302 = vmatpush1.bf16.msra.mxu0 0
  %6303 = vmatprep.subr.bf16.mxu0 0
  %6304 = vmatpush1.bf16.msra.mxu0 0
  %6305 = vmatprep.subr.bf16.mxu0 0
  %6306 = vmatpush1.bf16.msra.mxu0 0
  %6307 = vmatprep.subr.bf16.mxu0 0
  %6308 = vmatpush1.bf16.msra.mxu0 0
  %6309 = vmatprep.subr.bf16.mxu0 0
  %6310 = vmatpush1.bf16.msra.mxu0 0
  %6311 = vmatprep.subr.bf16.mxu0 0
  %6312 = vmatpush1.bf16.msra.mxu0 0
  %6313 = vmatprep.subr.bf16.mxu0 0
  %6314 = vmatpush1.bf16.msra.mxu0 0
  %6315 = vmatprep.subr.bf16.mxu0 0
  %6316 = vmatpush1.bf16.msra.mxu0 0
  %6317 = vmatprep.mubr.bf16.mxu0 0
  %6318 = vmatmul.mubr.bf16.gmra.mrb[0].mxu0 %v6274
  %v6319 = vpop.f32.mrb[0].mxu0
  %v6320 = vadd.f32 0.0, %v6319
  %v6321 = vpop.f32.mrb[0].mxu0
  %v6322 = vadd.f32 0.0, %v6321
  %v6323 = vpop.f32.mrb[0].mxu0
  %v6324 = vadd.f32 0.0, %v6323
  %v6325 = vpop.f32.mrb[0].mxu0
  %v6326 = vadd.f32 0.0, %v6325
  %6327 = vmatprep.mubr.bf16.mxu0 0
  %6328 = vmatmul.mubr.bf16.gmra.mrb[0].mxu0 %v6277
  %v6329 = vpop.f32.mrb[0].mxu0
  %v6330 = vadd.f32 0.0, %v6329
  %v6331 = vpop.f32.mrb[0].mxu0
  %v6332 = vadd.f32 0.0, %v6331
  %v6333 = vpop.f32.mrb[0].mxu0
  %v6334 = vadd.f32 0.0, %v6333
  %v6335 = vpop.f32.mrb[0].mxu0
  %v6336 = vadd.f32 0.0, %v6335
  %6337 = vmatprep.mubr.bf16.mxu0 0
  %6338 = vmatmul.mubr.bf16.gmra.mrb[0].mxu0 %v6280
  %v6339 = vpop.f32.mrb[0].mxu0
  %v6340 = vadd.f32 0.0, %v6339
  %v6341 = vpop.f32.mrb[0].mxu0
  %v6342 = vadd.f32 0.0, %v6341
  %v6343 = vpop.f32.mrb[0].mxu0
  %v6344 = vadd.f32 0.0, %v6343
  %v6345 = vpop.f32.mrb[0].mxu0
  %v6346 = vadd.f32 0.0, %v6345
  %6347 = vmatprep.mubr.bf16.mxu0 0
  %6348 = vmatmul.mubr.bf16.gmra.mrb[0].mxu0 %v6283
  %v6349 = vpop.f32.mrb[0].mxu0
  %v6350 = vadd.f32 0.0, %v6349
  %v6351 = vpop.f32.mrb[0].mxu0
  %v6352 = vadd.f32 0.0, %v6351
  %v6353 = vpop.f32.mrb[0].mxu0
  %v6354 = vadd.f32 0.0, %v6353
  %v6355 = vpop.f32.mrb[0].mxu0
  %v6356 = vadd.f32 0.0, %v6355
  %6357 = vdwg.mxu0
  %v6358 = vmul.f32 %v6320, %v5737
  %v6359 = vmul.f32 %v6322, %v5741
  %v6360 = vmul.f32 %v6324, %v5737
  %v6361 = vmul.f32 %v6326, %v5741
  %v6362 = vmul.f32 %v6330, %v5737
  %v6363 = vmul.f32 %v6332, %v5741
  %v6364 = vmul.f32 %v6334, %v5737
  %v6365 = vmul.f32 %v6336, %v5741
  %v6366 = vmul.f32 %v6340, %v5737
  %v6367 = vmul.f32 %v6342, %v5741
  %v6368 = vmul.f32 %v6344, %v5737
  %v6369 = vmul.f32 %v6346, %v5741
  %v6370 = vmul.f32 %v6350, %v5737
  %v6371 = vmul.f32 %v6352, %v5741
  %v6372 = vmul.f32 %v6354, %v5737
  %v6373 = vmul.f32 %v6356, %v5741
  %v6374 = vsel %vm400, %v6359, 0.0
  %v6375 = vadd.f32 %v6358, %v6374
  %6376 = vadd.xlane.f32.xlu0 %v6375
  %v6377 = vpop.xlane.xlu0 %6376
  %v6378 = vsel %vm400, %v6361, 0.0
  %v6379 = vadd.f32 %v6360, %v6378
  %6380 = vadd.xlane.f32.xlu0 %v6379
  %v6381 = vpop.xlane.xlu0 %6380
  %v6382 = vsel %vm400, %v6363, 0.0
  %v6383 = vadd.f32 %v6362, %v6382
  %6384 = vadd.xlane.f32.xlu0 %v6383
  %v6385 = vpop.xlane.xlu0 %6384
  %v6386 = vsel %vm400, %v6365, 0.0
  %v6387 = vadd.f32 %v6364, %v6386
  %6388 = vadd.xlane.f32.xlu0 %v6387
  %v6389 = vpop.xlane.xlu0 %6388
  %v6390 = vsel %vm400, %v6367, 0.0
  %v6391 = vadd.f32 %v6366, %v6390
  %6392 = vadd.xlane.f32.xlu0 %v6391
  %v6393 = vpop.xlane.xlu0 %6392
  %v6394 = vsel %vm400, %v6369, 0.0
  %v6395 = vadd.f32 %v6368, %v6394
  %6396 = vadd.xlane.f32.xlu0 %v6395
  %v6397 = vpop.xlane.xlu0 %6396
  %v6398 = vsel %vm400, %v6371, 0.0
  %v6399 = vadd.f32 %v6370, %v6398
  %6400 = vadd.xlane.f32.xlu0 %v6399
  %v6401 = vpop.xlane.xlu0 %6400
  %v6402 = vsel %vm400, %v6373, 0.0
  %v6403 = vadd.f32 %v6372, %v6402
  %6404 = vadd.xlane.f32.xlu0 %v6403
  %v6405 = vpop.xlane.xlu0 %6404
  %v6406 = vmul.f32 %v6377, 0.03125
  %v6407 = vmul.f32 %v6381, 0.03125
  %v6408 = vmul.f32 %v6385, 0.03125
  %v6409 = vmul.f32 %v6389, 0.03125
  %v6410 = vmul.f32 %v6393, 0.03125
  %v6411 = vmul.f32 %v6397, 0.03125
  %v6412 = vmul.f32 %v6401, 0.03125
  %v6413 = vmul.f32 %v6405, 0.03125
  %v6414 = vmul.f32 %v6320, %v6320
  %v6415 = vmul.f32 %v6322, %v6322
  %v6416 = vmul.f32 %v6324, %v6324
  %v6417 = vmul.f32 %v6326, %v6326
  %v6418 = vmul.f32 %v6330, %v6330
  %v6419 = vmul.f32 %v6332, %v6332
  %v6420 = vmul.f32 %v6334, %v6334
  %v6421 = vmul.f32 %v6336, %v6336
  %v6422 = vmul.f32 %v6340, %v6340
  %v6423 = vmul.f32 %v6342, %v6342
  %v6424 = vmul.f32 %v6344, %v6344
  %v6425 = vmul.f32 %v6346, %v6346
  %v6426 = vmul.f32 %v6350, %v6350
  %v6427 = vmul.f32 %v6352, %v6352
  %v6428 = vmul.f32 %v6354, %v6354
  %v6429 = vmul.f32 %v6356, %v6356
  %v6430 = vmul.f32 %v6414, %v5737
  %v6431 = vmul.f32 %v6415, %v5741
  %v6432 = vmul.f32 %v6416, %v5737
  %v6433 = vmul.f32 %v6417, %v5741
  %v6434 = vmul.f32 %v6418, %v5737
  %v6435 = vmul.f32 %v6419, %v5741
  %v6436 = vmul.f32 %v6420, %v5737
  %v6437 = vmul.f32 %v6421, %v5741
  %v6438 = vmul.f32 %v6422, %v5737
  %v6439 = vmul.f32 %v6423, %v5741
  %v6440 = vmul.f32 %v6424, %v5737
  %v6441 = vmul.f32 %v6425, %v5741
  %v6442 = vmul.f32 %v6426, %v5737
  %v6443 = vmul.f32 %v6427, %v5741
  %v6444 = vmul.f32 %v6428, %v5737
  %v6445 = vmul.f32 %v6429, %v5741
  %v6446 = vsel %vm400, %v6431, 0.0
  %v6447 = vadd.f32 %v6430, %v6446
  %6448 = vadd.xlane.f32.xlu0 %v6447
  %v6449 = vpop.xlane.xlu0 %6448
  %v6450 = vsel %vm400, %v6433, 0.0
  %v6451 = vadd.f32 %v6432, %v6450
  %6452 = vadd.xlane.f32.xlu0 %v6451
  %v6453 = vpop.xlane.xlu0 %6452
  %v6454 = vsel %vm400, %v6435, 0.0
  %v6455 = vadd.f32 %v6434, %v6454
  %6456 = vadd.xlane.f32.xlu0 %v6455
  %v6457 = vpop.xlane.xlu0 %6456
  %v6458 = vsel %vm400, %v6437, 0.0
  %v6459 = vadd.f32 %v6436, %v6458
  %6460 = vadd.xlane.f32.xlu0 %v6459
  %v6461 = vpop.xlane.xlu0 %6460
  %v6462 = vsel %vm400, %v6439, 0.0
  %v6463 = vadd.f32 %v6438, %v6462
  %6464 = vadd.xlane.f32.xlu0 %v6463
  %v6465 = vpop.xlane.xlu0 %6464
  %v6466 = vsel %vm400, %v6441, 0.0
  %v6467 = vadd.f32 %v6440, %v6466
  %6468 = vadd.xlane.f32.xlu0 %v6467
  %v6469 = vpop.xlane.xlu0 %6468
  %v6470 = vsel %vm400, %v6443, 0.0
  %v6471 = vadd.f32 %v6442, %v6470
  %6472 = vadd.xlane.f32.xlu0 %v6471
  %v6473 = vpop.xlane.xlu0 %6472
  %v6474 = vsel %vm400, %v6445, 0.0
  %v6475 = vadd.f32 %v6444, %v6474
  %6476 = vadd.xlane.f32.xlu0 %v6475
  %v6477 = vpop.xlane.xlu0 %6476
  %v6478 = vmul.f32 %v6449, 0.03125
  %v6479 = vmul.f32 %v6453, 0.03125
  %v6480 = vmul.f32 %v6457, 0.03125
  %v6481 = vmul.f32 %v6461, 0.03125
  %v6482 = vmul.f32 %v6465, 0.03125
  %v6483 = vmul.f32 %v6469, 0.03125
  %v6484 = vmul.f32 %v6473, 0.03125
  %v6485 = vmul.f32 %v6477, 0.03125
  %v6486 = vmul.f32 %v6406, %v6406
  %v6487 = vmul.f32 %v6407, %v6407
  %v6488 = vmul.f32 %v6408, %v6408
  %v6489 = vmul.f32 %v6409, %v6409
  %v6490 = vmul.f32 %v6410, %v6410
  %v6491 = vmul.f32 %v6411, %v6411
  %v6492 = vmul.f32 %v6412, %v6412
  %v6493 = vmul.f32 %v6413, %v6413
  %v6494 = vsub.f32 %v6478, %v6486
  %v6495 = vsub.f32 %v6479, %v6487
  %v6496 = vsub.f32 %v6480, %v6488
  %v6497 = vsub.f32 %v6481, %v6489
  %v6498 = vsub.f32 %v6482, %v6490
  %v6499 = vsub.f32 %v6483, %v6491
  %v6500 = vsub.f32 %v6484, %v6492
  %v6501 = vsub.f32 %v6485, %v6493
  %v6502 = vld [vmem:[%s63] sm:$0xff]
  %v6503 = vld [vmem:[%s63 + $0x8] sm:$0xff]
  %v6504 = vld [vmem:[%s63 + $0x10] sm:$0xff]
  %v6505 = vld [vmem:[%s63 + $0x18] sm:$0xff]
  %v6506 = vld [vmem:[%s63 + $0x20] sm:$0xff]
  %v6507 = vld [vmem:[%s63 + $0x28] sm:$0xff]
  %v6508 = vld [vmem:[%s63 + $0x30] sm:$0xff]
  %v6509 = vld [vmem:[%s63 + $0x38] sm:$0xff]
  %v6510 = vadd.f32 %v6494, 1e-05
  %v6511 = vadd.f32 %v6495, 1e-05
  %v6512 = vadd.f32 %v6496, 1e-05
  %v6513 = vadd.f32 %v6497, 1e-05
  %v6514 = vadd.f32 %v6498, 1e-05
  %v6515 = vadd.f32 %v6499, 1e-05
  %v6516 = vadd.f32 %v6500, 1e-05
  %v6517 = vadd.f32 %v6501, 1e-05
  %v6518 = vrsqrt.pop %v6510
  %v6519 = vrsqrt.pop %v6511
  %v6520 = vrsqrt.pop %v6512
  %v6521 = vrsqrt.pop %v6513
  %v6522 = vrsqrt.pop %v6514
  %v6523 = vrsqrt.pop %v6515
  %v6524 = vrsqrt.pop %v6516
  %v6525 = vrsqrt.pop %v6517
  %v6526 = vmul.f32 %v6502, %v6518
  %v6527 = vmul.f32 %v6503, %v6519
  %v6528 = vmul.f32 %v6504, %v6520
  %v6529 = vmul.f32 %v6505, %v6521
  %v6530 = vmul.f32 %v6506, %v6522
  %v6531 = vmul.f32 %v6507, %v6523
  %v6532 = vmul.f32 %v6508, %v6524
  %v6533 = vmul.f32 %v6509, %v6525
  %6535 = vset.pattern.permute.xlu0 0
  %6536 = vperm.xlu0 %6535, %v6526
  %v6537 = vpop.permute.xlu0 %6536
  %6540 = vset.pattern.permute.xlu0 0
  %6541 = vperm.xlu0 %6540, %v6527
  %v6542 = vpop.permute.xlu0 %6541
  %6545 = vset.pattern.permute.xlu0 0
  %6546 = vperm.xlu0 %6545, %v6528
  %v6547 = vpop.permute.xlu0 %6546
  %6550 = vset.pattern.permute.xlu0 0
  %6551 = vperm.xlu0 %6550, %v6529
  %v6552 = vpop.permute.xlu0 %6551
  %6555 = vset.pattern.permute.xlu0 0
  %6556 = vperm.xlu0 %6555, %v6530
  %v6557 = vpop.permute.xlu0 %6556
  %6560 = vset.pattern.permute.xlu0 0
  %6561 = vperm.xlu0 %6560, %v6531
  %v6562 = vpop.permute.xlu0 %6561
  %6565 = vset.pattern.permute.xlu0 0
  %6566 = vperm.xlu0 %6565, %v6532
  %v6567 = vpop.permute.xlu0 %6566
  %6570 = vset.pattern.permute.xlu0 0
  %6571 = vperm.xlu0 %6570, %v6533
  %v6572 = vpop.permute.xlu0 %6571
  %v6574 = vmul.f32 %v6320, %v6537
  %v6575 = vmul.f32 %v6322, %v6537
  %v6576 = vmul.f32 %v6324, %v6542
  %v6577 = vmul.f32 %v6326, %v6542
  %v6578 = vmul.f32 %v6330, %v6547
  %v6579 = vmul.f32 %v6332, %v6547
  %v6580 = vmul.f32 %v6334, %v6552
  %v6581 = vmul.f32 %v6336, %v6552
  %v6582 = vmul.f32 %v6340, %v6557
  %v6583 = vmul.f32 %v6342, %v6557
  %v6584 = vmul.f32 %v6344, %v6562
  %v6585 = vmul.f32 %v6346, %v6562
  %v6586 = vmul.f32 %v6350, %v6567
  %v6587 = vmul.f32 %v6352, %v6567
  %v6588 = vmul.f32 %v6354, %v6572
  %v6589 = vmul.f32 %v6356, %v6572
  %v6590 = vld [vmem:[%s65] sm:$0xff]
  %v6591 = vld [vmem:[%s65 + $0x8] sm:$0xff]
  %v6592 = vld [vmem:[%s65 + $0x10] sm:$0xff]
  %v6593 = vld [vmem:[%s65 + $0x18] sm:$0xff]
  %v6594 = vld [vmem:[%s65 + $0x20] sm:$0xff]
  %v6595 = vld [vmem:[%s65 + $0x28] sm:$0xff]
  %v6596 = vld [vmem:[%s65 + $0x30] sm:$0xff]
  %v6597 = vld [vmem:[%s65 + $0x38] sm:$0xff]
  %v6598 = vmul.f32 %v6406, %v6526
  %v6599 = vmul.f32 %v6407, %v6527
  %v6600 = vmul.f32 %v6408, %v6528
  %v6601 = vmul.f32 %v6409, %v6529
  %v6602 = vmul.f32 %v6410, %v6530
  %v6603 = vmul.f32 %v6411, %v6531
  %v6604 = vmul.f32 %v6412, %v6532
  %v6605 = vmul.f32 %v6413, %v6533
  %v6606 = vsub.f32 %v6590, %v6598
  %v6607 = vsub.f32 %v6591, %v6599
  %v6608 = vsub.f32 %v6592, %v6600
  %v6609 = vsub.f32 %v6593, %v6601
  %v6610 = vsub.f32 %v6594, %v6602
  %v6611 = vsub.f32 %v6595, %v6603
  %v6612 = vsub.f32 %v6596, %v6604
  %v6613 = vsub.f32 %v6597, %v6605
  %6615 = vset.pattern.permute.xlu0 0
  %6616 = vperm.xlu0 %6615, %v6606
  %v6617 = vpop.permute.xlu0 %6616
  %6620 = vset.pattern.permute.xlu0 0
  %6621 = vperm.xlu0 %6620, %v6607
  %v6622 = vpop.permute.xlu0 %6621
  %6625 = vset.pattern.permute.xlu0 0
  %6626 = vperm.xlu0 %6625, %v6608
  %v6627 = vpop.permute.xlu0 %6626
  %6630 = vset.pattern.permute.xlu0 0
  %6631 = vperm.xlu0 %6630, %v6609
  %v6632 = vpop.permute.xlu0 %6631
  %6635 = vset.pattern.permute.xlu0 0
  %6636 = vperm.xlu0 %6635, %v6610
  %v6637 = vpop.permute.xlu0 %6636
  %6640 = vset.pattern.permute.xlu0 0
  %6641 = vperm.xlu0 %6640, %v6611
  %v6642 = vpop.permute.xlu0 %6641
  %6645 = vset.pattern.permute.xlu0 0
  %6646 = vperm.xlu0 %6645, %v6612
  %v6647 = vpop.permute.xlu0 %6646
  %6650 = vset.pattern.permute.xlu0 0
  %6651 = vperm.xlu0 %6650, %v6613
  %v6652 = vpop.permute.xlu0 %6651
  %v6654 = vadd.f32 %v6574, %v6617
  %v6655 = vadd.f32 %v6575, %v6617
  %v6656 = vadd.f32 %v6576, %v6622
  %v6657 = vadd.f32 %v6577, %v6622
  %v6658 = vadd.f32 %v6578, %v6627
  %v6659 = vadd.f32 %v6579, %v6627
  %v6660 = vadd.f32 %v6580, %v6632
  %v6661 = vadd.f32 %v6581, %v6632
  %v6662 = vadd.f32 %v6582, %v6637
  %v6663 = vadd.f32 %v6583, %v6637
  %v6664 = vadd.f32 %v6584, %v6642
  %v6665 = vadd.f32 %v6585, %v6642
  %v6666 = vadd.f32 %v6586, %v6647
  %v6667 = vadd.f32 %v6587, %v6647
  %v6668 = vadd.f32 %v6588, %v6652
  %v6669 = vadd.f32 %v6589, %v6652
  %v6671 = vsel %vm400, %v6655, 0
  %v6674 = vsel %vm400, %v6657, 0
  %v6677 = vsel %vm400, %v6659, 0
  %v6680 = vsel %vm400, %v6661, 0
  %v6683 = vsel %vm400, %v6663, 0
  %v6686 = vsel %vm400, %v6665, 0
  %v6689 = vsel %vm400, %v6667, 0
  %v6692 = vsel %vm400, %v6669, 0
  %6694 = vmatprep.subr.mxu0 0.0
  %6695 = vmatpush1.msra.mxu0 %v6072
  %6696 = vmatprep.subr.mxu0 0.0
  %6697 = vmatpush1.msra.mxu0 %v6073
  %6698 = vmatprep.subr.mxu0 0.0
  %6699 = vmatpush1.msra.mxu0 %v6074
  %6700 = vmatprep.subr.mxu0 0.0
  %6701 = vmatpush1.msra.mxu0 %v6075
  %6702 = vmatprep.subr.mxu0 0.0
  %6703 = vmatpush1.msra.mxu0 %v6076
  %6704 = vmatprep.subr.mxu0 0.0
  %6705 = vmatpush1.msra.mxu0 %v6077
  %6706 = vmatprep.subr.mxu0 0.0
  %6707 = vmatpush1.msra.mxu0 %v6078
  %6708 = vmatprep.subr.mxu0 0.0
  %6709 = vmatpush1.msra.mxu0 %v6079
  %6710 = vmatprep.subr.mxu0 0.0
  %6711 = vmatpush1.msra.mxu0 %v6080
  %6712 = vmatprep.subr.mxu0 0.0
  %6713 = vmatpush1.msra.mxu0 %v6081
  %6714 = vmatprep.subr.mxu0 0.0
  %6715 = vmatpush1.msra.mxu0 %v6082
  %6716 = vmatprep.subr.mxu0 0.0
  %6717 = vmatpush1.msra.mxu0 %v6083
  %6718 = vmatprep.subr.mxu0 0.0
  %6719 = vmatpush1.msra.mxu0 %v6084
  %6720 = vmatprep.subr.mxu0 0.0
  %6721 = vmatpush1.msra.mxu0 %v6085
  %6722 = vmatprep.subr.mxu0 0.0
  %6723 = vmatpush1.msra.mxu0 %v6086
  %6724 = vmatprep.subr.mxu0 0.0
  %6725 = vmatpush1.msra.mxu0 %v6087
  %6726 = vmatprep.subr.mxu0 0.0
  %6727 = vmatpush1.msra.mxu0 %v6088
  %6728 = vmatprep.subr.mxu0 0.0
  %6729 = vmatpush1.msra.mxu0 %v6089
  %6730 = vmatprep.subr.mxu0 0.0
  %6731 = vmatpush1.msra.mxu0 %v6090
  %6732 = vmatprep.subr.mxu0 0.0
  %6733 = vmatpush1.msra.mxu0 %v6091
  %6734 = vmatprep.subr.mxu0 0.0
  %6735 = vmatpush1.msra.mxu0 %v6092
  %6736 = vmatprep.subr.mxu0 0.0
  %6737 = vmatpush1.msra.mxu0 %v6093
  %6738 = vmatprep.subr.mxu0 0.0
  %6739 = vmatpush1.msra.mxu0 %v6094
  %6740 = vmatprep.subr.mxu0 0.0
  %6741 = vmatpush1.msra.mxu0 %v6095
  %6742 = vmatprep.subr.mxu0 0.0
  %6743 = vmatpush1.msra.mxu0 %v6096
  %6744 = vmatprep.subr.mxu0 0.0
  %6745 = vmatpush1.msra.mxu0 0.0
  %6746 = vmatprep.subr.mxu0 0.0
  %6747 = vmatpush1.msra.mxu0 0.0
  %6748 = vmatprep.subr.mxu0 0.0
  %6749 = vmatpush1.msra.mxu0 0.0
  %6750 = vmatprep.subr.mxu0 0.0
  %6751 = vmatpush1.msra.mxu0 0.0
  %6752 = vmatprep.subr.mxu0 0.0
  %6753 = vmatpush1.msra.mxu0 0.0
  %6754 = vmatprep.subr.mxu0 0.0
  %6755 = vmatpush1.msra.mxu0 0.0
  %6756 = vmatprep.subr.mxu0 0.0
  %6757 = vmatpush1.msra.mxu0 0.0
  %6758 = vmatprep.mubr.f32.mxu0 %v6671
  %6759 = vmatmul.mubr.f32.gmra.mrb[0].mxu0 %v6654
  %v6760 = vpop.f32.mrb[0].mxu0
  %v6761 = vadd.f32 0.0, %v6760
  %v6762 = vpop.f32.mrb[0].mxu0
  %6763 = vmatprep.mubr.f32.mxu0 %v6674
  %6764 = vmatmul.mubr.f32.gmra.mrb[0].mxu0 %v6656
  %v6765 = vpop.f32.mrb[0].mxu0
  %v6766 = vadd.f32 0.0, %v6765
  %v6767 = vpop.f32.mrb[0].mxu0
  %6768 = vmatprep.mubr.f32.mxu0 %v6677
  %6769 = vmatmul.mubr.f32.gmra.mrb[0].mxu0 %v6658
  %v6770 = vpop.f32.mrb[0].mxu0
  %v6771 = vadd.f32 0.0, %v6770
  %v6772 = vpop.f32.mrb[0].mxu0
  %6773 = vmatprep.mubr.f32.mxu0 %v6680
  %6774 = vmatmul.mubr.f32.gmra.mrb[0].mxu0 %v6660
  %v6775 = vpop.f32.mrb[0].mxu0
  %v6776 = vadd.f32 0.0, %v6775
  %v6777 = vpop.f32.mrb[0].mxu0
  %6778 = vmatprep.mubr.f32.mxu0 %v6683
  %6779 = vmatmul.mubr.f32.gmra.mrb[0].mxu0 %v6662
  %v6780 = vpop.f32.mrb[0].mxu0
  %v6781 = vadd.f32 0.0, %v6780
  %v6782 = vpop.f32.mrb[0].mxu0
  %6783 = vmatprep.mubr.f32.mxu0 %v6686
  %6784 = vmatmul.mubr.f32.gmra.mrb[0].mxu0 %v6664
  %v6785 = vpop.f32.mrb[0].mxu0
  %v6786 = vadd.f32 0.0, %v6785
  %v6787 = vpop.f32.mrb[0].mxu0
  %6788 = vmatprep.mubr.f32.mxu0 %v6689
  %6789 = vmatmul.mubr.f32.gmra.mrb[0].mxu0 %v6666
  %v6790 = vpop.f32.mrb[0].mxu0
  %v6791 = vadd.f32 0.0, %v6790
  %v6792 = vpop.f32.mrb[0].mxu0
  %6793 = vmatprep.mubr.f32.mxu0 %v6692
  %6794 = vmatmul.mubr.f32.gmra.mrb[0].mxu0 %v6668
  %v6795 = vpop.f32.mrb[0].mxu0
  %v6796 = vadd.f32 0.0, %v6795
  %v6797 = vpop.f32.mrb[0].mxu0
  %6798 = vdwg.mxu0
  %6807 = vrot.lane.b32.xlu0 %v6188, 127
  %v6808 = vpop.permute.xlu0 %6807
  %6809 = vrot.lane.b32.xlu0 %v6193, 127
  %v6810 = vpop.permute.xlu0 %6809
  %6811 = vrot.lane.b32.xlu0 %v6198, 127
  %v6812 = vpop.permute.xlu0 %6811
  %6813 = vrot.lane.b32.xlu0 %v6203, 127
  %v6814 = vpop.permute.xlu0 %6813
  %6815 = vrot.lane.b32.xlu0 %v6208, 127
  %v6816 = vpop.permute.xlu0 %6815
  %6817 = vrot.lane.b32.xlu0 %v6213, 127
  %v6818 = vpop.permute.xlu0 %6817
  %6819 = vrot.lane.b32.xlu0 %v6218, 127
  %v6820 = vpop.permute.xlu0 %6819
  %6821 = vrot.lane.b32.xlu0 %v6223, 127
  %v6822 = vpop.permute.xlu0 %6821
  %6831 = vrot.lane.b32.xlu0 %v6188, 126
  %v6832 = vpop.permute.xlu0 %6831
  %6833 = vrot.lane.b32.xlu0 %v6193, 126
  %v6834 = vpop.permute.xlu0 %6833
  %6835 = vrot.lane.b32.xlu0 %v6198, 126
  %v6836 = vpop.permute.xlu0 %6835
  %6837 = vrot.lane.b32.xlu0 %v6203, 126
  %v6838 = vpop.permute.xlu0 %6837
  %6839 = vrot.lane.b32.xlu0 %v6208, 126
  %v6840 = vpop.permute.xlu0 %6839
  %6841 = vrot.lane.b32.xlu0 %v6213, 126
  %v6842 = vpop.permute.xlu0 %6841
  %6843 = vrot.lane.b32.xlu0 %v6218, 126
  %v6844 = vpop.permute.xlu0 %6843
  %6845 = vrot.lane.b32.xlu0 %v6223, 126
  %v6846 = vpop.permute.xlu0 %6845
  %6855 = vrot.lane.b32.xlu0 %v6188, 122
  %v6856 = vpop.permute.xlu0 %6855
  %6857 = vrot.lane.b32.xlu0 %v6193, 122
  %v6858 = vpop.permute.xlu0 %6857
  %6859 = vrot.lane.b32.xlu0 %v6198, 122
  %v6860 = vpop.permute.xlu0 %6859
  %6861 = vrot.lane.b32.xlu0 %v6203, 122
  %v6862 = vpop.permute.xlu0 %6861
  %6863 = vrot.lane.b32.xlu0 %v6208, 122
  %v6864 = vpop.permute.xlu0 %6863
  %6865 = vrot.lane.b32.xlu0 %v6213, 122
  %v6866 = vpop.permute.xlu0 %6865
  %6867 = vrot.lane.b32.xlu0 %v6218, 122
  %v6868 = vpop.permute.xlu0 %6867
  %6869 = vrot.lane.b32.xlu0 %v6223, 122
  %v6870 = vpop.permute.xlu0 %6869
  %6879 = vrot.lane.b32.xlu0 %v6188, 121
  %v6880 = vpop.permute.xlu0 %6879
  %6881 = vrot.lane.b32.xlu0 %v6193, 121
  %v6882 = vpop.permute.xlu0 %6881
  %6883 = vrot.lane.b32.xlu0 %v6198, 121
  %v6884 = vpop.permute.xlu0 %6883
  %6885 = vrot.lane.b32.xlu0 %v6203, 121
  %v6886 = vpop.permute.xlu0 %6885
  %6887 = vrot.lane.b32.xlu0 %v6208, 121
  %v6888 = vpop.permute.xlu0 %6887
  %6889 = vrot.lane.b32.xlu0 %v6213, 121
  %v6890 = vpop.permute.xlu0 %6889
  %6891 = vrot.lane.b32.xlu0 %v6218, 121
  %v6892 = vpop.permute.xlu0 %6891
  %6893 = vrot.lane.b32.xlu0 %v6223, 121
  %v6894 = vpop.permute.xlu0 %6893
  %6903 = vrot.lane.b32.xlu0 %v6188, 120
  %v6904 = vpop.permute.xlu0 %6903
  %6905 = vrot.lane.b32.xlu0 %v6193, 120
  %v6906 = vpop.permute.xlu0 %6905
  %6907 = vrot.lane.b32.xlu0 %v6198, 120
  %v6908 = vpop.permute.xlu0 %6907
  %6909 = vrot.lane.b32.xlu0 %v6203, 120
  %v6910 = vpop.permute.xlu0 %6909
  %6911 = vrot.lane.b32.xlu0 %v6208, 120
  %v6912 = vpop.permute.xlu0 %6911
  %6913 = vrot.lane.b32.xlu0 %v6213, 120
  %v6914 = vpop.permute.xlu0 %6913
  %6915 = vrot.lane.b32.xlu0 %v6218, 120
  %v6916 = vpop.permute.xlu0 %6915
  %6917 = vrot.lane.b32.xlu0 %v6223, 120
  %v6918 = vpop.permute.xlu0 %6917
  %6927 = vrot.lane.b32.xlu0 %v6188, 116
  %v6928 = vpop.permute.xlu0 %6927
  %6929 = vrot.lane.b32.xlu0 %v6193, 116
  %v6930 = vpop.permute.xlu0 %6929
  %6931 = vrot.lane.b32.xlu0 %v6198, 116
  %v6932 = vpop.permute.xlu0 %6931
  %6933 = vrot.lane.b32.xlu0 %v6203, 116
  %v6934 = vpop.permute.xlu0 %6933
  %6935 = vrot.lane.b32.xlu0 %v6208, 116
  %v6936 = vpop.permute.xlu0 %6935
  %6937 = vrot.lane.b32.xlu0 %v6213, 116
  %v6938 = vpop.permute.xlu0 %6937
  %6939 = vrot.lane.b32.xlu0 %v6218, 116
  %v6940 = vpop.permute.xlu0 %6939
  %6941 = vrot.lane.b32.xlu0 %v6223, 116
  %v6942 = vpop.permute.xlu0 %6941
  %6951 = vrot.lane.b32.xlu0 %v6188, 115
  %v6952 = vpop.permute.xlu0 %6951
  %6953 = vrot.lane.b32.xlu0 %v6193, 115
  %v6954 = vpop.permute.xlu0 %6953
  %6955 = vrot.lane.b32.xlu0 %v6198, 115
  %v6956 = vpop.permute.xlu0 %6955
  %6957 = vrot.lane.b32.xlu0 %v6203, 115
  %v6958 = vpop.permute.xlu0 %6957
  %6959 = vrot.lane.b32.xlu0 %v6208, 115
  %v6960 = vpop.permute.xlu0 %6959
  %6961 = vrot.lane.b32.xlu0 %v6213, 115
  %v6962 = vpop.permute.xlu0 %6961
  %6963 = vrot.lane.b32.xlu0 %v6218, 115
  %v6964 = vpop.permute.xlu0 %6963
  %6965 = vrot.lane.b32.xlu0 %v6223, 115
  %v6966 = vpop.permute.xlu0 %6965
  %6975 = vrot.lane.b32.xlu0 %v6188, 114
  %v6976 = vpop.permute.xlu0 %6975
  %6977 = vrot.lane.b32.xlu0 %v6193, 114
  %v6978 = vpop.permute.xlu0 %6977
  %6979 = vrot.lane.b32.xlu0 %v6198, 114
  %v6980 = vpop.permute.xlu0 %6979
  %6981 = vrot.lane.b32.xlu0 %v6203, 114
  %v6982 = vpop.permute.xlu0 %6981
  %6983 = vrot.lane.b32.xlu0 %v6208, 114
  %v6984 = vpop.permute.xlu0 %6983
  %6985 = vrot.lane.b32.xlu0 %v6213, 114
  %v6986 = vpop.permute.xlu0 %6985
  %6987 = vrot.lane.b32.xlu0 %v6218, 114
  %v6988 = vpop.permute.xlu0 %6987
  %6989 = vrot.lane.b32.xlu0 %v6223, 114
  %v6990 = vpop.permute.xlu0 %6989
  %v6999 = vld [vmem:[%s57] sm:$0xff]
  %v7000 = vld [vmem:[%s57 + $0x8] sm:$0xff]
  %v7001 = vld [vmem:[%s57 + $0x10] sm:$0xf]
  %v7002 = vld [vmem:[%s57 + $0x14] sm:$0xff]
  %v7003 = vld [vmem:[%s57 + $0x1c] sm:$0xff]
  %v7004 = vld [vmem:[%s57 + $0x24] sm:$0xf]
  %v7005 = vld [vmem:[%s57 + $0x28] sm:$0xff]
  %v7006 = vld [vmem:[%s57 + $0x30] sm:$0xff]
  %v7007 = vld [vmem:[%s57 + $0x38] sm:$0xf]
  %v7008 = vld [vmem:[%s57 + $0x3c] sm:$0xff]
  %v7009 = vld [vmem:[%s57 + $0x44] sm:$0xff]
  %v7010 = vld [vmem:[%s57 + $0x4c] sm:$0xf]
  %v7011 = vld [vmem:[%s57 + $0x50] sm:$0xff]
  %v7012 = vld [vmem:[%s57 + $0x58] sm:$0xff]
  %v7013 = vld [vmem:[%s57 + $0x60] sm:$0xf]
  %v7014 = vld [vmem:[%s57 + $0x64] sm:$0xff]
  %v7015 = vld [vmem:[%s57 + $0x6c] sm:$0xff]
  %v7016 = vld [vmem:[%s57 + $0x74] sm:$0xf]
  %v7017 = vld [vmem:[%s57 + $0x78] sm:$0xff]
  %v7018 = vld [vmem:[%s57 + $0x80] sm:$0xff]
  %v7019 = vld [vmem:[%s57 + $0x88] sm:$0xf]
  %v7020 = vld [vmem:[%s57 + $0x8c] sm:$0xff]
  %v7021 = vld [vmem:[%s57 + $0x94] sm:$0xff]
  %v7022 = vld [vmem:[%s57 + $0x9c] sm:$0xf]
  %v7023 = vpack.c.bf16 %v6193, %v6188
  %v7024 = vpack.c.bf16 %v6203, %v6198
  %v7025 = vpack.c.bf16 %v6213, %v6208
  %v7026 = vpack.c.bf16 %v6223, %v6218
  %v7027 = vpack.c.bf16 %v6810, %v6808
  %v7028 = vpack.c.bf16 %v6814, %v6812
  %v7029 = vpack.c.bf16 %v6818, %v6816
  %v7030 = vpack.c.bf16 %v6822, %v6820
  %v7031 = vpack.c.bf16 %v6834, %v6832
  %v7032 = vpack.c.bf16 %v6838, %v6836
  %v7033 = vpack.c.bf16 %v6842, %v6840
  %v7034 = vpack.c.bf16 %v6846, %v6844
  %v7035 = vpack.c.bf16 %v6858, %v6856
  %v7036 = vpack.c.bf16 %v6862, %v6860
  %v7037 = vpack.c.bf16 %v6866, %v6864
  %v7038 = vpack.c.bf16 %v6870, %v6868
  %v7039 = vpack.c.bf16 %v6882, %v6880
  %v7040 = vpack.c.bf16 %v6886, %v6884
  %v7041 = vpack.c.bf16 %v6890, %v6888
  %v7042 = vpack.c.bf16 %v6894, %v6892
  %v7043 = vpack.c.bf16 %v6906, %v6904
  %v7044 = vpack.c.bf16 %v6910, %v6908
  %v7045 = vpack.c.bf16 %v6914, %v6912
  %v7046 = vpack.c.bf16 %v6918, %v6916
  %v7047 = vpack.c.bf16 %v6930, %v6928
  %v7048 = vpack.c.bf16 %v6934, %v6932
  %v7049 = vpack.c.bf16 %v6938, %v6936
  %v7050 = vpack.c.bf16 %v6942, %v6940
  %v7051 = vpack.c.bf16 %v6954, %v6952
  %v7052 = vpack.c.bf16 %v6958, %v6956
  %v7053 = vpack.c.bf16 %v6962, %v6960
  %v7054 = vpack.c.bf16 %v6966, %v6964
  %v7055 = vpack.c.bf16 %v6978, %v6976
  %v7056 = vpack.c.bf16 %v6982, %v6980
  %v7057 = vpack.c.bf16 %v6986, %v6984
  %v7058 = vpack.c.bf16 %v6990, %v6988
  %v7083 = vunpack.c.l.b16 %v6999
  %v7084 = vunpack.c.h.b16 %v6999
  %v7085 = vunpack.c.l.b16 %v7000
  %v7086 = vunpack.c.h.b16 %v7000
  %v7087 = vunpack.c.l.b16 %v7001
  %v7088 = vunpack.c.l.b16 %v7002
  %v7089 = vunpack.c.h.b16 %v7002
  %v7090 = vunpack.c.l.b16 %v7003
  %v7091 = vunpack.c.h.b16 %v7003
  %v7092 = vunpack.c.l.b16 %v7004
  %v7093 = vunpack.c.l.b16 %v7005
  %v7094 = vunpack.c.h.b16 %v7005
  %v7095 = vunpack.c.l.b16 %v7006
  %v7096 = vunpack.c.h.b16 %v7006
  %v7097 = vunpack.c.l.b16 %v7007
  %v7098 = vunpack.c.l.b16 %v7008
  %v7099 = vunpack.c.h.b16 %v7008
  %v7100 = vunpack.c.l.b16 %v7009
  %v7101 = vunpack.c.h.b16 %v7009
  %v7102 = vunpack.c.l.b16 %v7010
  %v7103 = vunpack.c.l.b16 %v7011
  %v7104 = vunpack.c.h.b16 %v7011
  %v7105 = vunpack.c.l.b16 %v7012
  %v7106 = vunpack.c.h.b16 %v7012
  %v7107 = vunpack.c.l.b16 %v7013
  %v7108 = vunpack.c.l.b16 %v7014
  %v7109 = vunpack.c.h.b16 %v7014
  %v7110 = vunpack.c.l.b16 %v7015
  %v7111 = vunpack.c.h.b16 %v7015
  %v7112 = vunpack.c.l.b16 %v7016
  %v7113 = vunpack.c.l.b16 %v7017
  %v7114 = vunpack.c.h.b16 %v7017
  %v7115 = vunpack.c.l.b16 %v7018
  %v7116 = vunpack.c.h.b16 %v7018
  %v7117 = vunpack.c.l.b16 %v7019
  %v7118 = vunpack.c.l.b16 %v7020
  %v7119 = vunpack.c.h.b16 %v7020
  %v7120 = vunpack.c.l.b16 %v7021
  %v7121 = vunpack.c.h.b16 %v7021
  %v7122 = vunpack.c.l.b16 %v7022
  %v7123 = vpack.c.b16 %v7088, %v7083
  %v7124 = vpack.c.b16 %v7089, %v7084
  %v7125 = vpack.c.b16 %v7090, %v7085
  %v7126 = vpack.c.b16 %v7091, %v7086
  %v7127 = vpack.c.b16 %v7092, %v7087
  %v7128 = vpack.c.b16 %v7098, %v7093
  %v7129 = vpack.c.b16 %v7099, %v7094
  %v7130 = vpack.c.b16 %v7100, %v7095
  %v7131 = vpack.c.b16 %v7101, %v7096
  %v7132 = vpack.c.b16 %v7102, %v7097
  %v7133 = vpack.c.b16 %v7108, %v7103
  %v7134 = vpack.c.b16 %v7109, %v7104
  %v7135 = vpack.c.b16 %v7110, %v7105
  %v7136 = vpack.c.b16 %v7111, %v7106
  %v7137 = vpack.c.b16 %v7112, %v7107
  %v7138 = vpack.c.b16 %v7118, %v7113
  %v7139 = vpack.c.b16 %v7119, %v7114
  %v7140 = vpack.c.b16 %v7120, %v7115
  %v7141 = vpack.c.b16 %v7121, %v7116
  %v7142 = vpack.c.b16 %v7122, %v7117
  %vm7159 = vcmask 523264
  %v7161 = vsel %vm7159, %v7127, 0
  %v7164 = vsel %vm7159, %v7132, 0
  %v7167 = vsel %vm7159, %v7137, 0
  %v7170 = vsel %vm7159, %v7142, 0
  %7172 = vmatprep.subr.bf16.mxu0 0
  %7173 = vmatpush1.bf16.msra.mxu0 %v7023
  %7174 = vmatprep.subr.bf16.mxu0 0
  %7175 = vmatpush1.bf16.msra.mxu0 %v7024
  %7176 = vmatprep.subr.bf16.mxu0 0
  %7177 = vmatpush1.bf16.msra.mxu0 %v7025
  %7178 = vmatprep.subr.bf16.mxu0 0
  %7179 = vmatpush1.bf16.msra.mxu0 %v7026
  %7180 = vmatprep.subr.bf16.mxu0 0
  %7181 = vmatpush1.bf16.msra.mxu0 %v7027
  %7182 = vmatprep.subr.bf16.mxu0 0
  %7183 = vmatpush1.bf16.msra.mxu0 %v7028
  %7184 = vmatprep.subr.bf16.mxu0 0
  %7185 = vmatpush1.bf16.msra.mxu0 %v7029
  %7186 = vmatprep.subr.bf16.mxu0 0
  %7187 = vmatpush1.bf16.msra.mxu0 %v7030
  %7188 = vmatprep.subr.bf16.mxu0 0
  %7189 = vmatpush1.bf16.msra.mxu0 %v7031
  %7190 = vmatprep.subr.bf16.mxu0 0
  %7191 = vmatpush1.bf16.msra.mxu0 %v7032
  %7192 = vmatprep.subr.bf16.mxu0 0
  %7193 = vmatpush1.bf16.msra.mxu0 %v7033
  %7194 = vmatprep.subr.bf16.mxu0 0
  %7195 = vmatpush1.bf16.msra.mxu0 %v7034
  %7196 = vmatprep.subr.bf16.mxu0 0
  %7197 = vmatpush1.bf16.msra.mxu0 %v7035
  %7198 = vmatprep.subr.bf16.mxu0 0
  %7199 = vmatpush1.bf16.msra.mxu0 %v7036
  %7200 = vmatprep.subr.bf16.mxu0 0
  %7201 = vmatpush1.bf16.msra.mxu0 %v7037
  %7202 = vmatprep.subr.bf16.mxu0 0
  %7203 = vmatpush1.bf16.msra.mxu0 %v7038
  %7204 = vmatprep.mubr.bf16.mxu0 %v7124
  %7205 = vmatmul.mubr.bf16.gmra.mrb[0].mxu0 %v7123
  %v7206 = vpop.f32.mrb[0].mxu0
  %v7207 = vadd.f32 0.0, %v7206
  %v7208 = vpop.f32.mrb[0].mxu0
  %v7209 = vpop.f32.mrb[0].mxu0
  %v7210 = vadd.f32 0.0, %v7209
  %v7211 = vpop.f32.mrb[0].mxu0
  %7212 = vmatprep.mubr.bf16.mxu0 %v7129
  %7213 = vmatmul.mubr.bf16.gmra.mrb[0].mxu0 %v7128
  %v7214 = vpop.f32.mrb[0].mxu0
  %v7215 = vadd.f32 0.0, %v7214
  %v7216 = vpop.f32.mrb[0].mxu0
  %v7217 = vpop.f32.mrb[0].mxu0
  %v7218 = vadd.f32 0.0, %v7217
  %v7219 = vpop.f32.mrb[0].mxu0
  %7220 = vmatprep.mubr.bf16.mxu0 %v7134
  %7221 = vmatmul.mubr.bf16.gmra.mrb[0].mxu0 %v7133
  %v7222 = vpop.f32.mrb[0].mxu0
  %v7223 = vadd.f32 0.0, %v7222
  %v7224 = vpop.f32.mrb[0].mxu0
  %v7225 = vpop.f32.mrb[0].mxu0
  %v7226 = vadd.f32 0.0, %v7225
  %v7227 = vpop.f32.mrb[0].mxu0
  %7228 = vmatprep.mubr.bf16.mxu0 %v7139
  %7229 = vmatmul.mubr.bf16.gmra.mrb[0].mxu0 %v7138
  %v7230 = vpop.f32.mrb[0].mxu0
  %v7231 = vadd.f32 0.0, %v7230
  %v7232 = vpop.f32.mrb[0].mxu0
  %v7233 = vpop.f32.mrb[0].mxu0
  %v7234 = vadd.f32 0.0, %v7233
  %v7235 = vpop.f32.mrb[0].mxu0
  %7236 = vdwg.mxu0
  %7237 = vmatprep.subr.bf16.mxu0 0
  %7238 = vmatpush1.bf16.msra.mxu0 %v7039
  %7239 = vmatprep.subr.bf16.mxu0 0
  %7240 = vmatpush1.bf16.msra.mxu0 %v7040
  %7241 = vmatprep.subr.bf16.mxu0 0
  %7242 = vmatpush1.bf16.msra.mxu0 %v7041
  %7243 = vmatprep.subr.bf16.mxu0 0
  %7244 = vmatpush1.bf16.msra.mxu0 %v7042
  %7245 = vmatprep.subr.bf16.mxu0 0
  %7246 = vmatpush1.bf16.msra.mxu0 %v7043
  %7247 = vmatprep.subr.bf16.mxu0 0
  %7248 = vmatpush1.bf16.msra.mxu0 %v7044
  %7249 = vmatprep.subr.bf16.mxu0 0
  %7250 = vmatpush1.bf16.msra.mxu0 %v7045
  %7251 = vmatprep.subr.bf16.mxu0 0
  %7252 = vmatpush1.bf16.msra.mxu0 %v7046
  %7253 = vmatprep.subr.bf16.mxu0 0
  %7254 = vmatpush1.bf16.msra.mxu0 %v7047
  %7255 = vmatprep.subr.bf16.mxu0 0
  %7256 = vmatpush1.bf16.msra.mxu0 %v7048
  %7257 = vmatprep.subr.bf16.mxu0 0
  %7258 = vmatpush1.bf16.msra.mxu0 %v7049
  %7259 = vmatprep.subr.bf16.mxu0 0
  %7260 = vmatpush1.bf16.msra.mxu0 %v7050
  %7261 = vmatprep.subr.bf16.mxu0 0
  %7262 = vmatpush1.bf16.msra.mxu0 %v7051
  %7263 = vmatprep.subr.bf16.mxu0 0
  %7264 = vmatpush1.bf16.msra.mxu0 %v7052
  %7265 = vmatprep.subr.bf16.mxu0 0
  %7266 = vmatpush1.bf16.msra.mxu0 %v7053
  %7267 = vmatprep.subr.bf16.mxu0 0
  %7268 = vmatpush1.bf16.msra.mxu0 %v7054
  %7269 = vmatprep.mubr.bf16.mxu0 %v7126
  %7270 = vmatmul.mubr.bf16.gmra.mrb[0].mxu0 %v7125
  %v7271 = vpop.f32.mrb[0].mxu0
  %v7272 = vadd.f32 %v7207, %v7271
  %v7273 = vpop.f32.mrb[0].mxu0
  %v7274 = vpop.f32.mrb[0].mxu0
  %v7275 = vadd.f32 %v7210, %v7274
  %v7276 = vpop.f32.mrb[0].mxu0
  %7277 = vmatprep.mubr.bf16.mxu0 %v7131
  %7278 = vmatmul.mubr.bf16.gmra.mrb[0].mxu0 %v7130
  %v7279 = vpop.f32.mrb[0].mxu0
  %v7280 = vadd.f32 %v7215, %v7279
  %v7281 = vpop.f32.mrb[0].mxu0
  %v7282 = vpop.f32.mrb[0].mxu0
  %v7283 = vadd.f32 %v7218, %v7282
  %v7284 = vpop.f32.mrb[0].mxu0
  %7285 = vmatprep.mubr.bf16.mxu0 %v7136
  %7286 = vmatmul.mubr.bf16.gmra.mrb[0].mxu0 %v7135
  %v7287 = vpop.f32.mrb[0].mxu0
  %v7288 = vadd.f32 %v7223, %v7287
  %v7289 = vpop.f32.mrb[0].mxu0
  %v7290 = vpop.f32.mrb[0].mxu0
  %v7291 = vadd.f32 %v7226, %v7290
  %v7292 = vpop.f32.mrb[0].mxu0
  %7293 = vmatprep.mubr.bf16.mxu0 %v7141
  %7294 = vmatmul.mubr.bf16.gmra.mrb[0].mxu0 %v7140
  %v7295 = vpop.f32.mrb[0].mxu0
  %v7296 = vadd.f32 %v7231, %v7295
  %v7297 = vpop.f32.mrb[0].mxu0
  %v7298 = vpop.f32.mrb[0].mxu0
  %v7299 = vadd.f32 %v7234, %v7298
  %v7300 = vpop.f32.mrb[0].mxu0
  %7301 = vdwg.mxu0
  %7302 = vmatprep.subr.bf16.mxu0 0
  %7303 = vmatpush1.bf16.msra.mxu0 %v7055
  %7304 = vmatprep.subr.bf16.mxu0 0
  %7305 = vmatpush1.bf16.msra.mxu0 %v7056
  %7306 = vmatprep.subr.bf16.mxu0 0
  %7307 = vmatpush1.bf16.msra.mxu0 %v7057
  %7308 = vmatprep.subr.bf16.mxu0 0
  %7309 = vmatpush1.bf16.msra.mxu0 %v7058
  %7310 = vmatprep.subr.bf16.mxu0 0
  %7311 = vmatpush1.bf16.msra.mxu0 0
  %7312 = vmatprep.subr.bf16.mxu0 0
  %7313 = vmatpush1.bf16.msra.mxu0 0
  %7314 = vmatprep.subr.bf16.mxu0 0
  %7315 = vmatpush1.bf16.msra.mxu0 0
  %7316 = vmatprep.subr.bf16.mxu0 0
  %7317 = vmatpush1.bf16.msra.mxu0 0
  %7318 = vmatprep.subr.bf16.mxu0 0
  %7319 = vmatpush1.bf16.msra.mxu0 0
  %7320 = vmatprep.subr.bf16.mxu0 0
  %7321 = vmatpush1.bf16.msra.mxu0 0
  %7322 = vmatprep.subr.bf16.mxu0 0
  %7323 = vmatpush1.bf16.msra.mxu0 0
  %7324 = vmatprep.subr.bf16.mxu0 0
  %7325 = vmatpush1.bf16.msra.mxu0 0
  %7326 = vmatprep.subr.bf16.mxu0 0
  %7327 = vmatpush1.bf16.msra.mxu0 0
  %7328 = vmatprep.subr.bf16.mxu0 0
  %7329 = vmatpush1.bf16.msra.mxu0 0
  %7330 = vmatprep.subr.bf16.mxu0 0
  %7331 = vmatpush1.bf16.msra.mxu0 0
  %7332 = vmatprep.subr.bf16.mxu0 0
  %7333 = vmatpush1.bf16.msra.mxu0 0
  %7334 = vmatprep.mubr.bf16.mxu0 0
  %7335 = vmatmul.mubr.bf16.gmra.mrb[0].mxu0 %v7161
  %v7336 = vpop.f32.mrb[0].mxu0
  %v7337 = vadd.f32 %v7272, %v7336
  %v7338 = vpop.f32.mrb[0].mxu0
  %v7339 = vpop.f32.mrb[0].mxu0
  %v7340 = vadd.f32 %v7275, %v7339
  %v7341 = vpop.f32.mrb[0].mxu0
  %7342 = vmatprep.mubr.bf16.mxu0 0
  %7343 = vmatmul.mubr.bf16.gmra.mrb[0].mxu0 %v7164
  %v7344 = vpop.f32.mrb[0].mxu0
  %v7345 = vadd.f32 %v7280, %v7344
  %v7346 = vpop.f32.mrb[0].mxu0
  %v7347 = vpop.f32.mrb[0].mxu0
  %v7348 = vadd.f32 %v7283, %v7347
  %v7349 = vpop.f32.mrb[0].mxu0
  %7350 = vmatprep.mubr.bf16.mxu0 0
  %7351 = vmatmul.mubr.bf16.gmra.mrb[0].mxu0 %v7167
  %v7352 = vpop.f32.mrb[0].mxu0
  %v7353 = vadd.f32 %v7288, %v7352
  %v7354 = vpop.f32.mrb[0].mxu0
  %v7355 = vpop.f32.mrb[0].mxu0
  %v7356 = vadd.f32 %v7291, %v7355
  %v7357 = vpop.f32.mrb[0].mxu0
  %7358 = vmatprep.mubr.bf16.mxu0 0
  %7359 = vmatmul.mubr.bf16.gmra.mrb[0].mxu0 %v7170
  %v7360 = vpop.f32.mrb[0].mxu0
  %v7361 = vadd.f32 %v7296, %v7360
  %v7362 = vpop.f32.mrb[0].mxu0
  %v7363 = vpop.f32.mrb[0].mxu0
  %v7364 = vadd.f32 %v7299, %v7363
  %v7365 = vpop.f32.mrb[0].mxu0
  %7366 = vdwg.mxu0
  %v7367 = vld [vmem:[%s61] sm:$0x1]
  %v7369 = vlaneseq
  %v7370 = vshrl.u32 %v7369, 7
  %v7371 = vsub.s32 0, %v7370
  %v7372 = vrot.slane %v7367, %v7371
  %v7374 = vmul.f32 %v7337, %v7372
  %v7375 = vmul.f32 %v7340, %v7372
  %v7376 = vmul.f32 %v7345, %v7372
  %v7377 = vmul.f32 %v7348, %v7372
  %v7378 = vmul.f32 %v7353, %v7372
  %v7379 = vmul.f32 %v7356, %v7372
  %v7380 = vmul.f32 %v7361, %v7372
  %v7381 = vmul.f32 %v7364, %v7372
  %v7382 = vsel %vm400, %v7374, 0.0
  %7383 = vadd.xlane.f32.xlu0 %v7382
  %v7384 = vpop.xlane.xlu0 %7383
  %v7385 = vsel %vm400, %v7375, 0.0
  %7386 = vadd.xlane.f32.xlu0 %v7385
  %v7387 = vpop.xlane.xlu0 %7386
  %v7388 = vsel %vm400, %v7376, 0.0
  %7389 = vadd.xlane.f32.xlu0 %v7388
  %v7390 = vpop.xlane.xlu0 %7389
  %v7391 = vsel %vm400, %v7377, 0.0
  %7392 = vadd.xlane.f32.xlu0 %v7391
  %v7393 = vpop.xlane.xlu0 %7392
  %v7394 = vsel %vm400, %v7378, 0.0
  %7395 = vadd.xlane.f32.xlu0 %v7394
  %v7396 = vpop.xlane.xlu0 %7395
  %v7397 = vsel %vm400, %v7379, 0.0
  %7398 = vadd.xlane.f32.xlu0 %v7397
  %v7399 = vpop.xlane.xlu0 %7398
  %v7400 = vsel %vm400, %v7380, 0.0
  %7401 = vadd.xlane.f32.xlu0 %v7400
  %v7402 = vpop.xlane.xlu0 %7401
  %v7403 = vsel %vm400, %v7381, 0.0
  %7404 = vadd.xlane.f32.xlu0 %v7403
  %v7405 = vpop.xlane.xlu0 %7404
  %v7406 = vmul.f32 %v7384, 0.03125
  %v7407 = vmul.f32 %v7387, 0.03125
  %v7408 = vmul.f32 %v7390, 0.03125
  %v7409 = vmul.f32 %v7393, 0.03125
  %v7410 = vmul.f32 %v7396, 0.03125
  %v7411 = vmul.f32 %v7399, 0.03125
  %v7412 = vmul.f32 %v7402, 0.03125
  %v7413 = vmul.f32 %v7405, 0.03125
  %v7414 = vmul.f32 %v7337, %v7337
  %v7415 = vmul.f32 %v7340, %v7340
  %v7416 = vmul.f32 %v7345, %v7345
  %v7417 = vmul.f32 %v7348, %v7348
  %v7418 = vmul.f32 %v7353, %v7353
  %v7419 = vmul.f32 %v7356, %v7356
  %v7420 = vmul.f32 %v7361, %v7361
  %v7421 = vmul.f32 %v7364, %v7364
  %v7422 = vmul.f32 %v7414, %v7372
  %v7423 = vmul.f32 %v7415, %v7372
  %v7424 = vmul.f32 %v7416, %v7372
  %v7425 = vmul.f32 %v7417, %v7372
  %v7426 = vmul.f32 %v7418, %v7372
  %v7427 = vmul.f32 %v7419, %v7372
  %v7428 = vmul.f32 %v7420, %v7372
  %v7429 = vmul.f32 %v7421, %v7372
  %v7430 = vsel %vm400, %v7422, 0.0
  %7431 = vadd.xlane.f32.xlu0 %v7430
  %v7432 = vpop.xlane.xlu0 %7431
  %v7433 = vsel %vm400, %v7423, 0.0
  %7434 = vadd.xlane.f32.xlu0 %v7433
  %v7435 = vpop.xlane.xlu0 %7434
  %v7436 = vsel %vm400, %v7424, 0.0
  %7437 = vadd.xlane.f32.xlu0 %v7436
  %v7438 = vpop.xlane.xlu0 %7437
  %v7439 = vsel %vm400, %v7425, 0.0
  %7440 = vadd.xlane.f32.xlu0 %v7439
  %v7441 = vpop.xlane.xlu0 %7440
  %v7442 = vsel %vm400, %v7426, 0.0
  %7443 = vadd.xlane.f32.xlu0 %v7442
  %v7444 = vpop.xlane.xlu0 %7443
  %v7445 = vsel %vm400, %v7427, 0.0
  %7446 = vadd.xlane.f32.xlu0 %v7445
  %v7447 = vpop.xlane.xlu0 %7446
  %v7448 = vsel %vm400, %v7428, 0.0
  %7449 = vadd.xlane.f32.xlu0 %v7448
  %v7450 = vpop.xlane.xlu0 %7449
  %v7451 = vsel %vm400, %v7429, 0.0
  %7452 = vadd.xlane.f32.xlu0 %v7451
  %v7453 = vpop.xlane.xlu0 %7452
  %v7454 = vmul.f32 %v7432, 0.03125
  %v7455 = vmul.f32 %v7435, 0.03125
  %v7456 = vmul.f32 %v7438, 0.03125
  %v7457 = vmul.f32 %v7441, 0.03125
  %v7458 = vmul.f32 %v7444, 0.03125
  %v7459 = vmul.f32 %v7447, 0.03125
  %v7460 = vmul.f32 %v7450, 0.03125
  %v7461 = vmul.f32 %v7453, 0.03125
  %v7462 = vmul.f32 %v7406, %v7406
  %v7463 = vmul.f32 %v7407, %v7407
  %v7464 = vmul.f32 %v7408, %v7408
  %v7465 = vmul.f32 %v7409, %v7409
  %v7466 = vmul.f32 %v7410, %v7410
  %v7467 = vmul.f32 %v7411, %v7411
  %v7468 = vmul.f32 %v7412, %v7412
  %v7469 = vmul.f32 %v7413, %v7413
  %v7470 = vsub.f32 %v7454, %v7462
  %v7471 = vsub.f32 %v7455, %v7463
  %v7472 = vsub.f32 %v7456, %v7464
  %v7473 = vsub.f32 %v7457, %v7465
  %v7474 = vsub.f32 %v7458, %v7466
  %v7475 = vsub.f32 %v7459, %v7467
  %v7476 = vsub.f32 %v7460, %v7468
  %v7477 = vsub.f32 %v7461, %v7469
  %v7478 = vld [vmem:[%s53] sm:$0xff]
  %v7479 = vld [vmem:[%s53 + $0x8] sm:$0xff]
  %v7480 = vld [vmem:[%s53 + $0x10] sm:$0xff]
  %v7481 = vld [vmem:[%s53 + $0x18] sm:$0xff]
  %v7482 = vld [vmem:[%s53 + $0x20] sm:$0xff]
  %v7483 = vld [vmem:[%s53 + $0x28] sm:$0xff]
  %v7484 = vld [vmem:[%s53 + $0x30] sm:$0xff]
  %v7485 = vld [vmem:[%s53 + $0x38] sm:$0xff]
  %v7486 = vadd.f32 %v7470, 1e-05
  %v7487 = vadd.f32 %v7471, 1e-05
  %v7488 = vadd.f32 %v7472, 1e-05
  %v7489 = vadd.f32 %v7473, 1e-05
  %v7490 = vadd.f32 %v7474, 1e-05
  %v7491 = vadd.f32 %v7475, 1e-05
  %v7492 = vadd.f32 %v7476, 1e-05
  %v7493 = vadd.f32 %v7477, 1e-05
  %v7494 = vrsqrt.pop %v7486
  %v7495 = vrsqrt.pop %v7487
  %v7496 = vrsqrt.pop %v7488
  %v7497 = vrsqrt.pop %v7489
  %v7498 = vrsqrt.pop %v7490
  %v7499 = vrsqrt.pop %v7491
  %v7500 = vrsqrt.pop %v7492
  %v7501 = vrsqrt.pop %v7493
  %v7502 = vmul.f32 %v7478, %v7494
  %v7503 = vmul.f32 %v7479, %v7495
  %v7504 = vmul.f32 %v7480, %v7496
  %v7505 = vmul.f32 %v7481, %v7497
  %v7506 = vmul.f32 %v7482, %v7498
  %v7507 = vmul.f32 %v7483, %v7499
  %v7508 = vmul.f32 %v7484, %v7500
  %v7509 = vmul.f32 %v7485, %v7501
  %7511 = vset.pattern.permute.xlu0 0
  %7512 = vperm.xlu0 %7511, %v7502
  %v7513 = vpop.permute.xlu0 %7512
  %7516 = vset.pattern.permute.xlu0 0
  %7517 = vperm.xlu0 %7516, %v7503
  %v7518 = vpop.permute.xlu0 %7517
  %7521 = vset.pattern.permute.xlu0 0
  %7522 = vperm.xlu0 %7521, %v7504
  %v7523 = vpop.permute.xlu0 %7522
  %7526 = vset.pattern.permute.xlu0 0
  %7527 = vperm.xlu0 %7526, %v7505
  %v7528 = vpop.permute.xlu0 %7527
  %7531 = vset.pattern.permute.xlu0 0
  %7532 = vperm.xlu0 %7531, %v7506
  %v7533 = vpop.permute.xlu0 %7532
  %7536 = vset.pattern.permute.xlu0 0
  %7537 = vperm.xlu0 %7536, %v7507
  %v7538 = vpop.permute.xlu0 %7537
  %7541 = vset.pattern.permute.xlu0 0
  %7542 = vperm.xlu0 %7541, %v7508
  %v7543 = vpop.permute.xlu0 %7542
  %7546 = vset.pattern.permute.xlu0 0
  %7547 = vperm.xlu0 %7546, %v7509
  %v7548 = vpop.permute.xlu0 %7547
  %v7550 = vmul.f32 %v7337, %v7513
  %v7551 = vmul.f32 %v7340, %v7518
  %v7552 = vmul.f32 %v7345, %v7523
  %v7553 = vmul.f32 %v7348, %v7528
  %v7554 = vmul.f32 %v7353, %v7533
  %v7555 = vmul.f32 %v7356, %v7538
  %v7556 = vmul.f32 %v7361, %v7543
  %v7557 = vmul.f32 %v7364, %v7548
  %v7558 = vld [vmem:[%s55] sm:$0xff]
  %v7559 = vld [vmem:[%s55 + $0x8] sm:$0xff]
  %v7560 = vld [vmem:[%s55 + $0x10] sm:$0xff]
  %v7561 = vld [vmem:[%s55 + $0x18] sm:$0xff]
  %v7562 = vld [vmem:[%s55 + $0x20] sm:$0xff]
  %v7563 = vld [vmem:[%s55 + $0x28] sm:$0xff]
  %v7564 = vld [vmem:[%s55 + $0x30] sm:$0xff]
  %v7565 = vld [vmem:[%s55 + $0x38] sm:$0xff]
  %v7566 = vmul.f32 %v7406, %v7502
  %v7567 = vmul.f32 %v7407, %v7503
  %v7568 = vmul.f32 %v7408, %v7504
  %v7569 = vmul.f32 %v7409, %v7505
  %v7570 = vmul.f32 %v7410, %v7506
  %v7571 = vmul.f32 %v7411, %v7507
  %v7572 = vmul.f32 %v7412, %v7508
  %v7573 = vmul.f32 %v7413, %v7509
  %v7574 = vsub.f32 %v7558, %v7566
  %v7575 = vsub.f32 %v7559, %v7567
  %v7576 = vsub.f32 %v7560, %v7568
  %v7577 = vsub.f32 %v7561, %v7569
  %v7578 = vsub.f32 %v7562, %v7570
  %v7579 = vsub.f32 %v7563, %v7571
  %v7580 = vsub.f32 %v7564, %v7572
  %v7581 = vsub.f32 %v7565, %v7573
  %7583 = vset.pattern.permute.xlu0 0
  %7584 = vperm.xlu0 %7583, %v7574
  %v7585 = vpop.permute.xlu0 %7584
  %7588 = vset.pattern.permute.xlu0 0
  %7589 = vperm.xlu0 %7588, %v7575
  %v7590 = vpop.permute.xlu0 %7589
  %7593 = vset.pattern.permute.xlu0 0
  %7594 = vperm.xlu0 %7593, %v7576
  %v7595 = vpop.permute.xlu0 %7594
  %7598 = vset.pattern.permute.xlu0 0
  %7599 = vperm.xlu0 %7598, %v7577
  %v7600 = vpop.permute.xlu0 %7599
  %7603 = vset.pattern.permute.xlu0 0
  %7604 = vperm.xlu0 %7603, %v7578
  %v7605 = vpop.permute.xlu0 %7604
  %7608 = vset.pattern.permute.xlu0 0
  %7609 = vperm.xlu0 %7608, %v7579
  %v7610 = vpop.permute.xlu0 %7609
  %7613 = vset.pattern.permute.xlu0 0
  %7614 = vperm.xlu0 %7613, %v7580
  %v7615 = vpop.permute.xlu0 %7614
  %7618 = vset.pattern.permute.xlu0 0
  %7619 = vperm.xlu0 %7618, %v7581
  %v7620 = vpop.permute.xlu0 %7619
  %v7622 = vadd.f32 %v7550, %v7585
  %v7623 = vadd.f32 %v7551, %v7590
  %v7624 = vadd.f32 %v7552, %v7595
  %v7625 = vadd.f32 %v7553, %v7600
  %v7626 = vadd.f32 %v7554, %v7605
  %v7627 = vadd.f32 %v7555, %v7610
  %v7628 = vadd.f32 %v7556, %v7615
  %v7629 = vadd.f32 %v7557, %v7620
  %7638 = vrot.lane.b32.xlu0 %v6761, 121
  %v7639 = vpop.permute.xlu0 %7638
  %7640 = vrot.lane.b32.xlu0 %v6766, 121
  %v7641 = vpop.permute.xlu0 %7640
  %7642 = vrot.lane.b32.xlu0 %v6771, 121
  %v7643 = vpop.permute.xlu0 %7642
  %7644 = vrot.lane.b32.xlu0 %v6776, 121
  %v7645 = vpop.permute.xlu0 %7644
  %7646 = vrot.lane.b32.xlu0 %v6781, 121
  %v7647 = vpop.permute.xlu0 %7646
  %7648 = vrot.lane.b32.xlu0 %v6786, 121
  %v7649 = vpop.permute.xlu0 %7648
  %7650 = vrot.lane.b32.xlu0 %v6791, 121
  %v7651 = vpop.permute.xlu0 %7650
  %7652 = vrot.lane.b32.xlu0 %v6796, 121
  %v7653 = vpop.permute.xlu0 %7652
  %v7662 = vadd.f32 %v7622, %v7639
  %v7663 = vadd.f32 %v7623, %v7641
  %v7664 = vadd.f32 %v7624, %v7643
  %v7665 = vadd.f32 %v7625, %v7645
  %v7666 = vadd.f32 %v7626, %v7647
  %v7667 = vadd.f32 %v7627, %v7649
  %v7668 = vadd.f32 %v7628, %v7651
  %v7669 = vadd.f32 %v7629, %v7653
  %v7670 = vmax.f32 %v7662, 0.0
  %v7671 = vmax.f32 %v7663, 0.0
  %v7672 = vmax.f32 %v7664, 0.0
  %v7673 = vmax.f32 %v7665, 0.0
  %v7674 = vmax.f32 %v7666, 0.0
  %v7675 = vmax.f32 %v7667, 0.0
  %v7676 = vmax.f32 %v7668, 0.0
  %v7677 = vmax.f32 %v7669, 0.0
  %v7678 = vld [vmem:[%s71] sm:$0xff]
  %v7679 = vld [vmem:[%s71 + $0x8] sm:$0xff]
  %v7680 = vld [vmem:[%s71 + $0x10] sm:$0xff]
  %v7681 = vld [vmem:[%s71 + $0x18] sm:$0xff]
  %v7682 = vld [vmem:[%s71 + $0x20] sm:$0xff]
  %v7683 = vld [vmem:[%s71 + $0x28] sm:$0xff]
  %v7684 = vld [vmem:[%s71 + $0x30] sm:$0xff]
  %v7685 = vld [vmem:[%s71 + $0x38] sm:$0xff]
  %v7686 = vld [vmem:[%s71 + $0x40] sm:$0xff]
  %v7688 = vsel %vm400, %v7670, 0
  %v7691 = vsel %vm400, %v7671, 0
  %v7694 = vsel %vm400, %v7672, 0
  %v7697 = vsel %vm400, %v7673, 0
  %v7700 = vsel %vm400, %v7674, 0
  %v7703 = vsel %vm400, %v7675, 0
  %v7706 = vsel %vm400, %v7676, 0
  %v7709 = vsel %vm400, %v7677, 0
  %7711 = vmatprep.subr.mxu0 0.0
  %7712 = vmatpush1.msra.mxu0 %v7678
  %7713 = vmatprep.subr.mxu0 0.0
  %7714 = vmatpush1.msra.mxu0 %v7679
  %7715 = vmatprep.subr.mxu0 0.0
  %7716 = vmatpush1.msra.mxu0 %v7680
  %7717 = vmatprep.subr.mxu0 0.0
  %7718 = vmatpush1.msra.mxu0 %v7681
  %7719 = vmatprep.subr.mxu0 0.0
  %7720 = vmatpush1.msra.mxu0 %v7682
  %7721 = vmatprep.subr.mxu0 0.0
  %7722 = vmatpush1.msra.mxu0 %v7683
  %7723 = vmatprep.subr.mxu0 0.0
  %7724 = vmatpush1.msra.mxu0 %v7684
  %7725 = vmatprep.subr.mxu0 0.0
  %7726 = vmatpush1.msra.mxu0 %v7685
  %7727 = vmatprep.subr.mxu0 0.0
  %7728 = vmatpush1.msra.mxu0 %v7686
  %7729 = vmatprep.subr.mxu0 0.0
  %7730 = vmatpush1.msra.mxu0 0.0
  %7731 = vmatprep.subr.mxu0 0.0
  %7732 = vmatpush1.msra.mxu0 0.0
  %7733 = vmatprep.subr.mxu0 0.0
  %7734 = vmatpush1.msra.mxu0 0.0
  %7735 = vmatprep.subr.mxu0 0.0
  %7736 = vmatpush1.msra.mxu0 0.0
  %7737 = vmatprep.subr.mxu0 0.0
  %7738 = vmatpush1.msra.mxu0 0.0
  %7739 = vmatprep.subr.mxu0 0.0
  %7740 = vmatpush1.msra.mxu0 0.0
  %7741 = vmatprep.subr.mxu0 0.0
  %7742 = vmatpush1.msra.mxu0 0.0
  %7743 = vmatprep.subr.mxu0 0.0
  %7744 = vmatpush1.msra.mxu0 0.0
  %7745 = vmatprep.subr.mxu0 0.0
  %7746 = vmatpush1.msra.mxu0 0.0
  %7747 = vmatprep.subr.mxu0 0.0
  %7748 = vmatpush1.msra.mxu0 0.0
  %7749 = vmatprep.subr.mxu0 0.0
  %7750 = vmatpush1.msra.mxu0 0.0
  %7751 = vmatprep.subr.mxu0 0.0
  %7752 = vmatpush1.msra.mxu0 0.0
  %7753 = vmatprep.subr.mxu0 0.0
  %7754 = vmatpush1.msra.mxu0 0.0
  %7755 = vmatprep.subr.mxu0 0.0
  %7756 = vmatpush1.msra.mxu0 0.0
  %7757 = vmatprep.subr.mxu0 0.0
  %7758 = vmatpush1.msra.mxu0 0.0
  %7759 = vmatprep.subr.mxu0 0.0
  %7760 = vmatpush1.msra.mxu0 0.0
  %7761 = vmatprep.subr.mxu0 0.0
  %7762 = vmatpush1.msra.mxu0 0.0
  %7763 = vmatprep.subr.mxu0 0.0
  %7764 = vmatpush1.msra.mxu0 0.0
  %7765 = vmatprep.subr.mxu0 0.0
  %7766 = vmatpush1.msra.mxu0 0.0
  %7767 = vmatprep.subr.mxu0 0.0
  %7768 = vmatpush1.msra.mxu0 0.0
  %7769 = vmatprep.subr.mxu0 0.0
  %7770 = vmatpush1.msra.mxu0 0.0
  %7771 = vmatprep.subr.mxu0 0.0
  %7772 = vmatpush1.msra.mxu0 0.0
  %7773 = vmatprep.subr.mxu0 0.0
  %7774 = vmatpush1.msra.mxu0 0.0
  %7775 = vmatprep.mubr.f32.mxu0 0.0
  %7776 = vmatmul.mubr.f32.gmra.mrb[0].mxu0 %v7688
  %v7777 = vpop.f32.mrb[0].mxu0
  %v7778 = vadd.f32 0.0, %v7777
  %v7779 = vpop.f32.mrb[0].mxu0
  %7780 = vmatprep.mubr.f32.mxu0 0.0
  %7781 = vmatmul.mubr.f32.gmra.mrb[0].mxu0 %v7691
  %v7782 = vpop.f32.mrb[0].mxu0
  %v7783 = vadd.f32 0.0, %v7782
  %v7784 = vpop.f32.mrb[0].mxu0
  %7785 = vmatprep.mubr.f32.mxu0 0.0
  %7786 = vmatmul.mubr.f32.gmra.mrb[0].mxu0 %v7694
  %v7787 = vpop.f32.mrb[0].mxu0
  %v7788 = vadd.f32 0.0, %v7787
  %v7789 = vpop.f32.mrb[0].mxu0
  %7790 = vmatprep.mubr.f32.mxu0 0.0
  %7791 = vmatmul.mubr.f32.gmra.mrb[0].mxu0 %v7697
  %v7792 = vpop.f32.mrb[0].mxu0
  %v7793 = vadd.f32 0.0, %v7792
  %v7794 = vpop.f32.mrb[0].mxu0
  %7795 = vmatprep.mubr.f32.mxu0 0.0
  %7796 = vmatmul.mubr.f32.gmra.mrb[0].mxu0 %v7700
  %v7797 = vpop.f32.mrb[0].mxu0
  %v7798 = vadd.f32 0.0, %v7797
  %v7799 = vpop.f32.mrb[0].mxu0
  %7800 = vmatprep.mubr.f32.mxu0 0.0
  %7801 = vmatmul.mubr.f32.gmra.mrb[0].mxu0 %v7703
  %v7802 = vpop.f32.mrb[0].mxu0
  %v7803 = vadd.f32 0.0, %v7802
  %v7804 = vpop.f32.mrb[0].mxu0
  %7805 = vmatprep.mubr.f32.mxu0 0.0
  %7806 = vmatmul.mubr.f32.gmra.mrb[0].mxu0 %v7706
  %v7807 = vpop.f32.mrb[0].mxu0
  %v7808 = vadd.f32 0.0, %v7807
  %v7809 = vpop.f32.mrb[0].mxu0
  %7810 = vmatprep.mubr.f32.mxu0 0.0
  %7811 = vmatmul.mubr.f32.gmra.mrb[0].mxu0 %v7709
  %v7812 = vpop.f32.mrb[0].mxu0
  %v7813 = vadd.f32 0.0, %v7812
  %v7814 = vpop.f32.mrb[0].mxu0
  %7815 = vdwg.mxu0
  %v7816 = vld [vmem:[%s73] sm:$0xff]
  %v7817 = vld [vmem:[%s73 + $0x8] sm:$0x3]
  %v7818 = vld [vmem:[%s75] sm:$0xff]
  %v7819 = vld [vmem:[%s75 + $0x8] sm:$0x3]
  %7821 = vset.pattern.permute.xlu0 0
  %7822 = vperm.xlu0 %7821, %v7818
  %v7823 = vpop.permute.xlu0 %7822
  %7826 = vset.pattern.permute.xlu0 0
  %7827 = vperm.xlu0 %7826, %v7819
  %v7828 = vpop.permute.xlu0 %7827
  %v7831 = vsel %vm7159, %v7816, 0
  %v7834 = vsel %vm7159, %v7817, 0
  %7836 = vmatprep.subr.mxu0 0.0
  %7837 = vmatpush1.msra.mxu0 %v7778
  %7838 = vmatprep.subr.mxu0 0.0
  %7839 = vmatpush1.msra.mxu0 %v7783
  %7840 = vmatprep.subr.mxu0 0.0
  %7841 = vmatpush1.msra.mxu0 %v7788
  %7842 = vmatprep.subr.mxu0 0.0
  %7843 = vmatpush1.msra.mxu0 %v7793
  %7844 = vmatprep.subr.mxu0 0.0
  %7845 = vmatpush1.msra.mxu0 %v7798
  %7846 = vmatprep.subr.mxu0 0.0
  %7847 = vmatpush1.msra.mxu0 %v7803
  %7848 = vmatprep.subr.mxu0 0.0
  %7849 = vmatpush1.msra.mxu0 %v7808
  %7850 = vmatprep.subr.mxu0 0.0
  %7851 = vmatpush1.msra.mxu0 %v7813
  %7852 = vmatprep.subr.mxu0 0.0
  %7853 = vmatpush1.msra.mxu0 0.0
  %7854 = vmatprep.subr.mxu0 0.0
  %7855 = vmatpush1.msra.mxu0 0.0
  %7856 = vmatprep.subr.mxu0 0.0
  %7857 = vmatpush1.msra.mxu0 0.0
  %7858 = vmatprep.subr.mxu0 0.0
  %7859 = vmatpush1.msra.mxu0 0.0
  %7860 = vmatprep.subr.mxu0 0.0
  %7861 = vmatpush1.msra.mxu0 0.0
  %7862 = vmatprep.subr.mxu0 0.0
  %7863 = vmatpush1.msra.mxu0 0.0
  %7864 = vmatprep.subr.mxu0 0.0
  %7865 = vmatpush1.msra.mxu0 0.0
  %7866 = vmatprep.subr.mxu0 0.0
  %7867 = vmatpush1.msra.mxu0 0.0
  %7868 = vmatprep.subr.mxu0 0.0
  %7869 = vmatpush1.msra.mxu0 0.0
  %7870 = vmatprep.subr.mxu0 0.0
  %7871 = vmatpush1.msra.mxu0 0.0
  %7872 = vmatprep.subr.mxu0 0.0
  %7873 = vmatpush1.msra.mxu0 0.0
  %7874 = vmatprep.subr.mxu0 0.0
  %7875 = vmatpush1.msra.mxu0 0.0
  %7876 = vmatprep.subr.mxu0 0.0
  %7877 = vmatpush1.msra.mxu0 0.0
  %7878 = vmatprep.subr.mxu0 0.0
  %7879 = vmatpush1.msra.mxu0 0.0
  %7880 = vmatprep.subr.mxu0 0.0
  %7881 = vmatpush1.msra.mxu0 0.0
  %7882 = vmatprep.subr.mxu0 0.0
  %7883 = vmatpush1.msra.mxu0 0.0
  %7884 = vmatprep.subr.mxu0 0.0
  %7885 = vmatpush1.msra.mxu0 0.0
  %7886 = vmatprep.subr.mxu0 0.0
  %7887 = vmatpush1.msra.mxu0 0.0
  %7888 = vmatprep.subr.mxu0 0.0
  %7889 = vmatpush1.msra.mxu0 0.0
  %7890 = vmatprep.subr.mxu0 0.0
  %7891 = vmatpush1.msra.mxu0 0.0
  %7892 = vmatprep.subr.mxu0 0.0
  %7893 = vmatpush1.msra.mxu0 0.0
  %7894 = vmatprep.subr.mxu0 0.0
  %7895 = vmatpush1.msra.mxu0 0.0
  %7896 = vmatprep.subr.mxu0 0.0
  %7897 = vmatpush1.msra.mxu0 0.0
  %7898 = vmatprep.subr.mxu0 0.0
  %7899 = vmatpush1.msra.mxu0 0.0
  %7900 = vmatprep.mubr.f32.mxu0 0.0
  %7901 = vmatmul.mubr.f32.gmra.mrb[0].mxu0 %v7831
  %v7902 = vpop.f32.mrb[0].mxu0
  %v7903 = vadd.f32 %v7823, %v7902
  %v7904 = vpop.f32.mrb[0].mxu0
  %7905 = vmatprep.mubr.f32.mxu0 0.0
  %7906 = vmatmul.mubr.f32.gmra.mrb[0].mxu0 %v7834
  %v7907 = vpop.f32.mrb[0].mxu0
  %v7908 = vadd.f32 %v7828, %v7907
  %v7909 = vpop.f32.mrb[0].mxu0
  %7910 = vdwg.mxu0
  %vm7911 = vcmask 15360
  %7912 = vst.msk [vmem:[%s77] sm:$0xff] %vm7911, %v7903
  %vm7913 = vcmask 9216
  %7914 = vst.msk [vmem:[%s77 + $0x8] sm:$0x3] %vm7913, %v7908
  // Predicated region
  $region154: #{resnet_forward.1} parent=0 // pred_check
    _
  $region155: #{resnet_forward.1} parent=0 // pred_check_branch
    %7916 = sbr.rel (0) target = $region157
  $region156: #{resnet_forward.1} parent=0 // pred_region
    _
  $region157: #{resnet_forward.1} parent=0 // pred_fallthru
    _
  // Predicated region
  $region158: #{resnet_forward.1} parent=0 // pred_check
    _
  $region159: #{resnet_forward.1} parent=0 // pred_check_branch
    %7918 = sbr.rel (0) target = $region161
  $region160: #{resnet_forward.1} parent=0 // pred_region
    _
  $region161: #{resnet_forward.1} parent=0 // pred_fallthru
    _

</llo_original>
